<compile_context>
chip_gen: v5e
topology: v5e:2x2
jax: 0.10.0
libtpu: 0.0.40
codegen_flags: <defaults>
</compile_context>

<pallas_src>
import functools

import jax
import jax.numpy as jnp
from jax.experimental import pallas as pl
from jax.experimental.pallas import tpu as pltpu

_LN_EPS = 1e-5


# ----------------------------- tiling helper -----------------------------

def _tile_m(m, max_tile=512):
    """Largest M-tile that is a multiple of 8, divides m, and is <= max_tile."""
    if m <= max_tile:
        return m
    for t in range(max_tile, 7, -8):
        if m % t == 0:
            return t
    return m  # fall back to a single block


# ----------------------------- kernels -----------------------------

def _encoder_kernel(x_ref, win_ref, bin_ref, wblk_ref, bblk_ref, o_ref, *, num_blocks):
    """Fused ResidualEncoder: Linear+ReLU then num_blocks residual blocks, all in VMEM."""
    h = jnp.dot(x_ref[...], win_ref[...], preferred_element_type=jnp.float32) + bin_ref[...]
    h = jnp.maximum(h, 0.0)
    for j in range(num_blocks):
        y = h + jnp.dot(h, wblk_ref[j], preferred_element_type=jnp.float32) + bblk_ref[j]
        h = jnp.maximum(y, 0.0)
    o_ref[...] = h.astype(o_ref.dtype)


def _linear_kernel(x_ref, w_ref, b_ref, o_ref, *, relu):
    y = jnp.dot(x_ref[...], w_ref[...], preferred_element_type=jnp.float32) + b_ref[...]
    if relu:
        y = jnp.maximum(y, 0.0)
    o_ref[...] = y.astype(o_ref.dtype)


def _attn_o_ln_kernel(qkv_ref, h_ref, mask_ref, wo_ref, bo_ref, g_ref, b_ref, o_ref,
                      *, num_heads, scale, eps):
    """Multi-head attention (all heads of one batch element) + O-proj + residual + LayerNorm."""
    qkv = qkv_ref[0]                         # (S, 3D)
    h = h_ref[0]                             # (S, D)
    m = mask_ref[0]                          # (1, S), 1.0 = valid key
    d = h.shape[-1]
    dh = d // num_heads

    heads = []
    for j in range(num_heads):
        q = qkv[:, j * dh:(j + 1) * dh]                      # (S, Dh)
        k = qkv[:, d + j * dh:d + (j + 1) * dh]              # (S, Dh)
        v = qkv[:, 2 * d + j * dh:2 * d + (j + 1) * dh]      # (S, Dh)
        s = jax.lax.dot_general(q, k, (((1,), (1,)), ((), ())),
                                preferred_element_type=jnp.float32) * scale
        s = jnp.where(m > 0.0, s, -1e30)
        s = s - jnp.max(s, axis=-1, keepdims=True)
        p = jnp.exp(s)
        p = p * pl.reciprocal(jnp.sum(p, axis=-1, keepdims=True), approx=True)
        heads.append(jnp.dot(p, v, preferred_element_type=jnp.float32))
    attn = jnp.concatenate(heads, axis=-1)                   # (S, D)

    y = jnp.dot(attn, wo_ref[...], preferred_element_type=jnp.float32) + bo_ref[...]
    z = h + y
    mu = jnp.mean(z, axis=-1, keepdims=True)
    var = jnp.mean((z - mu) ** 2, axis=-1, keepdims=True)
    o_ref[0] = ((z - mu) * jax.lax.rsqrt(var + eps) * g_ref[...] + b_ref[...]).astype(o_ref.dtype)


def _ffn_ln_kernel(h_ref, w1_ref, b1_ref, w2_ref, b2_ref, g_ref, b_ref, o_ref, *, eps):
    """Fused FFN (Linear+ReLU+Linear) + residual + LayerNorm; (TM, 4D) stays in VMEM."""
    h = h_ref[...]
    ff = jnp.dot(h, w1_ref[...], preferred_element_type=jnp.float32) + b1_ref[...]
    ff = jnp.maximum(ff, 0.0)
    y = jnp.dot(ff, w2_ref[...], preferred_element_type=jnp.float32) + b2_ref[...]
    z = h + y
    mu = jnp.mean(z, axis=-1, keepdims=True)
    var = jnp.mean((z - mu) ** 2, axis=-1, keepdims=True)
    o_ref[...] = ((z - mu) * jax.lax.rsqrt(var + eps) * g_ref[...] + b_ref[...]).astype(o_ref.dtype)


def _pool_decoder_kernel(h_ref, mask_ref, w1_ref, b1_ref, w2_ref, b2_ref, o_ref):
    """Masked mean over the set dim + MLPDecoder1 (Linear+ReLU, Linear)."""
    x = h_ref[...]                            # (B, S, D)
    m = mask_ref[...]                         # (B, S)
    num = jnp.sum(x * m[:, :, None], axis=1)  # (B, D)
    den = jnp.maximum(jnp.sum(m, axis=1, keepdims=True), 1e-6)
    pooled = num * pl.reciprocal(den, approx=True)
    y = jnp.dot(pooled, w1_ref[...], preferred_element_type=jnp.float32) + b1_ref[...]
    y = jnp.maximum(y, 0.0)
    y = jnp.dot(y, w2_ref[...], preferred_element_type=jnp.float32) + b2_ref[...]
    o_ref[...] = y.astype(o_ref.dtype)


# ----------------------------- pallas_call wrappers -----------------------------

_PAR = pltpu.CompilerParams(dimension_semantics=("parallel",))


def encoder_forward(x2d, win, bin_, wblk, bblk):
    m, dim_data = x2d.shape
    d = win.shape[1]
    nb = wblk.shape[0]
    tm = _tile_m(m)
    return pl.pallas_call(
        functools.partial(_encoder_kernel, num_blocks=nb),
        grid=(m // tm,),
        in_specs=[
            pl.BlockSpec((tm, dim_data), lambda i: (i, 0)),
            pl.BlockSpec((dim_data, d), lambda i: (0, 0)),
            pl.BlockSpec((1, d), lambda i: (0, 0)),
            pl.BlockSpec((nb, d, d), lambda i: (0, 0, 0)),
            pl.BlockSpec((nb, 1, d), lambda i: (0, 0, 0)),
        ],
        out_specs=pl.BlockSpec((tm, d), lambda i: (i, 0)),
        out_shape=jax.ShapeDtypeStruct((m, d), jnp.float32),
        compiler_params=_PAR,
    )(x2d, win, bin_.reshape(1, d), wblk, bblk.reshape(nb, 1, d))


def fused_linear(x, w, b, relu=False):
    m, k = x.shape
    n = w.shape[1]
    tm = _tile_m(m)
    return pl.pallas_call(
        functools.partial(_linear_kernel, relu=relu),
        grid=(m // tm,),
        in_specs=[
            pl.BlockSpec((tm, k), lambda i: (i, 0)),
            pl.BlockSpec((k, n), lambda i: (0, 0)),
            pl.BlockSpec((1, n), lambda i: (0, 0)),
        ],
        out_specs=pl.BlockSpec((tm, n), lambda i: (i, 0)),
        out_shape=jax.ShapeDtypeStruct((m, n), jnp.float32),
        compiler_params=_PAR,
    )(x, w, b.reshape(1, n))


def attn_o_ln(qkv, h, mask, wo, bo, gamma, beta, *, num_heads, eps=_LN_EPS):
    bsz, s, d3 = qkv.shape
    d = d3 // 3
    dh = d // num_heads
    scale = 1.0 / (dh ** 0.5)
    mask3 = mask.reshape(bsz, 1, s)
    return pl.pallas_call(
        functools.partial(_attn_o_ln_kernel, num_heads=num_heads, scale=scale, eps=eps),
        grid=(bsz,),
        in_specs=[
            pl.BlockSpec((1, s, d3), lambda i: (i, 0, 0)),
            pl.BlockSpec((1, s, d), lambda i: (i, 0, 0)),
            pl.BlockSpec((1, 1, s), lambda i: (i, 0, 0)),
            pl.BlockSpec((d, d), lambda i: (0, 0)),
            pl.BlockSpec((1, d), lambda i: (0, 0)),
            pl.BlockSpec((1, d), lambda i: (0, 0)),
            pl.BlockSpec((1, d), lambda i: (0, 0)),
        ],
        out_specs=pl.BlockSpec((1, s, d), lambda i: (i, 0, 0)),
        out_shape=jax.ShapeDtypeStruct((bsz, s, d), jnp.float32),
        compiler_params=_PAR,
    )(qkv, h, mask3, wo, bo.reshape(1, d), gamma.reshape(1, d), beta.reshape(1, d))


def ffn_ln(h, w1, b1, w2, b2, gamma, beta, *, eps=_LN_EPS):
    m, d = h.shape
    dff = w1.shape[1]
    tm = _tile_m(m)
    return pl.pallas_call(
        functools.partial(_ffn_ln_kernel, eps=eps),
        grid=(m // tm,),
        in_specs=[
            pl.BlockSpec((tm, d), lambda i: (i, 0)),
            pl.BlockSpec((d, dff), lambda i: (0, 0)),
            pl.BlockSpec((1, dff), lambda i: (0, 0)),
            pl.BlockSpec((dff, d), lambda i: (0, 0)),
            pl.BlockSpec((1, d), lambda i: (0, 0)),
            pl.BlockSpec((1, d), lambda i: (0, 0)),
            pl.BlockSpec((1, d), lambda i: (0, 0)),
        ],
        out_specs=pl.BlockSpec((tm, d), lambda i: (i, 0)),
        out_shape=jax.ShapeDtypeStruct((m, d), jnp.float32),
        compiler_params=_PAR,
    )(h, w1, b1.reshape(1, dff), w2, b2.reshape(1, d), gamma.reshape(1, d), beta.reshape(1, d))


def pool_decoder(h3d, mask, w1, b1, w2, b2):
    bsz, _, d = h3d.shape
    n = w2.shape[1]
    return pl.pallas_call(
        _pool_decoder_kernel,
        out_shape=jax.ShapeDtypeStruct((bsz, n), jnp.float32),
    )(h3d, mask, w1, b1.reshape(1, d), w2, b2.reshape(1, n))


# ----------------------------- parameters -----------------------------

def _init_linear(key, fan_in, fan_out):
    kw, kb = jax.random.split(key)
    bound = 1.0 / (fan_in ** 0.5)
    w = jax.random.uniform(kw, (fan_in, fan_out), jnp.float32, -bound, bound)
    b = jax.random.uniform(kb, (fan_out,), jnp.float32, -bound, bound)
    return w, b


def init_params(key, dim_data, dim_output, dim_middle, num_layers, num_enc_blocks=4):
    keys = iter(jax.random.split(key, 128))
    p = {}
    # ResidualEncoder
    p["enc_in_w"], p["enc_in_b"] = _init_linear(next(keys), dim_data, dim_middle)
    ws, bs = [], []
    for _ in range(num_enc_blocks):
        w, b = _init_linear(next(keys), dim_middle, dim_middle)
        ws.append(w)
        bs.append(b)
    p["enc_blocks_w"] = jnp.stack(ws)       # (nb, D, D)
    p["enc_blocks_b"] = jnp.stack(bs)       # (nb, D)
    # Transformer1 aggregator (fused QKV weights)
    dff = 4 * dim_middle
    p["agg_layers"] = []
    for _ in range(num_layers):
        lyr = {}
        wq, bq = _init_linear(next(keys), dim_middle, dim_middle)
        wk, bk = _init_linear(next(keys), dim_middle, dim_middle)
        wv, bv = _init_linear(next(keys), dim_middle, dim_middle)
        lyr["wqkv"] = jnp.concatenate([wq, wk, wv], axis=1)   # (D, 3D)
        lyr["bqkv"] = jnp.concatenate([bq, bk, bv], axis=0)   # (3D,)
        lyr["wo"], lyr["bo"] = _init_linear(next(keys), dim_middle, dim_middle)
        lyr["w1"], lyr["b1"] = _init_linear(next(keys), dim_middle, dff)
        lyr["w2"], lyr["b2"] = _init_linear(next(keys), dff, dim_middle)
        lyr["ln1_g"] = jnp.ones((dim_middle,), jnp.float32)
        lyr["ln1_b"] = jnp.zeros((dim_middle,), jnp.float32)
        lyr["ln2_g"] = jnp.ones((dim_middle,), jnp.float32)
        lyr["ln2_b"] = jnp.zeros((dim_middle,), jnp.float32)
        p["agg_layers"].append(lyr)
    # MLPDecoder1
    p["dec_w1"], p["dec_b1"] = _init_linear(next(keys), dim_middle, dim_middle)
    p["dec_w2"], p["dec_b2"] = _init_linear(next(keys), dim_middle, dim_output)
    return p


# ----------------------------- forward -----------------------------

def reg_flat_niid_forward(params, X, mask, *, num_heads):
    """X: (B, S, dim_data) float32; mask: (B, S) float32 (1.0 = valid). Returns (B, dim_output)."""
    B, S, _ = X.shape
    D = params["enc_in_w"].shape[1]
    M = B * S

    # ResidualEncoder (one fused kernel over all blocks)
    h = encoder_forward(X.reshape(M, -1), params["enc_in_w"], params["enc_in_b"],
                        params["enc_blocks_w"], params["enc_blocks_b"])       # (M, D)

    # Transformer1 aggregator (post-norm layers)
    for lyr in params["agg_layers"]:
        qkv = fused_linear(h, lyr["wqkv"], lyr["bqkv"])                       # (M, 3D)
        h = attn_o_ln(qkv.reshape(B, S, 3 * D), h.reshape(B, S, D), mask,
                      lyr["wo"], lyr["bo"], lyr["ln1_g"], lyr["ln1_b"],
                      num_heads=num_heads)                                    # (B, S, D)
        h = h.reshape(M, D)
        h = ffn_ln(h, lyr["w1"], lyr["b1"], lyr["w2"], lyr["b2"],
                   lyr["ln2_g"], lyr["ln2_b"])                                # (M, D)

    # masked mean pooling + MLPDecoder1 (one fused kernel)
    return pool_decoder(h.reshape(B, S, D), mask,
                        params["dec_w1"], params["dec_b1"],
                        params["dec_w2"], params["dec_b2"])


# ----------------------------- demo -----------------------------

if __name__ == "__main__":
    # Small but representative config; M = B*S = 1024 so the M-tiled grids have >1 step.
    B, S = 8, 128                # batch, set size
    dim_data = 4
    dim_output = 3
    dim_middle = 32
    num_heads = 4
    num_layers = 2

    root = jax.random.PRNGKey(0)
    k_par, k_x = jax.random.split(root)

    params = init_params(k_par, dim_data, dim_output, dim_middle, num_layers)

    X = jax.random.normal(k_x, (B, S, dim_data), jnp.float32)
    lengths = jnp.array([128, 96, 64, 32, 16, 8, 100, 77], dtype=jnp.int32)
    mask = (jnp.arange(S)[None, :] < lengths[:, None]).astype(jnp.float32)   # (B, S), 1.0 = valid

    fwd = jax.jit(functools.partial(reg_flat_niid_forward, num_heads=num_heads))
    Yh = fwd(params, X, mask)
    Yh = jax.block_until_ready(Yh)

    assert Yh.shape == (B, dim_output)
    assert bool(jnp.all(jnp.isfinite(Yh)))
    print("KERNEL_OK")
</pallas_src>

<mosaic_0001>
module attributes {stable_mosaic.version = 11 : i64} {
  func.func @_linear_kernel(%arg0: i32, %arg1: memref<512x32xf32, #tpu.memory_space<vmem>>, %arg2: memref<32x96xf32, #tpu.memory_space<vmem>>, %arg3: memref<1x96xf32, #tpu.memory_space<vmem>>, %arg4: memref<512x96xf32, #tpu.memory_space<vmem>>) attributes {dimension_semantics = [#tpu.dimension_semantics<parallel>], iteration_bounds = array<i64: 2>, scalar_prefetch = 0 : i64, scratch_operands = 0 : i64, tpu.core_type = #tpu.core_type<tc>, window_params = [{transform_indices = @transform_0, window_bounds = array<i64: 512, 32>}, {pipeline_mode = #tpu.pipeline_mode<synchronous>, transform_indices = @transform_1, window_bounds = array<i64: 32, 96>}, {pipeline_mode = #tpu.pipeline_mode<synchronous>, transform_indices = @transform_2, window_bounds = array<i64: 1, 96>}, {transform_indices = @transform_3, window_bounds = array<i64: 512, 96>}]} {
    %c0 = arith.constant 0 : index
    %c0_0 = arith.constant 0 : index
    %0 = vector.load %arg1[%c0, %c0_0] : memref<512x32xf32, #tpu.memory_space<vmem>>, vector<512x32xf32>
    %c0_1 = arith.constant 0 : index
    %c0_2 = arith.constant 0 : index
    %1 = vector.load %arg2[%c0_1, %c0_2] : memref<32x96xf32, #tpu.memory_space<vmem>>, vector<32x96xf32>
    %cst = arith.constant dense<0.000000e+00> : vector<512x96xf32>
    %2 = tpu.matmul %0, %1, %cst {dimension_numbers = #tpu.dot_dimension_numbers<[1], [0], [0], [1], [0, 0, 1, 1], [], []>} : vector<512x32xf32>, vector<32x96xf32>, vector<512x96xf32> -> vector<512x96xf32>
    %c0_3 = arith.constant 0 : index
    %c0_4 = arith.constant 0 : index
    %3 = vector.load %arg3[%c0_3, %c0_4] : memref<1x96xf32, #tpu.memory_space<vmem>>, vector<1x96xf32>
    %4 = vector.broadcast %3 : vector<1x96xf32> to vector<512x96xf32>
    %5 = arith.addf %2, %4 : vector<512x96xf32>
    %c0_5 = arith.constant 0 : index
    %c0_6 = arith.constant 0 : index
    %6 = vector.load %arg4[%c0_5, %c0_6] : memref<512x96xf32, #tpu.memory_space<vmem>>, vector<512x96xf32>
    tpu.vector_store %arg4[%c0_5, %c0_6], %5 {strides = array<i32>} : memref<512x96xf32, #tpu.memory_space<vmem>>, vector<512x96xf32>,
    return
  }
  func.func @transform_0(%arg0: i32) -> (i32, i32) {
    %c0_i32 = arith.constant 0 : i32
    %c0_i32_0 = arith.constant 0 : i32
    return %arg0, %c0_i32 : i32, i32
  }
  func.func @transform_1(%arg0: i32) -> (i32, i32) {
    %c0_i32 = arith.constant 0 : i32
    %c0_i32_0 = arith.constant 0 : i32
    %c0_i32_1 = arith.constant 0 : i32
    return %c0_i32, %c0_i32_0 : i32, i32
  }
  func.func @transform_2(%arg0: i32) -> (i32, i32) {
    %c0_i32 = arith.constant 0 : i32
    %c0_i32_0 = arith.constant 0 : i32
    %c0_i32_1 = arith.constant 0 : i32
    return %c0_i32, %c0_i32_0 : i32, i32
  }
  func.func @transform_3(%arg0: i32) -> (i32, i32) {
    %c0_i32 = arith.constant 0 : i32
    %c0_i32_0 = arith.constant 0 : i32
    return %arg0, %c0_i32 : i32, i32
  }
}

module attributes {stable_mosaic.version = 11 : i64} {
  func.func @_encoder_kernel(%arg0: i32, %arg1: memref<512x4xf32, #tpu.memory_space<vmem>>, %arg2: memref<4x32xf32, #tpu.memory_space<vmem>>, %arg3: memref<1x32xf32, #tpu.memory_space<vmem>>, %arg4: memref<4x32x32xf32, #tpu.memory_space<vmem>>, %arg5: memref<4x1x32xf32, #tpu.memory_space<vmem>>, %arg6: memref<512x32xf32, #tpu.memory_space<vmem>>) attributes {dimension_semantics = [#tpu.dimension_semantics<parallel>], iteration_bounds = array<i64: 2>, scalar_prefetch = 0 : i64, scratch_operands = 0 : i64, tpu.core_type = #tpu.core_type<tc>, window_params = [{transform_indices = @transform_0, window_bounds = array<i64: 512, 4>}, {pipeline_mode = #tpu.pipeline_mode<synchronous>, transform_indices = @transform_1, window_bounds = array<i64: 4, 32>}, {pipeline_mode = #tpu.pipeline_mode<synchronous>, transform_indices = @transform_2, window_bounds = array<i64: 1, 32>}, {pipeline_mode = #tpu.pipeline_mode<synchronous>, transform_indices = @transform_3, window_bounds = array<i64: 4, 32, 32>}, {pipeline_mode = #tpu.pipeline_mode<synchronous>, transform_indices = @transform_4, window_bounds = array<i64: 4, 1, 32>}, {transform_indices = @transform_5, window_bounds = array<i64: 512, 32>}]} {
    %c0 = arith.constant 0 : index
    %c0_0 = arith.constant 0 : index
    %0 = vector.load %arg1[%c0, %c0_0] : memref<512x4xf32, #tpu.memory_space<vmem>>, vector<512x4xf32>
    %c0_1 = arith.constant 0 : index
    %c0_2 = arith.constant 0 : index
    %1 = vector.load %arg2[%c0_1, %c0_2] : memref<4x32xf32, #tpu.memory_space<vmem>>, vector<4x32xf32>
    %cst = arith.constant dense<0.000000e+00> : vector<512x32xf32>
    %2 = tpu.matmul %0, %1, %cst {dimension_numbers = #tpu.dot_dimension_numbers<[1], [0], [0], [1], [0, 0, 1, 1], [], []>} : vector<512x4xf32>, vector<4x32xf32>, vector<512x32xf32> -> vector<512x32xf32>
    %c0_3 = arith.constant 0 : index
    %c0_4 = arith.constant 0 : index
    %3 = vector.load %arg3[%c0_3, %c0_4] : memref<1x32xf32, #tpu.memory_space<vmem>>, vector<1x32xf32>
    %4 = vector.broadcast %3 : vector<1x32xf32> to vector<512x32xf32>
    %5 = arith.addf %2, %4 : vector<512x32xf32>
    %cst_5 = arith.constant 0.000000e+00 : f32
    %6 = vector.broadcast %cst_5 : f32 to vector<512x32xf32>
    %7 = arith.maximumf %5, %6 : vector<512x32xf32>
    %c0_6 = arith.constant 0 : index
    %c0_7 = arith.constant 0 : index
    %c0_8 = arith.constant 0 : index
    %8 = vector.load %arg4[%c0_6, %c0_7, %c0_8] : memref<4x32x32xf32, #tpu.memory_space<vmem>>, vector<1x32x32xf32>
    %9 = vector.shape_cast %8 : vector<1x32x32xf32> to vector<32x32xf32>
    %cst_9 = arith.constant dense<0.000000e+00> : vector<512x32xf32>
    %10 = tpu.matmul %7, %9, %cst_9 {dimension_numbers = #tpu.dot_dimension_numbers<[1], [0], [0], [1], [0, 0, 1, 1], [], []>} : vector<512x32xf32>, vector<32x32xf32>, vector<512x32xf32> -> vector<512x32xf32>
    %11 = arith.addf %7, %10 : vector<512x32xf32>
    %c0_10 = arith.constant 0 : index
    %c0_11 = arith.constant 0 : index
    %c0_12 = arith.constant 0 : index
    %12 = vector.load %arg5[%c0_10, %c0_11, %c0_12] : memref<4x1x32xf32, #tpu.memory_space<vmem>>, vector<1x1x32xf32>
    %13 = vector.shape_cast %12 : vector<1x1x32xf32> to vector<1x32xf32>
    %14 = vector.broadcast %13 : vector<1x32xf32> to vector<512x32xf32>
    %15 = arith.addf %11, %14 : vector<512x32xf32>
    %cst_13 = arith.constant 0.000000e+00 : f32
    %16 = vector.broadcast %cst_13 : f32 to vector<512x32xf32>
    %17 = arith.maximumf %15, %16 : vector<512x32xf32>
    %c1 = arith.constant 1 : index
    %c0_14 = arith.constant 0 : index
    %c0_15 = arith.constant 0 : index
    %18 = vector.load %arg4[%c1, %c0_14, %c0_15] : memref<4x32x32xf32, #tpu.memory_space<vmem>>, vector<1x32x32xf32>
    %19 = vector.shape_cast %18 : vector<1x32x32xf32> to vector<32x32xf32>
    %cst_16 = arith.constant dense<0.000000e+00> : vector<512x32xf32>
    %20 = tpu.matmul %17, %19, %cst_16 {dimension_numbers = #tpu.dot_dimension_numbers<[1], [0], [0], [1], [0, 0, 1, 1], [], []>} : vector<512x32xf32>, vector<32x32xf32>, vector<512x32xf32> -> vector<512x32xf32>
    %21 = arith.addf %17, %20 : vector<512x32xf32>
    %c1_17 = arith.constant 1 : index
    %c0_18 = arith.constant 0 : index
    %c0_19 = arith.constant 0 : index
    %22 = vector.load %arg5[%c1_17, %c0_18, %c0_19] : memref<4x1x32xf32, #tpu.memory_space<vmem>>, vector<1x1x32xf32>
    %23 = vector.shape_cast %22 : vector<1x1x32xf32> to vector<1x32xf32>
    %24 = vector.broadcast %23 : vector<1x32xf32> to vector<512x32xf32>
    %25 = arith.addf %21, %24 : vector<512x32xf32>
    %cst_20 = arith.constant 0.000000e+00 : f32
    %26 = vector.broadcast %cst_20 : f32 to vector<512x32xf32>
    %27 = arith.maximumf %25, %26 : vector<512x32xf32>
    %c2 = arith.constant 2 : index
    %c0_21 = arith.constant 0 : index
    %c0_22 = arith.constant 0 : index
    %28 = vector.load %arg4[%c2, %c0_21, %c0_22] : memref<4x32x32xf32, #tpu.memory_space<vmem>>, vector<1x32x32xf32>
    %29 = vector.shape_cast %28 : vector<1x32x32xf32> to vector<32x32xf32>
    %cst_23 = arith.constant dense<0.000000e+00> : vector<512x32xf32>
    %30 = tpu.matmul %27, %29, %cst_23 {dimension_numbers = #tpu.dot_dimension_numbers<[1], [0], [0], [1], [0, 0, 1, 1], [], []>} : vector<512x32xf32>, vector<32x32xf32>, vector<512x32xf32> -> vector<512x32xf32>
    %31 = arith.addf %27, %30 : vector<512x32xf32>
    %c2_24 = arith.constant 2 : index
    %c0_25 = arith.constant 0 : index
    %c0_26 = arith.constant 0 : index
    %32 = vector.load %arg5[%c2_24, %c0_25, %c0_26] : memref<4x1x32xf32, #tpu.memory_space<vmem>>, vector<1x1x32xf32>
    %33 = vector.shape_cast %32 : vector<1x1x32xf32> to vector<1x32xf32>
    %34 = vector.broadcast %33 : vector<1x32xf32> to vector<512x32xf32>
    %35 = arith.addf %31, %34 : vector<512x32xf32>
    %cst_27 = arith.constant 0.000000e+00 : f32
    %36 = vector.broadcast %cst_27 : f32 to vector<512x32xf32>
    %37 = arith.maximumf %35, %36 : vector<512x32xf32>
    %c3 = arith.constant 3 : index
    %c0_28 = arith.constant 0 : index
    %c0_29 = arith.constant 0 : index
    %38 = vector.load %arg4[%c3, %c0_28, %c0_29] : memref<4x32x32xf32, #tpu.memory_space<vmem>>, vector<1x32x32xf32>
    %39 = vector.shape_cast %38 : vector<1x32x32xf32> to vector<32x32xf32>
    %cst_30 = arith.constant dense<0.000000e+00> : vector<512x32xf32>
    %40 = tpu.matmul %37, %39, %cst_30 {dimension_numbers = #tpu.dot_dimension_numbers<[1], [0], [0], [1], [0, 0, 1, 1], [], []>} : vector<512x32xf32>, vector<32x32xf32>, vector<512x32xf32> -> vector<512x32xf32>
    %41 = arith.addf %37, %40 : vector<512x32xf32>
    %c3_31 = arith.constant 3 : index
    %c0_32 = arith.constant 0 : index
    %c0_33 = arith.constant 0 : index
    %42 = vector.load %arg5[%c3_31, %c0_32, %c0_33] : memref<4x1x32xf32, #tpu.memory_space<vmem>>, vector<1x1x32xf32>
    %43 = vector.shape_cast %42 : vector<1x1x32xf32> to vector<1x32xf32>
    %44 = vector.broadcast %43 : vector<1x32xf32> to vector<512x32xf32>
    %45 = arith.addf %41, %44 : vector<512x32xf32>
    %cst_34 = arith.constant 0.000000e+00 : f32
    %46 = vector.broadcast %cst_34 : f32 to vector<512x32xf32>
    %47 = arith.maximumf %45, %46 : vector<512x32xf32>
    %c0_35 = arith.constant 0 : index
    %c0_36 = arith.constant 0 : index
    %48 = vector.load %arg6[%c0_35, %c0_36] : memref<512x32xf32, #tpu.memory_space<vmem>>, vector<512x32xf32>
    tpu.vector_store %arg6[%c0_35, %c0_36], %47 {strides = array<i32>} : memref<512x32xf32, #tpu.memory_space<vmem>>, vector<512x32xf32>,
    return
  }
  func.func @transform_0(%arg0: i32) -> (i32, i32) {
    %c0_i32 = arith.constant 0 : i32
    %c0_i32_0 = arith.constant 0 : i32
    return %arg0, %c0_i32 : i32, i32
  }
  func.func @transform_1(%arg0: i32) -> (i32, i32) {
    %c0_i32 = arith.constant 0 : i32
    %c0_i32_0 = arith.constant 0 : i32
    %c0_i32_1 = arith.constant 0 : i32
    return %c0_i32, %c0_i32_0 : i32, i32
  }
  func.func @transform_2(%arg0: i32) -> (i32, i32) {
    %c0_i32 = arith.constant 0 : i32
    %c0_i32_0 = arith.constant 0 : i32
    %c0_i32_1 = arith.constant 0 : i32
    return %c0_i32, %c0_i32_0 : i32, i32
  }
  func.func @transform_3(%arg0: i32) -> (i32, i32, i32) {
    %c0_i32 = arith.constant 0 : i32
    %c0_i32_0 = arith.constant 0 : i32
    %c0_i32_1 = arith.constant 0 : i32
    %c0_i32_2 = arith.constant 0 : i32
    return %c0_i32, %c0_i32_0, %c0_i32_1 : i32, i32, i32
  }
  func.func @transform_4(%arg0: i32) -> (i32, i32, i32) {
    %c0_i32 = arith.constant 0 : i32
    %c0_i32_0 = arith.constant 0 : i32
    %c0_i32_1 = arith.constant 0 : i32
    %c0_i32_2 = arith.constant 0 : i32
    return %c0_i32, %c0_i32_0, %c0_i32_1 : i32, i32, i32
  }
  func.func @transform_5(%arg0: i32) -> (i32, i32) {
    %c0_i32 = arith.constant 0 : i32
    %c0_i32_0 = arith.constant 0 : i32
    return %arg0, %c0_i32 : i32, i32
  }
}

module attributes {stable_mosaic.version = 11 : i64} {
  func.func @_attn_o_ln_kernel(%arg0: i32, %arg1: memref<1x128x96xf32, #tpu.memory_space<vmem>>, %arg2: memref<1x128x32xf32, #tpu.memory_space<vmem>>, %arg3: memref<1x1x128xf32, #tpu.memory_space<vmem>>, %arg4: memref<32x32xf32, #tpu.memory_space<vmem>>, %arg5: memref<1x32xf32, #tpu.memory_space<vmem>>, %arg6: memref<1x32xf32, #tpu.memory_space<vmem>>, %arg7: memref<1x32xf32, #tpu.memory_space<vmem>>, %arg8: memref<1x128x32xf32, #tpu.memory_space<vmem>>) attributes {dimension_semantics = [#tpu.dimension_semantics<parallel>], iteration_bounds = array<i64: 8>, scalar_prefetch = 0 : i64, scratch_operands = 0 : i64, tpu.core_type = #tpu.core_type<tc>, window_params = [{transform_indices = @transform_0, window_bounds = array<i64: 1, 128, 96>}, {transform_indices = @transform_1, window_bounds = array<i64: 1, 128, 32>}, {transform_indices = @transform_2, window_bounds = array<i64: 1, 1, 128>}, {pipeline_mode = #tpu.pipeline_mode<synchronous>, transform_indices = @transform_3, window_bounds = array<i64: 32, 32>}, {pipeline_mode = #tpu.pipeline_mode<synchronous>, transform_indices = @transform_4, window_bounds = array<i64: 1, 32>}, {pipeline_mode = #tpu.pipeline_mode<synchronous>, transform_indices = @transform_5, window_bounds = array<i64: 1, 32>}, {pipeline_mode = #tpu.pipeline_mode<synchronous>, transform_indices = @transform_6, window_bounds = array<i64: 1, 32>}, {transform_indices = @transform_7, window_bounds = array<i64: 1, 128, 32>}]} {
    %c0 = arith.constant 0 : index
    %c0_0 = arith.constant 0 : index
    %c0_1 = arith.constant 0 : index
    %0 = vector.load %arg1[%c0, %c0_0, %c0_1] : memref<1x128x96xf32, #tpu.memory_space<vmem>>, vector<1x128x96xf32>
    %1 = vector.shape_cast %0 : vector<1x128x96xf32> to vector<128x96xf32>
    %c0_2 = arith.constant 0 : index
    %c0_3 = arith.constant 0 : index
    %c0_4 = arith.constant 0 : index
    %2 = vector.load %arg2[%c0_2, %c0_3, %c0_4] : memref<1x128x32xf32, #tpu.memory_space<vmem>>, vector<1x128x32xf32>
    %3 = vector.shape_cast %2 : vector<1x128x32xf32> to vector<128x32xf32>
    %c0_5 = arith.constant 0 : index
    %c0_6 = arith.constant 0 : index
    %c0_7 = arith.constant 0 : index
    %4 = vector.load %arg3[%c0_5, %c0_6, %c0_7] : memref<1x1x128xf32, #tpu.memory_space<vmem>>, vector<1x1x128xf32>
    %5 = vector.shape_cast %4 : vector<1x1x128xf32> to vector<1x128xf32>
    %6 = vector.extract_strided_slice %1 {offsets = [0, 0], sizes = [128, 8], strides = [1, 1]} : vector<128x96xf32> to vector<128x8xf32>
    %7 = vector.extract_strided_slice %1 {offsets = [0, 32], sizes = [128, 8], strides = [1, 1]} : vector<128x96xf32> to vector<128x8xf32>
    %8 = vector.extract_strided_slice %1 {offsets = [0, 64], sizes = [128, 8], strides = [1, 1]} : vector<128x96xf32> to vector<128x8xf32>
    %cst = arith.constant dense<0.000000e+00> : vector<128x128xf32>
    %9 = tpu.matmul %6, %7, %cst {dimension_numbers = #tpu.dot_dimension_numbers<[1], [1], [0], [0], [0, 0, 1, 0], [], []>} : vector<128x8xf32>, vector<128x8xf32>, vector<128x128xf32> -> vector<128x128xf32>
    %cst_8 = arith.constant 0.353553385 : f32
    %10 = vector.broadcast %cst_8 : f32 to vector<128x128xf32>
    %11 = arith.mulf %9, %10 : vector<128x128xf32>
    %cst_9 = arith.constant 0.000000e+00 : f32
    %12 = vector.broadcast %cst_9 : f32 to vector<1x128xf32>
    %13 = arith.cmpf ogt, %5, %12 : vector<1x128xf32>
    %cst_10 = arith.constant -1.000000e+30 : f32
    %14 = vector.shape_cast %13 : vector<1x128xi1> to vector<1x128xi1>
    %15 = vector.broadcast %14 : vector<1x128xi1> to vector<128x128xi1>
    %16 = vector.broadcast %cst_10 : f32 to vector<128x128xf32>
    %17 = arith.select %15, %11, %16 : vector<128x128xi1>, vector<128x128xf32>
    %cst_11 = arith.constant dense<0xFF800000> : vector<128xf32>
    %18 = vector.multi_reduction <maximumf>, %17, %cst_11 [1] : vector<128x128xf32> to vector<128xf32>
    %19 = vector.shape_cast %18 : vector<128xf32> to vector<128x1xf32>
    %20 = vector.broadcast %19 : vector<128x1xf32> to vector<128x128xf32>
    %21 = arith.subf %17, %20 : vector<128x128xf32>
    %22 = math.exp %21 : vector<128x128xf32>
    %cst_12 = arith.constant dense<0.000000e+00> : vector<128xf32>
    %23 = vector.multi_reduction <add>, %22, %cst_12 [1] : vector<128x128xf32> to vector<128xf32>
    %24 = vector.shape_cast %23 : vector<128xf32> to vector<128x1xf32>
    %25 = tpu.reciprocal %24 {approx = true} : vector<128x1xf32> -> vector<128x1xf32>
    %26 = vector.broadcast %25 : vector<128x1xf32> to vector<128x128xf32>
    %27 = arith.mulf %22, %26 : vector<128x128xf32>
    %cst_13 = arith.constant dense<0.000000e+00> : vector<128x8xf32>
    %28 = tpu.matmul %27, %8, %cst_13 {dimension_numbers = #tpu.dot_dimension_numbers<[1], [0], [0], [1], [0, 0, 1, 1], [], []>} : vector<128x128xf32>, vector<128x8xf32>, vector<128x8xf32> -> vector<128x8xf32>
    %29 = vector.extract_strided_slice %1 {offsets = [0, 8], sizes = [128, 8], strides = [1, 1]} : vector<128x96xf32> to vector<128x8xf32>
    %30 = vector.extract_strided_slice %1 {offsets = [0, 40], sizes = [128, 8], strides = [1, 1]} : vector<128x96xf32> to vector<128x8xf32>
    %31 = vector.extract_strided_slice %1 {offsets = [0, 72], sizes = [128, 8], strides = [1, 1]} : vector<128x96xf32> to vector<128x8xf32>
    %cst_14 = arith.constant dense<0.000000e+00> : vector<128x128xf32>
    %32 = tpu.matmul %29, %30, %cst_14 {dimension_numbers = #tpu.dot_dimension_numbers<[1], [1], [0], [0], [0, 0, 1, 0], [], []>} : vector<128x8xf32>, vector<128x8xf32>, vector<128x128xf32> -> vector<128x128xf32>
    %cst_15 = arith.constant 0.353553385 : f32
    %33 = vector.broadcast %cst_15 : f32 to vector<128x128xf32>
    %34 = arith.mulf %32, %33 : vector<128x128xf32>
    %cst_16 = arith.constant 0.000000e+00 : f32
    %35 = vector.broadcast %cst_16 : f32 to vector<1x128xf32>
    %36 = arith.cmpf ogt, %5, %35 : vector<1x128xf32>
    %cst_17 = arith.constant -1.000000e+30 : f32
    %37 = vector.shape_cast %36 : vector<1x128xi1> to vector<1x128xi1>
    %38 = vector.broadcast %37 : vector<1x128xi1> to vector<128x128xi1>
    %39 = vector.broadcast %cst_17 : f32 to vector<128x128xf32>
    %40 = arith.select %38, %34, %39 : vector<128x128xi1>, vector<128x128xf32>
    %cst_18 = arith.constant dense<0xFF800000> : vector<128xf32>
    %41 = vector.multi_reduction <maximumf>, %40, %cst_18 [1] : vector<128x128xf32> to vector<128xf32>
    %42 = vector.shape_cast %41 : vector<128xf32> to vector<128x1xf32>
    %43 = vector.broadcast %42 : vector<128x1xf32> to vector<128x128xf32>
    %44 = arith.subf %40, %43 : vector<128x128xf32>
    %45 = math.exp %44 : vector<128x128xf32>
    %cst_19 = arith.constant dense<0.000000e+00> : vector<128xf32>
    %46 = vector.multi_reduction <add>, %45, %cst_19 [1] : vector<128x128xf32> to vector<128xf32>
    %47 = vector.shape_cast %46 : vector<128xf32> to vector<128x1xf32>
    %48 = tpu.reciprocal %47 {approx = true} : vector<128x1xf32> -> vector<128x1xf32>
    %49 = vector.broadcast %48 : vector<128x1xf32> to vector<128x128xf32>
    %50 = arith.mulf %45, %49 : vector<128x128xf32>
    %cst_20 = arith.constant dense<0.000000e+00> : vector<128x8xf32>
    %51 = tpu.matmul %50, %31, %cst_20 {dimension_numbers = #tpu.dot_dimension_numbers<[1], [0], [0], [1], [0, 0, 1, 1], [], []>} : vector<128x128xf32>, vector<128x8xf32>, vector<128x8xf32> -> vector<128x8xf32>
    %52 = vector.extract_strided_slice %1 {offsets = [0, 16], sizes = [128, 8], strides = [1, 1]} : vector<128x96xf32> to vector<128x8xf32>
    %53 = vector.extract_strided_slice %1 {offsets = [0, 48], sizes = [128, 8], strides = [1, 1]} : vector<128x96xf32> to vector<128x8xf32>
    %54 = vector.extract_strided_slice %1 {offsets = [0, 80], sizes = [128, 8], strides = [1, 1]} : vector<128x96xf32> to vector<128x8xf32>
    %cst_21 = arith.constant dense<0.000000e+00> : vector<128x128xf32>
    %55 = tpu.matmul %52, %53, %cst_21 {dimension_numbers = #tpu.dot_dimension_numbers<[1], [1], [0], [0], [0, 0, 1, 0], [], []>} : vector<128x8xf32>, vector<128x8xf32>, vector<128x128xf32> -> vector<128x128xf32>
    %cst_22 = arith.constant 0.353553385 : f32
    %56 = vector.broadcast %cst_22 : f32 to vector<128x128xf32>
    %57 = arith.mulf %55, %56 : vector<128x128xf32>
    %cst_23 = arith.constant 0.000000e+00 : f32
    %58 = vector.broadcast %cst_23 : f32 to vector<1x128xf32>
    %59 = arith.cmpf ogt, %5, %58 : vector<1x128xf32>
    %cst_24 = arith.constant -1.000000e+30 : f32
    %60 = vector.shape_cast %59 : vector<1x128xi1> to vector<1x128xi1>
    %61 = vector.broadcast %60 : vector<1x128xi1> to vector<128x128xi1>
    %62 = vector.broadcast %cst_24 : f32 to vector<128x128xf32>
    %63 = arith.select %61, %57, %62 : vector<128x128xi1>, vector<128x128xf32>
    %cst_25 = arith.constant dense<0xFF800000> : vector<128xf32>
    %64 = vector.multi_reduction <maximumf>, %63, %cst_25 [1] : vector<128x128xf32> to vector<128xf32>
    %65 = vector.shape_cast %64 : vector<128xf32> to vector<128x1xf32>
    %66 = vector.broadcast %65 : vector<128x1xf32> to vector<128x128xf32>
    %67 = arith.subf %63, %66 : vector<128x128xf32>
    %68 = math.exp %67 : vector<128x128xf32>
    %cst_26 = arith.constant dense<0.000000e+00> : vector<128xf32>
    %69 = vector.multi_reduction <add>, %68, %cst_26 [1] : vector<128x128xf32> to vector<128xf32>
    %70 = vector.shape_cast %69 : vector<128xf32> to vector<128x1xf32>
    %71 = tpu.reciprocal %70 {approx = true} : vector<128x1xf32> -> vector<128x1xf32>
    %72 = vector.broadcast %71 : vector<128x1xf32> to vector<128x128xf32>
    %73 = arith.mulf %68, %72 : vector<128x128xf32>
    %cst_27 = arith.constant dense<0.000000e+00> : vector<128x8xf32>
    %74 = tpu.matmul %73, %54, %cst_27 {dimension_numbers = #tpu.dot_dimension_numbers<[1], [0], [0], [1], [0, 0, 1, 1], [], []>} : vector<128x128xf32>, vector<128x8xf32>, vector<128x8xf32> -> vector<128x8xf32>
    %75 = vector.extract_strided_slice %1 {offsets = [0, 24], sizes = [128, 8], strides = [1, 1]} : vector<128x96xf32> to vector<128x8xf32>
    %76 = vector.extract_strided_slice %1 {offsets = [0, 56], sizes = [128, 8], strides = [1, 1]} : vector<128x96xf32> to vector<128x8xf32>
    %77 = vector.extract_strided_slice %1 {offsets = [0, 88], sizes = [128, 8], strides = [1, 1]} : vector<128x96xf32> to vector<128x8xf32>
    %cst_28 = arith.constant dense<0.000000e+00> : vector<128x128xf32>
    %78 = tpu.matmul %75, %76, %cst_28 {dimension_numbers = #tpu.dot_dimension_numbers<[1], [1], [0], [0], [0, 0, 1, 0], [], []>} : vector<128x8xf32>, vector<128x8xf32>, vector<128x128xf32> -> vector<128x128xf32>
    %cst_29 = arith.constant 0.353553385 : f32
    %79 = vector.broadcast %cst_29 : f32 to vector<128x128xf32>
    %80 = arith.mulf %78, %79 : vector<128x128xf32>
    %cst_30 = arith.constant 0.000000e+00 : f32
    %81 = vector.broadcast %cst_30 : f32 to vector<1x128xf32>
    %82 = arith.cmpf ogt, %5, %81 : vector<1x128xf32>
    %cst_31 = arith.constant -1.000000e+30 : f32
    %83 = vector.shape_cast %82 : vector<1x128xi1> to vector<1x128xi1>
    %84 = vector.broadcast %83 : vector<1x128xi1> to vector<128x128xi1>
    %85 = vector.broadcast %cst_31 : f32 to vector<128x128xf32>
    %86 = arith.select %84, %80, %85 : vector<128x128xi1>, vector<128x128xf32>
    %cst_32 = arith.constant dense<0xFF800000> : vector<128xf32>
    %87 = vector.multi_reduction <maximumf>, %86, %cst_32 [1] : vector<128x128xf32> to vector<128xf32>
    %88 = vector.shape_cast %87 : vector<128xf32> to vector<128x1xf32>
    %89 = vector.broadcast %88 : vector<128x1xf32> to vector<128x128xf32>
    %90 = arith.subf %86, %89 : vector<128x128xf32>
    %91 = math.exp %90 : vector<128x128xf32>
    %cst_33 = arith.constant dense<0.000000e+00> : vector<128xf32>
    %92 = vector.multi_reduction <add>, %91, %cst_33 [1] : vector<128x128xf32> to vector<128xf32>
    %93 = vector.shape_cast %92 : vector<128xf32> to vector<128x1xf32>
    %94 = tpu.reciprocal %93 {approx = true} : vector<128x1xf32> -> vector<128x1xf32>
    %95 = vector.broadcast %94 : vector<128x1xf32> to vector<128x128xf32>
    %96 = arith.mulf %91, %95 : vector<128x128xf32>
    %cst_34 = arith.constant dense<0.000000e+00> : vector<128x8xf32>
    %97 = tpu.matmul %96, %77, %cst_34 {dimension_numbers = #tpu.dot_dimension_numbers<[1], [0], [0], [1], [0, 0, 1, 1], [], []>} : vector<128x128xf32>, vector<128x8xf32>, vector<128x8xf32> -> vector<128x8xf32>
    %98 = tpu.concatenate %28, %51, %74, %97 in 1 : vector<128x8xf32>, vector<128x8xf32>, vector<128x8xf32>, vector<128x8xf32> -> vector<128x32xf32>
    %c0_35 = arith.constant 0 : index
    %c0_36 = arith.constant 0 : index
    %99 = vector.load %arg4[%c0_35, %c0_36] : memref<32x32xf32, #tpu.memory_space<vmem>>, vector<32x32xf32>
    %cst_37 = arith.constant dense<0.000000e+00> : vector<128x32xf32>
    %100 = tpu.matmul %98, %99, %cst_37 {dimension_numbers = #tpu.dot_dimension_numbers<[1], [0], [0], [1], [0, 0, 1, 1], [], []>} : vector<128x32xf32>, vector<32x32xf32>, vector<128x32xf32> -> vector<128x32xf32>
    %c0_38 = arith.constant 0 : index
    %c0_39 = arith.constant 0 : index
    %101 = vector.load %arg5[%c0_38, %c0_39] : memref<1x32xf32, #tpu.memory_space<vmem>>, vector<1x32xf32>
    %102 = vector.broadcast %101 : vector<1x32xf32> to vector<128x32xf32>
    %103 = arith.addf %100, %102 : vector<128x32xf32>
    %104 = arith.addf %3, %103 : vector<128x32xf32>
    %cst_40 = arith.constant dense<0.000000e+00> : vector<128xf32>
    %105 = vector.multi_reduction <add>, %104, %cst_40 [1] : vector<128x32xf32> to vector<128xf32>
    %106 = vector.shape_cast %105 : vector<128xf32> to vector<128x1xf32>
    %cst_41 = arith.constant 3.200000e+01 : f32
    %107 = vector.broadcast %cst_41 : f32 to vector<128x1xf32>
    %108 = arith.divf %106, %107 : vector<128x1xf32>
    %109 = vector.broadcast %108 : vector<128x1xf32> to vector<128x32xf32>
    %110 = arith.subf %104, %109 : vector<128x32xf32>
    %111 = arith.mulf %110, %110 : vector<128x32xf32>
    %cst_42 = arith.constant dense<0.000000e+00> : vector<128xf32>
    %112 = vector.multi_reduction <add>, %111, %cst_42 [1] : vector<128x32xf32> to vector<128xf32>
    %113 = vector.shape_cast %112 : vector<128xf32> to vector<128x1xf32>
    %cst_43 = arith.constant 3.200000e+01 : f32
    %114 = vector.broadcast %cst_43 : f32 to vector<128x1xf32>
    %115 = arith.divf %113, %114 : vector<128x1xf32>
    %116 = vector.broadcast %108 : vector<128x1xf32> to vector<128x32xf32>
    %117 = arith.subf %104, %116 : vector<128x32xf32>
    %cst_44 = arith.constant 9.99999974E-6 : f32
    %118 = vector.broadcast %cst_44 : f32 to vector<128x1xf32>
    %119 = arith.addf %115, %118 : vector<128x1xf32>
    %120 = math.rsqrt %119 : vector<128x1xf32>
    %121 = vector.broadcast %120 : vector<128x1xf32> to vector<128x32xf32>
    %122 = arith.mulf %117, %121 : vector<128x32xf32>
    %c0_45 = arith.constant 0 : index
    %c0_46 = arith.constant 0 : index
    %123 = vector.load %arg6[%c0_45, %c0_46] : memref<1x32xf32, #tpu.memory_space<vmem>>, vector<1x32xf32>
    %124 = vector.broadcast %123 : vector<1x32xf32> to vector<128x32xf32>
    %125 = arith.mulf %122, %124 : vector<128x32xf32>
    %c0_47 = arith.constant 0 : index
    %c0_48 = arith.constant 0 : index
    %126 = vector.load %arg7[%c0_47, %c0_48] : memref<1x32xf32, #tpu.memory_space<vmem>>, vector<1x32xf32>
    %127 = vector.broadcast %126 : vector<1x32xf32> to vector<128x32xf32>
    %128 = arith.addf %125, %127 : vector<128x32xf32>
    %c0_49 = arith.constant 0 : index
    %c0_50 = arith.constant 0 : index
    %c0_51 = arith.constant 0 : index
    %129 = vector.load %arg8[%c0_49, %c0_50, %c0_51] : memref<1x128x32xf32, #tpu.memory_space<vmem>>, vector<1x128x32xf32>
    %130 = vector.shape_cast %129 : vector<1x128x32xf32> to vector<128x32xf32>
    %131 = vector.shape_cast %128 : vector<128x32xf32> to vector<1x128x32xf32>
    tpu.vector_store %arg8[%c0_49, %c0_50, %c0_51], %131 {strides = array<i32>} : memref<1x128x32xf32, #tpu.memory_space<vmem>>, vector<1x128x32xf32>,
    return
  }
  func.func @transform_0(%arg0: i32) -> (i32, i32, i32) {
    %c0_i32 = arith.constant 0 : i32
    %c0_i32_0 = arith.constant 0 : i32
    %c0_i32_1 = arith.constant 0 : i32
    return %arg0, %c0_i32, %c0_i32_0 : i32, i32, i32
  }
  func.func @transform_1(%arg0: i32) -> (i32, i32, i32) {
    %c0_i32 = arith.constant 0 : i32
    %c0_i32_0 = arith.constant 0 : i32
    %c0_i32_1 = arith.constant 0 : i32
    return %arg0, %c0_i32, %c0_i32_0 : i32, i32, i32
  }
  func.func @transform_2(%arg0: i32) -> (i32, i32, i32) {
    %c0_i32 = arith.constant 0 : i32
    %c0_i32_0 = arith.constant 0 : i32
    %c0_i32_1 = arith.constant 0 : i32
    return %arg0, %c0_i32, %c0_i32_0 : i32, i32, i32
  }
  func.func @transform_3(%arg0: i32) -> (i32, i32) {
    %c0_i32 = arith.constant 0 : i32
    %c0_i32_0 = arith.constant 0 : i32
    %c0_i32_1 = arith.constant 0 : i32
    return %c0_i32, %c0_i32_0 : i32, i32
  }
  func.func @transform_4(%arg0: i32) -> (i32, i32) {
    %c0_i32 = arith.constant 0 : i32
    %c0_i32_0 = arith.constant 0 : i32
    %c0_i32_1 = arith.constant 0 : i32
    return %c0_i32, %c0_i32_0 : i32, i32
  }
  func.func @transform_5(%arg0: i32) -> (i32, i32) {
    %c0_i32 = arith.constant 0 : i32
    %c0_i32_0 = arith.constant 0 : i32
    %c0_i32_1 = arith.constant 0 : i32
    return %c0_i32, %c0_i32_0 : i32, i32
  }
  func.func @transform_6(%arg0: i32) -> (i32, i32) {
    %c0_i32 = arith.constant 0 : i32
    %c0_i32_0 = arith.constant 0 : i32
    %c0_i32_1 = arith.constant 0 : i32
    return %c0_i32, %c0_i32_0 : i32, i32
  }
  func.func @transform_7(%arg0: i32) -> (i32, i32, i32) {
    %c0_i32 = arith.constant 0 : i32
    %c0_i32_0 = arith.constant 0 : i32
    %c0_i32_1 = arith.constant 0 : i32
    return %arg0, %c0_i32, %c0_i32_0 : i32, i32, i32
  }
}

module attributes {stable_mosaic.version = 11 : i64} {
  func.func @_ffn_ln_kernel(%arg0: i32, %arg1: memref<512x32xf32, #tpu.memory_space<vmem>>, %arg2: memref<32x128xf32, #tpu.memory_space<vmem>>, %arg3: memref<1x128xf32, #tpu.memory_space<vmem>>, %arg4: memref<128x32xf32, #tpu.memory_space<vmem>>, %arg5: memref<1x32xf32, #tpu.memory_space<vmem>>, %arg6: memref<1x32xf32, #tpu.memory_space<vmem>>, %arg7: memref<1x32xf32, #tpu.memory_space<vmem>>, %arg8: memref<512x32xf32, #tpu.memory_space<vmem>>) attributes {dimension_semantics = [#tpu.dimension_semantics<parallel>], iteration_bounds = array<i64: 2>, scalar_prefetch = 0 : i64, scratch_operands = 0 : i64, tpu.core_type = #tpu.core_type<tc>, window_params = [{transform_indices = @transform_0, window_bounds = array<i64: 512, 32>}, {pipeline_mode = #tpu.pipeline_mode<synchronous>, transform_indices = @transform_1, window_bounds = array<i64: 32, 128>}, {pipeline_mode = #tpu.pipeline_mode<synchronous>, transform_indices = @transform_2, window_bounds = array<i64: 1, 128>}, {pipeline_mode = #tpu.pipeline_mode<synchronous>, transform_indices = @transform_3, window_bounds = array<i64: 128, 32>}, {pipeline_mode = #tpu.pipeline_mode<synchronous>, transform_indices = @transform_4, window_bounds = array<i64: 1, 32>}, {pipeline_mode = #tpu.pipeline_mode<synchronous>, transform_indices = @transform_5, window_bounds = array<i64: 1, 32>}, {pipeline_mode = #tpu.pipeline_mode<synchronous>, transform_indices = @transform_6, window_bounds = array<i64: 1, 32>}, {transform_indices = @transform_7, window_bounds = array<i64: 512, 32>}]} {
    %c0 = arith.constant 0 : index
    %c0_0 = arith.constant 0 : index
    %0 = vector.load %arg1[%c0, %c0_0] : memref<512x32xf32, #tpu.memory_space<vmem>>, vector<512x32xf32>
    %c0_1 = arith.constant 0 : index
    %c0_2 = arith.constant 0 : index
    %1 = vector.load %arg2[%c0_1, %c0_2] : memref<32x128xf32, #tpu.memory_space<vmem>>, vector<32x128xf32>
    %cst = arith.constant dense<0.000000e+00> : vector<512x128xf32>
    %2 = tpu.matmul %0, %1, %cst {dimension_numbers = #tpu.dot_dimension_numbers<[1], [0], [0], [1], [0, 0, 1, 1], [], []>} : vector<512x32xf32>, vector<32x128xf32>, vector<512x128xf32> -> vector<512x128xf32>
    %c0_3 = arith.constant 0 : index
    %c0_4 = arith.constant 0 : index
    %3 = vector.load %arg3[%c0_3, %c0_4] : memref<1x128xf32, #tpu.memory_space<vmem>>, vector<1x128xf32>
    %4 = vector.broadcast %3 : vector<1x128xf32> to vector<512x128xf32>
    %5 = arith.addf %2, %4 : vector<512x128xf32>
    %cst_5 = arith.constant 0.000000e+00 : f32
    %6 = vector.broadcast %cst_5 : f32 to vector<512x128xf32>
    %7 = arith.maximumf %5, %6 : vector<512x128xf32>
    %c0_6 = arith.constant 0 : index
    %c0_7 = arith.constant 0 : index
    %8 = vector.load %arg4[%c0_6, %c0_7] : memref<128x32xf32, #tpu.memory_space<vmem>>, vector<128x32xf32>
    %cst_8 = arith.constant dense<0.000000e+00> : vector<512x32xf32>
    %9 = tpu.matmul %7, %8, %cst_8 {dimension_numbers = #tpu.dot_dimension_numbers<[1], [0], [0], [1], [0, 0, 1, 1], [], []>} : vector<512x128xf32>, vector<128x32xf32>, vector<512x32xf32> -> vector<512x32xf32>
    %c0_9 = arith.constant 0 : index
    %c0_10 = arith.constant 0 : index
    %10 = vector.load %arg5[%c0_9, %c0_10] : memref<1x32xf32, #tpu.memory_space<vmem>>, vector<1x32xf32>
    %11 = vector.broadcast %10 : vector<1x32xf32> to vector<512x32xf32>
    %12 = arith.addf %9, %11 : vector<512x32xf32>
    %13 = arith.addf %0, %12 : vector<512x32xf32>
    %cst_11 = arith.constant dense<0.000000e+00> : vector<512xf32>
    %14 = vector.multi_reduction <add>, %13, %cst_11 [1] : vector<512x32xf32> to vector<512xf32>
    %15 = vector.shape_cast %14 : vector<512xf32> to vector<512x1xf32>
    %cst_12 = arith.constant 3.200000e+01 : f32
    %16 = vector.broadcast %cst_12 : f32 to vector<512x1xf32>
    %17 = arith.divf %15, %16 : vector<512x1xf32>
    %18 = vector.broadcast %17 : vector<512x1xf32> to vector<512x32xf32>
    %19 = arith.subf %13, %18 : vector<512x32xf32>
    %20 = arith.mulf %19, %19 : vector<512x32xf32>
    %cst_13 = arith.constant dense<0.000000e+00> : vector<512xf32>
    %21 = vector.multi_reduction <add>, %20, %cst_13 [1] : vector<512x32xf32> to vector<512xf32>
    %22 = vector.shape_cast %21 : vector<512xf32> to vector<512x1xf32>
    %cst_14 = arith.constant 3.200000e+01 : f32
    %23 = vector.broadcast %cst_14 : f32 to vector<512x1xf32>
    %24 = arith.divf %22, %23 : vector<512x1xf32>
    %25 = vector.broadcast %17 : vector<512x1xf32> to vector<512x32xf32>
    %26 = arith.subf %13, %25 : vector<512x32xf32>
    %cst_15 = arith.constant 9.99999974E-6 : f32
    %27 = vector.broadcast %cst_15 : f32 to vector<512x1xf32>
    %28 = arith.addf %24, %27 : vector<512x1xf32>
    %29 = math.rsqrt %28 : vector<512x1xf32>
    %30 = vector.broadcast %29 : vector<512x1xf32> to vector<512x32xf32>
    %31 = arith.mulf %26, %30 : vector<512x32xf32>
    %c0_16 = arith.constant 0 : index
    %c0_17 = arith.constant 0 : index
    %32 = vector.load %arg6[%c0_16, %c0_17] : memref<1x32xf32, #tpu.memory_space<vmem>>, vector<1x32xf32>
    %33 = vector.broadcast %32 : vector<1x32xf32> to vector<512x32xf32>
    %34 = arith.mulf %31, %33 : vector<512x32xf32>
    %c0_18 = arith.constant 0 : index
    %c0_19 = arith.constant 0 : index
    %35 = vector.load %arg7[%c0_18, %c0_19] : memref<1x32xf32, #tpu.memory_space<vmem>>, vector<1x32xf32>
    %36 = vector.broadcast %35 : vector<1x32xf32> to vector<512x32xf32>
    %37 = arith.addf %34, %36 : vector<512x32xf32>
    %c0_20 = arith.constant 0 : index
    %c0_21 = arith.constant 0 : index
    %38 = vector.load %arg8[%c0_20, %c0_21] : memref<512x32xf32, #tpu.memory_space<vmem>>, vector<512x32xf32>
    tpu.vector_store %arg8[%c0_20, %c0_21], %37 {strides = array<i32>} : memref<512x32xf32, #tpu.memory_space<vmem>>, vector<512x32xf32>,
    return
  }
  func.func @transform_0(%arg0: i32) -> (i32, i32) {
    %c0_i32 = arith.constant 0 : i32
    %c0_i32_0 = arith.constant 0 : i32
    return %arg0, %c0_i32 : i32, i32
  }
  func.func @transform_1(%arg0: i32) -> (i32, i32) {
    %c0_i32 = arith.constant 0 : i32
    %c0_i32_0 = arith.constant 0 : i32
    %c0_i32_1 = arith.constant 0 : i32
    return %c0_i32, %c0_i32_0 : i32, i32
  }
  func.func @transform_2(%arg0: i32) -> (i32, i32) {
    %c0_i32 = arith.constant 0 : i32
    %c0_i32_0 = arith.constant 0 : i32
    %c0_i32_1 = arith.constant 0 : i32
    return %c0_i32, %c0_i32_0 : i32, i32
  }
  func.func @transform_3(%arg0: i32) -> (i32, i32) {
    %c0_i32 = arith.constant 0 : i32
    %c0_i32_0 = arith.constant 0 : i32
    %c0_i32_1 = arith.constant 0 : i32
    return %c0_i32, %c0_i32_0 : i32, i32
  }
  func.func @transform_4(%arg0: i32) -> (i32, i32) {
    %c0_i32 = arith.constant 0 : i32
    %c0_i32_0 = arith.constant 0 : i32
    %c0_i32_1 = arith.constant 0 : i32
    return %c0_i32, %c0_i32_0 : i32, i32
  }
  func.func @transform_5(%arg0: i32) -> (i32, i32) {
    %c0_i32 = arith.constant 0 : i32
    %c0_i32_0 = arith.constant 0 : i32
    %c0_i32_1 = arith.constant 0 : i32
    return %c0_i32, %c0_i32_0 : i32, i32
  }
  func.func @transform_6(%arg0: i32) -> (i32, i32) {
    %c0_i32 = arith.constant 0 : i32
    %c0_i32_0 = arith.constant 0 : i32
    %c0_i32_1 = arith.constant 0 : i32
    return %c0_i32, %c0_i32_0 : i32, i32
  }
  func.func @transform_7(%arg0: i32) -> (i32, i32) {
    %c0_i32 = arith.constant 0 : i32
    %c0_i32_0 = arith.constant 0 : i32
    return %arg0, %c0_i32 : i32, i32
  }
}

module attributes {stable_mosaic.version = 11 : i64} {
  func.func @_pool_decoder_kernel(%arg0: memref<8x128x32xf32, #tpu.memory_space<vmem>>, %arg1: memref<8x128xf32, #tpu.memory_space<vmem>>, %arg2: memref<32x32xf32, #tpu.memory_space<vmem>>, %arg3: memref<1x32xf32, #tpu.memory_space<vmem>>, %arg4: memref<32x3xf32, #tpu.memory_space<vmem>>, %arg5: memref<1x3xf32, #tpu.memory_space<vmem>>, %arg6: memref<8x3xf32, #tpu.memory_space<vmem>>) attributes {dimension_semantics = [], scalar_prefetch = 0 : i64, scratch_operands = 0 : i64, tpu.core_type = #tpu.core_type<tc>} {
    %c0 = arith.constant 0 : index
    %c0_0 = arith.constant 0 : index
    %c0_1 = arith.constant 0 : index
    %0 = vector.load %arg0[%c0, %c0_0, %c0_1] : memref<8x128x32xf32, #tpu.memory_space<vmem>>, vector<8x128x32xf32>
    %c0_2 = arith.constant 0 : index
    %c0_3 = arith.constant 0 : index
    %1 = vector.load %arg1[%c0_2, %c0_3] : memref<8x128xf32, #tpu.memory_space<vmem>>, vector<8x128xf32>
    %2 = vector.shape_cast %1 : vector<8x128xf32> to vector<8x128x1xf32>
    %3 = vector.broadcast %2 : vector<8x128x1xf32> to vector<8x128x32xf32>
    %4 = arith.mulf %0, %3 : vector<8x128x32xf32>
    %cst = arith.constant dense<0.000000e+00> : vector<8x32xf32>
    %5 = vector.multi_reduction <add>, %4, %cst [1] : vector<8x128x32xf32> to vector<8x32xf32>
    %cst_4 = arith.constant dense<0.000000e+00> : vector<8xf32>
    %6 = vector.multi_reduction <add>, %1, %cst_4 [1] : vector<8x128xf32> to vector<8xf32>
    %7 = vector.shape_cast %6 : vector<8xf32> to vector<8x1xf32>
    %cst_5 = arith.constant 9.99999997E-7 : f32
    %8 = vector.broadcast %cst_5 : f32 to vector<8x1xf32>
    %9 = arith.maximumf %7, %8 : vector<8x1xf32>
    %10 = tpu.reciprocal %9 {approx = true} : vector<8x1xf32> -> vector<8x1xf32>
    %11 = vector.broadcast %10 : vector<8x1xf32> to vector<8x32xf32>
    %12 = arith.mulf %5, %11 : vector<8x32xf32>
    %c0_6 = arith.constant 0 : index
    %c0_7 = arith.constant 0 : index
    %13 = vector.load %arg2[%c0_6, %c0_7] : memref<32x32xf32, #tpu.memory_space<vmem>>, vector<32x32xf32>
    %cst_8 = arith.constant dense<0.000000e+00> : vector<8x32xf32>
    %14 = tpu.matmul %12, %13, %cst_8 {dimension_numbers = #tpu.dot_dimension_numbers<[1], [0], [0], [1], [0, 0, 1, 1], [], []>} : vector<8x32xf32>, vector<32x32xf32>, vector<8x32xf32> -> vector<8x32xf32>
    %c0_9 = arith.constant 0 : index
    %c0_10 = arith.constant 0 : index
    %15 = vector.load %arg3[%c0_9, %c0_10] : memref<1x32xf32, #tpu.memory_space<vmem>>, vector<1x32xf32>
    %16 = vector.broadcast %15 : vector<1x32xf32> to vector<8x32xf32>
    %17 = arith.addf %14, %16 : vector<8x32xf32>
    %cst_11 = arith.constant 0.000000e+00 : f32
    %18 = vector.broadcast %cst_11 : f32 to vector<8x32xf32>
    %19 = arith.maximumf %17, %18 : vector<8x32xf32>
    %c0_12 = arith.constant 0 : index
    %c0_13 = arith.constant 0 : index
    %20 = vector.load %arg4[%c0_12, %c0_13] : memref<32x3xf32, #tpu.memory_space<vmem>>, vector<32x3xf32>
    %cst_14 = arith.constant dense<0.000000e+00> : vector<8x3xf32>
    %21 = tpu.matmul %19, %20, %cst_14 {dimension_numbers = #tpu.dot_dimension_numbers<[1], [0], [0], [1], [0, 0, 1, 1], [], []>} : vector<8x32xf32>, vector<32x3xf32>, vector<8x3xf32> -> vector<8x3xf32>
    %c0_15 = arith.constant 0 : index
    %c0_16 = arith.constant 0 : index
    %22 = vector.load %arg5[%c0_15, %c0_16] : memref<1x3xf32, #tpu.memory_space<vmem>>, vector<1x3xf32>
    %23 = vector.broadcast %22 : vector<1x3xf32> to vector<8x3xf32>
    %24 = arith.addf %21, %23 : vector<8x3xf32>
    %c0_17 = arith.constant 0 : index
    %c0_18 = arith.constant 0 : index
    %25 = vector.load %arg6[%c0_17, %c0_18] : memref<8x3xf32, #tpu.memory_space<vmem>>, vector<8x3xf32>
    tpu.vector_store %arg6[%c0_17, %c0_18], %24 {strides = array<i32>} : memref<8x3xf32, #tpu.memory_space<vmem>>, vector<8x3xf32>,
    return
  }
}

</mosaic_0001>

<llo_original>
// kernel: reg_flat_niid_forward.9
$region0: #{reg_flat_niid_forward.9}
  #allocation0 [shape = 'u32[]', space=smem, size = 0x4, offset = 0x4, fixed_abs, tag = 'smem constant byte address 0x4 - core index']
  #allocation1 [shape = 'u32[72,128]{1,0:T(1,128)}', space=vmem, size = 0x9000, scoped, tag = 'internal scratch']
  %s0 = inlined_call_operand.vmem [shape: f32[1024,32], index: 0, kind: input, shape index: {}]
  %s1 = inlined_call_operand.vmem [shape: f32[32,96], index: 1, kind: input, shape index: {}]
  %s2 = inlined_call_operand.vmem [shape: f32[1,96], index: 2, kind: input, shape index: {}]
  %s3 = inlined_call_operand.vmem [shape: f32[1024,96], index: 3, kind: output, shape index: {}]
  %s4 = sld [smem:[#allocation0]]
  $region45: #{reg_flat_niid_forward.9} parent=0
    _
  %s6 = ssub.s32 1, %s4
  %s7 = scalar_select 0, %s6, %s4
  loop: start=0, step=1, limit=4
  $region2: #{reg_flat_niid_forward.9} parent=0 // loop_pre_header
    _
  $region3: #{reg_flat_niid_forward.9} parent=0 // loop_header
    %s9 = sphi 0, %s13
    %p10 = scmp.ge.s32.totalorder %s9, 4
    %s19 = sphi 0, %s21
    %s22 = sphi 0, %s19
    %s23 = sphi 0, %s22
    %s39 = sphi 0, %s23
    %s43 = sphi 0, %s43
    %s45 = sphi 0, %s43
    %s46 = sphi 0, %s45
    %s60 = sphi 0, %s46
    %s64 = sphi 0, %s64
    %s66 = sphi 0, %s64
    %s67 = sphi 0, %s66
    %s81 = sphi 0, %s67
    %s87 = sphi 0, %s89
    %s90 = sphi 0, %s87
    %s91 = sphi 0, %s90
    %s107 = sphi 0, %s91
  $region4: #{reg_flat_niid_forward.9} parent=0 // loop_header_branch
    %12 = sbr.rel (%p10) target = $region8
  $region5: #{reg_flat_niid_forward.9} parent=0 // loop_body
    %s14 = ssub.s32 %s9, 1
    %s15 = ssub.s32 %s9, 2
    %s16 = sadd.s32 %s9, 1
    %s17 = ssub.s32 %s9, %s16
    %p18 = scmp.eq.s32.totalorder %s17, 0
    %s20 = sadd.s32 %s19, 1
    %s21 = scalar_select %p18, %s19, %s20
    %p24 = pneg %p18
    %p25 = scmp.eq.s32.totalorder %s9, 1
    %p26 = por %p24, %p25
    %p27 = scmp.ne.s32.totalorder %s19, %s22
    %p28 = scmp.eq.s32.totalorder %s9, 0
    %p29 = por %p27, %p28
    %p30 = scmp.ne.s32.totalorder %s19, %s22
    %p31 = scmp.eq.s32.totalorder %s14, 1
    %p32 = por %p30, %p31
    %p33 = scmp.ne.s32.totalorder %s22, %s23
    %p34 = scmp.eq.s32.totalorder %s14, 0
    %p35 = por %p33, %p34
    %p36 = scmp.ne.s32.totalorder %s22, %s23
    %p37 = scmp.eq.s32.totalorder %s15, 1
    %p38 = por %p36, %p37
    %p40 = scmp.ne.s32.totalorder %s23, %s39
    %p41 = scmp.eq.s32.totalorder %s15, 0
    %p42 = por %p40, %p41
    %s44 = sadd.s32 %s43, 1
    %p47 = scmp.eq.s32.totalorder %s9, 1
    %p48 = scmp.ne.s32.totalorder %s43, %s45
    %p49 = scmp.eq.s32.totalorder %s9, 0
    %p50 = por %p48, %p49
    %p51 = scmp.ne.s32.totalorder %s43, %s45
    %p52 = scmp.eq.s32.totalorder %s14, 1
    %p53 = por %p51, %p52
    %p54 = scmp.ne.s32.totalorder %s45, %s46
    %p55 = scmp.eq.s32.totalorder %s14, 0
    %p56 = por %p54, %p55
    %p57 = scmp.ne.s32.totalorder %s45, %s46
    %p58 = scmp.eq.s32.totalorder %s15, 1
    %p59 = por %p57, %p58
    %p61 = scmp.ne.s32.totalorder %s46, %s60
    %p62 = scmp.eq.s32.totalorder %s15, 0
    %p63 = por %p61, %p62
    %s65 = sadd.s32 %s64, 1
    %p68 = scmp.eq.s32.totalorder %s9, 1
    %p69 = scmp.ne.s32.totalorder %s64, %s66
    %p70 = scmp.eq.s32.totalorder %s9, 0
    %p71 = por %p69, %p70
    %p72 = scmp.ne.s32.totalorder %s64, %s66
    %p73 = scmp.eq.s32.totalorder %s14, 1
    %p74 = por %p72, %p73
    %p75 = scmp.ne.s32.totalorder %s66, %s67
    %p76 = scmp.eq.s32.totalorder %s14, 0
    %p77 = por %p75, %p76
    %p78 = scmp.ne.s32.totalorder %s66, %s67
    %p79 = scmp.eq.s32.totalorder %s15, 1
    %p80 = por %p78, %p79
    %p82 = scmp.ne.s32.totalorder %s67, %s81
    %p83 = scmp.eq.s32.totalorder %s15, 0
    %p84 = por %p82, %p83
    %s85 = ssub.s32 %s9, %s16
    %p86 = scmp.eq.s32.totalorder %s85, 0
    %s88 = sadd.s32 %s87, 1
    %s89 = scalar_select %p86, %s87, %s88
    %p92 = pneg %p86
    %p93 = scmp.eq.s32.totalorder %s9, 1
    %p94 = por %p92, %p93
    %p95 = scmp.ne.s32.totalorder %s87, %s90
    %p96 = scmp.eq.s32.totalorder %s9, 0
    %p97 = por %p95, %p96
    %p98 = scmp.ne.s32.totalorder %s87, %s90
    %p99 = scmp.eq.s32.totalorder %s14, 1
    %p100 = por %p98, %p99
    %p101 = scmp.ne.s32.totalorder %s90, %s91
    %p102 = scmp.eq.s32.totalorder %s14, 0
    %p103 = por %p101, %p102
    %p104 = scmp.ne.s32.totalorder %s90, %s91
    %p105 = scmp.eq.s32.totalorder %s15, 1
    %p106 = por %p104, %p105
    %p108 = scmp.ne.s32.totalorder %s91, %s107
    %p109 = scmp.eq.s32.totalorder %s15, 0
    %p110 = por %p108, %p109
    %p111 = scmp.le.s32.totalorder 1, %s9
    %p112 = scmp.lt.s32.totalorder %s9, 3
    %p113 = pnand %p111, %p112
    %p114 = pneg %p113
    // Predicated region
    $region9: #{reg_flat_niid_forward.9} parent=5 // pred_check
      _
    $region10: #{reg_flat_niid_forward.9} parent=5 // pred_check_branch
      %116 = sbr.rel (%p113) target = $region12
    $region11: #{reg_flat_niid_forward.9} parent=5 // pred_region
      %s117 = ssub.s32 %s9, 1
      // Predicated region
      $region13: #{reg_flat_niid_forward.9} parent=11 // pred_check
        %p118 = pneg %p56
      $region14: #{reg_flat_niid_forward.9} parent=11 // pred_check_branch
        %120 = sbr.rel (%p118) target = $region16
      $region15: #{reg_flat_niid_forward.9} parent=11 // pred_region
        _
      $region16: #{reg_flat_niid_forward.9} parent=11 // pred_fallthru
        _
      // Predicated region
      $region17: #{reg_flat_niid_forward.9} parent=11 // pred_check
        %p121 = pneg %p77
      $region18: #{reg_flat_niid_forward.9} parent=11 // pred_check_branch
        %123 = sbr.rel (%p121) target = $region20
      $region19: #{reg_flat_niid_forward.9} parent=11 // pred_region
        _
      $region20: #{reg_flat_niid_forward.9} parent=11 // pred_fallthru
        _
    $region12: #{reg_flat_niid_forward.9} parent=5 // pred_fallthru
      _
    %p124 = scmp.lt.s32.totalorder %s9, 2
    // Predicated region
    $region21: #{reg_flat_niid_forward.9} parent=5 // pred_check
      %p125 = pneg %p124
    $region22: #{reg_flat_niid_forward.9} parent=5 // pred_check_branch
      %127 = sbr.rel (%p125) target = $region24
    $region23: #{reg_flat_niid_forward.9} parent=5 // pred_region
      // Predicated region
      $region25: #{reg_flat_niid_forward.9} parent=23 // pred_check
        %p128 = pneg %p29
      $region26: #{reg_flat_niid_forward.9} parent=23 // pred_check_branch
        %130 = sbr.rel (%p128) target = $region28
      $region27: #{reg_flat_niid_forward.9} parent=23 // pred_region
        %s131 = smul.u32 64, %s9
        %p132 = scmp.lt.s32.totalorder %s131, 127
        %s133 = scalar_select %p132, %s131, 127
        %s134 = smul.addr %s133, 8
        %s135 = scalar_lea.vmem %s0, %s134
        %s136 = smul.u32 64, %s9
      $region28: #{reg_flat_niid_forward.9} parent=23 // pred_fallthru
        _
    $region24: #{reg_flat_niid_forward.9} parent=5 // pred_fallthru
      _
    %p137 = scmp.le.s32.totalorder 1, %s9
    %p138 = scmp.lt.s32.totalorder %s9, 3
    %p139 = pnand %p137, %p138
    %p140 = pneg %p139
    // Predicated region
    $region29: #{reg_flat_niid_forward.9} parent=5 // pred_check
      _
    $region30: #{reg_flat_niid_forward.9} parent=5 // pred_check_branch
      %142 = sbr.rel (%p139) target = $region32
    $region31: #{reg_flat_niid_forward.9} parent=5 // pred_region
      %s143 = ssub.s32 %s9, 1
      %s144 = smul.u32 64, %s14
      %p145 = scmp.lt.s32.totalorder %s144, 127
      %s146 = scalar_select %p145, %s144, 127
      %s147 = smul.addr %s146, 8
      %s148 = scalar_lea.vmem %s0, %s147
      %p149 = pneg %p35
      %p150 = pneg %p32
      %p151 = pneg %p56
      %p152 = pneg %p53
      %p153 = pneg %p77
      %p154 = pneg %p74
      %p155 = pneg %p103
      %p156 = pneg %p100
      %s157 = smul.u32 64, %s14
      %p158 = scmp.lt.s32.totalorder %s157, 127
      %s159 = scalar_select %p158, %s157, 127
      %s160 = smul.addr %s159, 8
      %s161 = scalar_lea.vmem %s3, %s160
      %s162 = smul.u32 64, %s14
      %p163 = scmp.lt.s32.totalorder %s162, 127
      %s164 = scalar_select %p163, %s162, 127
      %s165 = smul.addr %s164, 8
      %s166 = scalar_lea.vmem %s0, %s165
      %s167 = smul.u32 64, %s14
      %s168 = smul.u32 64, %s14
      %p169 = scmp.lt.s32.totalorder %s168, 127
      %s170 = scalar_select %p169, %s168, 127
      %s171 = smul.addr %s170, 8
      %s172 = scalar_lea.vmem %s3, %s171
      %s173 = smul.u32 64, %s14
      %v174 = vld [vmem:[%s166] sm:$0xff]
      %v175 = vld [vmem:[%s166 + $0x8] sm:$0xff]
      %v176 = vld [vmem:[%s166 + $0x10] sm:$0xff]
      %v177 = vld [vmem:[%s166 + $0x18] sm:$0xff]
      %v178 = vld [vmem:[%s166 + $0x20] sm:$0xff]
      %v179 = vld [vmem:[%s166 + $0x28] sm:$0xff]
      %v180 = vld [vmem:[%s166 + $0x30] sm:$0xff]
      %v181 = vld [vmem:[%s166 + $0x38] sm:$0xff]
      %v182 = vld [vmem:[%s166 + $0x40] sm:$0xff]
      %v183 = vld [vmem:[%s166 + $0x48] sm:$0xff]
      %v184 = vld [vmem:[%s166 + $0x50] sm:$0xff]
      %v185 = vld [vmem:[%s166 + $0x58] sm:$0xff]
      %v186 = vld [vmem:[%s166 + $0x60] sm:$0xff]
      %v187 = vld [vmem:[%s166 + $0x68] sm:$0xff]
      %v188 = vld [vmem:[%s166 + $0x70] sm:$0xff]
      %v189 = vld [vmem:[%s166 + $0x78] sm:$0xff]
      %v190 = vld [vmem:[%s166 + $0x80] sm:$0xff]
      %v191 = vld [vmem:[%s166 + $0x88] sm:$0xff]
      %v192 = vld [vmem:[%s166 + $0x90] sm:$0xff]
      %v193 = vld [vmem:[%s166 + $0x98] sm:$0xff]
      %v194 = vld [vmem:[%s166 + $0xa0] sm:$0xff]
      %v195 = vld [vmem:[%s166 + $0xa8] sm:$0xff]
      %v196 = vld [vmem:[%s166 + $0xb0] sm:$0xff]
      %v197 = vld [vmem:[%s166 + $0xb8] sm:$0xff]
      %v198 = vld [vmem:[%s166 + $0xc0] sm:$0xff]
      %v199 = vld [vmem:[%s166 + $0xc8] sm:$0xff]
      %v200 = vld [vmem:[%s166 + $0xd0] sm:$0xff]
      %v201 = vld [vmem:[%s166 + $0xd8] sm:$0xff]
      %v202 = vld [vmem:[%s166 + $0xe0] sm:$0xff]
      %v203 = vld [vmem:[%s166 + $0xe8] sm:$0xff]
      %v204 = vld [vmem:[%s166 + $0xf0] sm:$0xff]
      %v205 = vld [vmem:[%s166 + $0xf8] sm:$0xff]
      %v206 = vld [vmem:[%s166 + $0x100] sm:$0xff]
      %v207 = vld [vmem:[%s166 + $0x108] sm:$0xff]
      %v208 = vld [vmem:[%s166 + $0x110] sm:$0xff]
      %v209 = vld [vmem:[%s166 + $0x118] sm:$0xff]
      %v210 = vld [vmem:[%s166 + $0x120] sm:$0xff]
      %v211 = vld [vmem:[%s166 + $0x128] sm:$0xff]
      %v212 = vld [vmem:[%s166 + $0x130] sm:$0xff]
      %v213 = vld [vmem:[%s166 + $0x138] sm:$0xff]
      %v214 = vld [vmem:[%s166 + $0x140] sm:$0xff]
      %v215 = vld [vmem:[%s166 + $0x148] sm:$0xff]
      %v216 = vld [vmem:[%s166 + $0x150] sm:$0xff]
      %v217 = vld [vmem:[%s166 + $0x158] sm:$0xff]
      %v218 = vld [vmem:[%s166 + $0x160] sm:$0xff]
      %v219 = vld [vmem:[%s166 + $0x168] sm:$0xff]
      %v220 = vld [vmem:[%s166 + $0x170] sm:$0xff]
      %v221 = vld [vmem:[%s166 + $0x178] sm:$0xff]
      %v222 = vld [vmem:[%s166 + $0x180] sm:$0xff]
      %v223 = vld [vmem:[%s166 + $0x188] sm:$0xff]
      %v224 = vld [vmem:[%s166 + $0x190] sm:$0xff]
      %v225 = vld [vmem:[%s166 + $0x198] sm:$0xff]
      %v226 = vld [vmem:[%s166 + $0x1a0] sm:$0xff]
      %v227 = vld [vmem:[%s166 + $0x1a8] sm:$0xff]
      %v228 = vld [vmem:[%s166 + $0x1b0] sm:$0xff]
      %v229 = vld [vmem:[%s166 + $0x1b8] sm:$0xff]
      %v230 = vld [vmem:[%s166 + $0x1c0] sm:$0xff]
      %v231 = vld [vmem:[%s166 + $0x1c8] sm:$0xff]
      %v232 = vld [vmem:[%s166 + $0x1d0] sm:$0xff]
      %v233 = vld [vmem:[%s166 + $0x1d8] sm:$0xff]
      %v234 = vld [vmem:[%s166 + $0x1e0] sm:$0xff]
      %v235 = vld [vmem:[%s166 + $0x1e8] sm:$0xff]
      %v236 = vld [vmem:[%s166 + $0x1f0] sm:$0xff]
      %v237 = vld [vmem:[%s166 + $0x1f8] sm:$0xff]
      %v238 = vld [vmem:[%s1] sm:$0xff]
      %v239 = vld [vmem:[%s1 + $0x8] sm:$0xff]
      %v240 = vld [vmem:[%s1 + $0x10] sm:$0xff]
      %v241 = vld [vmem:[%s1 + $0x18] sm:$0xff]
      %v242 = vld [vmem:[%s2] sm:$0x1]
      %v244 = vperm.slane %v242, 0
      %vm246 = vcmask 261120
      %v248 = vsel %vm246, %v174, 0
      %v251 = vsel %vm246, %v175, 0
      %v254 = vsel %vm246, %v176, 0
      %v257 = vsel %vm246, %v177, 0
      %v260 = vsel %vm246, %v178, 0
      %v263 = vsel %vm246, %v179, 0
      %v266 = vsel %vm246, %v180, 0
      %v269 = vsel %vm246, %v181, 0
      %v272 = vsel %vm246, %v182, 0
      %v275 = vsel %vm246, %v183, 0
      %v278 = vsel %vm246, %v184, 0
      %v281 = vsel %vm246, %v185, 0
      %v284 = vsel %vm246, %v186, 0
      %v287 = vsel %vm246, %v187, 0
      %v290 = vsel %vm246, %v188, 0
      %v293 = vsel %vm246, %v189, 0
      %v296 = vsel %vm246, %v190, 0
      %v299 = vsel %vm246, %v191, 0
      %v302 = vsel %vm246, %v192, 0
      %v305 = vsel %vm246, %v193, 0
      %v308 = vsel %vm246, %v194, 0
      %v311 = vsel %vm246, %v195, 0
      %v314 = vsel %vm246, %v196, 0
      %v317 = vsel %vm246, %v197, 0
      %v320 = vsel %vm246, %v198, 0
      %v323 = vsel %vm246, %v199, 0
      %v326 = vsel %vm246, %v200, 0
      %v329 = vsel %vm246, %v201, 0
      %v332 = vsel %vm246, %v202, 0
      %v335 = vsel %vm246, %v203, 0
      %v338 = vsel %vm246, %v204, 0
      %v341 = vsel %vm246, %v205, 0
      %v344 = vsel %vm246, %v206, 0
      %v347 = vsel %vm246, %v207, 0
      %v350 = vsel %vm246, %v208, 0
      %v353 = vsel %vm246, %v209, 0
      %v356 = vsel %vm246, %v210, 0
      %v359 = vsel %vm246, %v211, 0
      %v362 = vsel %vm246, %v212, 0
      %v365 = vsel %vm246, %v213, 0
      %v368 = vsel %vm246, %v214, 0
      %v371 = vsel %vm246, %v215, 0
      %v374 = vsel %vm246, %v216, 0
      %v377 = vsel %vm246, %v217, 0
      %v380 = vsel %vm246, %v218, 0
      %v383 = vsel %vm246, %v219, 0
      %v386 = vsel %vm246, %v220, 0
      %v389 = vsel %vm246, %v221, 0
      %v392 = vsel %vm246, %v222, 0
      %v395 = vsel %vm246, %v223, 0
      %v398 = vsel %vm246, %v224, 0
      %v401 = vsel %vm246, %v225, 0
      %v404 = vsel %vm246, %v226, 0
      %v407 = vsel %vm246, %v227, 0
      %v410 = vsel %vm246, %v228, 0
      %v413 = vsel %vm246, %v229, 0
      %v416 = vsel %vm246, %v230, 0
      %v419 = vsel %vm246, %v231, 0
      %v422 = vsel %vm246, %v232, 0
      %v425 = vsel %vm246, %v233, 0
      %v428 = vsel %vm246, %v234, 0
      %v431 = vsel %vm246, %v235, 0
      %v434 = vsel %vm246, %v236, 0
      %v437 = vsel %vm246, %v237, 0
      %439 = vmatpush.msra.mxu0 0.0
      %440 = vmatpush.msra.mxu0 0.0
      %441 = vmatpush.msra.mxu0 0.0
      %442 = vmatpush.msra.mxu0 0.0
      %443 = vmatpush.msra.mxu0 0.0
      %444 = vmatpush.msra.mxu0 0.0
      %445 = vmatpush.msra.mxu0 0.0
      %446 = vmatpush.msra.mxu0 0.0
      %447 = vmatpush.msra.mxu0 0.0
      %448 = vmatpush.msra.mxu0 0.0
      %449 = vmatpush.msra.mxu0 0.0
      %450 = vmatpush.msra.mxu0 0.0
      %451 = vmatpush.msra.mxu0 %v241
      %452 = vmatpush.msra.mxu0 %v240
      %453 = vmatpush.msra.mxu0 %v239
      %454 = vmatpush.msra.mxu0 %v238
      %455 = vmatmul.f32.gmra.mxu0 %v248
      %v456 = vpop.f32.mrf.mxu0
      %v457 = vadd.f32 %v244, %v456
      %458 = vmatmul.f32.gmra.mxu0 %v251
      %v459 = vpop.f32.mrf.mxu0
      %v460 = vadd.f32 %v244, %v459
      %461 = vmatmul.f32.gmra.mxu0 %v254
      %v462 = vpop.f32.mrf.mxu0
      %v463 = vadd.f32 %v244, %v462
      %464 = vmatmul.f32.gmra.mxu0 %v257
      %v465 = vpop.f32.mrf.mxu0
      %v466 = vadd.f32 %v244, %v465
      %467 = vmatmul.f32.gmra.mxu0 %v260
      %v468 = vpop.f32.mrf.mxu0
      %v469 = vadd.f32 %v244, %v468
      %470 = vmatmul.f32.gmra.mxu0 %v263
      %v471 = vpop.f32.mrf.mxu0
      %v472 = vadd.f32 %v244, %v471
      %473 = vmatmul.f32.gmra.mxu0 %v266
      %v474 = vpop.f32.mrf.mxu0
      %v475 = vadd.f32 %v244, %v474
      %476 = vmatmul.f32.gmra.mxu0 %v269
      %v477 = vpop.f32.mrf.mxu0
      %v478 = vadd.f32 %v244, %v477
      %479 = vmatmul.f32.gmra.mxu0 %v272
      %v480 = vpop.f32.mrf.mxu0
      %v481 = vadd.f32 %v244, %v480
      %482 = vmatmul.f32.gmra.mxu0 %v275
      %v483 = vpop.f32.mrf.mxu0
      %v484 = vadd.f32 %v244, %v483
      %485 = vmatmul.f32.gmra.mxu0 %v278
      %v486 = vpop.f32.mrf.mxu0
      %v487 = vadd.f32 %v244, %v486
      %488 = vmatmul.f32.gmra.mxu0 %v281
      %v489 = vpop.f32.mrf.mxu0
      %v490 = vadd.f32 %v244, %v489
      %491 = vmatmul.f32.gmra.mxu0 %v284
      %v492 = vpop.f32.mrf.mxu0
      %v493 = vadd.f32 %v244, %v492
      %494 = vmatmul.f32.gmra.mxu0 %v287
      %v495 = vpop.f32.mrf.mxu0
      %v496 = vadd.f32 %v244, %v495
      %497 = vmatmul.f32.gmra.mxu0 %v290
      %v498 = vpop.f32.mrf.mxu0
      %v499 = vadd.f32 %v244, %v498
      %500 = vmatmul.f32.gmra.mxu0 %v293
      %v501 = vpop.f32.mrf.mxu0
      %v502 = vadd.f32 %v244, %v501
      %503 = vmatmul.f32.gmra.mxu0 %v296
      %v504 = vpop.f32.mrf.mxu0
      %v505 = vadd.f32 %v244, %v504
      %506 = vmatmul.f32.gmra.mxu0 %v299
      %v507 = vpop.f32.mrf.mxu0
      %v508 = vadd.f32 %v244, %v507
      %509 = vmatmul.f32.gmra.mxu0 %v302
      %v510 = vpop.f32.mrf.mxu0
      %v511 = vadd.f32 %v244, %v510
      %512 = vmatmul.f32.gmra.mxu0 %v305
      %v513 = vpop.f32.mrf.mxu0
      %v514 = vadd.f32 %v244, %v513
      %515 = vmatmul.f32.gmra.mxu0 %v308
      %v516 = vpop.f32.mrf.mxu0
      %v517 = vadd.f32 %v244, %v516
      %518 = vmatmul.f32.gmra.mxu0 %v311
      %v519 = vpop.f32.mrf.mxu0
      %v520 = vadd.f32 %v244, %v519
      %521 = vmatmul.f32.gmra.mxu0 %v314
      %v522 = vpop.f32.mrf.mxu0
      %v523 = vadd.f32 %v244, %v522
      %524 = vmatmul.f32.gmra.mxu0 %v317
      %v525 = vpop.f32.mrf.mxu0
      %v526 = vadd.f32 %v244, %v525
      %527 = vmatmul.f32.gmra.mxu0 %v320
      %v528 = vpop.f32.mrf.mxu0
      %v529 = vadd.f32 %v244, %v528
      %530 = vmatmul.f32.gmra.mxu0 %v323
      %v531 = vpop.f32.mrf.mxu0
      %v532 = vadd.f32 %v244, %v531
      %533 = vmatmul.f32.gmra.mxu0 %v326
      %v534 = vpop.f32.mrf.mxu0
      %v535 = vadd.f32 %v244, %v534
      %536 = vmatmul.f32.gmra.mxu0 %v329
      %v537 = vpop.f32.mrf.mxu0
      %v538 = vadd.f32 %v244, %v537
      %539 = vmatmul.f32.gmra.mxu0 %v332
      %v540 = vpop.f32.mrf.mxu0
      %v541 = vadd.f32 %v244, %v540
      %542 = vmatmul.f32.gmra.mxu0 %v335
      %v543 = vpop.f32.mrf.mxu0
      %v544 = vadd.f32 %v244, %v543
      %545 = vmatmul.f32.gmra.mxu0 %v338
      %v546 = vpop.f32.mrf.mxu0
      %v547 = vadd.f32 %v244, %v546
      %548 = vmatmul.f32.gmra.mxu0 %v341
      %v549 = vpop.f32.mrf.mxu0
      %v550 = vadd.f32 %v244, %v549
      %551 = vmatmul.f32.gmra.mxu0 %v344
      %v552 = vpop.f32.mrf.mxu0
      %v553 = vadd.f32 %v244, %v552
      %554 = vmatmul.f32.gmra.mxu0 %v347
      %v555 = vpop.f32.mrf.mxu0
      %v556 = vadd.f32 %v244, %v555
      %557 = vmatmul.f32.gmra.mxu0 %v350
      %v558 = vpop.f32.mrf.mxu0
      %v559 = vadd.f32 %v244, %v558
      %560 = vmatmul.f32.gmra.mxu0 %v353
      %v561 = vpop.f32.mrf.mxu0
      %v562 = vadd.f32 %v244, %v561
      %563 = vmatmul.f32.gmra.mxu0 %v356
      %v564 = vpop.f32.mrf.mxu0
      %v565 = vadd.f32 %v244, %v564
      %566 = vmatmul.f32.gmra.mxu0 %v359
      %v567 = vpop.f32.mrf.mxu0
      %v568 = vadd.f32 %v244, %v567
      %569 = vmatmul.f32.gmra.mxu0 %v362
      %v570 = vpop.f32.mrf.mxu0
      %v571 = vadd.f32 %v244, %v570
      %572 = vmatmul.f32.gmra.mxu0 %v365
      %v573 = vpop.f32.mrf.mxu0
      %v574 = vadd.f32 %v244, %v573
      %575 = vmatmul.f32.gmra.mxu0 %v368
      %v576 = vpop.f32.mrf.mxu0
      %v577 = vadd.f32 %v244, %v576
      %578 = vmatmul.f32.gmra.mxu0 %v371
      %v579 = vpop.f32.mrf.mxu0
      %v580 = vadd.f32 %v244, %v579
      %581 = vmatmul.f32.gmra.mxu0 %v374
      %v582 = vpop.f32.mrf.mxu0
      %v583 = vadd.f32 %v244, %v582
      %584 = vmatmul.f32.gmra.mxu0 %v377
      %v585 = vpop.f32.mrf.mxu0
      %v586 = vadd.f32 %v244, %v585
      %587 = vmatmul.f32.gmra.mxu0 %v380
      %v588 = vpop.f32.mrf.mxu0
      %v589 = vadd.f32 %v244, %v588
      %590 = vmatmul.f32.gmra.mxu0 %v383
      %v591 = vpop.f32.mrf.mxu0
      %v592 = vadd.f32 %v244, %v591
      %593 = vmatmul.f32.gmra.mxu0 %v386
      %v594 = vpop.f32.mrf.mxu0
      %v595 = vadd.f32 %v244, %v594
      %596 = vmatmul.f32.gmra.mxu0 %v389
      %v597 = vpop.f32.mrf.mxu0
      %v598 = vadd.f32 %v244, %v597
      %599 = vmatmul.f32.gmra.mxu0 %v392
      %v600 = vpop.f32.mrf.mxu0
      %v601 = vadd.f32 %v244, %v600
      %602 = vmatmul.f32.gmra.mxu0 %v395
      %v603 = vpop.f32.mrf.mxu0
      %v604 = vadd.f32 %v244, %v603
      %605 = vmatmul.f32.gmra.mxu0 %v398
      %v606 = vpop.f32.mrf.mxu0
      %v607 = vadd.f32 %v244, %v606
      %608 = vmatmul.f32.gmra.mxu0 %v401
      %v609 = vpop.f32.mrf.mxu0
      %v610 = vadd.f32 %v244, %v609
      %611 = vmatmul.f32.gmra.mxu0 %v404
      %v612 = vpop.f32.mrf.mxu0
      %v613 = vadd.f32 %v244, %v612
      %614 = vmatmul.f32.gmra.mxu0 %v407
      %v615 = vpop.f32.mrf.mxu0
      %v616 = vadd.f32 %v244, %v615
      %617 = vmatmul.f32.gmra.mxu0 %v410
      %v618 = vpop.f32.mrf.mxu0
      %v619 = vadd.f32 %v244, %v618
      %620 = vmatmul.f32.gmra.mxu0 %v413
      %v621 = vpop.f32.mrf.mxu0
      %v622 = vadd.f32 %v244, %v621
      %623 = vmatmul.f32.gmra.mxu0 %v416
      %v624 = vpop.f32.mrf.mxu0
      %v625 = vadd.f32 %v244, %v624
      %626 = vmatmul.f32.gmra.mxu0 %v419
      %v627 = vpop.f32.mrf.mxu0
      %v628 = vadd.f32 %v244, %v627
      %629 = vmatmul.f32.gmra.mxu0 %v422
      %v630 = vpop.f32.mrf.mxu0
      %v631 = vadd.f32 %v244, %v630
      %632 = vmatmul.f32.gmra.mxu0 %v425
      %v633 = vpop.f32.mrf.mxu0
      %v634 = vadd.f32 %v244, %v633
      %635 = vmatmul.f32.gmra.mxu0 %v428
      %v636 = vpop.f32.mrf.mxu0
      %v637 = vadd.f32 %v244, %v636
      %638 = vmatmul.f32.gmra.mxu0 %v431
      %v639 = vpop.f32.mrf.mxu0
      %v640 = vadd.f32 %v244, %v639
      %641 = vmatmul.f32.gmra.mxu0 %v434
      %v642 = vpop.f32.mrf.mxu0
      %v643 = vadd.f32 %v244, %v642
      %644 = vmatmul.f32.gmra.mxu0 %v437
      %v645 = vpop.f32.mrf.mxu0
      %v646 = vadd.f32 %v244, %v645
      %647 = vdwg.mxu0
      %vm648 = vcmask 785408
      %649 = vst.msk [vmem:[%s172] sm:$0xff] %vm648, %v457
      %650 = vst.msk [vmem:[%s172 + $0x8] sm:$0xff] %vm648, %v460
      %651 = vst.msk [vmem:[%s172 + $0x10] sm:$0xff] %vm648, %v463
      %652 = vst.msk [vmem:[%s172 + $0x18] sm:$0xff] %vm648, %v466
      %653 = vst.msk [vmem:[%s172 + $0x20] sm:$0xff] %vm648, %v469
      %654 = vst.msk [vmem:[%s172 + $0x28] sm:$0xff] %vm648, %v472
      %655 = vst.msk [vmem:[%s172 + $0x30] sm:$0xff] %vm648, %v475
      %656 = vst.msk [vmem:[%s172 + $0x38] sm:$0xff] %vm648, %v478
      %657 = vst.msk [vmem:[%s172 + $0x40] sm:$0xff] %vm648, %v481
      %658 = vst.msk [vmem:[%s172 + $0x48] sm:$0xff] %vm648, %v484
      %659 = vst.msk [vmem:[%s172 + $0x50] sm:$0xff] %vm648, %v487
      %660 = vst.msk [vmem:[%s172 + $0x58] sm:$0xff] %vm648, %v490
      %661 = vst.msk [vmem:[%s172 + $0x60] sm:$0xff] %vm648, %v493
      %662 = vst.msk [vmem:[%s172 + $0x68] sm:$0xff] %vm648, %v496
      %663 = vst.msk [vmem:[%s172 + $0x70] sm:$0xff] %vm648, %v499
      %664 = vst.msk [vmem:[%s172 + $0x78] sm:$0xff] %vm648, %v502
      %665 = vst.msk [vmem:[%s172 + $0x80] sm:$0xff] %vm648, %v505
      %666 = vst.msk [vmem:[%s172 + $0x88] sm:$0xff] %vm648, %v508
      %667 = vst.msk [vmem:[%s172 + $0x90] sm:$0xff] %vm648, %v511
      %668 = vst.msk [vmem:[%s172 + $0x98] sm:$0xff] %vm648, %v514
      %669 = vst.msk [vmem:[%s172 + $0xa0] sm:$0xff] %vm648, %v517
      %670 = vst.msk [vmem:[%s172 + $0xa8] sm:$0xff] %vm648, %v520
      %671 = vst.msk [vmem:[%s172 + $0xb0] sm:$0xff] %vm648, %v523
      %672 = vst.msk [vmem:[%s172 + $0xb8] sm:$0xff] %vm648, %v526
      %673 = vst.msk [vmem:[%s172 + $0xc0] sm:$0xff] %vm648, %v529
      %674 = vst.msk [vmem:[%s172 + $0xc8] sm:$0xff] %vm648, %v532
      %675 = vst.msk [vmem:[%s172 + $0xd0] sm:$0xff] %vm648, %v535
      %676 = vst.msk [vmem:[%s172 + $0xd8] sm:$0xff] %vm648, %v538
      %677 = vst.msk [vmem:[%s172 + $0xe0] sm:$0xff] %vm648, %v541
      %678 = vst.msk [vmem:[%s172 + $0xe8] sm:$0xff] %vm648, %v544
      %679 = vst.msk [vmem:[%s172 + $0xf0] sm:$0xff] %vm648, %v547
      %680 = vst.msk [vmem:[%s172 + $0xf8] sm:$0xff] %vm648, %v550
      %681 = vst.msk [vmem:[%s172 + $0x100] sm:$0xff] %vm648, %v553
      %682 = vst.msk [vmem:[%s172 + $0x108] sm:$0xff] %vm648, %v556
      %683 = vst.msk [vmem:[%s172 + $0x110] sm:$0xff] %vm648, %v559
      %684 = vst.msk [vmem:[%s172 + $0x118] sm:$0xff] %vm648, %v562
      %685 = vst.msk [vmem:[%s172 + $0x120] sm:$0xff] %vm648, %v565
      %686 = vst.msk [vmem:[%s172 + $0x128] sm:$0xff] %vm648, %v568
      %687 = vst.msk [vmem:[%s172 + $0x130] sm:$0xff] %vm648, %v571
      %688 = vst.msk [vmem:[%s172 + $0x138] sm:$0xff] %vm648, %v574
      %689 = vst.msk [vmem:[%s172 + $0x140] sm:$0xff] %vm648, %v577
      %690 = vst.msk [vmem:[%s172 + $0x148] sm:$0xff] %vm648, %v580
      %691 = vst.msk [vmem:[%s172 + $0x150] sm:$0xff] %vm648, %v583
      %692 = vst.msk [vmem:[%s172 + $0x158] sm:$0xff] %vm648, %v586
      %693 = vst.msk [vmem:[%s172 + $0x160] sm:$0xff] %vm648, %v589
      %694 = vst.msk [vmem:[%s172 + $0x168] sm:$0xff] %vm648, %v592
      %695 = vst.msk [vmem:[%s172 + $0x170] sm:$0xff] %vm648, %v595
      %696 = vst.msk [vmem:[%s172 + $0x178] sm:$0xff] %vm648, %v598
      %697 = vst.msk [vmem:[%s172 + $0x180] sm:$0xff] %vm648, %v601
      %698 = vst.msk [vmem:[%s172 + $0x188] sm:$0xff] %vm648, %v604
      %699 = vst.msk [vmem:[%s172 + $0x190] sm:$0xff] %vm648, %v607
      %700 = vst.msk [vmem:[%s172 + $0x198] sm:$0xff] %vm648, %v610
      %701 = vst.msk [vmem:[%s172 + $0x1a0] sm:$0xff] %vm648, %v613
      %702 = vst.msk [vmem:[%s172 + $0x1a8] sm:$0xff] %vm648, %v616
      %703 = vst.msk [vmem:[%s172 + $0x1b0] sm:$0xff] %vm648, %v619
      %704 = vst.msk [vmem:[%s172 + $0x1b8] sm:$0xff] %vm648, %v622
      %705 = vst.msk [vmem:[%s172 + $0x1c0] sm:$0xff] %vm648, %v625
      %706 = vst.msk [vmem:[%s172 + $0x1c8] sm:$0xff] %vm648, %v628
      %707 = vst.msk [vmem:[%s172 + $0x1d0] sm:$0xff] %vm648, %v631
      %708 = vst.msk [vmem:[%s172 + $0x1d8] sm:$0xff] %vm648, %v634
      %709 = vst.msk [vmem:[%s172 + $0x1e0] sm:$0xff] %vm648, %v637
      %710 = vst.msk [vmem:[%s172 + $0x1e8] sm:$0xff] %vm648, %v640
      %711 = vst.msk [vmem:[%s172 + $0x1f0] sm:$0xff] %vm648, %v643
      %712 = vst.msk [vmem:[%s172 + $0x1f8] sm:$0xff] %vm648, %v646
      %s713 = smul.u32 64, %s14
      %p714 = scmp.lt.s32.totalorder %s713, 127
      %s715 = scalar_select %p714, %s713, 127
      %s716 = smul.addr %s715, 8
      %s717 = scalar_lea.vmem %s3, %s716
      // Predicated region
      $region33: #{reg_flat_niid_forward.9} parent=31 // pred_check
        %p718 = pneg %p100
      $region34: #{reg_flat_niid_forward.9} parent=31 // pred_check_branch
        %720 = sbr.rel (%p718) target = $region36
      $region35: #{reg_flat_niid_forward.9} parent=31 // pred_region
        %s721 = smul.u32 64, %s14
      $region36: #{reg_flat_niid_forward.9} parent=31 // pred_fallthru
        _
    $region32: #{reg_flat_niid_forward.9} parent=5 // pred_fallthru
      _
    %p722 = scmp.le.s32.totalorder 2, %s9
    // Predicated region
    $region37: #{reg_flat_niid_forward.9} parent=5 // pred_check
      %p723 = pneg %p722
    $region38: #{reg_flat_niid_forward.9} parent=5 // pred_check_branch
      %725 = sbr.rel (%p723) target = $region40
    $region39: #{reg_flat_niid_forward.9} parent=5 // pred_region
      %s726 = ssub.s32 %s9, 2
      // Predicated region
      $region41: #{reg_flat_niid_forward.9} parent=39 // pred_check
        %p727 = pneg %p106
      $region42: #{reg_flat_niid_forward.9} parent=39 // pred_check_branch
        %729 = sbr.rel (%p727) target = $region44
      $region43: #{reg_flat_niid_forward.9} parent=39 // pred_region
        %s730 = smul.u32 64, %s15
        %p731 = scmp.lt.s32.totalorder %s730, 127
        %s732 = scalar_select %p731, %s730, 127
        %s733 = smul.addr %s732, 8
        %s734 = scalar_lea.vmem %s3, %s733
      $region44: #{reg_flat_niid_forward.9} parent=39 // pred_fallthru
        _
    $region40: #{reg_flat_niid_forward.9} parent=5 // pred_fallthru
      _
  $region6: #{reg_flat_niid_forward.9} parent=0 // loop_footer
    %s13 = sadd.s32 1, %s9
  $region7: #{reg_flat_niid_forward.9} parent=0 // loop_footer_branch
    %8 = sbr.rel target = $region3
  $region8: #{reg_flat_niid_forward.9} parent=0 // loop_exit
    _

// kernel: reg_flat_niid_forward.10
$region0: #{reg_flat_niid_forward.10}
  #allocation0 [shape = 'u32[]', space=smem, size = 0x4, offset = 0x4, fixed_abs, tag = 'smem constant byte address 0x4 - core index']
  #allocation1 [shape = 'u32[72,128]{1,0:T(1,128)}', space=vmem, size = 0x9000, scoped, tag = 'internal scratch']
  %s0 = inlined_call_operand.vmem [shape: f32[8,128,96], index: 0, kind: input, shape index: {}]
  %s1 = inlined_call_operand.vmem [shape: f32[8,128,32], index: 1, kind: input, shape index: {}]
  %s2 = inlined_call_operand.vmem [shape: f32[8,1,128], index: 2, kind: input, shape index: {}]
  %s3 = inlined_call_operand.vmem [shape: f32[32,32], index: 3, kind: input, shape index: {}]
  %s4 = inlined_call_operand.vmem [shape: f32[1,32], index: 4, kind: input, shape index: {}]
  %s5 = inlined_call_operand.vmem [shape: f32[1,32], index: 5, kind: input, shape index: {}]
  %s6 = inlined_call_operand.vmem [shape: f32[1,32], index: 6, kind: input, shape index: {}]
  %s7 = inlined_call_operand.vmem [shape: f32[8,128,32], index: 7, kind: output, shape index: {}]
  %s8 = sld [smem:[#allocation0]]
  $region61: #{reg_flat_niid_forward.10} parent=0
    _
  %s10 = ssub.s32 1, %s8
  %s11 = scalar_select 0, %s10, %s8
  loop: start=0, step=1, limit=10
  $region2: #{reg_flat_niid_forward.10} parent=0 // loop_pre_header
    _
  $region3: #{reg_flat_niid_forward.10} parent=0 // loop_header
    %s13 = sphi 0, %s17
    %p14 = scmp.ge.s32.totalorder %s13, 10
    %s23 = sphi 0, %s25
    %s26 = sphi 0, %s23
    %s27 = sphi 0, %s26
    %s43 = sphi 0, %s27
    %s49 = sphi 0, %s51
    %s52 = sphi 0, %s49
    %s53 = sphi 0, %s52
    %s69 = sphi 0, %s53
    %s75 = sphi 0, %s77
    %s78 = sphi 0, %s75
    %s79 = sphi 0, %s78
    %s95 = sphi 0, %s79
    %s99 = sphi 0, %s99
    %s101 = sphi 0, %s99
    %s102 = sphi 0, %s101
    %s116 = sphi 0, %s102
    %s120 = sphi 0, %s120
    %s122 = sphi 0, %s120
    %s123 = sphi 0, %s122
    %s137 = sphi 0, %s123
    %s141 = sphi 0, %s141
    %s143 = sphi 0, %s141
    %s144 = sphi 0, %s143
    %s158 = sphi 0, %s144
    %s162 = sphi 0, %s162
    %s164 = sphi 0, %s162
    %s165 = sphi 0, %s164
    %s179 = sphi 0, %s165
    %s185 = sphi 0, %s187
    %s188 = sphi 0, %s185
    %s189 = sphi 0, %s188
    %s205 = sphi 0, %s189
  $region4: #{reg_flat_niid_forward.10} parent=0 // loop_header_branch
    %16 = sbr.rel (%p14) target = $region8
  $region5: #{reg_flat_niid_forward.10} parent=0 // loop_body
    %s18 = ssub.s32 %s13, 1
    %s19 = ssub.s32 %s13, 2
    %s20 = sadd.s32 %s13, 1
    %s21 = ssub.s32 %s13, %s20
    %p22 = scmp.eq.s32.totalorder %s21, 0
    %s24 = sadd.s32 %s23, 1
    %s25 = scalar_select %p22, %s23, %s24
    %p28 = pneg %p22
    %p29 = scmp.eq.s32.totalorder %s13, 7
    %p30 = por %p28, %p29
    %p31 = scmp.ne.s32.totalorder %s23, %s26
    %p32 = scmp.eq.s32.totalorder %s13, 0
    %p33 = por %p31, %p32
    %p34 = scmp.ne.s32.totalorder %s23, %s26
    %p35 = scmp.eq.s32.totalorder %s18, 7
    %p36 = por %p34, %p35
    %p37 = scmp.ne.s32.totalorder %s26, %s27
    %p38 = scmp.eq.s32.totalorder %s18, 0
    %p39 = por %p37, %p38
    %p40 = scmp.ne.s32.totalorder %s26, %s27
    %p41 = scmp.eq.s32.totalorder %s19, 7
    %p42 = por %p40, %p41
    %p44 = scmp.ne.s32.totalorder %s27, %s43
    %p45 = scmp.eq.s32.totalorder %s19, 0
    %p46 = por %p44, %p45
    %s47 = ssub.s32 %s13, %s20
    %p48 = scmp.eq.s32.totalorder %s47, 0
    %s50 = sadd.s32 %s49, 1
    %s51 = scalar_select %p48, %s49, %s50
    %p54 = pneg %p48
    %p55 = scmp.eq.s32.totalorder %s13, 7
    %p56 = por %p54, %p55
    %p57 = scmp.ne.s32.totalorder %s49, %s52
    %p58 = scmp.eq.s32.totalorder %s13, 0
    %p59 = por %p57, %p58
    %p60 = scmp.ne.s32.totalorder %s49, %s52
    %p61 = scmp.eq.s32.totalorder %s18, 7
    %p62 = por %p60, %p61
    %p63 = scmp.ne.s32.totalorder %s52, %s53
    %p64 = scmp.eq.s32.totalorder %s18, 0
    %p65 = por %p63, %p64
    %p66 = scmp.ne.s32.totalorder %s52, %s53
    %p67 = scmp.eq.s32.totalorder %s19, 7
    %p68 = por %p66, %p67
    %p70 = scmp.ne.s32.totalorder %s53, %s69
    %p71 = scmp.eq.s32.totalorder %s19, 0
    %p72 = por %p70, %p71
    %s73 = ssub.s32 %s13, %s20
    %p74 = scmp.eq.s32.totalorder %s73, 0
    %s76 = sadd.s32 %s75, 1
    %s77 = scalar_select %p74, %s75, %s76
    %p80 = pneg %p74
    %p81 = scmp.eq.s32.totalorder %s13, 7
    %p82 = por %p80, %p81
    %p83 = scmp.ne.s32.totalorder %s75, %s78
    %p84 = scmp.eq.s32.totalorder %s13, 0
    %p85 = por %p83, %p84
    %p86 = scmp.ne.s32.totalorder %s75, %s78
    %p87 = scmp.eq.s32.totalorder %s18, 7
    %p88 = por %p86, %p87
    %p89 = scmp.ne.s32.totalorder %s78, %s79
    %p90 = scmp.eq.s32.totalorder %s18, 0
    %p91 = por %p89, %p90
    %p92 = scmp.ne.s32.totalorder %s78, %s79
    %p93 = scmp.eq.s32.totalorder %s19, 7
    %p94 = por %p92, %p93
    %p96 = scmp.ne.s32.totalorder %s79, %s95
    %p97 = scmp.eq.s32.totalorder %s19, 0
    %p98 = por %p96, %p97
    %s100 = sadd.s32 %s99, 1
    %p103 = scmp.eq.s32.totalorder %s13, 7
    %p104 = scmp.ne.s32.totalorder %s99, %s101
    %p105 = scmp.eq.s32.totalorder %s13, 0
    %p106 = por %p104, %p105
    %p107 = scmp.ne.s32.totalorder %s99, %s101
    %p108 = scmp.eq.s32.totalorder %s18, 7
    %p109 = por %p107, %p108
    %p110 = scmp.ne.s32.totalorder %s101, %s102
    %p111 = scmp.eq.s32.totalorder %s18, 0
    %p112 = por %p110, %p111
    %p113 = scmp.ne.s32.totalorder %s101, %s102
    %p114 = scmp.eq.s32.totalorder %s19, 7
    %p115 = por %p113, %p114
    %p117 = scmp.ne.s32.totalorder %s102, %s116
    %p118 = scmp.eq.s32.totalorder %s19, 0
    %p119 = por %p117, %p118
    %s121 = sadd.s32 %s120, 1
    %p124 = scmp.eq.s32.totalorder %s13, 7
    %p125 = scmp.ne.s32.totalorder %s120, %s122
    %p126 = scmp.eq.s32.totalorder %s13, 0
    %p127 = por %p125, %p126
    %p128 = scmp.ne.s32.totalorder %s120, %s122
    %p129 = scmp.eq.s32.totalorder %s18, 7
    %p130 = por %p128, %p129
    %p131 = scmp.ne.s32.totalorder %s122, %s123
    %p132 = scmp.eq.s32.totalorder %s18, 0
    %p133 = por %p131, %p132
    %p134 = scmp.ne.s32.totalorder %s122, %s123
    %p135 = scmp.eq.s32.totalorder %s19, 7
    %p136 = por %p134, %p135
    %p138 = scmp.ne.s32.totalorder %s123, %s137
    %p139 = scmp.eq.s32.totalorder %s19, 0
    %p140 = por %p138, %p139
    %s142 = sadd.s32 %s141, 1
    %p145 = scmp.eq.s32.totalorder %s13, 7
    %p146 = scmp.ne.s32.totalorder %s141, %s143
    %p147 = scmp.eq.s32.totalorder %s13, 0
    %p148 = por %p146, %p147
    %p149 = scmp.ne.s32.totalorder %s141, %s143
    %p150 = scmp.eq.s32.totalorder %s18, 7
    %p151 = por %p149, %p150
    %p152 = scmp.ne.s32.totalorder %s143, %s144
    %p153 = scmp.eq.s32.totalorder %s18, 0
    %p154 = por %p152, %p153
    %p155 = scmp.ne.s32.totalorder %s143, %s144
    %p156 = scmp.eq.s32.totalorder %s19, 7
    %p157 = por %p155, %p156
    %p159 = scmp.ne.s32.totalorder %s144, %s158
    %p160 = scmp.eq.s32.totalorder %s19, 0
    %p161 = por %p159, %p160
    %s163 = sadd.s32 %s162, 1
    %p166 = scmp.eq.s32.totalorder %s13, 7
    %p167 = scmp.ne.s32.totalorder %s162, %s164
    %p168 = scmp.eq.s32.totalorder %s13, 0
    %p169 = por %p167, %p168
    %p170 = scmp.ne.s32.totalorder %s162, %s164
    %p171 = scmp.eq.s32.totalorder %s18, 7
    %p172 = por %p170, %p171
    %p173 = scmp.ne.s32.totalorder %s164, %s165
    %p174 = scmp.eq.s32.totalorder %s18, 0
    %p175 = por %p173, %p174
    %p176 = scmp.ne.s32.totalorder %s164, %s165
    %p177 = scmp.eq.s32.totalorder %s19, 7
    %p178 = por %p176, %p177
    %p180 = scmp.ne.s32.totalorder %s165, %s179
    %p181 = scmp.eq.s32.totalorder %s19, 0
    %p182 = por %p180, %p181
    %s183 = ssub.s32 %s13, %s20
    %p184 = scmp.eq.s32.totalorder %s183, 0
    %s186 = sadd.s32 %s185, 1
    %s187 = scalar_select %p184, %s185, %s186
    %p190 = pneg %p184
    %p191 = scmp.eq.s32.totalorder %s13, 7
    %p192 = por %p190, %p191
    %p193 = scmp.ne.s32.totalorder %s185, %s188
    %p194 = scmp.eq.s32.totalorder %s13, 0
    %p195 = por %p193, %p194
    %p196 = scmp.ne.s32.totalorder %s185, %s188
    %p197 = scmp.eq.s32.totalorder %s18, 7
    %p198 = por %p196, %p197
    %p199 = scmp.ne.s32.totalorder %s188, %s189
    %p200 = scmp.eq.s32.totalorder %s18, 0
    %p201 = por %p199, %p200
    %p202 = scmp.ne.s32.totalorder %s188, %s189
    %p203 = scmp.eq.s32.totalorder %s19, 7
    %p204 = por %p202, %p203
    %p206 = scmp.ne.s32.totalorder %s189, %s205
    %p207 = scmp.eq.s32.totalorder %s19, 0
    %p208 = por %p206, %p207
    %p209 = scmp.le.s32.totalorder 1, %s13
    %p210 = scmp.lt.s32.totalorder %s13, 9
    %p211 = pnand %p209, %p210
    %p212 = pneg %p211
    // Predicated region
    $region9: #{reg_flat_niid_forward.10} parent=5 // pred_check
      _
    $region10: #{reg_flat_niid_forward.10} parent=5 // pred_check_branch
      %214 = sbr.rel (%p211) target = $region12
    $region11: #{reg_flat_niid_forward.10} parent=5 // pred_region
      %s215 = ssub.s32 %s13, 1
      // Predicated region
      $region13: #{reg_flat_niid_forward.10} parent=11 // pred_check
        %p216 = pneg %p112
      $region14: #{reg_flat_niid_forward.10} parent=11 // pred_check_branch
        %218 = sbr.rel (%p216) target = $region16
      $region15: #{reg_flat_niid_forward.10} parent=11 // pred_region
        _
      $region16: #{reg_flat_niid_forward.10} parent=11 // pred_fallthru
        _
      // Predicated region
      $region17: #{reg_flat_niid_forward.10} parent=11 // pred_check
        %p219 = pneg %p133
      $region18: #{reg_flat_niid_forward.10} parent=11 // pred_check_branch
        %221 = sbr.rel (%p219) target = $region20
      $region19: #{reg_flat_niid_forward.10} parent=11 // pred_region
        _
      $region20: #{reg_flat_niid_forward.10} parent=11 // pred_fallthru
        _
      // Predicated region
      $region21: #{reg_flat_niid_forward.10} parent=11 // pred_check
        %p222 = pneg %p154
      $region22: #{reg_flat_niid_forward.10} parent=11 // pred_check_branch
        %224 = sbr.rel (%p222) target = $region24
      $region23: #{reg_flat_niid_forward.10} parent=11 // pred_region
        _
      $region24: #{reg_flat_niid_forward.10} parent=11 // pred_fallthru
        _
      // Predicated region
      $region25: #{reg_flat_niid_forward.10} parent=11 // pred_check
        %p225 = pneg %p175
      $region26: #{reg_flat_niid_forward.10} parent=11 // pred_check_branch
        %227 = sbr.rel (%p225) target = $region28
      $region27: #{reg_flat_niid_forward.10} parent=11 // pred_region
        _
      $region28: #{reg_flat_niid_forward.10} parent=11 // pred_fallthru
        _
    $region12: #{reg_flat_niid_forward.10} parent=5 // pred_fallthru
      _
    %p228 = scmp.lt.s32.totalorder %s13, 8
    // Predicated region
    $region29: #{reg_flat_niid_forward.10} parent=5 // pred_check
      %p229 = pneg %p228
    $region30: #{reg_flat_niid_forward.10} parent=5 // pred_check_branch
      %231 = sbr.rel (%p229) target = $region32
    $region31: #{reg_flat_niid_forward.10} parent=5 // pred_region
      // Predicated region
      $region33: #{reg_flat_niid_forward.10} parent=31 // pred_check
        %p232 = pneg %p33
      $region34: #{reg_flat_niid_forward.10} parent=31 // pred_check_branch
        %234 = sbr.rel (%p232) target = $region36
      $region35: #{reg_flat_niid_forward.10} parent=31 // pred_region
        %p235 = scmp.lt.s32.totalorder %s13, 7
        %s236 = scalar_select %p235, %s13, 7
        %s237 = smul.addr %s236, 16
        %s238 = smul.addr %s237, 8
        %s239 = scalar_lea.vmem %s0, %s238
      $region36: #{reg_flat_niid_forward.10} parent=31 // pred_fallthru
        _
      // Predicated region
      $region37: #{reg_flat_niid_forward.10} parent=31 // pred_check
        %p240 = pneg %p59
      $region38: #{reg_flat_niid_forward.10} parent=31 // pred_check_branch
        %242 = sbr.rel (%p240) target = $region40
      $region39: #{reg_flat_niid_forward.10} parent=31 // pred_region
        %p243 = scmp.lt.s32.totalorder %s13, 7
        %s244 = scalar_select %p243, %s13, 7
        %s245 = smul.addr %s244, 16
        %s246 = smul.addr %s245, 8
        %s247 = scalar_lea.vmem %s1, %s246
      $region40: #{reg_flat_niid_forward.10} parent=31 // pred_fallthru
        _
      // Predicated region
      $region41: #{reg_flat_niid_forward.10} parent=31 // pred_check
        %p248 = pneg %p85
      $region42: #{reg_flat_niid_forward.10} parent=31 // pred_check_branch
        %250 = sbr.rel (%p248) target = $region44
      $region43: #{reg_flat_niid_forward.10} parent=31 // pred_region
        %p251 = scmp.lt.s32.totalorder %s13, 7
        %s252 = scalar_select %p251, %s13, 7
        %s253 = scalar_lea.vmem %s2, %s252
      $region44: #{reg_flat_niid_forward.10} parent=31 // pred_fallthru
        _
    $region32: #{reg_flat_niid_forward.10} parent=5 // pred_fallthru
      _
    %p254 = scmp.le.s32.totalorder 1, %s13
    %p255 = scmp.lt.s32.totalorder %s13, 9
    %p256 = pnand %p254, %p255
    %p257 = pneg %p256
    // Predicated region
    $region45: #{reg_flat_niid_forward.10} parent=5 // pred_check
      _
    $region46: #{reg_flat_niid_forward.10} parent=5 // pred_check_branch
      %259 = sbr.rel (%p256) target = $region48
    $region47: #{reg_flat_niid_forward.10} parent=5 // pred_region
      %s260 = ssub.s32 %s13, 1
      %p261 = scmp.lt.s32.totalorder %s18, 7
      %s262 = scalar_select %p261, %s18, 7
      %s263 = smul.addr %s262, 16
      %s264 = smul.addr %s263, 8
      %s265 = scalar_lea.vmem %s0, %s264
      %p266 = pneg %p39
      %p267 = pneg %p36
      %p268 = scmp.lt.s32.totalorder %s18, 7
      %s269 = scalar_select %p268, %s18, 7
      %s270 = smul.addr %s269, 16
      %s271 = smul.addr %s270, 8
      %s272 = scalar_lea.vmem %s1, %s271
      %p273 = pneg %p65
      %p274 = pneg %p62
      %p275 = scmp.lt.s32.totalorder %s18, 7
      %s276 = scalar_select %p275, %s18, 7
      %s277 = scalar_lea.vmem %s2, %s276
      %p278 = pneg %p91
      %p279 = pneg %p88
      %p280 = pneg %p112
      %p281 = pneg %p109
      %p282 = pneg %p133
      %p283 = pneg %p130
      %p284 = pneg %p154
      %p285 = pneg %p151
      %p286 = pneg %p175
      %p287 = pneg %p172
      %p288 = pneg %p201
      %p289 = pneg %p198
      %p290 = scmp.lt.s32.totalorder %s18, 7
      %s291 = scalar_select %p290, %s18, 7
      %s292 = smul.addr %s291, 16
      %s293 = smul.addr %s292, 8
      %s294 = scalar_lea.vmem %s7, %s293
      %p295 = scmp.lt.s32.totalorder %s18, 7
      %s296 = scalar_select %p295, %s18, 7
      %s297 = smul.addr %s296, 16
      %s298 = smul.addr %s297, 8
      %s299 = scalar_lea.vmem %s0, %s298
      %p300 = scmp.lt.s32.totalorder %s18, 7
      %s301 = scalar_select %p300, %s18, 7
      %s302 = smul.addr %s301, 16
      %s303 = smul.addr %s302, 8
      %s304 = scalar_lea.vmem %s1, %s303
      %p305 = scmp.lt.s32.totalorder %s18, 7
      %s306 = scalar_select %p305, %s18, 7
      %s307 = scalar_lea.vmem %s2, %s306
      %p308 = scmp.lt.s32.totalorder %s18, 7
      %s309 = scalar_select %p308, %s18, 7
      %s310 = smul.addr %s309, 16
      %s311 = smul.addr %s310, 8
      %s312 = scalar_lea.vmem %s7, %s311
      %v313 = vld [vmem:[%s299] sm:$0xff]
      %v314 = vld [vmem:[%s299 + $0x8] sm:$0xff]
      %v315 = vld [vmem:[%s299 + $0x10] sm:$0xff]
      %v316 = vld [vmem:[%s299 + $0x18] sm:$0xff]
      %v317 = vld [vmem:[%s299 + $0x20] sm:$0xff]
      %v318 = vld [vmem:[%s299 + $0x28] sm:$0xff]
      %v319 = vld [vmem:[%s299 + $0x30] sm:$0xff]
      %v320 = vld [vmem:[%s299 + $0x38] sm:$0xff]
      %v321 = vld [vmem:[%s299 + $0x40] sm:$0xff]
      %v322 = vld [vmem:[%s299 + $0x48] sm:$0xff]
      %v323 = vld [vmem:[%s299 + $0x50] sm:$0xff]
      %v324 = vld [vmem:[%s299 + $0x58] sm:$0xff]
      %v325 = vld [vmem:[%s299 + $0x60] sm:$0xff]
      %v326 = vld [vmem:[%s299 + $0x68] sm:$0xff]
      %v327 = vld [vmem:[%s299 + $0x70] sm:$0xff]
      %v328 = vld [vmem:[%s299 + $0x78] sm:$0xff]
      %v329 = vld [vmem:[%s304] sm:$0xff]
      %v330 = vld [vmem:[%s304 + $0x8] sm:$0xff]
      %v331 = vld [vmem:[%s304 + $0x10] sm:$0xff]
      %v332 = vld [vmem:[%s304 + $0x18] sm:$0xff]
      %v333 = vld [vmem:[%s304 + $0x20] sm:$0xff]
      %v334 = vld [vmem:[%s304 + $0x28] sm:$0xff]
      %v335 = vld [vmem:[%s304 + $0x30] sm:$0xff]
      %v336 = vld [vmem:[%s304 + $0x38] sm:$0xff]
      %v337 = vld [vmem:[%s304 + $0x40] sm:$0xff]
      %v338 = vld [vmem:[%s304 + $0x48] sm:$0xff]
      %v339 = vld [vmem:[%s304 + $0x50] sm:$0xff]
      %v340 = vld [vmem:[%s304 + $0x58] sm:$0xff]
      %v341 = vld [vmem:[%s304 + $0x60] sm:$0xff]
      %v342 = vld [vmem:[%s304 + $0x68] sm:$0xff]
      %v343 = vld [vmem:[%s304 + $0x70] sm:$0xff]
      %v344 = vld [vmem:[%s304 + $0x78] sm:$0xff]
      %v345 = vld [vmem:[%s307] sm:$0x1]
      %362 = vrot.lane.b32.xlu0 %v313, 96
      %v363 = vpop.permute.xlu0 %362
      %364 = vrot.lane.b32.xlu0 %v314, 96
      %v365 = vpop.permute.xlu0 %364
      %366 = vrot.lane.b32.xlu0 %v315, 96
      %v367 = vpop.permute.xlu0 %366
      %368 = vrot.lane.b32.xlu0 %v316, 96
      %v369 = vpop.permute.xlu0 %368
      %370 = vrot.lane.b32.xlu0 %v317, 96
      %v371 = vpop.permute.xlu0 %370
      %372 = vrot.lane.b32.xlu0 %v318, 96
      %v373 = vpop.permute.xlu0 %372
      %374 = vrot.lane.b32.xlu0 %v319, 96
      %v375 = vpop.permute.xlu0 %374
      %376 = vrot.lane.b32.xlu0 %v320, 96
      %v377 = vpop.permute.xlu0 %376
      %378 = vrot.lane.b32.xlu0 %v321, 96
      %v379 = vpop.permute.xlu0 %378
      %380 = vrot.lane.b32.xlu0 %v322, 96
      %v381 = vpop.permute.xlu0 %380
      %382 = vrot.lane.b32.xlu0 %v323, 96
      %v383 = vpop.permute.xlu0 %382
      %384 = vrot.lane.b32.xlu0 %v324, 96
      %v385 = vpop.permute.xlu0 %384
      %386 = vrot.lane.b32.xlu0 %v325, 96
      %v387 = vpop.permute.xlu0 %386
      %388 = vrot.lane.b32.xlu0 %v326, 96
      %v389 = vpop.permute.xlu0 %388
      %390 = vrot.lane.b32.xlu0 %v327, 96
      %v391 = vpop.permute.xlu0 %390
      %392 = vrot.lane.b32.xlu0 %v328, 96
      %v393 = vpop.permute.xlu0 %392
      %vm394 = vcmask 64512
      %v395 = vsel %vm394, %v313, 0
      %v397 = vsel %vm394, %v314, 0
      %v399 = vsel %vm394, %v315, 0
      %v401 = vsel %vm394, %v316, 0
      %v403 = vsel %vm394, %v317, 0
      %v405 = vsel %vm394, %v318, 0
      %v407 = vsel %vm394, %v319, 0
      %v409 = vsel %vm394, %v320, 0
      %v411 = vsel %vm394, %v321, 0
      %v413 = vsel %vm394, %v322, 0
      %v415 = vsel %vm394, %v323, 0
      %v417 = vsel %vm394, %v324, 0
      %v419 = vsel %vm394, %v325, 0
      %v421 = vsel %vm394, %v326, 0
      %v423 = vsel %vm394, %v327, 0
      %v425 = vsel %vm394, %v328, 0
      %v427 = vsel %vm394, %v363, 0
      %v429 = vsel %vm394, %v365, 0
      %v431 = vsel %vm394, %v367, 0
      %v433 = vsel %vm394, %v369, 0
      %v435 = vsel %vm394, %v371, 0
      %v437 = vsel %vm394, %v373, 0
      %v439 = vsel %vm394, %v375, 0
      %v441 = vsel %vm394, %v377, 0
      %v443 = vsel %vm394, %v379, 0
      %v445 = vsel %vm394, %v381, 0
      %v447 = vsel %vm394, %v383, 0
      %v449 = vsel %vm394, %v385, 0
      %v451 = vsel %vm394, %v387, 0
      %v453 = vsel %vm394, %v389, 0
      %v455 = vsel %vm394, %v391, 0
      %v457 = vsel %vm394, %v393, 0
      %459 = vmatpush.xpose.msra.mxu0 %v457
      %460 = vmatpush.xpose.msra.mxu0 %v455
      %461 = vmatpush.xpose.msra.mxu0 %v453
      %462 = vmatpush.xpose.msra.mxu0 %v451
      %463 = vmatpush.xpose.msra.mxu0 %v449
      %464 = vmatpush.xpose.msra.mxu0 %v447
      %465 = vmatpush.xpose.msra.mxu0 %v445
      %466 = vmatpush.xpose.msra.mxu0 %v443
      %467 = vmatpush.xpose.msra.mxu0 %v441
      %468 = vmatpush.xpose.msra.mxu0 %v439
      %469 = vmatpush.xpose.msra.mxu0 %v437
      %470 = vmatpush.xpose.msra.mxu0 %v435
      %471 = vmatpush.xpose.msra.mxu0 %v433
      %472 = vmatpush.xpose.msra.mxu0 %v431
      %473 = vmatpush.xpose.msra.mxu0 %v429
      %474 = vmatpush.xpose.msra.mxu0 %v427
      %475 = vmatmul.f32.gmra.mxu0 %v395
      %v476 = vpop.f32.mrf.mxu0
      %v477 = vadd.f32 0.0, %v476
      %478 = vmatmul.f32.gmra.mxu0 %v397
      %v479 = vpop.f32.mrf.mxu0
      %v480 = vadd.f32 0.0, %v479
      %481 = vmatmul.f32.gmra.mxu0 %v399
      %v482 = vpop.f32.mrf.mxu0
      %v483 = vadd.f32 0.0, %v482
      %484 = vmatmul.f32.gmra.mxu0 %v401
      %v485 = vpop.f32.mrf.mxu0
      %v486 = vadd.f32 0.0, %v485
      %487 = vmatmul.f32.gmra.mxu0 %v403
      %v488 = vpop.f32.mrf.mxu0
      %v489 = vadd.f32 0.0, %v488
      %490 = vmatmul.f32.gmra.mxu0 %v405
      %v491 = vpop.f32.mrf.mxu0
      %v492 = vadd.f32 0.0, %v491
      %493 = vmatmul.f32.gmra.mxu0 %v407
      %v494 = vpop.f32.mrf.mxu0
      %v495 = vadd.f32 0.0, %v494
      %496 = vmatmul.f32.gmra.mxu0 %v409
      %v497 = vpop.f32.mrf.mxu0
      %v498 = vadd.f32 0.0, %v497
      %499 = vmatmul.f32.gmra.mxu0 %v411
      %v500 = vpop.f32.mrf.mxu0
      %v501 = vadd.f32 0.0, %v500
      %502 = vmatmul.f32.gmra.mxu0 %v413
      %v503 = vpop.f32.mrf.mxu0
      %v504 = vadd.f32 0.0, %v503
      %505 = vmatmul.f32.gmra.mxu0 %v415
      %v506 = vpop.f32.mrf.mxu0
      %v507 = vadd.f32 0.0, %v506
      %508 = vmatmul.f32.gmra.mxu0 %v417
      %v509 = vpop.f32.mrf.mxu0
      %v510 = vadd.f32 0.0, %v509
      %511 = vmatmul.f32.gmra.mxu0 %v419
      %v512 = vpop.f32.mrf.mxu0
      %v513 = vadd.f32 0.0, %v512
      %514 = vmatmul.f32.gmra.mxu0 %v421
      %v515 = vpop.f32.mrf.mxu0
      %v516 = vadd.f32 0.0, %v515
      %517 = vmatmul.f32.gmra.mxu0 %v423
      %v518 = vpop.f32.mrf.mxu0
      %v519 = vadd.f32 0.0, %v518
      %520 = vmatmul.f32.gmra.mxu0 %v425
      %v521 = vpop.f32.mrf.mxu0
      %v522 = vadd.f32 0.0, %v521
      %523 = vdwg.mxu0
      %v524 = vmul.f32 %v477, 0.35355338
      %v525 = vmul.f32 %v480, 0.35355338
      %v526 = vmul.f32 %v483, 0.35355338
      %v527 = vmul.f32 %v486, 0.35355338
      %v528 = vmul.f32 %v489, 0.35355338
      %v529 = vmul.f32 %v492, 0.35355338
      %v530 = vmul.f32 %v495, 0.35355338
      %v531 = vmul.f32 %v498, 0.35355338
      %v532 = vmul.f32 %v501, 0.35355338
      %v533 = vmul.f32 %v504, 0.35355338
      %v534 = vmul.f32 %v507, 0.35355338
      %v535 = vmul.f32 %v510, 0.35355338
      %v536 = vmul.f32 %v513, 0.35355338
      %v537 = vmul.f32 %v516, 0.35355338
      %v538 = vmul.f32 %v519, 0.35355338
      %v539 = vmul.f32 %v522, 0.35355338
      %vm540 = vcmp.gt.f32.partialorder %v345, 0.0
      %v541 = vsel %vm540, 1, 0
      %v542 = vperm.slane %v541, 0
      %vm543 = vcmp.eq.s32.totalorder %v542, 1
      %v544 = vsel %vm543, %v524, -1e+30
      %v545 = vsel %vm543, %v525, -1e+30
      %v546 = vsel %vm543, %v526, -1e+30
      %v547 = vsel %vm543, %v527, -1e+30
      %v548 = vsel %vm543, %v528, -1e+30
      %v549 = vsel %vm543, %v529, -1e+30
      %v550 = vsel %vm543, %v530, -1e+30
      %v551 = vsel %vm543, %v531, -1e+30
      %v552 = vsel %vm543, %v532, -1e+30
      %v553 = vsel %vm543, %v533, -1e+30
      %v554 = vsel %vm543, %v534, -1e+30
      %v555 = vsel %vm543, %v535, -1e+30
      %v556 = vsel %vm543, %v536, -1e+30
      %v557 = vsel %vm543, %v537, -1e+30
      %v558 = vsel %vm543, %v538, -1e+30
      %v559 = vsel %vm543, %v539, -1e+30
      %560 = vmax.xlane.f32.xlu0 %v544
      %v561 = vpop.xlane.xlu0 %560
      %562 = vmax.xlane.f32.xlu0 %v545
      %v563 = vpop.xlane.xlu0 %562
      %564 = vmax.xlane.f32.xlu0 %v546
      %v565 = vpop.xlane.xlu0 %564
      %566 = vmax.xlane.f32.xlu0 %v547
      %v567 = vpop.xlane.xlu0 %566
      %568 = vmax.xlane.f32.xlu0 %v548
      %v569 = vpop.xlane.xlu0 %568
      %570 = vmax.xlane.f32.xlu0 %v549
      %v571 = vpop.xlane.xlu0 %570
      %572 = vmax.xlane.f32.xlu0 %v550
      %v573 = vpop.xlane.xlu0 %572
      %574 = vmax.xlane.f32.xlu0 %v551
      %v575 = vpop.xlane.xlu0 %574
      %576 = vmax.xlane.f32.xlu0 %v552
      %v577 = vpop.xlane.xlu0 %576
      %578 = vmax.xlane.f32.xlu0 %v553
      %v579 = vpop.xlane.xlu0 %578
      %580 = vmax.xlane.f32.xlu0 %v554
      %v581 = vpop.xlane.xlu0 %580
      %582 = vmax.xlane.f32.xlu0 %v555
      %v583 = vpop.xlane.xlu0 %582
      %584 = vmax.xlane.f32.xlu0 %v556
      %v585 = vpop.xlane.xlu0 %584
      %586 = vmax.xlane.f32.xlu0 %v557
      %v587 = vpop.xlane.xlu0 %586
      %588 = vmax.xlane.f32.xlu0 %v558
      %v589 = vpop.xlane.xlu0 %588
      %590 = vmax.xlane.f32.xlu0 %v559
      %v591 = vpop.xlane.xlu0 %590
      %v592 = vsub.f32 %v544, %v561
      %v593 = vsub.f32 %v545, %v563
      %v594 = vsub.f32 %v546, %v565
      %v595 = vsub.f32 %v547, %v567
      %v596 = vsub.f32 %v548, %v569
      %v597 = vsub.f32 %v549, %v571
      %v598 = vsub.f32 %v550, %v573
      %v599 = vsub.f32 %v551, %v575
      %v600 = vsub.f32 %v552, %v577
      %v601 = vsub.f32 %v553, %v579
      %v602 = vsub.f32 %v554, %v581
      %v603 = vsub.f32 %v555, %v583
      %v604 = vsub.f32 %v556, %v585
      %v605 = vsub.f32 %v557, %v587
      %v606 = vsub.f32 %v558, %v589
      %v607 = vsub.f32 %v559, %v591
      %v608 = vmul.f32 %v592, 1.442695
      %v609 = vpow.pop %v608
      %v610 = vmul.f32 %v593, 1.442695
      %v611 = vpow.pop %v610
      %v612 = vmul.f32 %v594, 1.442695
      %v613 = vpow.pop %v612
      %v614 = vmul.f32 %v595, 1.442695
      %v615 = vpow.pop %v614
      %v616 = vmul.f32 %v596, 1.442695
      %v617 = vpow.pop %v616
      %v618 = vmul.f32 %v597, 1.442695
      %v619 = vpow.pop %v618
      %v620 = vmul.f32 %v598, 1.442695
      %v621 = vpow.pop %v620
      %v622 = vmul.f32 %v599, 1.442695
      %v623 = vpow.pop %v622
      %v624 = vmul.f32 %v600, 1.442695
      %v625 = vpow.pop %v624
      %v626 = vmul.f32 %v601, 1.442695
      %v627 = vpow.pop %v626
      %v628 = vmul.f32 %v602, 1.442695
      %v629 = vpow.pop %v628
      %v630 = vmul.f32 %v603, 1.442695
      %v631 = vpow.pop %v630
      %v632 = vmul.f32 %v604, 1.442695
      %v633 = vpow.pop %v632
      %v634 = vmul.f32 %v605, 1.442695
      %v635 = vpow.pop %v634
      %v636 = vmul.f32 %v606, 1.442695
      %v637 = vpow.pop %v636
      %v638 = vmul.f32 %v607, 1.442695
      %v639 = vpow.pop %v638
      %640 = vadd.xlane.f32.xlu0 %v609
      %v641 = vpop.xlane.xlu0 %640
      %642 = vadd.xlane.f32.xlu0 %v611
      %v643 = vpop.xlane.xlu0 %642
      %644 = vadd.xlane.f32.xlu0 %v613
      %v645 = vpop.xlane.xlu0 %644
      %646 = vadd.xlane.f32.xlu0 %v615
      %v647 = vpop.xlane.xlu0 %646
      %648 = vadd.xlane.f32.xlu0 %v617
      %v649 = vpop.xlane.xlu0 %648
      %650 = vadd.xlane.f32.xlu0 %v619
      %v651 = vpop.xlane.xlu0 %650
      %652 = vadd.xlane.f32.xlu0 %v621
      %v653 = vpop.xlane.xlu0 %652
      %654 = vadd.xlane.f32.xlu0 %v623
      %v655 = vpop.xlane.xlu0 %654
      %656 = vadd.xlane.f32.xlu0 %v625
      %v657 = vpop.xlane.xlu0 %656
      %658 = vadd.xlane.f32.xlu0 %v627
      %v659 = vpop.xlane.xlu0 %658
      %660 = vadd.xlane.f32.xlu0 %v629
      %v661 = vpop.xlane.xlu0 %660
      %662 = vadd.xlane.f32.xlu0 %v631
      %v663 = vpop.xlane.xlu0 %662
      %664 = vadd.xlane.f32.xlu0 %v633
      %v665 = vpop.xlane.xlu0 %664
      %666 = vadd.xlane.f32.xlu0 %v635
      %v667 = vpop.xlane.xlu0 %666
      %668 = vadd.xlane.f32.xlu0 %v637
      %v669 = vpop.xlane.xlu0 %668
      %670 = vadd.xlane.f32.xlu0 %v639
      %v671 = vpop.xlane.xlu0 %670
      %v672 = vrcp.pop %v641
      %v673 = vrcp.pop %v643
      %v674 = vrcp.pop %v645
      %v675 = vrcp.pop %v647
      %v676 = vrcp.pop %v649
      %v677 = vrcp.pop %v651
      %v678 = vrcp.pop %v653
      %v679 = vrcp.pop %v655
      %v680 = vrcp.pop %v657
      %v681 = vrcp.pop %v659
      %v682 = vrcp.pop %v661
      %v683 = vrcp.pop %v663
      %v684 = vrcp.pop %v665
      %v685 = vrcp.pop %v667
      %v686 = vrcp.pop %v669
      %v687 = vrcp.pop %v671
      %v688 = vmul.f32 %v609, %v672
      %v689 = vmul.f32 %v611, %v673
      %v690 = vmul.f32 %v613, %v674
      %v691 = vmul.f32 %v615, %v675
      %v692 = vmul.f32 %v617, %v676
      %v693 = vmul.f32 %v619, %v677
      %v694 = vmul.f32 %v621, %v678
      %v695 = vmul.f32 %v623, %v679
      %v696 = vmul.f32 %v625, %v680
      %v697 = vmul.f32 %v627, %v681
      %v698 = vmul.f32 %v629, %v682
      %v699 = vmul.f32 %v631, %v683
      %v700 = vmul.f32 %v633, %v684
      %v701 = vmul.f32 %v635, %v685
      %v702 = vmul.f32 %v637, %v686
      %v703 = vmul.f32 %v639, %v687
      %704 = vrot.lane.b32.xlu0 %v313, 64
      %v705 = vpop.permute.xlu0 %704
      %706 = vrot.lane.b32.xlu0 %v314, 64
      %v707 = vpop.permute.xlu0 %706
      %708 = vrot.lane.b32.xlu0 %v315, 64
      %v709 = vpop.permute.xlu0 %708
      %710 = vrot.lane.b32.xlu0 %v316, 64
      %v711 = vpop.permute.xlu0 %710
      %712 = vrot.lane.b32.xlu0 %v317, 64
      %v713 = vpop.permute.xlu0 %712
      %714 = vrot.lane.b32.xlu0 %v318, 64
      %v715 = vpop.permute.xlu0 %714
      %716 = vrot.lane.b32.xlu0 %v319, 64
      %v717 = vpop.permute.xlu0 %716
      %718 = vrot.lane.b32.xlu0 %v320, 64
      %v719 = vpop.permute.xlu0 %718
      %720 = vrot.lane.b32.xlu0 %v321, 64
      %v721 = vpop.permute.xlu0 %720
      %722 = vrot.lane.b32.xlu0 %v322, 64
      %v723 = vpop.permute.xlu0 %722
      %724 = vrot.lane.b32.xlu0 %v323, 64
      %v725 = vpop.permute.xlu0 %724
      %726 = vrot.lane.b32.xlu0 %v324, 64
      %v727 = vpop.permute.xlu0 %726
      %728 = vrot.lane.b32.xlu0 %v325, 64
      %v729 = vpop.permute.xlu0 %728
      %730 = vrot.lane.b32.xlu0 %v326, 64
      %v731 = vpop.permute.xlu0 %730
      %732 = vrot.lane.b32.xlu0 %v327, 64
      %v733 = vpop.permute.xlu0 %732
      %734 = vrot.lane.b32.xlu0 %v328, 64
      %v735 = vpop.permute.xlu0 %734
      %752 = vmatpush.msra.mxu0 %v735
      %753 = vmatpush.msra.mxu0 %v733
      %754 = vmatpush.msra.mxu0 %v731
      %755 = vmatpush.msra.mxu0 %v729
      %756 = vmatpush.msra.mxu0 %v727
      %757 = vmatpush.msra.mxu0 %v725
      %758 = vmatpush.msra.mxu0 %v723
      %759 = vmatpush.msra.mxu0 %v721
      %760 = vmatpush.msra.mxu0 %v719
      %761 = vmatpush.msra.mxu0 %v717
      %762 = vmatpush.msra.mxu0 %v715
      %763 = vmatpush.msra.mxu0 %v713
      %764 = vmatpush.msra.mxu0 %v711
      %765 = vmatpush.msra.mxu0 %v709
      %766 = vmatpush.msra.mxu0 %v707
      %767 = vmatpush.msra.mxu0 %v705
      %768 = vmatmul.f32.gmra.mxu0 %v688
      %v769 = vpop.f32.mrf.mxu0
      %v770 = vadd.f32 0.0, %v769
      %771 = vmatmul.f32.gmra.mxu0 %v689
      %v772 = vpop.f32.mrf.mxu0
      %v773 = vadd.f32 0.0, %v772
      %774 = vmatmul.f32.gmra.mxu0 %v690
      %v775 = vpop.f32.mrf.mxu0
      %v776 = vadd.f32 0.0, %v775
      %777 = vmatmul.f32.gmra.mxu0 %v691
      %v778 = vpop.f32.mrf.mxu0
      %v779 = vadd.f32 0.0, %v778
      %780 = vmatmul.f32.gmra.mxu0 %v692
      %v781 = vpop.f32.mrf.mxu0
      %v782 = vadd.f32 0.0, %v781
      %783 = vmatmul.f32.gmra.mxu0 %v693
      %v784 = vpop.f32.mrf.mxu0
      %v785 = vadd.f32 0.0, %v784
      %786 = vmatmul.f32.gmra.mxu0 %v694
      %v787 = vpop.f32.mrf.mxu0
      %v788 = vadd.f32 0.0, %v787
      %789 = vmatmul.f32.gmra.mxu0 %v695
      %v790 = vpop.f32.mrf.mxu0
      %v791 = vadd.f32 0.0, %v790
      %792 = vmatmul.f32.gmra.mxu0 %v696
      %v793 = vpop.f32.mrf.mxu0
      %v794 = vadd.f32 0.0, %v793
      %795 = vmatmul.f32.gmra.mxu0 %v697
      %v796 = vpop.f32.mrf.mxu0
      %v797 = vadd.f32 0.0, %v796
      %798 = vmatmul.f32.gmra.mxu0 %v698
      %v799 = vpop.f32.mrf.mxu0
      %v800 = vadd.f32 0.0, %v799
      %801 = vmatmul.f32.gmra.mxu0 %v699
      %v802 = vpop.f32.mrf.mxu0
      %v803 = vadd.f32 0.0, %v802
      %804 = vmatmul.f32.gmra.mxu0 %v700
      %v805 = vpop.f32.mrf.mxu0
      %v806 = vadd.f32 0.0, %v805
      %807 = vmatmul.f32.gmra.mxu0 %v701
      %v808 = vpop.f32.mrf.mxu0
      %v809 = vadd.f32 0.0, %v808
      %810 = vmatmul.f32.gmra.mxu0 %v702
      %v811 = vpop.f32.mrf.mxu0
      %v812 = vadd.f32 0.0, %v811
      %813 = vmatmul.f32.gmra.mxu0 %v703
      %v814 = vpop.f32.mrf.mxu0
      %v815 = vadd.f32 0.0, %v814
      %816 = vdwg.mxu0
      %817 = vrot.lane.b32.xlu0 %v313, 120
      %v818 = vpop.permute.xlu0 %817
      %819 = vrot.lane.b32.xlu0 %v314, 120
      %v820 = vpop.permute.xlu0 %819
      %821 = vrot.lane.b32.xlu0 %v315, 120
      %v822 = vpop.permute.xlu0 %821
      %823 = vrot.lane.b32.xlu0 %v316, 120
      %v824 = vpop.permute.xlu0 %823
      %825 = vrot.lane.b32.xlu0 %v317, 120
      %v826 = vpop.permute.xlu0 %825
      %827 = vrot.lane.b32.xlu0 %v318, 120
      %v828 = vpop.permute.xlu0 %827
      %829 = vrot.lane.b32.xlu0 %v319, 120
      %v830 = vpop.permute.xlu0 %829
      %831 = vrot.lane.b32.xlu0 %v320, 120
      %v832 = vpop.permute.xlu0 %831
      %833 = vrot.lane.b32.xlu0 %v321, 120
      %v834 = vpop.permute.xlu0 %833
      %835 = vrot.lane.b32.xlu0 %v322, 120
      %v836 = vpop.permute.xlu0 %835
      %837 = vrot.lane.b32.xlu0 %v323, 120
      %v838 = vpop.permute.xlu0 %837
      %839 = vrot.lane.b32.xlu0 %v324, 120
      %v840 = vpop.permute.xlu0 %839
      %841 = vrot.lane.b32.xlu0 %v325, 120
      %v842 = vpop.permute.xlu0 %841
      %843 = vrot.lane.b32.xlu0 %v326, 120
      %v844 = vpop.permute.xlu0 %843
      %845 = vrot.lane.b32.xlu0 %v327, 120
      %v846 = vpop.permute.xlu0 %845
      %847 = vrot.lane.b32.xlu0 %v328, 120
      %v848 = vpop.permute.xlu0 %847
      %849 = vrot.lane.b32.xlu0 %v313, 88
      %v850 = vpop.permute.xlu0 %849
      %851 = vrot.lane.b32.xlu0 %v314, 88
      %v852 = vpop.permute.xlu0 %851
      %853 = vrot.lane.b32.xlu0 %v315, 88
      %v854 = vpop.permute.xlu0 %853
      %855 = vrot.lane.b32.xlu0 %v316, 88
      %v856 = vpop.permute.xlu0 %855
      %857 = vrot.lane.b32.xlu0 %v317, 88
      %v858 = vpop.permute.xlu0 %857
      %859 = vrot.lane.b32.xlu0 %v318, 88
      %v860 = vpop.permute.xlu0 %859
      %861 = vrot.lane.b32.xlu0 %v319, 88
      %v862 = vpop.permute.xlu0 %861
      %863 = vrot.lane.b32.xlu0 %v320, 88
      %v864 = vpop.permute.xlu0 %863
      %865 = vrot.lane.b32.xlu0 %v321, 88
      %v866 = vpop.permute.xlu0 %865
      %867 = vrot.lane.b32.xlu0 %v322, 88
      %v868 = vpop.permute.xlu0 %867
      %869 = vrot.lane.b32.xlu0 %v323, 88
      %v870 = vpop.permute.xlu0 %869
      %871 = vrot.lane.b32.xlu0 %v324, 88
      %v872 = vpop.permute.xlu0 %871
      %873 = vrot.lane.b32.xlu0 %v325, 88
      %v874 = vpop.permute.xlu0 %873
      %875 = vrot.lane.b32.xlu0 %v326, 88
      %v876 = vpop.permute.xlu0 %875
      %877 = vrot.lane.b32.xlu0 %v327, 88
      %v878 = vpop.permute.xlu0 %877
      %879 = vrot.lane.b32.xlu0 %v328, 88
      %v880 = vpop.permute.xlu0 %879
      %v881 = vsel %vm394, %v818, 0
      %v883 = vsel %vm394, %v820, 0
      %v885 = vsel %vm394, %v822, 0
      %v887 = vsel %vm394, %v824, 0
      %v889 = vsel %vm394, %v826, 0
      %v891 = vsel %vm394, %v828, 0
      %v893 = vsel %vm394, %v830, 0
      %v895 = vsel %vm394, %v832, 0
      %v897 = vsel %vm394, %v834, 0
      %v899 = vsel %vm394, %v836, 0
      %v901 = vsel %vm394, %v838, 0
      %v903 = vsel %vm394, %v840, 0
      %v905 = vsel %vm394, %v842, 0
      %v907 = vsel %vm394, %v844, 0
      %v909 = vsel %vm394, %v846, 0
      %v911 = vsel %vm394, %v848, 0
      %v913 = vsel %vm394, %v850, 0
      %v915 = vsel %vm394, %v852, 0
      %v917 = vsel %vm394, %v854, 0
      %v919 = vsel %vm394, %v856, 0
      %v921 = vsel %vm394, %v858, 0
      %v923 = vsel %vm394, %v860, 0
      %v925 = vsel %vm394, %v862, 0
      %v927 = vsel %vm394, %v864, 0
      %v929 = vsel %vm394, %v866, 0
      %v931 = vsel %vm394, %v868, 0
      %v933 = vsel %vm394, %v870, 0
      %v935 = vsel %vm394, %v872, 0
      %v937 = vsel %vm394, %v874, 0
      %v939 = vsel %vm394, %v876, 0
      %v941 = vsel %vm394, %v878, 0
      %v943 = vsel %vm394, %v880, 0
      %945 = vmatpush.xpose.msra.mxu0 %v943
      %946 = vmatpush.xpose.msra.mxu0 %v941
      %947 = vmatpush.xpose.msra.mxu0 %v939
      %948 = vmatpush.xpose.msra.mxu0 %v937
      %949 = vmatpush.xpose.msra.mxu0 %v935
      %950 = vmatpush.xpose.msra.mxu0 %v933
      %951 = vmatpush.xpose.msra.mxu0 %v931
      %952 = vmatpush.xpose.msra.mxu0 %v929
      %953 = vmatpush.xpose.msra.mxu0 %v927
      %954 = vmatpush.xpose.msra.mxu0 %v925
      %955 = vmatpush.xpose.msra.mxu0 %v923
      %956 = vmatpush.xpose.msra.mxu0 %v921
      %957 = vmatpush.xpose.msra.mxu0 %v919
      %958 = vmatpush.xpose.msra.mxu0 %v917
      %959 = vmatpush.xpose.msra.mxu0 %v915
      %960 = vmatpush.xpose.msra.mxu0 %v913
      %961 = vmatmul.f32.gmra.mxu0 %v881
      %v962 = vpop.f32.mrf.mxu0
      %v963 = vadd.f32 0.0, %v962
      %964 = vmatmul.f32.gmra.mxu0 %v883
      %v965 = vpop.f32.mrf.mxu0
      %v966 = vadd.f32 0.0, %v965
      %967 = vmatmul.f32.gmra.mxu0 %v885
      %v968 = vpop.f32.mrf.mxu0
      %v969 = vadd.f32 0.0, %v968
      %970 = vmatmul.f32.gmra.mxu0 %v887
      %v971 = vpop.f32.mrf.mxu0
      %v972 = vadd.f32 0.0, %v971
      %973 = vmatmul.f32.gmra.mxu0 %v889
      %v974 = vpop.f32.mrf.mxu0
      %v975 = vadd.f32 0.0, %v974
      %976 = vmatmul.f32.gmra.mxu0 %v891
      %v977 = vpop.f32.mrf.mxu0
      %v978 = vadd.f32 0.0, %v977
      %979 = vmatmul.f32.gmra.mxu0 %v893
      %v980 = vpop.f32.mrf.mxu0
      %v981 = vadd.f32 0.0, %v980
      %982 = vmatmul.f32.gmra.mxu0 %v895
      %v983 = vpop.f32.mrf.mxu0
      %v984 = vadd.f32 0.0, %v983
      %985 = vmatmul.f32.gmra.mxu0 %v897
      %v986 = vpop.f32.mrf.mxu0
      %v987 = vadd.f32 0.0, %v986
      %988 = vmatmul.f32.gmra.mxu0 %v899
      %v989 = vpop.f32.mrf.mxu0
      %v990 = vadd.f32 0.0, %v989
      %991 = vmatmul.f32.gmra.mxu0 %v901
      %v992 = vpop.f32.mrf.mxu0
      %v993 = vadd.f32 0.0, %v992
      %994 = vmatmul.f32.gmra.mxu0 %v903
      %v995 = vpop.f32.mrf.mxu0
      %v996 = vadd.f32 0.0, %v995
      %997 = vmatmul.f32.gmra.mxu0 %v905
      %v998 = vpop.f32.mrf.mxu0
      %v999 = vadd.f32 0.0, %v998
      %1000 = vmatmul.f32.gmra.mxu0 %v907
      %v1001 = vpop.f32.mrf.mxu0
      %v1002 = vadd.f32 0.0, %v1001
      %1003 = vmatmul.f32.gmra.mxu0 %v909
      %v1004 = vpop.f32.mrf.mxu0
      %v1005 = vadd.f32 0.0, %v1004
      %1006 = vmatmul.f32.gmra.mxu0 %v911
      %v1007 = vpop.f32.mrf.mxu0
      %v1008 = vadd.f32 0.0, %v1007
      %1009 = vdwg.mxu0
      %v1010 = vmul.f32 %v963, 0.35355338
      %v1011 = vmul.f32 %v966, 0.35355338
      %v1012 = vmul.f32 %v969, 0.35355338
      %v1013 = vmul.f32 %v972, 0.35355338
      %v1014 = vmul.f32 %v975, 0.35355338
      %v1015 = vmul.f32 %v978, 0.35355338
      %v1016 = vmul.f32 %v981, 0.35355338
      %v1017 = vmul.f32 %v984, 0.35355338
      %v1018 = vmul.f32 %v987, 0.35355338
      %v1019 = vmul.f32 %v990, 0.35355338
      %v1020 = vmul.f32 %v993, 0.35355338
      %v1021 = vmul.f32 %v996, 0.35355338
      %v1022 = vmul.f32 %v999, 0.35355338
      %v1023 = vmul.f32 %v1002, 0.35355338
      %v1024 = vmul.f32 %v1005, 0.35355338
      %v1025 = vmul.f32 %v1008, 0.35355338
      %v1026 = vsel %vm543, %v1010, -1e+30
      %v1027 = vsel %vm543, %v1011, -1e+30
      %v1028 = vsel %vm543, %v1012, -1e+30
      %v1029 = vsel %vm543, %v1013, -1e+30
      %v1030 = vsel %vm543, %v1014, -1e+30
      %v1031 = vsel %vm543, %v1015, -1e+30
      %v1032 = vsel %vm543, %v1016, -1e+30
      %v1033 = vsel %vm543, %v1017, -1e+30
      %v1034 = vsel %vm543, %v1018, -1e+30
      %v1035 = vsel %vm543, %v1019, -1e+30
      %v1036 = vsel %vm543, %v1020, -1e+30
      %v1037 = vsel %vm543, %v1021, -1e+30
      %v1038 = vsel %vm543, %v1022, -1e+30
      %v1039 = vsel %vm543, %v1023, -1e+30
      %v1040 = vsel %vm543, %v1024, -1e+30
      %v1041 = vsel %vm543, %v1025, -1e+30
      %1042 = vmax.xlane.f32.xlu0 %v1026
      %v1043 = vpop.xlane.xlu0 %1042
      %1044 = vmax.xlane.f32.xlu0 %v1027
      %v1045 = vpop.xlane.xlu0 %1044
      %1046 = vmax.xlane.f32.xlu0 %v1028
      %v1047 = vpop.xlane.xlu0 %1046
      %1048 = vmax.xlane.f32.xlu0 %v1029
      %v1049 = vpop.xlane.xlu0 %1048
      %1050 = vmax.xlane.f32.xlu0 %v1030
      %v1051 = vpop.xlane.xlu0 %1050
      %1052 = vmax.xlane.f32.xlu0 %v1031
      %v1053 = vpop.xlane.xlu0 %1052
      %1054 = vmax.xlane.f32.xlu0 %v1032
      %v1055 = vpop.xlane.xlu0 %1054
      %1056 = vmax.xlane.f32.xlu0 %v1033
      %v1057 = vpop.xlane.xlu0 %1056
      %1058 = vmax.xlane.f32.xlu0 %v1034
      %v1059 = vpop.xlane.xlu0 %1058
      %1060 = vmax.xlane.f32.xlu0 %v1035
      %v1061 = vpop.xlane.xlu0 %1060
      %1062 = vmax.xlane.f32.xlu0 %v1036
      %v1063 = vpop.xlane.xlu0 %1062
      %1064 = vmax.xlane.f32.xlu0 %v1037
      %v1065 = vpop.xlane.xlu0 %1064
      %1066 = vmax.xlane.f32.xlu0 %v1038
      %v1067 = vpop.xlane.xlu0 %1066
      %1068 = vmax.xlane.f32.xlu0 %v1039
      %v1069 = vpop.xlane.xlu0 %1068
      %1070 = vmax.xlane.f32.xlu0 %v1040
      %v1071 = vpop.xlane.xlu0 %1070
      %1072 = vmax.xlane.f32.xlu0 %v1041
      %v1073 = vpop.xlane.xlu0 %1072
      %v1074 = vsub.f32 %v1026, %v1043
      %v1075 = vsub.f32 %v1027, %v1045
      %v1076 = vsub.f32 %v1028, %v1047
      %v1077 = vsub.f32 %v1029, %v1049
      %v1078 = vsub.f32 %v1030, %v1051
      %v1079 = vsub.f32 %v1031, %v1053
      %v1080 = vsub.f32 %v1032, %v1055
      %v1081 = vsub.f32 %v1033, %v1057
      %v1082 = vsub.f32 %v1034, %v1059
      %v1083 = vsub.f32 %v1035, %v1061
      %v1084 = vsub.f32 %v1036, %v1063
      %v1085 = vsub.f32 %v1037, %v1065
      %v1086 = vsub.f32 %v1038, %v1067
      %v1087 = vsub.f32 %v1039, %v1069
      %v1088 = vsub.f32 %v1040, %v1071
      %v1089 = vsub.f32 %v1041, %v1073
      %v1090 = vmul.f32 %v1074, 1.442695
      %v1091 = vpow.pop %v1090
      %v1092 = vmul.f32 %v1075, 1.442695
      %v1093 = vpow.pop %v1092
      %v1094 = vmul.f32 %v1076, 1.442695
      %v1095 = vpow.pop %v1094
      %v1096 = vmul.f32 %v1077, 1.442695
      %v1097 = vpow.pop %v1096
      %v1098 = vmul.f32 %v1078, 1.442695
      %v1099 = vpow.pop %v1098
      %v1100 = vmul.f32 %v1079, 1.442695
      %v1101 = vpow.pop %v1100
      %v1102 = vmul.f32 %v1080, 1.442695
      %v1103 = vpow.pop %v1102
      %v1104 = vmul.f32 %v1081, 1.442695
      %v1105 = vpow.pop %v1104
      %v1106 = vmul.f32 %v1082, 1.442695
      %v1107 = vpow.pop %v1106
      %v1108 = vmul.f32 %v1083, 1.442695
      %v1109 = vpow.pop %v1108
      %v1110 = vmul.f32 %v1084, 1.442695
      %v1111 = vpow.pop %v1110
      %v1112 = vmul.f32 %v1085, 1.442695
      %v1113 = vpow.pop %v1112
      %v1114 = vmul.f32 %v1086, 1.442695
      %v1115 = vpow.pop %v1114
      %v1116 = vmul.f32 %v1087, 1.442695
      %v1117 = vpow.pop %v1116
      %v1118 = vmul.f32 %v1088, 1.442695
      %v1119 = vpow.pop %v1118
      %v1120 = vmul.f32 %v1089, 1.442695
      %v1121 = vpow.pop %v1120
      %1122 = vadd.xlane.f32.xlu0 %v1091
      %v1123 = vpop.xlane.xlu0 %1122
      %1124 = vadd.xlane.f32.xlu0 %v1093
      %v1125 = vpop.xlane.xlu0 %1124
      %1126 = vadd.xlane.f32.xlu0 %v1095
      %v1127 = vpop.xlane.xlu0 %1126
      %1128 = vadd.xlane.f32.xlu0 %v1097
      %v1129 = vpop.xlane.xlu0 %1128
      %1130 = vadd.xlane.f32.xlu0 %v1099
      %v1131 = vpop.xlane.xlu0 %1130
      %1132 = vadd.xlane.f32.xlu0 %v1101
      %v1133 = vpop.xlane.xlu0 %1132
      %1134 = vadd.xlane.f32.xlu0 %v1103
      %v1135 = vpop.xlane.xlu0 %1134
      %1136 = vadd.xlane.f32.xlu0 %v1105
      %v1137 = vpop.xlane.xlu0 %1136
      %1138 = vadd.xlane.f32.xlu0 %v1107
      %v1139 = vpop.xlane.xlu0 %1138
      %1140 = vadd.xlane.f32.xlu0 %v1109
      %v1141 = vpop.xlane.xlu0 %1140
      %1142 = vadd.xlane.f32.xlu0 %v1111
      %v1143 = vpop.xlane.xlu0 %1142
      %1144 = vadd.xlane.f32.xlu0 %v1113
      %v1145 = vpop.xlane.xlu0 %1144
      %1146 = vadd.xlane.f32.xlu0 %v1115
      %v1147 = vpop.xlane.xlu0 %1146
      %1148 = vadd.xlane.f32.xlu0 %v1117
      %v1149 = vpop.xlane.xlu0 %1148
      %1150 = vadd.xlane.f32.xlu0 %v1119
      %v1151 = vpop.xlane.xlu0 %1150
      %1152 = vadd.xlane.f32.xlu0 %v1121
      %v1153 = vpop.xlane.xlu0 %1152
      %v1154 = vrcp.pop %v1123
      %v1155 = vrcp.pop %v1125
      %v1156 = vrcp.pop %v1127
      %v1157 = vrcp.pop %v1129
      %v1158 = vrcp.pop %v1131
      %v1159 = vrcp.pop %v1133
      %v1160 = vrcp.pop %v1135
      %v1161 = vrcp.pop %v1137
      %v1162 = vrcp.pop %v1139
      %v1163 = vrcp.pop %v1141
      %v1164 = vrcp.pop %v1143
      %v1165 = vrcp.pop %v1145
      %v1166 = vrcp.pop %v1147
      %v1167 = vrcp.pop %v1149
      %v1168 = vrcp.pop %v1151
      %v1169 = vrcp.pop %v1153
      %v1170 = vmul.f32 %v1091, %v1154
      %v1171 = vmul.f32 %v1093, %v1155
      %v1172 = vmul.f32 %v1095, %v1156
      %v1173 = vmul.f32 %v1097, %v1157
      %v1174 = vmul.f32 %v1099, %v1158
      %v1175 = vmul.f32 %v1101, %v1159
      %v1176 = vmul.f32 %v1103, %v1160
      %v1177 = vmul.f32 %v1105, %v1161
      %v1178 = vmul.f32 %v1107, %v1162
      %v1179 = vmul.f32 %v1109, %v1163
      %v1180 = vmul.f32 %v1111, %v1164
      %v1181 = vmul.f32 %v1113, %v1165
      %v1182 = vmul.f32 %v1115, %v1166
      %v1183 = vmul.f32 %v1117, %v1167
      %v1184 = vmul.f32 %v1119, %v1168
      %v1185 = vmul.f32 %v1121, %v1169
      %1186 = vrot.lane.b32.xlu0 %v313, 56
      %v1187 = vpop.permute.xlu0 %1186
      %1188 = vrot.lane.b32.xlu0 %v314, 56
      %v1189 = vpop.permute.xlu0 %1188
      %1190 = vrot.lane.b32.xlu0 %v315, 56
      %v1191 = vpop.permute.xlu0 %1190
      %1192 = vrot.lane.b32.xlu0 %v316, 56
      %v1193 = vpop.permute.xlu0 %1192
      %1194 = vrot.lane.b32.xlu0 %v317, 56
      %v1195 = vpop.permute.xlu0 %1194
      %1196 = vrot.lane.b32.xlu0 %v318, 56
      %v1197 = vpop.permute.xlu0 %1196
      %1198 = vrot.lane.b32.xlu0 %v319, 56
      %v1199 = vpop.permute.xlu0 %1198
      %1200 = vrot.lane.b32.xlu0 %v320, 56
      %v1201 = vpop.permute.xlu0 %1200
      %1202 = vrot.lane.b32.xlu0 %v321, 56
      %v1203 = vpop.permute.xlu0 %1202
      %1204 = vrot.lane.b32.xlu0 %v322, 56
      %v1205 = vpop.permute.xlu0 %1204
      %1206 = vrot.lane.b32.xlu0 %v323, 56
      %v1207 = vpop.permute.xlu0 %1206
      %1208 = vrot.lane.b32.xlu0 %v324, 56
      %v1209 = vpop.permute.xlu0 %1208
      %1210 = vrot.lane.b32.xlu0 %v325, 56
      %v1211 = vpop.permute.xlu0 %1210
      %1212 = vrot.lane.b32.xlu0 %v326, 56
      %v1213 = vpop.permute.xlu0 %1212
      %1214 = vrot.lane.b32.xlu0 %v327, 56
      %v1215 = vpop.permute.xlu0 %1214
      %1216 = vrot.lane.b32.xlu0 %v328, 56
      %v1217 = vpop.permute.xlu0 %1216
      %1234 = vmatpush.msra.mxu0 %v1217
      %1235 = vmatpush.msra.mxu0 %v1215
      %1236 = vmatpush.msra.mxu0 %v1213
      %1237 = vmatpush.msra.mxu0 %v1211
      %1238 = vmatpush.msra.mxu0 %v1209
      %1239 = vmatpush.msra.mxu0 %v1207
      %1240 = vmatpush.msra.mxu0 %v1205
      %1241 = vmatpush.msra.mxu0 %v1203
      %1242 = vmatpush.msra.mxu0 %v1201
      %1243 = vmatpush.msra.mxu0 %v1199
      %1244 = vmatpush.msra.mxu0 %v1197
      %1245 = vmatpush.msra.mxu0 %v1195
      %1246 = vmatpush.msra.mxu0 %v1193
      %1247 = vmatpush.msra.mxu0 %v1191
      %1248 = vmatpush.msra.mxu0 %v1189
      %1249 = vmatpush.msra.mxu0 %v1187
      %1250 = vmatmul.f32.gmra.mxu0 %v1170
      %v1251 = vpop.f32.mrf.mxu0
      %v1252 = vadd.f32 0.0, %v1251
      %1253 = vmatmul.f32.gmra.mxu0 %v1171
      %v1254 = vpop.f32.mrf.mxu0
      %v1255 = vadd.f32 0.0, %v1254
      %1256 = vmatmul.f32.gmra.mxu0 %v1172
      %v1257 = vpop.f32.mrf.mxu0
      %v1258 = vadd.f32 0.0, %v1257
      %1259 = vmatmul.f32.gmra.mxu0 %v1173
      %v1260 = vpop.f32.mrf.mxu0
      %v1261 = vadd.f32 0.0, %v1260
      %1262 = vmatmul.f32.gmra.mxu0 %v1174
      %v1263 = vpop.f32.mrf.mxu0
      %v1264 = vadd.f32 0.0, %v1263
      %1265 = vmatmul.f32.gmra.mxu0 %v1175
      %v1266 = vpop.f32.mrf.mxu0
      %v1267 = vadd.f32 0.0, %v1266
      %1268 = vmatmul.f32.gmra.mxu0 %v1176
      %v1269 = vpop.f32.mrf.mxu0
      %v1270 = vadd.f32 0.0, %v1269
      %1271 = vmatmul.f32.gmra.mxu0 %v1177
      %v1272 = vpop.f32.mrf.mxu0
      %v1273 = vadd.f32 0.0, %v1272
      %1274 = vmatmul.f32.gmra.mxu0 %v1178
      %v1275 = vpop.f32.mrf.mxu0
      %v1276 = vadd.f32 0.0, %v1275
      %1277 = vmatmul.f32.gmra.mxu0 %v1179
      %v1278 = vpop.f32.mrf.mxu0
      %v1279 = vadd.f32 0.0, %v1278
      %1280 = vmatmul.f32.gmra.mxu0 %v1180
      %v1281 = vpop.f32.mrf.mxu0
      %v1282 = vadd.f32 0.0, %v1281
      %1283 = vmatmul.f32.gmra.mxu0 %v1181
      %v1284 = vpop.f32.mrf.mxu0
      %v1285 = vadd.f32 0.0, %v1284
      %1286 = vmatmul.f32.gmra.mxu0 %v1182
      %v1287 = vpop.f32.mrf.mxu0
      %v1288 = vadd.f32 0.0, %v1287
      %1289 = vmatmul.f32.gmra.mxu0 %v1183
      %v1290 = vpop.f32.mrf.mxu0
      %v1291 = vadd.f32 0.0, %v1290
      %1292 = vmatmul.f32.gmra.mxu0 %v1184
      %v1293 = vpop.f32.mrf.mxu0
      %v1294 = vadd.f32 0.0, %v1293
      %1295 = vmatmul.f32.gmra.mxu0 %v1185
      %v1296 = vpop.f32.mrf.mxu0
      %v1297 = vadd.f32 0.0, %v1296
      %1298 = vdwg.mxu0
      %1299 = vrot.lane.b32.xlu0 %v313, 112
      %v1300 = vpop.permute.xlu0 %1299
      %1301 = vrot.lane.b32.xlu0 %v314, 112
      %v1302 = vpop.permute.xlu0 %1301
      %1303 = vrot.lane.b32.xlu0 %v315, 112
      %v1304 = vpop.permute.xlu0 %1303
      %1305 = vrot.lane.b32.xlu0 %v316, 112
      %v1306 = vpop.permute.xlu0 %1305
      %1307 = vrot.lane.b32.xlu0 %v317, 112
      %v1308 = vpop.permute.xlu0 %1307
      %1309 = vrot.lane.b32.xlu0 %v318, 112
      %v1310 = vpop.permute.xlu0 %1309
      %1311 = vrot.lane.b32.xlu0 %v319, 112
      %v1312 = vpop.permute.xlu0 %1311
      %1313 = vrot.lane.b32.xlu0 %v320, 112
      %v1314 = vpop.permute.xlu0 %1313
      %1315 = vrot.lane.b32.xlu0 %v321, 112
      %v1316 = vpop.permute.xlu0 %1315
      %1317 = vrot.lane.b32.xlu0 %v322, 112
      %v1318 = vpop.permute.xlu0 %1317
      %1319 = vrot.lane.b32.xlu0 %v323, 112
      %v1320 = vpop.permute.xlu0 %1319
      %1321 = vrot.lane.b32.xlu0 %v324, 112
      %v1322 = vpop.permute.xlu0 %1321
      %1323 = vrot.lane.b32.xlu0 %v325, 112
      %v1324 = vpop.permute.xlu0 %1323
      %1325 = vrot.lane.b32.xlu0 %v326, 112
      %v1326 = vpop.permute.xlu0 %1325
      %1327 = vrot.lane.b32.xlu0 %v327, 112
      %v1328 = vpop.permute.xlu0 %1327
      %1329 = vrot.lane.b32.xlu0 %v328, 112
      %v1330 = vpop.permute.xlu0 %1329
      %1331 = vrot.lane.b32.xlu0 %v313, 80
      %v1332 = vpop.permute.xlu0 %1331
      %1333 = vrot.lane.b32.xlu0 %v314, 80
      %v1334 = vpop.permute.xlu0 %1333
      %1335 = vrot.lane.b32.xlu0 %v315, 80
      %v1336 = vpop.permute.xlu0 %1335
      %1337 = vrot.lane.b32.xlu0 %v316, 80
      %v1338 = vpop.permute.xlu0 %1337
      %1339 = vrot.lane.b32.xlu0 %v317, 80
      %v1340 = vpop.permute.xlu0 %1339
      %1341 = vrot.lane.b32.xlu0 %v318, 80
      %v1342 = vpop.permute.xlu0 %1341
      %1343 = vrot.lane.b32.xlu0 %v319, 80
      %v1344 = vpop.permute.xlu0 %1343
      %1345 = vrot.lane.b32.xlu0 %v320, 80
      %v1346 = vpop.permute.xlu0 %1345
      %1347 = vrot.lane.b32.xlu0 %v321, 80
      %v1348 = vpop.permute.xlu0 %1347
      %1349 = vrot.lane.b32.xlu0 %v322, 80
      %v1350 = vpop.permute.xlu0 %1349
      %1351 = vrot.lane.b32.xlu0 %v323, 80
      %v1352 = vpop.permute.xlu0 %1351
      %1353 = vrot.lane.b32.xlu0 %v324, 80
      %v1354 = vpop.permute.xlu0 %1353
      %1355 = vrot.lane.b32.xlu0 %v325, 80
      %v1356 = vpop.permute.xlu0 %1355
      %1357 = vrot.lane.b32.xlu0 %v326, 80
      %v1358 = vpop.permute.xlu0 %1357
      %1359 = vrot.lane.b32.xlu0 %v327, 80
      %v1360 = vpop.permute.xlu0 %1359
      %1361 = vrot.lane.b32.xlu0 %v328, 80
      %v1362 = vpop.permute.xlu0 %1361
      %v1363 = vsel %vm394, %v1300, 0
      %v1365 = vsel %vm394, %v1302, 0
      %v1367 = vsel %vm394, %v1304, 0
      %v1369 = vsel %vm394, %v1306, 0
      %v1371 = vsel %vm394, %v1308, 0
      %v1373 = vsel %vm394, %v1310, 0
      %v1375 = vsel %vm394, %v1312, 0
      %v1377 = vsel %vm394, %v1314, 0
      %v1379 = vsel %vm394, %v1316, 0
      %v1381 = vsel %vm394, %v1318, 0
      %v1383 = vsel %vm394, %v1320, 0
      %v1385 = vsel %vm394, %v1322, 0
      %v1387 = vsel %vm394, %v1324, 0
      %v1389 = vsel %vm394, %v1326, 0
      %v1391 = vsel %vm394, %v1328, 0
      %v1393 = vsel %vm394, %v1330, 0
      %v1395 = vsel %vm394, %v1332, 0
      %v1397 = vsel %vm394, %v1334, 0
      %v1399 = vsel %vm394, %v1336, 0
      %v1401 = vsel %vm394, %v1338, 0
      %v1403 = vsel %vm394, %v1340, 0
      %v1405 = vsel %vm394, %v1342, 0
      %v1407 = vsel %vm394, %v1344, 0
      %v1409 = vsel %vm394, %v1346, 0
      %v1411 = vsel %vm394, %v1348, 0
      %v1413 = vsel %vm394, %v1350, 0
      %v1415 = vsel %vm394, %v1352, 0
      %v1417 = vsel %vm394, %v1354, 0
      %v1419 = vsel %vm394, %v1356, 0
      %v1421 = vsel %vm394, %v1358, 0
      %v1423 = vsel %vm394, %v1360, 0
      %v1425 = vsel %vm394, %v1362, 0
      %1427 = vmatpush.xpose.msra.mxu0 %v1425
      %1428 = vmatpush.xpose.msra.mxu0 %v1423
      %1429 = vmatpush.xpose.msra.mxu0 %v1421
      %1430 = vmatpush.xpose.msra.mxu0 %v1419
      %1431 = vmatpush.xpose.msra.mxu0 %v1417
      %1432 = vmatpush.xpose.msra.mxu0 %v1415
      %1433 = vmatpush.xpose.msra.mxu0 %v1413
      %1434 = vmatpush.xpose.msra.mxu0 %v1411
      %1435 = vmatpush.xpose.msra.mxu0 %v1409
      %1436 = vmatpush.xpose.msra.mxu0 %v1407
      %1437 = vmatpush.xpose.msra.mxu0 %v1405
      %1438 = vmatpush.xpose.msra.mxu0 %v1403
      %1439 = vmatpush.xpose.msra.mxu0 %v1401
      %1440 = vmatpush.xpose.msra.mxu0 %v1399
      %1441 = vmatpush.xpose.msra.mxu0 %v1397
      %1442 = vmatpush.xpose.msra.mxu0 %v1395
      %1443 = vmatmul.f32.gmra.mxu0 %v1363
      %v1444 = vpop.f32.mrf.mxu0
      %v1445 = vadd.f32 0.0, %v1444
      %1446 = vmatmul.f32.gmra.mxu0 %v1365
      %v1447 = vpop.f32.mrf.mxu0
      %v1448 = vadd.f32 0.0, %v1447
      %1449 = vmatmul.f32.gmra.mxu0 %v1367
      %v1450 = vpop.f32.mrf.mxu0
      %v1451 = vadd.f32 0.0, %v1450
      %1452 = vmatmul.f32.gmra.mxu0 %v1369
      %v1453 = vpop.f32.mrf.mxu0
      %v1454 = vadd.f32 0.0, %v1453
      %1455 = vmatmul.f32.gmra.mxu0 %v1371
      %v1456 = vpop.f32.mrf.mxu0
      %v1457 = vadd.f32 0.0, %v1456
      %1458 = vmatmul.f32.gmra.mxu0 %v1373
      %v1459 = vpop.f32.mrf.mxu0
      %v1460 = vadd.f32 0.0, %v1459
      %1461 = vmatmul.f32.gmra.mxu0 %v1375
      %v1462 = vpop.f32.mrf.mxu0
      %v1463 = vadd.f32 0.0, %v1462
      %1464 = vmatmul.f32.gmra.mxu0 %v1377
      %v1465 = vpop.f32.mrf.mxu0
      %v1466 = vadd.f32 0.0, %v1465
      %1467 = vmatmul.f32.gmra.mxu0 %v1379
      %v1468 = vpop.f32.mrf.mxu0
      %v1469 = vadd.f32 0.0, %v1468
      %1470 = vmatmul.f32.gmra.mxu0 %v1381
      %v1471 = vpop.f32.mrf.mxu0
      %v1472 = vadd.f32 0.0, %v1471
      %1473 = vmatmul.f32.gmra.mxu0 %v1383
      %v1474 = vpop.f32.mrf.mxu0
      %v1475 = vadd.f32 0.0, %v1474
      %1476 = vmatmul.f32.gmra.mxu0 %v1385
      %v1477 = vpop.f32.mrf.mxu0
      %v1478 = vadd.f32 0.0, %v1477
      %1479 = vmatmul.f32.gmra.mxu0 %v1387
      %v1480 = vpop.f32.mrf.mxu0
      %v1481 = vadd.f32 0.0, %v1480
      %1482 = vmatmul.f32.gmra.mxu0 %v1389
      %v1483 = vpop.f32.mrf.mxu0
      %v1484 = vadd.f32 0.0, %v1483
      %1485 = vmatmul.f32.gmra.mxu0 %v1391
      %v1486 = vpop.f32.mrf.mxu0
      %v1487 = vadd.f32 0.0, %v1486
      %1488 = vmatmul.f32.gmra.mxu0 %v1393
      %v1489 = vpop.f32.mrf.mxu0
      %v1490 = vadd.f32 0.0, %v1489
      %1491 = vdwg.mxu0
      %v1492 = vmul.f32 %v1445, 0.35355338
      %v1493 = vmul.f32 %v1448, 0.35355338
      %v1494 = vmul.f32 %v1451, 0.35355338
      %v1495 = vmul.f32 %v1454, 0.35355338
      %v1496 = vmul.f32 %v1457, 0.35355338
      %v1497 = vmul.f32 %v1460, 0.35355338
      %v1498 = vmul.f32 %v1463, 0.35355338
      %v1499 = vmul.f32 %v1466, 0.35355338
      %v1500 = vmul.f32 %v1469, 0.35355338
      %v1501 = vmul.f32 %v1472, 0.35355338
      %v1502 = vmul.f32 %v1475, 0.35355338
      %v1503 = vmul.f32 %v1478, 0.35355338
      %v1504 = vmul.f32 %v1481, 0.35355338
      %v1505 = vmul.f32 %v1484, 0.35355338
      %v1506 = vmul.f32 %v1487, 0.35355338
      %v1507 = vmul.f32 %v1490, 0.35355338
      %v1508 = vsel %vm543, %v1492, -1e+30
      %v1509 = vsel %vm543, %v1493, -1e+30
      %v1510 = vsel %vm543, %v1494, -1e+30
      %v1511 = vsel %vm543, %v1495, -1e+30
      %v1512 = vsel %vm543, %v1496, -1e+30
      %v1513 = vsel %vm543, %v1497, -1e+30
      %v1514 = vsel %vm543, %v1498, -1e+30
      %v1515 = vsel %vm543, %v1499, -1e+30
      %v1516 = vsel %vm543, %v1500, -1e+30
      %v1517 = vsel %vm543, %v1501, -1e+30
      %v1518 = vsel %vm543, %v1502, -1e+30
      %v1519 = vsel %vm543, %v1503, -1e+30
      %v1520 = vsel %vm543, %v1504, -1e+30
      %v1521 = vsel %vm543, %v1505, -1e+30
      %v1522 = vsel %vm543, %v1506, -1e+30
      %v1523 = vsel %vm543, %v1507, -1e+30
      %1524 = vmax.xlane.f32.xlu0 %v1508
      %v1525 = vpop.xlane.xlu0 %1524
      %1526 = vmax.xlane.f32.xlu0 %v1509
      %v1527 = vpop.xlane.xlu0 %1526
      %1528 = vmax.xlane.f32.xlu0 %v1510
      %v1529 = vpop.xlane.xlu0 %1528
      %1530 = vmax.xlane.f32.xlu0 %v1511
      %v1531 = vpop.xlane.xlu0 %1530
      %1532 = vmax.xlane.f32.xlu0 %v1512
      %v1533 = vpop.xlane.xlu0 %1532
      %1534 = vmax.xlane.f32.xlu0 %v1513
      %v1535 = vpop.xlane.xlu0 %1534
      %1536 = vmax.xlane.f32.xlu0 %v1514
      %v1537 = vpop.xlane.xlu0 %1536
      %1538 = vmax.xlane.f32.xlu0 %v1515
      %v1539 = vpop.xlane.xlu0 %1538
      %1540 = vmax.xlane.f32.xlu0 %v1516
      %v1541 = vpop.xlane.xlu0 %1540
      %1542 = vmax.xlane.f32.xlu0 %v1517
      %v1543 = vpop.xlane.xlu0 %1542
      %1544 = vmax.xlane.f32.xlu0 %v1518
      %v1545 = vpop.xlane.xlu0 %1544
      %1546 = vmax.xlane.f32.xlu0 %v1519
      %v1547 = vpop.xlane.xlu0 %1546
      %1548 = vmax.xlane.f32.xlu0 %v1520
      %v1549 = vpop.xlane.xlu0 %1548
      %1550 = vmax.xlane.f32.xlu0 %v1521
      %v1551 = vpop.xlane.xlu0 %1550
      %1552 = vmax.xlane.f32.xlu0 %v1522
      %v1553 = vpop.xlane.xlu0 %1552
      %1554 = vmax.xlane.f32.xlu0 %v1523
      %v1555 = vpop.xlane.xlu0 %1554
      %v1556 = vsub.f32 %v1508, %v1525
      %v1557 = vsub.f32 %v1509, %v1527
      %v1558 = vsub.f32 %v1510, %v1529
      %v1559 = vsub.f32 %v1511, %v1531
      %v1560 = vsub.f32 %v1512, %v1533
      %v1561 = vsub.f32 %v1513, %v1535
      %v1562 = vsub.f32 %v1514, %v1537
      %v1563 = vsub.f32 %v1515, %v1539
      %v1564 = vsub.f32 %v1516, %v1541
      %v1565 = vsub.f32 %v1517, %v1543
      %v1566 = vsub.f32 %v1518, %v1545
      %v1567 = vsub.f32 %v1519, %v1547
      %v1568 = vsub.f32 %v1520, %v1549
      %v1569 = vsub.f32 %v1521, %v1551
      %v1570 = vsub.f32 %v1522, %v1553
      %v1571 = vsub.f32 %v1523, %v1555
      %v1572 = vmul.f32 %v1556, 1.442695
      %v1573 = vpow.pop %v1572
      %v1574 = vmul.f32 %v1557, 1.442695
      %v1575 = vpow.pop %v1574
      %v1576 = vmul.f32 %v1558, 1.442695
      %v1577 = vpow.pop %v1576
      %v1578 = vmul.f32 %v1559, 1.442695
      %v1579 = vpow.pop %v1578
      %v1580 = vmul.f32 %v1560, 1.442695
      %v1581 = vpow.pop %v1580
      %v1582 = vmul.f32 %v1561, 1.442695
      %v1583 = vpow.pop %v1582
      %v1584 = vmul.f32 %v1562, 1.442695
      %v1585 = vpow.pop %v1584
      %v1586 = vmul.f32 %v1563, 1.442695
      %v1587 = vpow.pop %v1586
      %v1588 = vmul.f32 %v1564, 1.442695
      %v1589 = vpow.pop %v1588
      %v1590 = vmul.f32 %v1565, 1.442695
      %v1591 = vpow.pop %v1590
      %v1592 = vmul.f32 %v1566, 1.442695
      %v1593 = vpow.pop %v1592
      %v1594 = vmul.f32 %v1567, 1.442695
      %v1595 = vpow.pop %v1594
      %v1596 = vmul.f32 %v1568, 1.442695
      %v1597 = vpow.pop %v1596
      %v1598 = vmul.f32 %v1569, 1.442695
      %v1599 = vpow.pop %v1598
      %v1600 = vmul.f32 %v1570, 1.442695
      %v1601 = vpow.pop %v1600
      %v1602 = vmul.f32 %v1571, 1.442695
      %v1603 = vpow.pop %v1602
      %1604 = vadd.xlane.f32.xlu0 %v1573
      %v1605 = vpop.xlane.xlu0 %1604
      %1606 = vadd.xlane.f32.xlu0 %v1575
      %v1607 = vpop.xlane.xlu0 %1606
      %1608 = vadd.xlane.f32.xlu0 %v1577
      %v1609 = vpop.xlane.xlu0 %1608
      %1610 = vadd.xlane.f32.xlu0 %v1579
      %v1611 = vpop.xlane.xlu0 %1610
      %1612 = vadd.xlane.f32.xlu0 %v1581
      %v1613 = vpop.xlane.xlu0 %1612
      %1614 = vadd.xlane.f32.xlu0 %v1583
      %v1615 = vpop.xlane.xlu0 %1614
      %1616 = vadd.xlane.f32.xlu0 %v1585
      %v1617 = vpop.xlane.xlu0 %1616
      %1618 = vadd.xlane.f32.xlu0 %v1587
      %v1619 = vpop.xlane.xlu0 %1618
      %1620 = vadd.xlane.f32.xlu0 %v1589
      %v1621 = vpop.xlane.xlu0 %1620
      %1622 = vadd.xlane.f32.xlu0 %v1591
      %v1623 = vpop.xlane.xlu0 %1622
      %1624 = vadd.xlane.f32.xlu0 %v1593
      %v1625 = vpop.xlane.xlu0 %1624
      %1626 = vadd.xlane.f32.xlu0 %v1595
      %v1627 = vpop.xlane.xlu0 %1626
      %1628 = vadd.xlane.f32.xlu0 %v1597
      %v1629 = vpop.xlane.xlu0 %1628
      %1630 = vadd.xlane.f32.xlu0 %v1599
      %v1631 = vpop.xlane.xlu0 %1630
      %1632 = vadd.xlane.f32.xlu0 %v1601
      %v1633 = vpop.xlane.xlu0 %1632
      %1634 = vadd.xlane.f32.xlu0 %v1603
      %v1635 = vpop.xlane.xlu0 %1634
      %v1636 = vrcp.pop %v1605
      %v1637 = vrcp.pop %v1607
      %v1638 = vrcp.pop %v1609
      %v1639 = vrcp.pop %v1611
      %v1640 = vrcp.pop %v1613
      %v1641 = vrcp.pop %v1615
      %v1642 = vrcp.pop %v1617
      %v1643 = vrcp.pop %v1619
      %v1644 = vrcp.pop %v1621
      %v1645 = vrcp.pop %v1623
      %v1646 = vrcp.pop %v1625
      %v1647 = vrcp.pop %v1627
      %v1648 = vrcp.pop %v1629
      %v1649 = vrcp.pop %v1631
      %v1650 = vrcp.pop %v1633
      %v1651 = vrcp.pop %v1635
      %v1652 = vmul.f32 %v1573, %v1636
      %v1653 = vmul.f32 %v1575, %v1637
      %v1654 = vmul.f32 %v1577, %v1638
      %v1655 = vmul.f32 %v1579, %v1639
      %v1656 = vmul.f32 %v1581, %v1640
      %v1657 = vmul.f32 %v1583, %v1641
      %v1658 = vmul.f32 %v1585, %v1642
      %v1659 = vmul.f32 %v1587, %v1643
      %v1660 = vmul.f32 %v1589, %v1644
      %v1661 = vmul.f32 %v1591, %v1645
      %v1662 = vmul.f32 %v1593, %v1646
      %v1663 = vmul.f32 %v1595, %v1647
      %v1664 = vmul.f32 %v1597, %v1648
      %v1665 = vmul.f32 %v1599, %v1649
      %v1666 = vmul.f32 %v1601, %v1650
      %v1667 = vmul.f32 %v1603, %v1651
      %1668 = vrot.lane.b32.xlu0 %v313, 48
      %v1669 = vpop.permute.xlu0 %1668
      %1670 = vrot.lane.b32.xlu0 %v314, 48
      %v1671 = vpop.permute.xlu0 %1670
      %1672 = vrot.lane.b32.xlu0 %v315, 48
      %v1673 = vpop.permute.xlu0 %1672
      %1674 = vrot.lane.b32.xlu0 %v316, 48
      %v1675 = vpop.permute.xlu0 %1674
      %1676 = vrot.lane.b32.xlu0 %v317, 48
      %v1677 = vpop.permute.xlu0 %1676
      %1678 = vrot.lane.b32.xlu0 %v318, 48
      %v1679 = vpop.permute.xlu0 %1678
      %1680 = vrot.lane.b32.xlu0 %v319, 48
      %v1681 = vpop.permute.xlu0 %1680
      %1682 = vrot.lane.b32.xlu0 %v320, 48
      %v1683 = vpop.permute.xlu0 %1682
      %1684 = vrot.lane.b32.xlu0 %v321, 48
      %v1685 = vpop.permute.xlu0 %1684
      %1686 = vrot.lane.b32.xlu0 %v322, 48
      %v1687 = vpop.permute.xlu0 %1686
      %1688 = vrot.lane.b32.xlu0 %v323, 48
      %v1689 = vpop.permute.xlu0 %1688
      %1690 = vrot.lane.b32.xlu0 %v324, 48
      %v1691 = vpop.permute.xlu0 %1690
      %1692 = vrot.lane.b32.xlu0 %v325, 48
      %v1693 = vpop.permute.xlu0 %1692
      %1694 = vrot.lane.b32.xlu0 %v326, 48
      %v1695 = vpop.permute.xlu0 %1694
      %1696 = vrot.lane.b32.xlu0 %v327, 48
      %v1697 = vpop.permute.xlu0 %1696
      %1698 = vrot.lane.b32.xlu0 %v328, 48
      %v1699 = vpop.permute.xlu0 %1698
      %1716 = vmatpush.msra.mxu0 %v1699
      %1717 = vmatpush.msra.mxu0 %v1697
      %1718 = vmatpush.msra.mxu0 %v1695
      %1719 = vmatpush.msra.mxu0 %v1693
      %1720 = vmatpush.msra.mxu0 %v1691
      %1721 = vmatpush.msra.mxu0 %v1689
      %1722 = vmatpush.msra.mxu0 %v1687
      %1723 = vmatpush.msra.mxu0 %v1685
      %1724 = vmatpush.msra.mxu0 %v1683
      %1725 = vmatpush.msra.mxu0 %v1681
      %1726 = vmatpush.msra.mxu0 %v1679
      %1727 = vmatpush.msra.mxu0 %v1677
      %1728 = vmatpush.msra.mxu0 %v1675
      %1729 = vmatpush.msra.mxu0 %v1673
      %1730 = vmatpush.msra.mxu0 %v1671
      %1731 = vmatpush.msra.mxu0 %v1669
      %1732 = vmatmul.f32.gmra.mxu0 %v1652
      %v1733 = vpop.f32.mrf.mxu0
      %v1734 = vadd.f32 0.0, %v1733
      %1735 = vmatmul.f32.gmra.mxu0 %v1653
      %v1736 = vpop.f32.mrf.mxu0
      %v1737 = vadd.f32 0.0, %v1736
      %1738 = vmatmul.f32.gmra.mxu0 %v1654
      %v1739 = vpop.f32.mrf.mxu0
      %v1740 = vadd.f32 0.0, %v1739
      %1741 = vmatmul.f32.gmra.mxu0 %v1655
      %v1742 = vpop.f32.mrf.mxu0
      %v1743 = vadd.f32 0.0, %v1742
      %1744 = vmatmul.f32.gmra.mxu0 %v1656
      %v1745 = vpop.f32.mrf.mxu0
      %v1746 = vadd.f32 0.0, %v1745
      %1747 = vmatmul.f32.gmra.mxu0 %v1657
      %v1748 = vpop.f32.mrf.mxu0
      %v1749 = vadd.f32 0.0, %v1748
      %1750 = vmatmul.f32.gmra.mxu0 %v1658
      %v1751 = vpop.f32.mrf.mxu0
      %v1752 = vadd.f32 0.0, %v1751
      %1753 = vmatmul.f32.gmra.mxu0 %v1659
      %v1754 = vpop.f32.mrf.mxu0
      %v1755 = vadd.f32 0.0, %v1754
      %1756 = vmatmul.f32.gmra.mxu0 %v1660
      %v1757 = vpop.f32.mrf.mxu0
      %v1758 = vadd.f32 0.0, %v1757
      %1759 = vmatmul.f32.gmra.mxu0 %v1661
      %v1760 = vpop.f32.mrf.mxu0
      %v1761 = vadd.f32 0.0, %v1760
      %1762 = vmatmul.f32.gmra.mxu0 %v1662
      %v1763 = vpop.f32.mrf.mxu0
      %v1764 = vadd.f32 0.0, %v1763
      %1765 = vmatmul.f32.gmra.mxu0 %v1663
      %v1766 = vpop.f32.mrf.mxu0
      %v1767 = vadd.f32 0.0, %v1766
      %1768 = vmatmul.f32.gmra.mxu0 %v1664
      %v1769 = vpop.f32.mrf.mxu0
      %v1770 = vadd.f32 0.0, %v1769
      %1771 = vmatmul.f32.gmra.mxu0 %v1665
      %v1772 = vpop.f32.mrf.mxu0
      %v1773 = vadd.f32 0.0, %v1772
      %1774 = vmatmul.f32.gmra.mxu0 %v1666
      %v1775 = vpop.f32.mrf.mxu0
      %v1776 = vadd.f32 0.0, %v1775
      %1777 = vmatmul.f32.gmra.mxu0 %v1667
      %v1778 = vpop.f32.mrf.mxu0
      %v1779 = vadd.f32 0.0, %v1778
      %1780 = vdwg.mxu0
      %1781 = vrot.lane.b32.xlu0 %v313, 104
      %v1782 = vpop.permute.xlu0 %1781
      %1783 = vrot.lane.b32.xlu0 %v314, 104
      %v1784 = vpop.permute.xlu0 %1783
      %1785 = vrot.lane.b32.xlu0 %v315, 104
      %v1786 = vpop.permute.xlu0 %1785
      %1787 = vrot.lane.b32.xlu0 %v316, 104
      %v1788 = vpop.permute.xlu0 %1787
      %1789 = vrot.lane.b32.xlu0 %v317, 104
      %v1790 = vpop.permute.xlu0 %1789
      %1791 = vrot.lane.b32.xlu0 %v318, 104
      %v1792 = vpop.permute.xlu0 %1791
      %1793 = vrot.lane.b32.xlu0 %v319, 104
      %v1794 = vpop.permute.xlu0 %1793
      %1795 = vrot.lane.b32.xlu0 %v320, 104
      %v1796 = vpop.permute.xlu0 %1795
      %1797 = vrot.lane.b32.xlu0 %v321, 104
      %v1798 = vpop.permute.xlu0 %1797
      %1799 = vrot.lane.b32.xlu0 %v322, 104
      %v1800 = vpop.permute.xlu0 %1799
      %1801 = vrot.lane.b32.xlu0 %v323, 104
      %v1802 = vpop.permute.xlu0 %1801
      %1803 = vrot.lane.b32.xlu0 %v324, 104
      %v1804 = vpop.permute.xlu0 %1803
      %1805 = vrot.lane.b32.xlu0 %v325, 104
      %v1806 = vpop.permute.xlu0 %1805
      %1807 = vrot.lane.b32.xlu0 %v326, 104
      %v1808 = vpop.permute.xlu0 %1807
      %1809 = vrot.lane.b32.xlu0 %v327, 104
      %v1810 = vpop.permute.xlu0 %1809
      %1811 = vrot.lane.b32.xlu0 %v328, 104
      %v1812 = vpop.permute.xlu0 %1811
      %1813 = vrot.lane.b32.xlu0 %v313, 72
      %v1814 = vpop.permute.xlu0 %1813
      %1815 = vrot.lane.b32.xlu0 %v314, 72
      %v1816 = vpop.permute.xlu0 %1815
      %1817 = vrot.lane.b32.xlu0 %v315, 72
      %v1818 = vpop.permute.xlu0 %1817
      %1819 = vrot.lane.b32.xlu0 %v316, 72
      %v1820 = vpop.permute.xlu0 %1819
      %1821 = vrot.lane.b32.xlu0 %v317, 72
      %v1822 = vpop.permute.xlu0 %1821
      %1823 = vrot.lane.b32.xlu0 %v318, 72
      %v1824 = vpop.permute.xlu0 %1823
      %1825 = vrot.lane.b32.xlu0 %v319, 72
      %v1826 = vpop.permute.xlu0 %1825
      %1827 = vrot.lane.b32.xlu0 %v320, 72
      %v1828 = vpop.permute.xlu0 %1827
      %1829 = vrot.lane.b32.xlu0 %v321, 72
      %v1830 = vpop.permute.xlu0 %1829
      %1831 = vrot.lane.b32.xlu0 %v322, 72
      %v1832 = vpop.permute.xlu0 %1831
      %1833 = vrot.lane.b32.xlu0 %v323, 72
      %v1834 = vpop.permute.xlu0 %1833
      %1835 = vrot.lane.b32.xlu0 %v324, 72
      %v1836 = vpop.permute.xlu0 %1835
      %1837 = vrot.lane.b32.xlu0 %v325, 72
      %v1838 = vpop.permute.xlu0 %1837
      %1839 = vrot.lane.b32.xlu0 %v326, 72
      %v1840 = vpop.permute.xlu0 %1839
      %1841 = vrot.lane.b32.xlu0 %v327, 72
      %v1842 = vpop.permute.xlu0 %1841
      %1843 = vrot.lane.b32.xlu0 %v328, 72
      %v1844 = vpop.permute.xlu0 %1843
      %v1845 = vsel %vm394, %v1782, 0
      %v1847 = vsel %vm394, %v1784, 0
      %v1849 = vsel %vm394, %v1786, 0
      %v1851 = vsel %vm394, %v1788, 0
      %v1853 = vsel %vm394, %v1790, 0
      %v1855 = vsel %vm394, %v1792, 0
      %v1857 = vsel %vm394, %v1794, 0
      %v1859 = vsel %vm394, %v1796, 0
      %v1861 = vsel %vm394, %v1798, 0
      %v1863 = vsel %vm394, %v1800, 0
      %v1865 = vsel %vm394, %v1802, 0
      %v1867 = vsel %vm394, %v1804, 0
      %v1869 = vsel %vm394, %v1806, 0
      %v1871 = vsel %vm394, %v1808, 0
      %v1873 = vsel %vm394, %v1810, 0
      %v1875 = vsel %vm394, %v1812, 0
      %v1877 = vsel %vm394, %v1814, 0
      %v1879 = vsel %vm394, %v1816, 0
      %v1881 = vsel %vm394, %v1818, 0
      %v1883 = vsel %vm394, %v1820, 0
      %v1885 = vsel %vm394, %v1822, 0
      %v1887 = vsel %vm394, %v1824, 0
      %v1889 = vsel %vm394, %v1826, 0
      %v1891 = vsel %vm394, %v1828, 0
      %v1893 = vsel %vm394, %v1830, 0
      %v1895 = vsel %vm394, %v1832, 0
      %v1897 = vsel %vm394, %v1834, 0
      %v1899 = vsel %vm394, %v1836, 0
      %v1901 = vsel %vm394, %v1838, 0
      %v1903 = vsel %vm394, %v1840, 0
      %v1905 = vsel %vm394, %v1842, 0
      %v1907 = vsel %vm394, %v1844, 0
      %1909 = vmatpush.xpose.msra.mxu0 %v1907
      %1910 = vmatpush.xpose.msra.mxu0 %v1905
      %1911 = vmatpush.xpose.msra.mxu0 %v1903
      %1912 = vmatpush.xpose.msra.mxu0 %v1901
      %1913 = vmatpush.xpose.msra.mxu0 %v1899
      %1914 = vmatpush.xpose.msra.mxu0 %v1897
      %1915 = vmatpush.xpose.msra.mxu0 %v1895
      %1916 = vmatpush.xpose.msra.mxu0 %v1893
      %1917 = vmatpush.xpose.msra.mxu0 %v1891
      %1918 = vmatpush.xpose.msra.mxu0 %v1889
      %1919 = vmatpush.xpose.msra.mxu0 %v1887
      %1920 = vmatpush.xpose.msra.mxu0 %v1885
      %1921 = vmatpush.xpose.msra.mxu0 %v1883
      %1922 = vmatpush.xpose.msra.mxu0 %v1881
      %1923 = vmatpush.xpose.msra.mxu0 %v1879
      %1924 = vmatpush.xpose.msra.mxu0 %v1877
      %1925 = vmatmul.f32.gmra.mxu0 %v1845
      %v1926 = vpop.f32.mrf.mxu0
      %v1927 = vadd.f32 0.0, %v1926
      %1928 = vmatmul.f32.gmra.mxu0 %v1847
      %v1929 = vpop.f32.mrf.mxu0
      %v1930 = vadd.f32 0.0, %v1929
      %1931 = vmatmul.f32.gmra.mxu0 %v1849
      %v1932 = vpop.f32.mrf.mxu0
      %v1933 = vadd.f32 0.0, %v1932
      %1934 = vmatmul.f32.gmra.mxu0 %v1851
      %v1935 = vpop.f32.mrf.mxu0
      %v1936 = vadd.f32 0.0, %v1935
      %1937 = vmatmul.f32.gmra.mxu0 %v1853
      %v1938 = vpop.f32.mrf.mxu0
      %v1939 = vadd.f32 0.0, %v1938
      %1940 = vmatmul.f32.gmra.mxu0 %v1855
      %v1941 = vpop.f32.mrf.mxu0
      %v1942 = vadd.f32 0.0, %v1941
      %1943 = vmatmul.f32.gmra.mxu0 %v1857
      %v1944 = vpop.f32.mrf.mxu0
      %v1945 = vadd.f32 0.0, %v1944
      %1946 = vmatmul.f32.gmra.mxu0 %v1859
      %v1947 = vpop.f32.mrf.mxu0
      %v1948 = vadd.f32 0.0, %v1947
      %1949 = vmatmul.f32.gmra.mxu0 %v1861
      %v1950 = vpop.f32.mrf.mxu0
      %v1951 = vadd.f32 0.0, %v1950
      %1952 = vmatmul.f32.gmra.mxu0 %v1863
      %v1953 = vpop.f32.mrf.mxu0
      %v1954 = vadd.f32 0.0, %v1953
      %1955 = vmatmul.f32.gmra.mxu0 %v1865
      %v1956 = vpop.f32.mrf.mxu0
      %v1957 = vadd.f32 0.0, %v1956
      %1958 = vmatmul.f32.gmra.mxu0 %v1867
      %v1959 = vpop.f32.mrf.mxu0
      %v1960 = vadd.f32 0.0, %v1959
      %1961 = vmatmul.f32.gmra.mxu0 %v1869
      %v1962 = vpop.f32.mrf.mxu0
      %v1963 = vadd.f32 0.0, %v1962
      %1964 = vmatmul.f32.gmra.mxu0 %v1871
      %v1965 = vpop.f32.mrf.mxu0
      %v1966 = vadd.f32 0.0, %v1965
      %1967 = vmatmul.f32.gmra.mxu0 %v1873
      %v1968 = vpop.f32.mrf.mxu0
      %v1969 = vadd.f32 0.0, %v1968
      %1970 = vmatmul.f32.gmra.mxu0 %v1875
      %v1971 = vpop.f32.mrf.mxu0
      %v1972 = vadd.f32 0.0, %v1971
      %1973 = vdwg.mxu0
      %v1974 = vmul.f32 %v1927, 0.35355338
      %v1975 = vmul.f32 %v1930, 0.35355338
      %v1976 = vmul.f32 %v1933, 0.35355338
      %v1977 = vmul.f32 %v1936, 0.35355338
      %v1978 = vmul.f32 %v1939, 0.35355338
      %v1979 = vmul.f32 %v1942, 0.35355338
      %v1980 = vmul.f32 %v1945, 0.35355338
      %v1981 = vmul.f32 %v1948, 0.35355338
      %v1982 = vmul.f32 %v1951, 0.35355338
      %v1983 = vmul.f32 %v1954, 0.35355338
      %v1984 = vmul.f32 %v1957, 0.35355338
      %v1985 = vmul.f32 %v1960, 0.35355338
      %v1986 = vmul.f32 %v1963, 0.35355338
      %v1987 = vmul.f32 %v1966, 0.35355338
      %v1988 = vmul.f32 %v1969, 0.35355338
      %v1989 = vmul.f32 %v1972, 0.35355338
      %v1990 = vsel %vm543, %v1974, -1e+30
      %v1991 = vsel %vm543, %v1975, -1e+30
      %v1992 = vsel %vm543, %v1976, -1e+30
      %v1993 = vsel %vm543, %v1977, -1e+30
      %v1994 = vsel %vm543, %v1978, -1e+30
      %v1995 = vsel %vm543, %v1979, -1e+30
      %v1996 = vsel %vm543, %v1980, -1e+30
      %v1997 = vsel %vm543, %v1981, -1e+30
      %v1998 = vsel %vm543, %v1982, -1e+30
      %v1999 = vsel %vm543, %v1983, -1e+30
      %v2000 = vsel %vm543, %v1984, -1e+30
      %v2001 = vsel %vm543, %v1985, -1e+30
      %v2002 = vsel %vm543, %v1986, -1e+30
      %v2003 = vsel %vm543, %v1987, -1e+30
      %v2004 = vsel %vm543, %v1988, -1e+30
      %v2005 = vsel %vm543, %v1989, -1e+30
      %2006 = vmax.xlane.f32.xlu0 %v1990
      %v2007 = vpop.xlane.xlu0 %2006
      %2008 = vmax.xlane.f32.xlu0 %v1991
      %v2009 = vpop.xlane.xlu0 %2008
      %2010 = vmax.xlane.f32.xlu0 %v1992
      %v2011 = vpop.xlane.xlu0 %2010
      %2012 = vmax.xlane.f32.xlu0 %v1993
      %v2013 = vpop.xlane.xlu0 %2012
      %2014 = vmax.xlane.f32.xlu0 %v1994
      %v2015 = vpop.xlane.xlu0 %2014
      %2016 = vmax.xlane.f32.xlu0 %v1995
      %v2017 = vpop.xlane.xlu0 %2016
      %2018 = vmax.xlane.f32.xlu0 %v1996
      %v2019 = vpop.xlane.xlu0 %2018
      %2020 = vmax.xlane.f32.xlu0 %v1997
      %v2021 = vpop.xlane.xlu0 %2020
      %2022 = vmax.xlane.f32.xlu0 %v1998
      %v2023 = vpop.xlane.xlu0 %2022
      %2024 = vmax.xlane.f32.xlu0 %v1999
      %v2025 = vpop.xlane.xlu0 %2024
      %2026 = vmax.xlane.f32.xlu0 %v2000
      %v2027 = vpop.xlane.xlu0 %2026
      %2028 = vmax.xlane.f32.xlu0 %v2001
      %v2029 = vpop.xlane.xlu0 %2028
      %2030 = vmax.xlane.f32.xlu0 %v2002
      %v2031 = vpop.xlane.xlu0 %2030
      %2032 = vmax.xlane.f32.xlu0 %v2003
      %v2033 = vpop.xlane.xlu0 %2032
      %2034 = vmax.xlane.f32.xlu0 %v2004
      %v2035 = vpop.xlane.xlu0 %2034
      %2036 = vmax.xlane.f32.xlu0 %v2005
      %v2037 = vpop.xlane.xlu0 %2036
      %v2038 = vsub.f32 %v1990, %v2007
      %v2039 = vsub.f32 %v1991, %v2009
      %v2040 = vsub.f32 %v1992, %v2011
      %v2041 = vsub.f32 %v1993, %v2013
      %v2042 = vsub.f32 %v1994, %v2015
      %v2043 = vsub.f32 %v1995, %v2017
      %v2044 = vsub.f32 %v1996, %v2019
      %v2045 = vsub.f32 %v1997, %v2021
      %v2046 = vsub.f32 %v1998, %v2023
      %v2047 = vsub.f32 %v1999, %v2025
      %v2048 = vsub.f32 %v2000, %v2027
      %v2049 = vsub.f32 %v2001, %v2029
      %v2050 = vsub.f32 %v2002, %v2031
      %v2051 = vsub.f32 %v2003, %v2033
      %v2052 = vsub.f32 %v2004, %v2035
      %v2053 = vsub.f32 %v2005, %v2037
      %v2054 = vmul.f32 %v2038, 1.442695
      %v2055 = vpow.pop %v2054
      %v2056 = vmul.f32 %v2039, 1.442695
      %v2057 = vpow.pop %v2056
      %v2058 = vmul.f32 %v2040, 1.442695
      %v2059 = vpow.pop %v2058
      %v2060 = vmul.f32 %v2041, 1.442695
      %v2061 = vpow.pop %v2060
      %v2062 = vmul.f32 %v2042, 1.442695
      %v2063 = vpow.pop %v2062
      %v2064 = vmul.f32 %v2043, 1.442695
      %v2065 = vpow.pop %v2064
      %v2066 = vmul.f32 %v2044, 1.442695
      %v2067 = vpow.pop %v2066
      %v2068 = vmul.f32 %v2045, 1.442695
      %v2069 = vpow.pop %v2068
      %v2070 = vmul.f32 %v2046, 1.442695
      %v2071 = vpow.pop %v2070
      %v2072 = vmul.f32 %v2047, 1.442695
      %v2073 = vpow.pop %v2072
      %v2074 = vmul.f32 %v2048, 1.442695
      %v2075 = vpow.pop %v2074
      %v2076 = vmul.f32 %v2049, 1.442695
      %v2077 = vpow.pop %v2076
      %v2078 = vmul.f32 %v2050, 1.442695
      %v2079 = vpow.pop %v2078
      %v2080 = vmul.f32 %v2051, 1.442695
      %v2081 = vpow.pop %v2080
      %v2082 = vmul.f32 %v2052, 1.442695
      %v2083 = vpow.pop %v2082
      %v2084 = vmul.f32 %v2053, 1.442695
      %v2085 = vpow.pop %v2084
      %2086 = vadd.xlane.f32.xlu0 %v2055
      %v2087 = vpop.xlane.xlu0 %2086
      %2088 = vadd.xlane.f32.xlu0 %v2057
      %v2089 = vpop.xlane.xlu0 %2088
      %2090 = vadd.xlane.f32.xlu0 %v2059
      %v2091 = vpop.xlane.xlu0 %2090
      %2092 = vadd.xlane.f32.xlu0 %v2061
      %v2093 = vpop.xlane.xlu0 %2092
      %2094 = vadd.xlane.f32.xlu0 %v2063
      %v2095 = vpop.xlane.xlu0 %2094
      %2096 = vadd.xlane.f32.xlu0 %v2065
      %v2097 = vpop.xlane.xlu0 %2096
      %2098 = vadd.xlane.f32.xlu0 %v2067
      %v2099 = vpop.xlane.xlu0 %2098
      %2100 = vadd.xlane.f32.xlu0 %v2069
      %v2101 = vpop.xlane.xlu0 %2100
      %2102 = vadd.xlane.f32.xlu0 %v2071
      %v2103 = vpop.xlane.xlu0 %2102
      %2104 = vadd.xlane.f32.xlu0 %v2073
      %v2105 = vpop.xlane.xlu0 %2104
      %2106 = vadd.xlane.f32.xlu0 %v2075
      %v2107 = vpop.xlane.xlu0 %2106
      %2108 = vadd.xlane.f32.xlu0 %v2077
      %v2109 = vpop.xlane.xlu0 %2108
      %2110 = vadd.xlane.f32.xlu0 %v2079
      %v2111 = vpop.xlane.xlu0 %2110
      %2112 = vadd.xlane.f32.xlu0 %v2081
      %v2113 = vpop.xlane.xlu0 %2112
      %2114 = vadd.xlane.f32.xlu0 %v2083
      %v2115 = vpop.xlane.xlu0 %2114
      %2116 = vadd.xlane.f32.xlu0 %v2085
      %v2117 = vpop.xlane.xlu0 %2116
      %v2118 = vrcp.pop %v2087
      %v2119 = vrcp.pop %v2089
      %v2120 = vrcp.pop %v2091
      %v2121 = vrcp.pop %v2093
      %v2122 = vrcp.pop %v2095
      %v2123 = vrcp.pop %v2097
      %v2124 = vrcp.pop %v2099
      %v2125 = vrcp.pop %v2101
      %v2126 = vrcp.pop %v2103
      %v2127 = vrcp.pop %v2105
      %v2128 = vrcp.pop %v2107
      %v2129 = vrcp.pop %v2109
      %v2130 = vrcp.pop %v2111
      %v2131 = vrcp.pop %v2113
      %v2132 = vrcp.pop %v2115
      %v2133 = vrcp.pop %v2117
      %v2134 = vmul.f32 %v2055, %v2118
      %v2135 = vmul.f32 %v2057, %v2119
      %v2136 = vmul.f32 %v2059, %v2120
      %v2137 = vmul.f32 %v2061, %v2121
      %v2138 = vmul.f32 %v2063, %v2122
      %v2139 = vmul.f32 %v2065, %v2123
      %v2140 = vmul.f32 %v2067, %v2124
      %v2141 = vmul.f32 %v2069, %v2125
      %v2142 = vmul.f32 %v2071, %v2126
      %v2143 = vmul.f32 %v2073, %v2127
      %v2144 = vmul.f32 %v2075, %v2128
      %v2145 = vmul.f32 %v2077, %v2129
      %v2146 = vmul.f32 %v2079, %v2130
      %v2147 = vmul.f32 %v2081, %v2131
      %v2148 = vmul.f32 %v2083, %v2132
      %v2149 = vmul.f32 %v2085, %v2133
      %2150 = vrot.lane.b32.xlu0 %v313, 40
      %v2151 = vpop.permute.xlu0 %2150
      %2152 = vrot.lane.b32.xlu0 %v314, 40
      %v2153 = vpop.permute.xlu0 %2152
      %2154 = vrot.lane.b32.xlu0 %v315, 40
      %v2155 = vpop.permute.xlu0 %2154
      %2156 = vrot.lane.b32.xlu0 %v316, 40
      %v2157 = vpop.permute.xlu0 %2156
      %2158 = vrot.lane.b32.xlu0 %v317, 40
      %v2159 = vpop.permute.xlu0 %2158
      %2160 = vrot.lane.b32.xlu0 %v318, 40
      %v2161 = vpop.permute.xlu0 %2160
      %2162 = vrot.lane.b32.xlu0 %v319, 40
      %v2163 = vpop.permute.xlu0 %2162
      %2164 = vrot.lane.b32.xlu0 %v320, 40
      %v2165 = vpop.permute.xlu0 %2164
      %2166 = vrot.lane.b32.xlu0 %v321, 40
      %v2167 = vpop.permute.xlu0 %2166
      %2168 = vrot.lane.b32.xlu0 %v322, 40
      %v2169 = vpop.permute.xlu0 %2168
      %2170 = vrot.lane.b32.xlu0 %v323, 40
      %v2171 = vpop.permute.xlu0 %2170
      %2172 = vrot.lane.b32.xlu0 %v324, 40
      %v2173 = vpop.permute.xlu0 %2172
      %2174 = vrot.lane.b32.xlu0 %v325, 40
      %v2175 = vpop.permute.xlu0 %2174
      %2176 = vrot.lane.b32.xlu0 %v326, 40
      %v2177 = vpop.permute.xlu0 %2176
      %2178 = vrot.lane.b32.xlu0 %v327, 40
      %v2179 = vpop.permute.xlu0 %2178
      %2180 = vrot.lane.b32.xlu0 %v328, 40
      %v2181 = vpop.permute.xlu0 %2180
      %2198 = vmatpush.msra.mxu0 %v2181
      %2199 = vmatpush.msra.mxu0 %v2179
      %2200 = vmatpush.msra.mxu0 %v2177
      %2201 = vmatpush.msra.mxu0 %v2175
      %2202 = vmatpush.msra.mxu0 %v2173
      %2203 = vmatpush.msra.mxu0 %v2171
      %2204 = vmatpush.msra.mxu0 %v2169
      %2205 = vmatpush.msra.mxu0 %v2167
      %2206 = vmatpush.msra.mxu0 %v2165
      %2207 = vmatpush.msra.mxu0 %v2163
      %2208 = vmatpush.msra.mxu0 %v2161
      %2209 = vmatpush.msra.mxu0 %v2159
      %2210 = vmatpush.msra.mxu0 %v2157
      %2211 = vmatpush.msra.mxu0 %v2155
      %2212 = vmatpush.msra.mxu0 %v2153
      %2213 = vmatpush.msra.mxu0 %v2151
      %2214 = vmatmul.f32.gmra.mxu0 %v2134
      %v2215 = vpop.f32.mrf.mxu0
      %v2216 = vadd.f32 0.0, %v2215
      %2217 = vmatmul.f32.gmra.mxu0 %v2135
      %v2218 = vpop.f32.mrf.mxu0
      %v2219 = vadd.f32 0.0, %v2218
      %2220 = vmatmul.f32.gmra.mxu0 %v2136
      %v2221 = vpop.f32.mrf.mxu0
      %v2222 = vadd.f32 0.0, %v2221
      %2223 = vmatmul.f32.gmra.mxu0 %v2137
      %v2224 = vpop.f32.mrf.mxu0
      %v2225 = vadd.f32 0.0, %v2224
      %2226 = vmatmul.f32.gmra.mxu0 %v2138
      %v2227 = vpop.f32.mrf.mxu0
      %v2228 = vadd.f32 0.0, %v2227
      %2229 = vmatmul.f32.gmra.mxu0 %v2139
      %v2230 = vpop.f32.mrf.mxu0
      %v2231 = vadd.f32 0.0, %v2230
      %2232 = vmatmul.f32.gmra.mxu0 %v2140
      %v2233 = vpop.f32.mrf.mxu0
      %v2234 = vadd.f32 0.0, %v2233
      %2235 = vmatmul.f32.gmra.mxu0 %v2141
      %v2236 = vpop.f32.mrf.mxu0
      %v2237 = vadd.f32 0.0, %v2236
      %2238 = vmatmul.f32.gmra.mxu0 %v2142
      %v2239 = vpop.f32.mrf.mxu0
      %v2240 = vadd.f32 0.0, %v2239
      %2241 = vmatmul.f32.gmra.mxu0 %v2143
      %v2242 = vpop.f32.mrf.mxu0
      %v2243 = vadd.f32 0.0, %v2242
      %2244 = vmatmul.f32.gmra.mxu0 %v2144
      %v2245 = vpop.f32.mrf.mxu0
      %v2246 = vadd.f32 0.0, %v2245
      %2247 = vmatmul.f32.gmra.mxu0 %v2145
      %v2248 = vpop.f32.mrf.mxu0
      %v2249 = vadd.f32 0.0, %v2248
      %2250 = vmatmul.f32.gmra.mxu0 %v2146
      %v2251 = vpop.f32.mrf.mxu0
      %v2252 = vadd.f32 0.0, %v2251
      %2253 = vmatmul.f32.gmra.mxu0 %v2147
      %v2254 = vpop.f32.mrf.mxu0
      %v2255 = vadd.f32 0.0, %v2254
      %2256 = vmatmul.f32.gmra.mxu0 %v2148
      %v2257 = vpop.f32.mrf.mxu0
      %v2258 = vadd.f32 0.0, %v2257
      %2259 = vmatmul.f32.gmra.mxu0 %v2149
      %v2260 = vpop.f32.mrf.mxu0
      %v2261 = vadd.f32 0.0, %v2260
      %2262 = vdwg.mxu0
      %2279 = vrot.lane.b32.xlu0 %v1252, 8
      %v2280 = vpop.permute.xlu0 %2279
      %2281 = vrot.lane.b32.xlu0 %v1255, 8
      %v2282 = vpop.permute.xlu0 %2281
      %2283 = vrot.lane.b32.xlu0 %v1258, 8
      %v2284 = vpop.permute.xlu0 %2283
      %2285 = vrot.lane.b32.xlu0 %v1261, 8
      %v2286 = vpop.permute.xlu0 %2285
      %2287 = vrot.lane.b32.xlu0 %v1264, 8
      %v2288 = vpop.permute.xlu0 %2287
      %2289 = vrot.lane.b32.xlu0 %v1267, 8
      %v2290 = vpop.permute.xlu0 %2289
      %2291 = vrot.lane.b32.xlu0 %v1270, 8
      %v2292 = vpop.permute.xlu0 %2291
      %2293 = vrot.lane.b32.xlu0 %v1273, 8
      %v2294 = vpop.permute.xlu0 %2293
      %2295 = vrot.lane.b32.xlu0 %v1276, 8
      %v2296 = vpop.permute.xlu0 %2295
      %2297 = vrot.lane.b32.xlu0 %v1279, 8
      %v2298 = vpop.permute.xlu0 %2297
      %2299 = vrot.lane.b32.xlu0 %v1282, 8
      %v2300 = vpop.permute.xlu0 %2299
      %2301 = vrot.lane.b32.xlu0 %v1285, 8
      %v2302 = vpop.permute.xlu0 %2301
      %2303 = vrot.lane.b32.xlu0 %v1288, 8
      %v2304 = vpop.permute.xlu0 %2303
      %2305 = vrot.lane.b32.xlu0 %v1291, 8
      %v2306 = vpop.permute.xlu0 %2305
      %2307 = vrot.lane.b32.xlu0 %v1294, 8
      %v2308 = vpop.permute.xlu0 %2307
      %2309 = vrot.lane.b32.xlu0 %v1297, 8
      %v2310 = vpop.permute.xlu0 %2309
      %2343 = vrot.lane.b32.xlu0 %v1734, 16
      %v2344 = vpop.permute.xlu0 %2343
      %2345 = vrot.lane.b32.xlu0 %v1737, 16
      %v2346 = vpop.permute.xlu0 %2345
      %2347 = vrot.lane.b32.xlu0 %v1740, 16
      %v2348 = vpop.permute.xlu0 %2347
      %2349 = vrot.lane.b32.xlu0 %v1743, 16
      %v2350 = vpop.permute.xlu0 %2349
      %2351 = vrot.lane.b32.xlu0 %v1746, 16
      %v2352 = vpop.permute.xlu0 %2351
      %2353 = vrot.lane.b32.xlu0 %v1749, 16
      %v2354 = vpop.permute.xlu0 %2353
      %2355 = vrot.lane.b32.xlu0 %v1752, 16
      %v2356 = vpop.permute.xlu0 %2355
      %2357 = vrot.lane.b32.xlu0 %v1755, 16
      %v2358 = vpop.permute.xlu0 %2357
      %2359 = vrot.lane.b32.xlu0 %v1758, 16
      %v2360 = vpop.permute.xlu0 %2359
      %2361 = vrot.lane.b32.xlu0 %v1761, 16
      %v2362 = vpop.permute.xlu0 %2361
      %2363 = vrot.lane.b32.xlu0 %v1764, 16
      %v2364 = vpop.permute.xlu0 %2363
      %2365 = vrot.lane.b32.xlu0 %v1767, 16
      %v2366 = vpop.permute.xlu0 %2365
      %2367 = vrot.lane.b32.xlu0 %v1770, 16
      %v2368 = vpop.permute.xlu0 %2367
      %2369 = vrot.lane.b32.xlu0 %v1773, 16
      %v2370 = vpop.permute.xlu0 %2369
      %2371 = vrot.lane.b32.xlu0 %v1776, 16
      %v2372 = vpop.permute.xlu0 %2371
      %2373 = vrot.lane.b32.xlu0 %v1779, 16
      %v2374 = vpop.permute.xlu0 %2373
      %2407 = vrot.lane.b32.xlu0 %v2216, 24
      %v2408 = vpop.permute.xlu0 %2407
      %2409 = vrot.lane.b32.xlu0 %v2219, 24
      %v2410 = vpop.permute.xlu0 %2409
      %2411 = vrot.lane.b32.xlu0 %v2222, 24
      %v2412 = vpop.permute.xlu0 %2411
      %2413 = vrot.lane.b32.xlu0 %v2225, 24
      %v2414 = vpop.permute.xlu0 %2413
      %2415 = vrot.lane.b32.xlu0 %v2228, 24
      %v2416 = vpop.permute.xlu0 %2415
      %2417 = vrot.lane.b32.xlu0 %v2231, 24
      %v2418 = vpop.permute.xlu0 %2417
      %2419 = vrot.lane.b32.xlu0 %v2234, 24
      %v2420 = vpop.permute.xlu0 %2419
      %2421 = vrot.lane.b32.xlu0 %v2237, 24
      %v2422 = vpop.permute.xlu0 %2421
      %2423 = vrot.lane.b32.xlu0 %v2240, 24
      %v2424 = vpop.permute.xlu0 %2423
      %2425 = vrot.lane.b32.xlu0 %v2243, 24
      %v2426 = vpop.permute.xlu0 %2425
      %2427 = vrot.lane.b32.xlu0 %v2246, 24
      %v2428 = vpop.permute.xlu0 %2427
      %2429 = vrot.lane.b32.xlu0 %v2249, 24
      %v2430 = vpop.permute.xlu0 %2429
      %2431 = vrot.lane.b32.xlu0 %v2252, 24
      %v2432 = vpop.permute.xlu0 %2431
      %2433 = vrot.lane.b32.xlu0 %v2255, 24
      %v2434 = vpop.permute.xlu0 %2433
      %2435 = vrot.lane.b32.xlu0 %v2258, 24
      %v2436 = vpop.permute.xlu0 %2435
      %2437 = vrot.lane.b32.xlu0 %v2261, 24
      %v2438 = vpop.permute.xlu0 %2437
      %v2455 = vsel %vm394, %v770, %v2280
      %v2456 = vsel %vm394, %v773, %v2282
      %v2457 = vsel %vm394, %v776, %v2284
      %v2458 = vsel %vm394, %v779, %v2286
      %v2459 = vsel %vm394, %v782, %v2288
      %v2460 = vsel %vm394, %v785, %v2290
      %v2461 = vsel %vm394, %v788, %v2292
      %v2462 = vsel %vm394, %v791, %v2294
      %v2463 = vsel %vm394, %v794, %v2296
      %v2464 = vsel %vm394, %v797, %v2298
      %v2465 = vsel %vm394, %v800, %v2300
      %v2466 = vsel %vm394, %v803, %v2302
      %v2467 = vsel %vm394, %v806, %v2304
      %v2468 = vsel %vm394, %v809, %v2306
      %v2469 = vsel %vm394, %v812, %v2308
      %v2470 = vsel %vm394, %v815, %v2310
      %vm2471 = vcmask 130048
      %v2472 = vsel %vm2471, %v2455, %v2344
      %v2473 = vsel %vm2471, %v2456, %v2346
      %v2474 = vsel %vm2471, %v2457, %v2348
      %v2475 = vsel %vm2471, %v2458, %v2350
      %v2476 = vsel %vm2471, %v2459, %v2352
      %v2477 = vsel %vm2471, %v2460, %v2354
      %v2478 = vsel %vm2471, %v2461, %v2356
      %v2479 = vsel %vm2471, %v2462, %v2358
      %v2480 = vsel %vm2471, %v2463, %v2360
      %v2481 = vsel %vm2471, %v2464, %v2362
      %v2482 = vsel %vm2471, %v2465, %v2364
      %v2483 = vsel %vm2471, %v2466, %v2366
      %v2484 = vsel %vm2471, %v2467, %v2368
      %v2485 = vsel %vm2471, %v2468, %v2370
      %v2486 = vsel %vm2471, %v2469, %v2372
      %v2487 = vsel %vm2471, %v2470, %v2374
      %vm2488 = vcmask 195584
      %v2489 = vsel %vm2488, %v2472, %v2408
      %v2490 = vsel %vm2488, %v2473, %v2410
      %v2491 = vsel %vm2488, %v2474, %v2412
      %v2492 = vsel %vm2488, %v2475, %v2414
      %v2493 = vsel %vm2488, %v2476, %v2416
      %v2494 = vsel %vm2488, %v2477, %v2418
      %v2495 = vsel %vm2488, %v2478, %v2420
      %v2496 = vsel %vm2488, %v2479, %v2422
      %v2497 = vsel %vm2488, %v2480, %v2424
      %v2498 = vsel %vm2488, %v2481, %v2426
      %v2499 = vsel %vm2488, %v2482, %v2428
      %v2500 = vsel %vm2488, %v2483, %v2430
      %v2501 = vsel %vm2488, %v2484, %v2432
      %v2502 = vsel %vm2488, %v2485, %v2434
      %v2503 = vsel %vm2488, %v2486, %v2436
      %v2504 = vsel %vm2488, %v2487, %v2438
      %v2505 = vld [vmem:[%s3] sm:$0xff]
      %v2506 = vld [vmem:[%s3 + $0x8] sm:$0xff]
      %v2507 = vld [vmem:[%s3 + $0x10] sm:$0xff]
      %v2508 = vld [vmem:[%s3 + $0x18] sm:$0xff]
      %v2509 = vld [vmem:[%s4] sm:$0x1]
      %v2511 = vperm.slane %v2509, 0
      %vm2513 = vcmask 261120
      %v2515 = vsel %vm2513, %v2489, 0
      %v2518 = vsel %vm2513, %v2490, 0
      %v2521 = vsel %vm2513, %v2491, 0
      %v2524 = vsel %vm2513, %v2492, 0
      %v2527 = vsel %vm2513, %v2493, 0
      %v2530 = vsel %vm2513, %v2494, 0
      %v2533 = vsel %vm2513, %v2495, 0
      %v2536 = vsel %vm2513, %v2496, 0
      %v2539 = vsel %vm2513, %v2497, 0
      %v2542 = vsel %vm2513, %v2498, 0
      %v2545 = vsel %vm2513, %v2499, 0
      %v2548 = vsel %vm2513, %v2500, 0
      %v2551 = vsel %vm2513, %v2501, 0
      %v2554 = vsel %vm2513, %v2502, 0
      %v2557 = vsel %vm2513, %v2503, 0
      %v2560 = vsel %vm2513, %v2504, 0
      %2562 = vmatpush.msra.mxu0 0.0
      %2563 = vmatpush.msra.mxu0 0.0
      %2564 = vmatpush.msra.mxu0 0.0
      %2565 = vmatpush.msra.mxu0 0.0
      %2566 = vmatpush.msra.mxu0 0.0
      %2567 = vmatpush.msra.mxu0 0.0
      %2568 = vmatpush.msra.mxu0 0.0
      %2569 = vmatpush.msra.mxu0 0.0
      %2570 = vmatpush.msra.mxu0 0.0
      %2571 = vmatpush.msra.mxu0 0.0
      %2572 = vmatpush.msra.mxu0 0.0
      %2573 = vmatpush.msra.mxu0 0.0
      %2574 = vmatpush.msra.mxu0 %v2508
      %2575 = vmatpush.msra.mxu0 %v2507
      %2576 = vmatpush.msra.mxu0 %v2506
      %2577 = vmatpush.msra.mxu0 %v2505
      %2578 = vmatmul.f32.gmra.mxu0 %v2515
      %v2579 = vpop.f32.mrf.mxu0
      %v2580 = vadd.f32 %v2511, %v2579
      %2581 = vmatmul.f32.gmra.mxu0 %v2518
      %v2582 = vpop.f32.mrf.mxu0
      %v2583 = vadd.f32 %v2511, %v2582
      %2584 = vmatmul.f32.gmra.mxu0 %v2521
      %v2585 = vpop.f32.mrf.mxu0
      %v2586 = vadd.f32 %v2511, %v2585
      %2587 = vmatmul.f32.gmra.mxu0 %v2524
      %v2588 = vpop.f32.mrf.mxu0
      %v2589 = vadd.f32 %v2511, %v2588
      %2590 = vmatmul.f32.gmra.mxu0 %v2527
      %v2591 = vpop.f32.mrf.mxu0
      %v2592 = vadd.f32 %v2511, %v2591
      %2593 = vmatmul.f32.gmra.mxu0 %v2530
      %v2594 = vpop.f32.mrf.mxu0
      %v2595 = vadd.f32 %v2511, %v2594
      %2596 = vmatmul.f32.gmra.mxu0 %v2533
      %v2597 = vpop.f32.mrf.mxu0
      %v2598 = vadd.f32 %v2511, %v2597
      %2599 = vmatmul.f32.gmra.mxu0 %v2536
      %v2600 = vpop.f32.mrf.mxu0
      %v2601 = vadd.f32 %v2511, %v2600
      %2602 = vmatmul.f32.gmra.mxu0 %v2539
      %v2603 = vpop.f32.mrf.mxu0
      %v2604 = vadd.f32 %v2511, %v2603
      %2605 = vmatmul.f32.gmra.mxu0 %v2542
      %v2606 = vpop.f32.mrf.mxu0
      %v2607 = vadd.f32 %v2511, %v2606
      %2608 = vmatmul.f32.gmra.mxu0 %v2545
      %v2609 = vpop.f32.mrf.mxu0
      %v2610 = vadd.f32 %v2511, %v2609
      %2611 = vmatmul.f32.gmra.mxu0 %v2548
      %v2612 = vpop.f32.mrf.mxu0
      %v2613 = vadd.f32 %v2511, %v2612
      %2614 = vmatmul.f32.gmra.mxu0 %v2551
      %v2615 = vpop.f32.mrf.mxu0
      %v2616 = vadd.f32 %v2511, %v2615
      %2617 = vmatmul.f32.gmra.mxu0 %v2554
      %v2618 = vpop.f32.mrf.mxu0
      %v2619 = vadd.f32 %v2511, %v2618
      %2620 = vmatmul.f32.gmra.mxu0 %v2557
      %v2621 = vpop.f32.mrf.mxu0
      %v2622 = vadd.f32 %v2511, %v2621
      %2623 = vmatmul.f32.gmra.mxu0 %v2560
      %v2624 = vpop.f32.mrf.mxu0
      %v2625 = vadd.f32 %v2511, %v2624
      %2626 = vdwg.mxu0
      %v2627 = vadd.f32 %v329, %v2580
      %v2628 = vadd.f32 %v330, %v2583
      %v2629 = vadd.f32 %v331, %v2586
      %v2630 = vadd.f32 %v332, %v2589
      %v2631 = vadd.f32 %v333, %v2592
      %v2632 = vadd.f32 %v334, %v2595
      %v2633 = vadd.f32 %v335, %v2598
      %v2634 = vadd.f32 %v336, %v2601
      %v2635 = vadd.f32 %v337, %v2604
      %v2636 = vadd.f32 %v338, %v2607
      %v2637 = vadd.f32 %v339, %v2610
      %v2638 = vadd.f32 %v340, %v2613
      %v2639 = vadd.f32 %v341, %v2616
      %v2640 = vadd.f32 %v342, %v2619
      %v2641 = vadd.f32 %v343, %v2622
      %v2642 = vadd.f32 %v344, %v2625
      %v2643 = vsel %vm2513, %v2627, 0.0
      %2644 = vadd.xlane.f32.xlu0 %v2643
      %v2645 = vpop.xlane.xlu0 %2644
      %v2646 = vsel %vm2513, %v2628, 0.0
      %2647 = vadd.xlane.f32.xlu0 %v2646
      %v2648 = vpop.xlane.xlu0 %2647
      %v2649 = vsel %vm2513, %v2629, 0.0
      %2650 = vadd.xlane.f32.xlu0 %v2649
      %v2651 = vpop.xlane.xlu0 %2650
      %v2652 = vsel %vm2513, %v2630, 0.0
      %2653 = vadd.xlane.f32.xlu0 %v2652
      %v2654 = vpop.xlane.xlu0 %2653
      %v2655 = vsel %vm2513, %v2631, 0.0
      %2656 = vadd.xlane.f32.xlu0 %v2655
      %v2657 = vpop.xlane.xlu0 %2656
      %v2658 = vsel %vm2513, %v2632, 0.0
      %2659 = vadd.xlane.f32.xlu0 %v2658
      %v2660 = vpop.xlane.xlu0 %2659
      %v2661 = vsel %vm2513, %v2633, 0.0
      %2662 = vadd.xlane.f32.xlu0 %v2661
      %v2663 = vpop.xlane.xlu0 %2662
      %v2664 = vsel %vm2513, %v2634, 0.0
      %2665 = vadd.xlane.f32.xlu0 %v2664
      %v2666 = vpop.xlane.xlu0 %2665
      %v2667 = vsel %vm2513, %v2635, 0.0
      %2668 = vadd.xlane.f32.xlu0 %v2667
      %v2669 = vpop.xlane.xlu0 %2668
      %v2670 = vsel %vm2513, %v2636, 0.0
      %2671 = vadd.xlane.f32.xlu0 %v2670
      %v2672 = vpop.xlane.xlu0 %2671
      %v2673 = vsel %vm2513, %v2637, 0.0
      %2674 = vadd.xlane.f32.xlu0 %v2673
      %v2675 = vpop.xlane.xlu0 %2674
      %v2676 = vsel %vm2513, %v2638, 0.0
      %2677 = vadd.xlane.f32.xlu0 %v2676
      %v2678 = vpop.xlane.xlu0 %2677
      %v2679 = vsel %vm2513, %v2639, 0.0
      %2680 = vadd.xlane.f32.xlu0 %v2679
      %v2681 = vpop.xlane.xlu0 %2680
      %v2682 = vsel %vm2513, %v2640, 0.0
      %2683 = vadd.xlane.f32.xlu0 %v2682
      %v2684 = vpop.xlane.xlu0 %2683
      %v2685 = vsel %vm2513, %v2641, 0.0
      %2686 = vadd.xlane.f32.xlu0 %v2685
      %v2687 = vpop.xlane.xlu0 %2686
      %v2688 = vsel %vm2513, %v2642, 0.0
      %2689 = vadd.xlane.f32.xlu0 %v2688
      %v2690 = vpop.xlane.xlu0 %2689
      %v2691 = vrcp.pop 32.0
      %v2692 = vmul.f32 32.0, %v2691
      %v2693 = vsub.f32 1.0, %v2692
      %v2694 = vmul.f32 %v2691, %v2693
      %v2695 = vadd.f32 %v2691, %v2694
      %vm2696 = vweird.f32 %v2691
      %v2697 = vsel %vm2696, %v2691, %v2695
      %v2698 = vmul.f32 %v2645, %v2697
      %v2699 = vmul.f32 %v2648, %v2697
      %v2700 = vmul.f32 %v2651, %v2697
      %v2701 = vmul.f32 %v2654, %v2697
      %v2702 = vmul.f32 %v2657, %v2697
      %v2703 = vmul.f32 %v2660, %v2697
      %v2704 = vmul.f32 %v2663, %v2697
      %v2705 = vmul.f32 %v2666, %v2697
      %v2706 = vmul.f32 %v2669, %v2697
      %v2707 = vmul.f32 %v2672, %v2697
      %v2708 = vmul.f32 %v2675, %v2697
      %v2709 = vmul.f32 %v2678, %v2697
      %v2710 = vmul.f32 %v2681, %v2697
      %v2711 = vmul.f32 %v2684, %v2697
      %v2712 = vmul.f32 %v2687, %v2697
      %v2713 = vmul.f32 %v2690, %v2697
      %v2714 = vsub.f32 %v2627, %v2698
      %v2715 = vsub.f32 %v2628, %v2699
      %v2716 = vsub.f32 %v2629, %v2700
      %v2717 = vsub.f32 %v2630, %v2701
      %v2718 = vsub.f32 %v2631, %v2702
      %v2719 = vsub.f32 %v2632, %v2703
      %v2720 = vsub.f32 %v2633, %v2704
      %v2721 = vsub.f32 %v2634, %v2705
      %v2722 = vsub.f32 %v2635, %v2706
      %v2723 = vsub.f32 %v2636, %v2707
      %v2724 = vsub.f32 %v2637, %v2708
      %v2725 = vsub.f32 %v2638, %v2709
      %v2726 = vsub.f32 %v2639, %v2710
      %v2727 = vsub.f32 %v2640, %v2711
      %v2728 = vsub.f32 %v2641, %v2712
      %v2729 = vsub.f32 %v2642, %v2713
      %v2730 = vmul.f32 %v2714, %v2714
      %v2731 = vmul.f32 %v2715, %v2715
      %v2732 = vmul.f32 %v2716, %v2716
      %v2733 = vmul.f32 %v2717, %v2717
      %v2734 = vmul.f32 %v2718, %v2718
      %v2735 = vmul.f32 %v2719, %v2719
      %v2736 = vmul.f32 %v2720, %v2720
      %v2737 = vmul.f32 %v2721, %v2721
      %v2738 = vmul.f32 %v2722, %v2722
      %v2739 = vmul.f32 %v2723, %v2723
      %v2740 = vmul.f32 %v2724, %v2724
      %v2741 = vmul.f32 %v2725, %v2725
      %v2742 = vmul.f32 %v2726, %v2726
      %v2743 = vmul.f32 %v2727, %v2727
      %v2744 = vmul.f32 %v2728, %v2728
      %v2745 = vmul.f32 %v2729, %v2729
      %v2746 = vsel %vm2513, %v2730, 0.0
      %2747 = vadd.xlane.f32.xlu0 %v2746
      %v2748 = vpop.xlane.xlu0 %2747
      %v2749 = vsel %vm2513, %v2731, 0.0
      %2750 = vadd.xlane.f32.xlu0 %v2749
      %v2751 = vpop.xlane.xlu0 %2750
      %v2752 = vsel %vm2513, %v2732, 0.0
      %2753 = vadd.xlane.f32.xlu0 %v2752
      %v2754 = vpop.xlane.xlu0 %2753
      %v2755 = vsel %vm2513, %v2733, 0.0
      %2756 = vadd.xlane.f32.xlu0 %v2755
      %v2757 = vpop.xlane.xlu0 %2756
      %v2758 = vsel %vm2513, %v2734, 0.0
      %2759 = vadd.xlane.f32.xlu0 %v2758
      %v2760 = vpop.xlane.xlu0 %2759
      %v2761 = vsel %vm2513, %v2735, 0.0
      %2762 = vadd.xlane.f32.xlu0 %v2761
      %v2763 = vpop.xlane.xlu0 %2762
      %v2764 = vsel %vm2513, %v2736, 0.0
      %2765 = vadd.xlane.f32.xlu0 %v2764
      %v2766 = vpop.xlane.xlu0 %2765
      %v2767 = vsel %vm2513, %v2737, 0.0
      %2768 = vadd.xlane.f32.xlu0 %v2767
      %v2769 = vpop.xlane.xlu0 %2768
      %v2770 = vsel %vm2513, %v2738, 0.0
      %2771 = vadd.xlane.f32.xlu0 %v2770
      %v2772 = vpop.xlane.xlu0 %2771
      %v2773 = vsel %vm2513, %v2739, 0.0
      %2774 = vadd.xlane.f32.xlu0 %v2773
      %v2775 = vpop.xlane.xlu0 %2774
      %v2776 = vsel %vm2513, %v2740, 0.0
      %2777 = vadd.xlane.f32.xlu0 %v2776
      %v2778 = vpop.xlane.xlu0 %2777
      %v2779 = vsel %vm2513, %v2741, 0.0
      %2780 = vadd.xlane.f32.xlu0 %v2779
      %v2781 = vpop.xlane.xlu0 %2780
      %v2782 = vsel %vm2513, %v2742, 0.0
      %2783 = vadd.xlane.f32.xlu0 %v2782
      %v2784 = vpop.xlane.xlu0 %2783
      %v2785 = vsel %vm2513, %v2743, 0.0
      %2786 = vadd.xlane.f32.xlu0 %v2785
      %v2787 = vpop.xlane.xlu0 %2786
      %v2788 = vsel %vm2513, %v2744, 0.0
      %2789 = vadd.xlane.f32.xlu0 %v2788
      %v2790 = vpop.xlane.xlu0 %2789
      %v2791 = vsel %vm2513, %v2745, 0.0
      %2792 = vadd.xlane.f32.xlu0 %v2791
      %v2793 = vpop.xlane.xlu0 %2792
      %v2794 = vmul.f32 %v2748, %v2697
      %v2795 = vmul.f32 %v2751, %v2697
      %v2796 = vmul.f32 %v2754, %v2697
      %v2797 = vmul.f32 %v2757, %v2697
      %v2798 = vmul.f32 %v2760, %v2697
      %v2799 = vmul.f32 %v2763, %v2697
      %v2800 = vmul.f32 %v2766, %v2697
      %v2801 = vmul.f32 %v2769, %v2697
      %v2802 = vmul.f32 %v2772, %v2697
      %v2803 = vmul.f32 %v2775, %v2697
      %v2804 = vmul.f32 %v2778, %v2697
      %v2805 = vmul.f32 %v2781, %v2697
      %v2806 = vmul.f32 %v2784, %v2697
      %v2807 = vmul.f32 %v2787, %v2697
      %v2808 = vmul.f32 %v2790, %v2697
      %v2809 = vmul.f32 %v2793, %v2697
      %v2810 = vadd.f32 %v2794, 1e-05
      %v2811 = vadd.f32 %v2795, 1e-05
      %v2812 = vadd.f32 %v2796, 1e-05
      %v2813 = vadd.f32 %v2797, 1e-05
      %v2814 = vadd.f32 %v2798, 1e-05
      %v2815 = vadd.f32 %v2799, 1e-05
      %v2816 = vadd.f32 %v2800, 1e-05
      %v2817 = vadd.f32 %v2801, 1e-05
      %v2818 = vadd.f32 %v2802, 1e-05
      %v2819 = vadd.f32 %v2803, 1e-05
      %v2820 = vadd.f32 %v2804, 1e-05
      %v2821 = vadd.f32 %v2805, 1e-05
      %v2822 = vadd.f32 %v2806, 1e-05
      %v2823 = vadd.f32 %v2807, 1e-05
      %v2824 = vadd.f32 %v2808, 1e-05
      %v2825 = vadd.f32 %v2809, 1e-05
      %v2826 = vrsqrt.pop %v2810
      %v2827 = vmul.f32 %v2826, %v2810
      %v2828 = vmul.f32 %v2827, %v2826
      %v2829 = vmul.f32 0.5, %v2828
      %v2830 = vsub.f32 1.5, %v2829
      %v2831 = vmul.f32 %v2826, %v2830
      %vm2832 = vweird.f32 %v2810
      %vm2833 = vweird.f32 %v2826
      %vm2834 = vmor %vm2832, %vm2833
      %v2835 = vsel %vm2834, %v2826, %v2831
      %v2836 = vrsqrt.pop %v2811
      %v2837 = vmul.f32 %v2836, %v2811
      %v2838 = vmul.f32 %v2837, %v2836
      %v2839 = vmul.f32 0.5, %v2838
      %v2840 = vsub.f32 1.5, %v2839
      %v2841 = vmul.f32 %v2836, %v2840
      %vm2842 = vweird.f32 %v2811
      %vm2843 = vweird.f32 %v2836
      %vm2844 = vmor %vm2842, %vm2843
      %v2845 = vsel %vm2844, %v2836, %v2841
      %v2846 = vrsqrt.pop %v2812
      %v2847 = vmul.f32 %v2846, %v2812
      %v2848 = vmul.f32 %v2847, %v2846
      %v2849 = vmul.f32 0.5, %v2848
      %v2850 = vsub.f32 1.5, %v2849
      %v2851 = vmul.f32 %v2846, %v2850
      %vm2852 = vweird.f32 %v2812
      %vm2853 = vweird.f32 %v2846
      %vm2854 = vmor %vm2852, %vm2853
      %v2855 = vsel %vm2854, %v2846, %v2851
      %v2856 = vrsqrt.pop %v2813
      %v2857 = vmul.f32 %v2856, %v2813
      %v2858 = vmul.f32 %v2857, %v2856
      %v2859 = vmul.f32 0.5, %v2858
      %v2860 = vsub.f32 1.5, %v2859
      %v2861 = vmul.f32 %v2856, %v2860
      %vm2862 = vweird.f32 %v2813
      %vm2863 = vweird.f32 %v2856
      %vm2864 = vmor %vm2862, %vm2863
      %v2865 = vsel %vm2864, %v2856, %v2861
      %v2866 = vrsqrt.pop %v2814
      %v2867 = vmul.f32 %v2866, %v2814
      %v2868 = vmul.f32 %v2867, %v2866
      %v2869 = vmul.f32 0.5, %v2868
      %v2870 = vsub.f32 1.5, %v2869
      %v2871 = vmul.f32 %v2866, %v2870
      %vm2872 = vweird.f32 %v2814
      %vm2873 = vweird.f32 %v2866
      %vm2874 = vmor %vm2872, %vm2873
      %v2875 = vsel %vm2874, %v2866, %v2871
      %v2876 = vrsqrt.pop %v2815
      %v2877 = vmul.f32 %v2876, %v2815
      %v2878 = vmul.f32 %v2877, %v2876
      %v2879 = vmul.f32 0.5, %v2878
      %v2880 = vsub.f32 1.5, %v2879
      %v2881 = vmul.f32 %v2876, %v2880
      %vm2882 = vweird.f32 %v2815
      %vm2883 = vweird.f32 %v2876
      %vm2884 = vmor %vm2882, %vm2883
      %v2885 = vsel %vm2884, %v2876, %v2881
      %v2886 = vrsqrt.pop %v2816
      %v2887 = vmul.f32 %v2886, %v2816
      %v2888 = vmul.f32 %v2887, %v2886
      %v2889 = vmul.f32 0.5, %v2888
      %v2890 = vsub.f32 1.5, %v2889
      %v2891 = vmul.f32 %v2886, %v2890
      %vm2892 = vweird.f32 %v2816
      %vm2893 = vweird.f32 %v2886
      %vm2894 = vmor %vm2892, %vm2893
      %v2895 = vsel %vm2894, %v2886, %v2891
      %v2896 = vrsqrt.pop %v2817
      %v2897 = vmul.f32 %v2896, %v2817
      %v2898 = vmul.f32 %v2897, %v2896
      %v2899 = vmul.f32 0.5, %v2898
      %v2900 = vsub.f32 1.5, %v2899
      %v2901 = vmul.f32 %v2896, %v2900
      %vm2902 = vweird.f32 %v2817
      %vm2903 = vweird.f32 %v2896
      %vm2904 = vmor %vm2902, %vm2903
      %v2905 = vsel %vm2904, %v2896, %v2901
      %v2906 = vrsqrt.pop %v2818
      %v2907 = vmul.f32 %v2906, %v2818
      %v2908 = vmul.f32 %v2907, %v2906
      %v2909 = vmul.f32 0.5, %v2908
      %v2910 = vsub.f32 1.5, %v2909
      %v2911 = vmul.f32 %v2906, %v2910
      %vm2912 = vweird.f32 %v2818
      %vm2913 = vweird.f32 %v2906
      %vm2914 = vmor %vm2912, %vm2913
      %v2915 = vsel %vm2914, %v2906, %v2911
      %v2916 = vrsqrt.pop %v2819
      %v2917 = vmul.f32 %v2916, %v2819
      %v2918 = vmul.f32 %v2917, %v2916
      %v2919 = vmul.f32 0.5, %v2918
      %v2920 = vsub.f32 1.5, %v2919
      %v2921 = vmul.f32 %v2916, %v2920
      %vm2922 = vweird.f32 %v2819
      %vm2923 = vweird.f32 %v2916
      %vm2924 = vmor %vm2922, %vm2923
      %v2925 = vsel %vm2924, %v2916, %v2921
      %v2926 = vrsqrt.pop %v2820
      %v2927 = vmul.f32 %v2926, %v2820
      %v2928 = vmul.f32 %v2927, %v2926
      %v2929 = vmul.f32 0.5, %v2928
      %v2930 = vsub.f32 1.5, %v2929
      %v2931 = vmul.f32 %v2926, %v2930
      %vm2932 = vweird.f32 %v2820
      %vm2933 = vweird.f32 %v2926
      %vm2934 = vmor %vm2932, %vm2933
      %v2935 = vsel %vm2934, %v2926, %v2931
      %v2936 = vrsqrt.pop %v2821
      %v2937 = vmul.f32 %v2936, %v2821
      %v2938 = vmul.f32 %v2937, %v2936
      %v2939 = vmul.f32 0.5, %v2938
      %v2940 = vsub.f32 1.5, %v2939
      %v2941 = vmul.f32 %v2936, %v2940
      %vm2942 = vweird.f32 %v2821
      %vm2943 = vweird.f32 %v2936
      %vm2944 = vmor %vm2942, %vm2943
      %v2945 = vsel %vm2944, %v2936, %v2941
      %v2946 = vrsqrt.pop %v2822
      %v2947 = vmul.f32 %v2946, %v2822
      %v2948 = vmul.f32 %v2947, %v2946
      %v2949 = vmul.f32 0.5, %v2948
      %v2950 = vsub.f32 1.5, %v2949
      %v2951 = vmul.f32 %v2946, %v2950
      %vm2952 = vweird.f32 %v2822
      %vm2953 = vweird.f32 %v2946
      %vm2954 = vmor %vm2952, %vm2953
      %v2955 = vsel %vm2954, %v2946, %v2951
      %v2956 = vrsqrt.pop %v2823
      %v2957 = vmul.f32 %v2956, %v2823
      %v2958 = vmul.f32 %v2957, %v2956
      %v2959 = vmul.f32 0.5, %v2958
      %v2960 = vsub.f32 1.5, %v2959
      %v2961 = vmul.f32 %v2956, %v2960
      %vm2962 = vweird.f32 %v2823
      %vm2963 = vweird.f32 %v2956
      %vm2964 = vmor %vm2962, %vm2963
      %v2965 = vsel %vm2964, %v2956, %v2961
      %v2966 = vrsqrt.pop %v2824
      %v2967 = vmul.f32 %v2966, %v2824
      %v2968 = vmul.f32 %v2967, %v2966
      %v2969 = vmul.f32 0.5, %v2968
      %v2970 = vsub.f32 1.5, %v2969
      %v2971 = vmul.f32 %v2966, %v2970
      %vm2972 = vweird.f32 %v2824
      %vm2973 = vweird.f32 %v2966
      %vm2974 = vmor %vm2972, %vm2973
      %v2975 = vsel %vm2974, %v2966, %v2971
      %v2976 = vrsqrt.pop %v2825
      %v2977 = vmul.f32 %v2976, %v2825
      %v2978 = vmul.f32 %v2977, %v2976
      %v2979 = vmul.f32 0.5, %v2978
      %v2980 = vsub.f32 1.5, %v2979
      %v2981 = vmul.f32 %v2976, %v2980
      %vm2982 = vweird.f32 %v2825
      %vm2983 = vweird.f32 %v2976
      %vm2984 = vmor %vm2982, %vm2983
      %v2985 = vsel %vm2984, %v2976, %v2981
      %v2986 = vmul.f32 %v2714, %v2835
      %v2987 = vmul.f32 %v2715, %v2845
      %v2988 = vmul.f32 %v2716, %v2855
      %v2989 = vmul.f32 %v2717, %v2865
      %v2990 = vmul.f32 %v2718, %v2875
      %v2991 = vmul.f32 %v2719, %v2885
      %v2992 = vmul.f32 %v2720, %v2895
      %v2993 = vmul.f32 %v2721, %v2905
      %v2994 = vmul.f32 %v2722, %v2915
      %v2995 = vmul.f32 %v2723, %v2925
      %v2996 = vmul.f32 %v2724, %v2935
      %v2997 = vmul.f32 %v2725, %v2945
      %v2998 = vmul.f32 %v2726, %v2955
      %v2999 = vmul.f32 %v2727, %v2965
      %v3000 = vmul.f32 %v2728, %v2975
      %v3001 = vmul.f32 %v2729, %v2985
      %v3002 = vld [vmem:[%s5] sm:$0x1]
      %v3004 = vperm.slane %v3002, 0
      %v3006 = vmul.f32 %v2986, %v3004
      %v3007 = vmul.f32 %v2987, %v3004
      %v3008 = vmul.f32 %v2988, %v3004
      %v3009 = vmul.f32 %v2989, %v3004
      %v3010 = vmul.f32 %v2990, %v3004
      %v3011 = vmul.f32 %v2991, %v3004
      %v3012 = vmul.f32 %v2992, %v3004
      %v3013 = vmul.f32 %v2993, %v3004
      %v3014 = vmul.f32 %v2994, %v3004
      %v3015 = vmul.f32 %v2995, %v3004
      %v3016 = vmul.f32 %v2996, %v3004
      %v3017 = vmul.f32 %v2997, %v3004
      %v3018 = vmul.f32 %v2998, %v3004
      %v3019 = vmul.f32 %v2999, %v3004
      %v3020 = vmul.f32 %v3000, %v3004
      %v3021 = vmul.f32 %v3001, %v3004
      %v3022 = vld [vmem:[%s6] sm:$0x1]
      %v3024 = vperm.slane %v3022, 0
      %v3026 = vadd.f32 %v3006, %v3024
      %v3027 = vadd.f32 %v3007, %v3024
      %v3028 = vadd.f32 %v3008, %v3024
      %v3029 = vadd.f32 %v3009, %v3024
      %v3030 = vadd.f32 %v3010, %v3024
      %v3031 = vadd.f32 %v3011, %v3024
      %v3032 = vadd.f32 %v3012, %v3024
      %v3033 = vadd.f32 %v3013, %v3024
      %v3034 = vadd.f32 %v3014, %v3024
      %v3035 = vadd.f32 %v3015, %v3024
      %v3036 = vadd.f32 %v3016, %v3024
      %v3037 = vadd.f32 %v3017, %v3024
      %v3038 = vadd.f32 %v3018, %v3024
      %v3039 = vadd.f32 %v3019, %v3024
      %v3040 = vadd.f32 %v3020, %v3024
      %v3041 = vadd.f32 %v3021, %v3024
      %3042 = vst.msk [vmem:[%s312] sm:$0xff] %vm2513, %v3026
      %3043 = vst.msk [vmem:[%s312 + $0x8] sm:$0xff] %vm2513, %v3027
      %3044 = vst.msk [vmem:[%s312 + $0x10] sm:$0xff] %vm2513, %v3028
      %3045 = vst.msk [vmem:[%s312 + $0x18] sm:$0xff] %vm2513, %v3029
      %3046 = vst.msk [vmem:[%s312 + $0x20] sm:$0xff] %vm2513, %v3030
      %3047 = vst.msk [vmem:[%s312 + $0x28] sm:$0xff] %vm2513, %v3031
      %3048 = vst.msk [vmem:[%s312 + $0x30] sm:$0xff] %vm2513, %v3032
      %3049 = vst.msk [vmem:[%s312 + $0x38] sm:$0xff] %vm2513, %v3033
      %3050 = vst.msk [vmem:[%s312 + $0x40] sm:$0xff] %vm2513, %v3034
      %3051 = vst.msk [vmem:[%s312 + $0x48] sm:$0xff] %vm2513, %v3035
      %3052 = vst.msk [vmem:[%s312 + $0x50] sm:$0xff] %vm2513, %v3036
      %3053 = vst.msk [vmem:[%s312 + $0x58] sm:$0xff] %vm2513, %v3037
      %3054 = vst.msk [vmem:[%s312 + $0x60] sm:$0xff] %vm2513, %v3038
      %3055 = vst.msk [vmem:[%s312 + $0x68] sm:$0xff] %vm2513, %v3039
      %3056 = vst.msk [vmem:[%s312 + $0x70] sm:$0xff] %vm2513, %v3040
      %3057 = vst.msk [vmem:[%s312 + $0x78] sm:$0xff] %vm2513, %v3041
      %p3058 = scmp.lt.s32.totalorder %s18, 7
      %s3059 = scalar_select %p3058, %s18, 7
      %s3060 = smul.addr %s3059, 16
      %s3061 = smul.addr %s3060, 8
      %s3062 = scalar_lea.vmem %s7, %s3061
      // Predicated region
      $region49: #{reg_flat_niid_forward.10} parent=47 // pred_check
        %p3063 = pneg %p198
      $region50: #{reg_flat_niid_forward.10} parent=47 // pred_check_branch
        %3065 = sbr.rel (%p3063) target = $region52
      $region51: #{reg_flat_niid_forward.10} parent=47 // pred_region
        _
      $region52: #{reg_flat_niid_forward.10} parent=47 // pred_fallthru
        _
    $region48: #{reg_flat_niid_forward.10} parent=5 // pred_fallthru
      _
    %p3066 = scmp.le.s32.totalorder 2, %s13
    // Predicated region
    $region53: #{reg_flat_niid_forward.10} parent=5 // pred_check
      %p3067 = pneg %p3066
    $region54: #{reg_flat_niid_forward.10} parent=5 // pred_check_branch
      %3069 = sbr.rel (%p3067) target = $region56
    $region55: #{reg_flat_niid_forward.10} parent=5 // pred_region
      %s3070 = ssub.s32 %s13, 2
      // Predicated region
      $region57: #{reg_flat_niid_forward.10} parent=55 // pred_check
        %p3071 = pneg %p204
      $region58: #{reg_flat_niid_forward.10} parent=55 // pred_check_branch
        %3073 = sbr.rel (%p3071) target = $region60
      $region59: #{reg_flat_niid_forward.10} parent=55 // pred_region
        %p3074 = scmp.lt.s32.totalorder %s19, 7
        %s3075 = scalar_select %p3074, %s19, 7
        %s3076 = smul.addr %s3075, 16
        %s3077 = smul.addr %s3076, 8
        %s3078 = scalar_lea.vmem %s7, %s3077
      $region60: #{reg_flat_niid_forward.10} parent=55 // pred_fallthru
        _
    $region56: #{reg_flat_niid_forward.10} parent=5 // pred_fallthru
      _
  $region6: #{reg_flat_niid_forward.10} parent=0 // loop_footer
    %s17 = sadd.s32 1, %s13
  $region7: #{reg_flat_niid_forward.10} parent=0 // loop_footer_branch
    %12 = sbr.rel target = $region3
  $region8: #{reg_flat_niid_forward.10} parent=0 // loop_exit
    _

// kernel: reg_flat_niid_forward.8
$region0: #{reg_flat_niid_forward.8}
  #allocation0 [shape = 'u32[]', space=smem, size = 0x4, offset = 0x4, fixed_abs, tag = 'smem constant byte address 0x4 - core index']
  #allocation1 [shape = 'u32[72,128]{1,0:T(1,128)}', space=vmem, size = 0x9000, scoped, tag = 'internal scratch']
  %s0 = inlined_call_operand.vmem [shape: f32[1024,4], index: 0, kind: input, shape index: {}]
  %s1 = inlined_call_operand.vmem [shape: f32[4,32], index: 1, kind: input, shape index: {}]
  %s2 = inlined_call_operand.vmem [shape: f32[1,32], index: 2, kind: input, shape index: {}]
  %s3 = inlined_call_operand.vmem [shape: f32[4,32,32], index: 3, kind: input, shape index: {}]
  %s4 = inlined_call_operand.vmem [shape: f32[4,1,32], index: 4, kind: input, shape index: {}]
  %s5 = inlined_call_operand.vmem [shape: f32[1024,32], index: 5, kind: output, shape index: {}]
  %s6 = sld [smem:[#allocation0]]
  $region53: #{reg_flat_niid_forward.8} parent=0
    _
  %s8 = ssub.s32 1, %s6
  %s9 = scalar_select 0, %s8, %s6
  loop: start=0, step=1, limit=4
  $region2: #{reg_flat_niid_forward.8} parent=0 // loop_pre_header
    _
  $region3: #{reg_flat_niid_forward.8} parent=0 // loop_header
    %s11 = sphi 0, %s15
    %p12 = scmp.ge.s32.totalorder %s11, 4
    %s21 = sphi 0, %s23
    %s24 = sphi 0, %s21
    %s25 = sphi 0, %s24
    %s41 = sphi 0, %s25
    %s45 = sphi 0, %s45
    %s47 = sphi 0, %s45
    %s48 = sphi 0, %s47
    %s62 = sphi 0, %s48
    %s66 = sphi 0, %s66
    %s68 = sphi 0, %s66
    %s69 = sphi 0, %s68
    %s83 = sphi 0, %s69
    %s87 = sphi 0, %s87
    %s89 = sphi 0, %s87
    %s90 = sphi 0, %s89
    %s104 = sphi 0, %s90
    %s108 = sphi 0, %s108
    %s110 = sphi 0, %s108
    %s111 = sphi 0, %s110
    %s125 = sphi 0, %s111
    %s131 = sphi 0, %s133
    %s134 = sphi 0, %s131
    %s135 = sphi 0, %s134
    %s151 = sphi 0, %s135
  $region4: #{reg_flat_niid_forward.8} parent=0 // loop_header_branch
    %14 = sbr.rel (%p12) target = $region8
  $region5: #{reg_flat_niid_forward.8} parent=0 // loop_body
    %s16 = ssub.s32 %s11, 1
    %s17 = ssub.s32 %s11, 2
    %s18 = sadd.s32 %s11, 1
    %s19 = ssub.s32 %s11, %s18
    %p20 = scmp.eq.s32.totalorder %s19, 0
    %s22 = sadd.s32 %s21, 1
    %s23 = scalar_select %p20, %s21, %s22
    %p26 = pneg %p20
    %p27 = scmp.eq.s32.totalorder %s11, 1
    %p28 = por %p26, %p27
    %p29 = scmp.ne.s32.totalorder %s21, %s24
    %p30 = scmp.eq.s32.totalorder %s11, 0
    %p31 = por %p29, %p30
    %p32 = scmp.ne.s32.totalorder %s21, %s24
    %p33 = scmp.eq.s32.totalorder %s16, 1
    %p34 = por %p32, %p33
    %p35 = scmp.ne.s32.totalorder %s24, %s25
    %p36 = scmp.eq.s32.totalorder %s16, 0
    %p37 = por %p35, %p36
    %p38 = scmp.ne.s32.totalorder %s24, %s25
    %p39 = scmp.eq.s32.totalorder %s17, 1
    %p40 = por %p38, %p39
    %p42 = scmp.ne.s32.totalorder %s25, %s41
    %p43 = scmp.eq.s32.totalorder %s17, 0
    %p44 = por %p42, %p43
    %s46 = sadd.s32 %s45, 1
    %p49 = scmp.eq.s32.totalorder %s11, 1
    %p50 = scmp.ne.s32.totalorder %s45, %s47
    %p51 = scmp.eq.s32.totalorder %s11, 0
    %p52 = por %p50, %p51
    %p53 = scmp.ne.s32.totalorder %s45, %s47
    %p54 = scmp.eq.s32.totalorder %s16, 1
    %p55 = por %p53, %p54
    %p56 = scmp.ne.s32.totalorder %s47, %s48
    %p57 = scmp.eq.s32.totalorder %s16, 0
    %p58 = por %p56, %p57
    %p59 = scmp.ne.s32.totalorder %s47, %s48
    %p60 = scmp.eq.s32.totalorder %s17, 1
    %p61 = por %p59, %p60
    %p63 = scmp.ne.s32.totalorder %s48, %s62
    %p64 = scmp.eq.s32.totalorder %s17, 0
    %p65 = por %p63, %p64
    %s67 = sadd.s32 %s66, 1
    %p70 = scmp.eq.s32.totalorder %s11, 1
    %p71 = scmp.ne.s32.totalorder %s66, %s68
    %p72 = scmp.eq.s32.totalorder %s11, 0
    %p73 = por %p71, %p72
    %p74 = scmp.ne.s32.totalorder %s66, %s68
    %p75 = scmp.eq.s32.totalorder %s16, 1
    %p76 = por %p74, %p75
    %p77 = scmp.ne.s32.totalorder %s68, %s69
    %p78 = scmp.eq.s32.totalorder %s16, 0
    %p79 = por %p77, %p78
    %p80 = scmp.ne.s32.totalorder %s68, %s69
    %p81 = scmp.eq.s32.totalorder %s17, 1
    %p82 = por %p80, %p81
    %p84 = scmp.ne.s32.totalorder %s69, %s83
    %p85 = scmp.eq.s32.totalorder %s17, 0
    %p86 = por %p84, %p85
    %s88 = sadd.s32 %s87, 1
    %p91 = scmp.eq.s32.totalorder %s11, 1
    %p92 = scmp.ne.s32.totalorder %s87, %s89
    %p93 = scmp.eq.s32.totalorder %s11, 0
    %p94 = por %p92, %p93
    %p95 = scmp.ne.s32.totalorder %s87, %s89
    %p96 = scmp.eq.s32.totalorder %s16, 1
    %p97 = por %p95, %p96
    %p98 = scmp.ne.s32.totalorder %s89, %s90
    %p99 = scmp.eq.s32.totalorder %s16, 0
    %p100 = por %p98, %p99
    %p101 = scmp.ne.s32.totalorder %s89, %s90
    %p102 = scmp.eq.s32.totalorder %s17, 1
    %p103 = por %p101, %p102
    %p105 = scmp.ne.s32.totalorder %s90, %s104
    %p106 = scmp.eq.s32.totalorder %s17, 0
    %p107 = por %p105, %p106
    %s109 = sadd.s32 %s108, 1
    %p112 = scmp.eq.s32.totalorder %s11, 1
    %p113 = scmp.ne.s32.totalorder %s108, %s110
    %p114 = scmp.eq.s32.totalorder %s11, 0
    %p115 = por %p113, %p114
    %p116 = scmp.ne.s32.totalorder %s108, %s110
    %p117 = scmp.eq.s32.totalorder %s16, 1
    %p118 = por %p116, %p117
    %p119 = scmp.ne.s32.totalorder %s110, %s111
    %p120 = scmp.eq.s32.totalorder %s16, 0
    %p121 = por %p119, %p120
    %p122 = scmp.ne.s32.totalorder %s110, %s111
    %p123 = scmp.eq.s32.totalorder %s17, 1
    %p124 = por %p122, %p123
    %p126 = scmp.ne.s32.totalorder %s111, %s125
    %p127 = scmp.eq.s32.totalorder %s17, 0
    %p128 = por %p126, %p127
    %s129 = ssub.s32 %s11, %s18
    %p130 = scmp.eq.s32.totalorder %s129, 0
    %s132 = sadd.s32 %s131, 1
    %s133 = scalar_select %p130, %s131, %s132
    %p136 = pneg %p130
    %p137 = scmp.eq.s32.totalorder %s11, 1
    %p138 = por %p136, %p137
    %p139 = scmp.ne.s32.totalorder %s131, %s134
    %p140 = scmp.eq.s32.totalorder %s11, 0
    %p141 = por %p139, %p140
    %p142 = scmp.ne.s32.totalorder %s131, %s134
    %p143 = scmp.eq.s32.totalorder %s16, 1
    %p144 = por %p142, %p143
    %p145 = scmp.ne.s32.totalorder %s134, %s135
    %p146 = scmp.eq.s32.totalorder %s16, 0
    %p147 = por %p145, %p146
    %p148 = scmp.ne.s32.totalorder %s134, %s135
    %p149 = scmp.eq.s32.totalorder %s17, 1
    %p150 = por %p148, %p149
    %p152 = scmp.ne.s32.totalorder %s135, %s151
    %p153 = scmp.eq.s32.totalorder %s17, 0
    %p154 = por %p152, %p153
    %p155 = scmp.le.s32.totalorder 1, %s11
    %p156 = scmp.lt.s32.totalorder %s11, 3
    %p157 = pnand %p155, %p156
    %p158 = pneg %p157
    // Predicated region
    $region9: #{reg_flat_niid_forward.8} parent=5 // pred_check
      _
    $region10: #{reg_flat_niid_forward.8} parent=5 // pred_check_branch
      %160 = sbr.rel (%p157) target = $region12
    $region11: #{reg_flat_niid_forward.8} parent=5 // pred_region
      %s161 = ssub.s32 %s11, 1
      // Predicated region
      $region13: #{reg_flat_niid_forward.8} parent=11 // pred_check
        %p162 = pneg %p58
      $region14: #{reg_flat_niid_forward.8} parent=11 // pred_check_branch
        %164 = sbr.rel (%p162) target = $region16
      $region15: #{reg_flat_niid_forward.8} parent=11 // pred_region
        _
      $region16: #{reg_flat_niid_forward.8} parent=11 // pred_fallthru
        _
      // Predicated region
      $region17: #{reg_flat_niid_forward.8} parent=11 // pred_check
        %p165 = pneg %p79
      $region18: #{reg_flat_niid_forward.8} parent=11 // pred_check_branch
        %167 = sbr.rel (%p165) target = $region20
      $region19: #{reg_flat_niid_forward.8} parent=11 // pred_region
        _
      $region20: #{reg_flat_niid_forward.8} parent=11 // pred_fallthru
        _
      // Predicated region
      $region21: #{reg_flat_niid_forward.8} parent=11 // pred_check
        %p168 = pneg %p100
      $region22: #{reg_flat_niid_forward.8} parent=11 // pred_check_branch
        %170 = sbr.rel (%p168) target = $region24
      $region23: #{reg_flat_niid_forward.8} parent=11 // pred_region
        _
      $region24: #{reg_flat_niid_forward.8} parent=11 // pred_fallthru
        _
      // Predicated region
      $region25: #{reg_flat_niid_forward.8} parent=11 // pred_check
        %p171 = pneg %p121
      $region26: #{reg_flat_niid_forward.8} parent=11 // pred_check_branch
        %173 = sbr.rel (%p171) target = $region28
      $region27: #{reg_flat_niid_forward.8} parent=11 // pred_region
        _
      $region28: #{reg_flat_niid_forward.8} parent=11 // pred_fallthru
        _
    $region12: #{reg_flat_niid_forward.8} parent=5 // pred_fallthru
      _
    %p174 = scmp.lt.s32.totalorder %s11, 2
    // Predicated region
    $region29: #{reg_flat_niid_forward.8} parent=5 // pred_check
      %p175 = pneg %p174
    $region30: #{reg_flat_niid_forward.8} parent=5 // pred_check_branch
      %177 = sbr.rel (%p175) target = $region32
    $region31: #{reg_flat_niid_forward.8} parent=5 // pred_region
      // Predicated region
      $region33: #{reg_flat_niid_forward.8} parent=31 // pred_check
        %p178 = pneg %p31
      $region34: #{reg_flat_niid_forward.8} parent=31 // pred_check_branch
        %180 = sbr.rel (%p178) target = $region36
      $region35: #{reg_flat_niid_forward.8} parent=31 // pred_region
        %s181 = smul.u32 64, %s11
        %p182 = scmp.lt.s32.totalorder %s181, 127
        %s183 = scalar_select %p182, %s181, 127
        %s184 = smul.addr %s183, 8
        %s185 = scalar_lea.vmem %s0, %s184
        %s186 = smul.u32 64, %s11
      $region36: #{reg_flat_niid_forward.8} parent=31 // pred_fallthru
        _
    $region32: #{reg_flat_niid_forward.8} parent=5 // pred_fallthru
      _
    %p187 = scmp.le.s32.totalorder 1, %s11
    %p188 = scmp.lt.s32.totalorder %s11, 3
    %p189 = pnand %p187, %p188
    %p190 = pneg %p189
    // Predicated region
    $region37: #{reg_flat_niid_forward.8} parent=5 // pred_check
      _
    $region38: #{reg_flat_niid_forward.8} parent=5 // pred_check_branch
      %192 = sbr.rel (%p189) target = $region40
    $region39: #{reg_flat_niid_forward.8} parent=5 // pred_region
      %s193 = ssub.s32 %s11, 1
      %s194 = smul.u32 64, %s16
      %p195 = scmp.lt.s32.totalorder %s194, 127
      %s196 = scalar_select %p195, %s194, 127
      %s197 = smul.addr %s196, 8
      %s198 = scalar_lea.vmem %s0, %s197
      %p199 = pneg %p37
      %p200 = pneg %p34
      %p201 = pneg %p58
      %p202 = pneg %p55
      %p203 = pneg %p79
      %p204 = pneg %p76
      %p205 = pneg %p100
      %p206 = pneg %p97
      %p207 = pneg %p121
      %p208 = pneg %p118
      %p209 = pneg %p147
      %p210 = pneg %p144
      %s211 = smul.u32 64, %s16
      %p212 = scmp.lt.s32.totalorder %s211, 127
      %s213 = scalar_select %p212, %s211, 127
      %s214 = smul.addr %s213, 8
      %s215 = scalar_lea.vmem %s5, %s214
      %s216 = smul.u32 64, %s16
      %p217 = scmp.lt.s32.totalorder %s216, 127
      %s218 = scalar_select %p217, %s216, 127
      %s219 = smul.addr %s218, 8
      %s220 = scalar_lea.vmem %s0, %s219
      %s221 = smul.u32 64, %s16
      %s222 = smul.u32 64, %s16
      %p223 = scmp.lt.s32.totalorder %s222, 127
      %s224 = scalar_select %p223, %s222, 127
      %s225 = smul.addr %s224, 8
      %s226 = scalar_lea.vmem %s5, %s225
      %s227 = smul.u32 64, %s16
      %v228 = vld [vmem:[%s220] sm:$0xff]
      %v229 = vld [vmem:[%s220 + $0x8] sm:$0xff]
      %v230 = vld [vmem:[%s220 + $0x10] sm:$0xff]
      %v231 = vld [vmem:[%s220 + $0x18] sm:$0xff]
      %v232 = vld [vmem:[%s220 + $0x20] sm:$0xff]
      %v233 = vld [vmem:[%s220 + $0x28] sm:$0xff]
      %v234 = vld [vmem:[%s220 + $0x30] sm:$0xff]
      %v235 = vld [vmem:[%s220 + $0x38] sm:$0xff]
      %v236 = vld [vmem:[%s220 + $0x40] sm:$0xff]
      %v237 = vld [vmem:[%s220 + $0x48] sm:$0xff]
      %v238 = vld [vmem:[%s220 + $0x50] sm:$0xff]
      %v239 = vld [vmem:[%s220 + $0x58] sm:$0xff]
      %v240 = vld [vmem:[%s220 + $0x60] sm:$0xff]
      %v241 = vld [vmem:[%s220 + $0x68] sm:$0xff]
      %v242 = vld [vmem:[%s220 + $0x70] sm:$0xff]
      %v243 = vld [vmem:[%s220 + $0x78] sm:$0xff]
      %v244 = vld [vmem:[%s220 + $0x80] sm:$0xff]
      %v245 = vld [vmem:[%s220 + $0x88] sm:$0xff]
      %v246 = vld [vmem:[%s220 + $0x90] sm:$0xff]
      %v247 = vld [vmem:[%s220 + $0x98] sm:$0xff]
      %v248 = vld [vmem:[%s220 + $0xa0] sm:$0xff]
      %v249 = vld [vmem:[%s220 + $0xa8] sm:$0xff]
      %v250 = vld [vmem:[%s220 + $0xb0] sm:$0xff]
      %v251 = vld [vmem:[%s220 + $0xb8] sm:$0xff]
      %v252 = vld [vmem:[%s220 + $0xc0] sm:$0xff]
      %v253 = vld [vmem:[%s220 + $0xc8] sm:$0xff]
      %v254 = vld [vmem:[%s220 + $0xd0] sm:$0xff]
      %v255 = vld [vmem:[%s220 + $0xd8] sm:$0xff]
      %v256 = vld [vmem:[%s220 + $0xe0] sm:$0xff]
      %v257 = vld [vmem:[%s220 + $0xe8] sm:$0xff]
      %v258 = vld [vmem:[%s220 + $0xf0] sm:$0xff]
      %v259 = vld [vmem:[%s220 + $0xf8] sm:$0xff]
      %v260 = vld [vmem:[%s220 + $0x100] sm:$0xff]
      %v261 = vld [vmem:[%s220 + $0x108] sm:$0xff]
      %v262 = vld [vmem:[%s220 + $0x110] sm:$0xff]
      %v263 = vld [vmem:[%s220 + $0x118] sm:$0xff]
      %v264 = vld [vmem:[%s220 + $0x120] sm:$0xff]
      %v265 = vld [vmem:[%s220 + $0x128] sm:$0xff]
      %v266 = vld [vmem:[%s220 + $0x130] sm:$0xff]
      %v267 = vld [vmem:[%s220 + $0x138] sm:$0xff]
      %v268 = vld [vmem:[%s220 + $0x140] sm:$0xff]
      %v269 = vld [vmem:[%s220 + $0x148] sm:$0xff]
      %v270 = vld [vmem:[%s220 + $0x150] sm:$0xff]
      %v271 = vld [vmem:[%s220 + $0x158] sm:$0xff]
      %v272 = vld [vmem:[%s220 + $0x160] sm:$0xff]
      %v273 = vld [vmem:[%s220 + $0x168] sm:$0xff]
      %v274 = vld [vmem:[%s220 + $0x170] sm:$0xff]
      %v275 = vld [vmem:[%s220 + $0x178] sm:$0xff]
      %v276 = vld [vmem:[%s220 + $0x180] sm:$0xff]
      %v277 = vld [vmem:[%s220 + $0x188] sm:$0xff]
      %v278 = vld [vmem:[%s220 + $0x190] sm:$0xff]
      %v279 = vld [vmem:[%s220 + $0x198] sm:$0xff]
      %v280 = vld [vmem:[%s220 + $0x1a0] sm:$0xff]
      %v281 = vld [vmem:[%s220 + $0x1a8] sm:$0xff]
      %v282 = vld [vmem:[%s220 + $0x1b0] sm:$0xff]
      %v283 = vld [vmem:[%s220 + $0x1b8] sm:$0xff]
      %v284 = vld [vmem:[%s220 + $0x1c0] sm:$0xff]
      %v285 = vld [vmem:[%s220 + $0x1c8] sm:$0xff]
      %v286 = vld [vmem:[%s220 + $0x1d0] sm:$0xff]
      %v287 = vld [vmem:[%s220 + $0x1d8] sm:$0xff]
      %v288 = vld [vmem:[%s220 + $0x1e0] sm:$0xff]
      %v289 = vld [vmem:[%s220 + $0x1e8] sm:$0xff]
      %v290 = vld [vmem:[%s220 + $0x1f0] sm:$0xff]
      %v291 = vld [vmem:[%s220 + $0x1f8] sm:$0xff]
      %v292 = vld [vmem:[%s1] sm:$0xf]
      %v293 = vld [vmem:[%s2] sm:$0x1]
      %v295 = vperm.slane %v293, 0
      %vm297 = vcmask 31744
      %v299 = vsel %vm297, %v228, 0
      %v302 = vsel %vm297, %v229, 0
      %v305 = vsel %vm297, %v230, 0
      %v308 = vsel %vm297, %v231, 0
      %v311 = vsel %vm297, %v232, 0
      %v314 = vsel %vm297, %v233, 0
      %v317 = vsel %vm297, %v234, 0
      %v320 = vsel %vm297, %v235, 0
      %v323 = vsel %vm297, %v236, 0
      %v326 = vsel %vm297, %v237, 0
      %v329 = vsel %vm297, %v238, 0
      %v332 = vsel %vm297, %v239, 0
      %v335 = vsel %vm297, %v240, 0
      %v338 = vsel %vm297, %v241, 0
      %v341 = vsel %vm297, %v242, 0
      %v344 = vsel %vm297, %v243, 0
      %v347 = vsel %vm297, %v244, 0
      %v350 = vsel %vm297, %v245, 0
      %v353 = vsel %vm297, %v246, 0
      %v356 = vsel %vm297, %v247, 0
      %v359 = vsel %vm297, %v248, 0
      %v362 = vsel %vm297, %v249, 0
      %v365 = vsel %vm297, %v250, 0
      %v368 = vsel %vm297, %v251, 0
      %v371 = vsel %vm297, %v252, 0
      %v374 = vsel %vm297, %v253, 0
      %v377 = vsel %vm297, %v254, 0
      %v380 = vsel %vm297, %v255, 0
      %v383 = vsel %vm297, %v256, 0
      %v386 = vsel %vm297, %v257, 0
      %v389 = vsel %vm297, %v258, 0
      %v392 = vsel %vm297, %v259, 0
      %v395 = vsel %vm297, %v260, 0
      %v398 = vsel %vm297, %v261, 0
      %v401 = vsel %vm297, %v262, 0
      %v404 = vsel %vm297, %v263, 0
      %v407 = vsel %vm297, %v264, 0
      %v410 = vsel %vm297, %v265, 0
      %v413 = vsel %vm297, %v266, 0
      %v416 = vsel %vm297, %v267, 0
      %v419 = vsel %vm297, %v268, 0
      %v422 = vsel %vm297, %v269, 0
      %v425 = vsel %vm297, %v270, 0
      %v428 = vsel %vm297, %v271, 0
      %v431 = vsel %vm297, %v272, 0
      %v434 = vsel %vm297, %v273, 0
      %v437 = vsel %vm297, %v274, 0
      %v440 = vsel %vm297, %v275, 0
      %v443 = vsel %vm297, %v276, 0
      %v446 = vsel %vm297, %v277, 0
      %v449 = vsel %vm297, %v278, 0
      %v452 = vsel %vm297, %v279, 0
      %v455 = vsel %vm297, %v280, 0
      %v458 = vsel %vm297, %v281, 0
      %v461 = vsel %vm297, %v282, 0
      %v464 = vsel %vm297, %v283, 0
      %v467 = vsel %vm297, %v284, 0
      %v470 = vsel %vm297, %v285, 0
      %v473 = vsel %vm297, %v286, 0
      %v476 = vsel %vm297, %v287, 0
      %v479 = vsel %vm297, %v288, 0
      %v482 = vsel %vm297, %v289, 0
      %v485 = vsel %vm297, %v290, 0
      %v488 = vsel %vm297, %v291, 0
      %vm490 = vcmask 1043456
      %v492 = vsel %vm490, %v292, 0
      %494 = vmatpush.msra.mxu0 0.0
      %495 = vmatpush.msra.mxu0 0.0
      %496 = vmatpush.msra.mxu0 0.0
      %497 = vmatpush.msra.mxu0 0.0
      %498 = vmatpush.msra.mxu0 0.0
      %499 = vmatpush.msra.mxu0 0.0
      %500 = vmatpush.msra.mxu0 0.0
      %501 = vmatpush.msra.mxu0 0.0
      %502 = vmatpush.msra.mxu0 0.0
      %503 = vmatpush.msra.mxu0 0.0
      %504 = vmatpush.msra.mxu0 0.0
      %505 = vmatpush.msra.mxu0 0.0
      %506 = vmatpush.msra.mxu0 0.0
      %507 = vmatpush.msra.mxu0 0.0
      %508 = vmatpush.msra.mxu0 0.0
      %509 = vmatpush.msra.mxu0 %v492
      %510 = vmatmul.f32.gmra.mxu0 %v299
      %v511 = vpop.f32.mrf.mxu0
      %v512 = vadd.f32 %v295, %v511
      %513 = vmatmul.f32.gmra.mxu0 %v302
      %v514 = vpop.f32.mrf.mxu0
      %v515 = vadd.f32 %v295, %v514
      %516 = vmatmul.f32.gmra.mxu0 %v305
      %v517 = vpop.f32.mrf.mxu0
      %v518 = vadd.f32 %v295, %v517
      %519 = vmatmul.f32.gmra.mxu0 %v308
      %v520 = vpop.f32.mrf.mxu0
      %v521 = vadd.f32 %v295, %v520
      %522 = vmatmul.f32.gmra.mxu0 %v311
      %v523 = vpop.f32.mrf.mxu0
      %v524 = vadd.f32 %v295, %v523
      %525 = vmatmul.f32.gmra.mxu0 %v314
      %v526 = vpop.f32.mrf.mxu0
      %v527 = vadd.f32 %v295, %v526
      %528 = vmatmul.f32.gmra.mxu0 %v317
      %v529 = vpop.f32.mrf.mxu0
      %v530 = vadd.f32 %v295, %v529
      %531 = vmatmul.f32.gmra.mxu0 %v320
      %v532 = vpop.f32.mrf.mxu0
      %v533 = vadd.f32 %v295, %v532
      %534 = vmatmul.f32.gmra.mxu0 %v323
      %v535 = vpop.f32.mrf.mxu0
      %v536 = vadd.f32 %v295, %v535
      %537 = vmatmul.f32.gmra.mxu0 %v326
      %v538 = vpop.f32.mrf.mxu0
      %v539 = vadd.f32 %v295, %v538
      %540 = vmatmul.f32.gmra.mxu0 %v329
      %v541 = vpop.f32.mrf.mxu0
      %v542 = vadd.f32 %v295, %v541
      %543 = vmatmul.f32.gmra.mxu0 %v332
      %v544 = vpop.f32.mrf.mxu0
      %v545 = vadd.f32 %v295, %v544
      %546 = vmatmul.f32.gmra.mxu0 %v335
      %v547 = vpop.f32.mrf.mxu0
      %v548 = vadd.f32 %v295, %v547
      %549 = vmatmul.f32.gmra.mxu0 %v338
      %v550 = vpop.f32.mrf.mxu0
      %v551 = vadd.f32 %v295, %v550
      %552 = vmatmul.f32.gmra.mxu0 %v341
      %v553 = vpop.f32.mrf.mxu0
      %v554 = vadd.f32 %v295, %v553
      %555 = vmatmul.f32.gmra.mxu0 %v344
      %v556 = vpop.f32.mrf.mxu0
      %v557 = vadd.f32 %v295, %v556
      %558 = vmatmul.f32.gmra.mxu0 %v347
      %v559 = vpop.f32.mrf.mxu0
      %v560 = vadd.f32 %v295, %v559
      %561 = vmatmul.f32.gmra.mxu0 %v350
      %v562 = vpop.f32.mrf.mxu0
      %v563 = vadd.f32 %v295, %v562
      %564 = vmatmul.f32.gmra.mxu0 %v353
      %v565 = vpop.f32.mrf.mxu0
      %v566 = vadd.f32 %v295, %v565
      %567 = vmatmul.f32.gmra.mxu0 %v356
      %v568 = vpop.f32.mrf.mxu0
      %v569 = vadd.f32 %v295, %v568
      %570 = vmatmul.f32.gmra.mxu0 %v359
      %v571 = vpop.f32.mrf.mxu0
      %v572 = vadd.f32 %v295, %v571
      %573 = vmatmul.f32.gmra.mxu0 %v362
      %v574 = vpop.f32.mrf.mxu0
      %v575 = vadd.f32 %v295, %v574
      %576 = vmatmul.f32.gmra.mxu0 %v365
      %v577 = vpop.f32.mrf.mxu0
      %v578 = vadd.f32 %v295, %v577
      %579 = vmatmul.f32.gmra.mxu0 %v368
      %v580 = vpop.f32.mrf.mxu0
      %v581 = vadd.f32 %v295, %v580
      %582 = vmatmul.f32.gmra.mxu0 %v371
      %v583 = vpop.f32.mrf.mxu0
      %v584 = vadd.f32 %v295, %v583
      %585 = vmatmul.f32.gmra.mxu0 %v374
      %v586 = vpop.f32.mrf.mxu0
      %v587 = vadd.f32 %v295, %v586
      %588 = vmatmul.f32.gmra.mxu0 %v377
      %v589 = vpop.f32.mrf.mxu0
      %v590 = vadd.f32 %v295, %v589
      %591 = vmatmul.f32.gmra.mxu0 %v380
      %v592 = vpop.f32.mrf.mxu0
      %v593 = vadd.f32 %v295, %v592
      %594 = vmatmul.f32.gmra.mxu0 %v383
      %v595 = vpop.f32.mrf.mxu0
      %v596 = vadd.f32 %v295, %v595
      %597 = vmatmul.f32.gmra.mxu0 %v386
      %v598 = vpop.f32.mrf.mxu0
      %v599 = vadd.f32 %v295, %v598
      %600 = vmatmul.f32.gmra.mxu0 %v389
      %v601 = vpop.f32.mrf.mxu0
      %v602 = vadd.f32 %v295, %v601
      %603 = vmatmul.f32.gmra.mxu0 %v392
      %v604 = vpop.f32.mrf.mxu0
      %v605 = vadd.f32 %v295, %v604
      %606 = vmatmul.f32.gmra.mxu0 %v395
      %v607 = vpop.f32.mrf.mxu0
      %v608 = vadd.f32 %v295, %v607
      %609 = vmatmul.f32.gmra.mxu0 %v398
      %v610 = vpop.f32.mrf.mxu0
      %v611 = vadd.f32 %v295, %v610
      %612 = vmatmul.f32.gmra.mxu0 %v401
      %v613 = vpop.f32.mrf.mxu0
      %v614 = vadd.f32 %v295, %v613
      %615 = vmatmul.f32.gmra.mxu0 %v404
      %v616 = vpop.f32.mrf.mxu0
      %v617 = vadd.f32 %v295, %v616
      %618 = vmatmul.f32.gmra.mxu0 %v407
      %v619 = vpop.f32.mrf.mxu0
      %v620 = vadd.f32 %v295, %v619
      %621 = vmatmul.f32.gmra.mxu0 %v410
      %v622 = vpop.f32.mrf.mxu0
      %v623 = vadd.f32 %v295, %v622
      %624 = vmatmul.f32.gmra.mxu0 %v413
      %v625 = vpop.f32.mrf.mxu0
      %v626 = vadd.f32 %v295, %v625
      %627 = vmatmul.f32.gmra.mxu0 %v416
      %v628 = vpop.f32.mrf.mxu0
      %v629 = vadd.f32 %v295, %v628
      %630 = vmatmul.f32.gmra.mxu0 %v419
      %v631 = vpop.f32.mrf.mxu0
      %v632 = vadd.f32 %v295, %v631
      %633 = vmatmul.f32.gmra.mxu0 %v422
      %v634 = vpop.f32.mrf.mxu0
      %v635 = vadd.f32 %v295, %v634
      %636 = vmatmul.f32.gmra.mxu0 %v425
      %v637 = vpop.f32.mrf.mxu0
      %v638 = vadd.f32 %v295, %v637
      %639 = vmatmul.f32.gmra.mxu0 %v428
      %v640 = vpop.f32.mrf.mxu0
      %v641 = vadd.f32 %v295, %v640
      %642 = vmatmul.f32.gmra.mxu0 %v431
      %v643 = vpop.f32.mrf.mxu0
      %v644 = vadd.f32 %v295, %v643
      %645 = vmatmul.f32.gmra.mxu0 %v434
      %v646 = vpop.f32.mrf.mxu0
      %v647 = vadd.f32 %v295, %v646
      %648 = vmatmul.f32.gmra.mxu0 %v437
      %v649 = vpop.f32.mrf.mxu0
      %v650 = vadd.f32 %v295, %v649
      %651 = vmatmul.f32.gmra.mxu0 %v440
      %v652 = vpop.f32.mrf.mxu0
      %v653 = vadd.f32 %v295, %v652
      %654 = vmatmul.f32.gmra.mxu0 %v443
      %v655 = vpop.f32.mrf.mxu0
      %v656 = vadd.f32 %v295, %v655
      %657 = vmatmul.f32.gmra.mxu0 %v446
      %v658 = vpop.f32.mrf.mxu0
      %v659 = vadd.f32 %v295, %v658
      %660 = vmatmul.f32.gmra.mxu0 %v449
      %v661 = vpop.f32.mrf.mxu0
      %v662 = vadd.f32 %v295, %v661
      %663 = vmatmul.f32.gmra.mxu0 %v452
      %v664 = vpop.f32.mrf.mxu0
      %v665 = vadd.f32 %v295, %v664
      %666 = vmatmul.f32.gmra.mxu0 %v455
      %v667 = vpop.f32.mrf.mxu0
      %v668 = vadd.f32 %v295, %v667
      %669 = vmatmul.f32.gmra.mxu0 %v458
      %v670 = vpop.f32.mrf.mxu0
      %v671 = vadd.f32 %v295, %v670
      %672 = vmatmul.f32.gmra.mxu0 %v461
      %v673 = vpop.f32.mrf.mxu0
      %v674 = vadd.f32 %v295, %v673
      %675 = vmatmul.f32.gmra.mxu0 %v464
      %v676 = vpop.f32.mrf.mxu0
      %v677 = vadd.f32 %v295, %v676
      %678 = vmatmul.f32.gmra.mxu0 %v467
      %v679 = vpop.f32.mrf.mxu0
      %v680 = vadd.f32 %v295, %v679
      %681 = vmatmul.f32.gmra.mxu0 %v470
      %v682 = vpop.f32.mrf.mxu0
      %v683 = vadd.f32 %v295, %v682
      %684 = vmatmul.f32.gmra.mxu0 %v473
      %v685 = vpop.f32.mrf.mxu0
      %v686 = vadd.f32 %v295, %v685
      %687 = vmatmul.f32.gmra.mxu0 %v476
      %v688 = vpop.f32.mrf.mxu0
      %v689 = vadd.f32 %v295, %v688
      %690 = vmatmul.f32.gmra.mxu0 %v479
      %v691 = vpop.f32.mrf.mxu0
      %v692 = vadd.f32 %v295, %v691
      %693 = vmatmul.f32.gmra.mxu0 %v482
      %v694 = vpop.f32.mrf.mxu0
      %v695 = vadd.f32 %v295, %v694
      %696 = vmatmul.f32.gmra.mxu0 %v485
      %v697 = vpop.f32.mrf.mxu0
      %v698 = vadd.f32 %v295, %v697
      %699 = vmatmul.f32.gmra.mxu0 %v488
      %v700 = vpop.f32.mrf.mxu0
      %v701 = vadd.f32 %v295, %v700
      %702 = vdwg.mxu0
      %v703 = vmax.f32 %v512, 0.0
      %v704 = vmax.f32 %v515, 0.0
      %v705 = vmax.f32 %v518, 0.0
      %v706 = vmax.f32 %v521, 0.0
      %v707 = vmax.f32 %v524, 0.0
      %v708 = vmax.f32 %v527, 0.0
      %v709 = vmax.f32 %v530, 0.0
      %v710 = vmax.f32 %v533, 0.0
      %v711 = vmax.f32 %v536, 0.0
      %v712 = vmax.f32 %v539, 0.0
      %v713 = vmax.f32 %v542, 0.0
      %v714 = vmax.f32 %v545, 0.0
      %v715 = vmax.f32 %v548, 0.0
      %v716 = vmax.f32 %v551, 0.0
      %v717 = vmax.f32 %v554, 0.0
      %v718 = vmax.f32 %v557, 0.0
      %v719 = vmax.f32 %v560, 0.0
      %v720 = vmax.f32 %v563, 0.0
      %v721 = vmax.f32 %v566, 0.0
      %v722 = vmax.f32 %v569, 0.0
      %v723 = vmax.f32 %v572, 0.0
      %v724 = vmax.f32 %v575, 0.0
      %v725 = vmax.f32 %v578, 0.0
      %v726 = vmax.f32 %v581, 0.0
      %v727 = vmax.f32 %v584, 0.0
      %v728 = vmax.f32 %v587, 0.0
      %v729 = vmax.f32 %v590, 0.0
      %v730 = vmax.f32 %v593, 0.0
      %v731 = vmax.f32 %v596, 0.0
      %v732 = vmax.f32 %v599, 0.0
      %v733 = vmax.f32 %v602, 0.0
      %v734 = vmax.f32 %v605, 0.0
      %v735 = vmax.f32 %v608, 0.0
      %v736 = vmax.f32 %v611, 0.0
      %v737 = vmax.f32 %v614, 0.0
      %v738 = vmax.f32 %v617, 0.0
      %v739 = vmax.f32 %v620, 0.0
      %v740 = vmax.f32 %v623, 0.0
      %v741 = vmax.f32 %v626, 0.0
      %v742 = vmax.f32 %v629, 0.0
      %v743 = vmax.f32 %v632, 0.0
      %v744 = vmax.f32 %v635, 0.0
      %v745 = vmax.f32 %v638, 0.0
      %v746 = vmax.f32 %v641, 0.0
      %v747 = vmax.f32 %v644, 0.0
      %v748 = vmax.f32 %v647, 0.0
      %v749 = vmax.f32 %v650, 0.0
      %v750 = vmax.f32 %v653, 0.0
      %v751 = vmax.f32 %v656, 0.0
      %v752 = vmax.f32 %v659, 0.0
      %v753 = vmax.f32 %v662, 0.0
      %v754 = vmax.f32 %v665, 0.0
      %v755 = vmax.f32 %v668, 0.0
      %v756 = vmax.f32 %v671, 0.0
      %v757 = vmax.f32 %v674, 0.0
      %v758 = vmax.f32 %v677, 0.0
      %v759 = vmax.f32 %v680, 0.0
      %v760 = vmax.f32 %v683, 0.0
      %v761 = vmax.f32 %v686, 0.0
      %v762 = vmax.f32 %v689, 0.0
      %v763 = vmax.f32 %v692, 0.0
      %v764 = vmax.f32 %v695, 0.0
      %v765 = vmax.f32 %v698, 0.0
      %v766 = vmax.f32 %v701, 0.0
      %v767 = vld [vmem:[%s3] sm:$0xff]
      %v768 = vld [vmem:[%s3 + $0x8] sm:$0xff]
      %v769 = vld [vmem:[%s3 + $0x10] sm:$0xff]
      %v770 = vld [vmem:[%s3 + $0x18] sm:$0xff]
      %vm771 = vcmask 261120
      %v773 = vsel %vm771, %v703, 0
      %v776 = vsel %vm771, %v704, 0
      %v779 = vsel %vm771, %v705, 0
      %v782 = vsel %vm771, %v706, 0
      %v785 = vsel %vm771, %v707, 0
      %v788 = vsel %vm771, %v708, 0
      %v791 = vsel %vm771, %v709, 0
      %v794 = vsel %vm771, %v710, 0
      %v797 = vsel %vm771, %v711, 0
      %v800 = vsel %vm771, %v712, 0
      %v803 = vsel %vm771, %v713, 0
      %v806 = vsel %vm771, %v714, 0
      %v809 = vsel %vm771, %v715, 0
      %v812 = vsel %vm771, %v716, 0
      %v815 = vsel %vm771, %v717, 0
      %v818 = vsel %vm771, %v718, 0
      %v821 = vsel %vm771, %v719, 0
      %v824 = vsel %vm771, %v720, 0
      %v827 = vsel %vm771, %v721, 0
      %v830 = vsel %vm771, %v722, 0
      %v833 = vsel %vm771, %v723, 0
      %v836 = vsel %vm771, %v724, 0
      %v839 = vsel %vm771, %v725, 0
      %v842 = vsel %vm771, %v726, 0
      %v845 = vsel %vm771, %v727, 0
      %v848 = vsel %vm771, %v728, 0
      %v851 = vsel %vm771, %v729, 0
      %v854 = vsel %vm771, %v730, 0
      %v857 = vsel %vm771, %v731, 0
      %v860 = vsel %vm771, %v732, 0
      %v863 = vsel %vm771, %v733, 0
      %v866 = vsel %vm771, %v734, 0
      %v869 = vsel %vm771, %v735, 0
      %v872 = vsel %vm771, %v736, 0
      %v875 = vsel %vm771, %v737, 0
      %v878 = vsel %vm771, %v738, 0
      %v881 = vsel %vm771, %v739, 0
      %v884 = vsel %vm771, %v740, 0
      %v887 = vsel %vm771, %v741, 0
      %v890 = vsel %vm771, %v742, 0
      %v893 = vsel %vm771, %v743, 0
      %v896 = vsel %vm771, %v744, 0
      %v899 = vsel %vm771, %v745, 0
      %v902 = vsel %vm771, %v746, 0
      %v905 = vsel %vm771, %v747, 0
      %v908 = vsel %vm771, %v748, 0
      %v911 = vsel %vm771, %v749, 0
      %v914 = vsel %vm771, %v750, 0
      %v917 = vsel %vm771, %v751, 0
      %v920 = vsel %vm771, %v752, 0
      %v923 = vsel %vm771, %v753, 0
      %v926 = vsel %vm771, %v754, 0
      %v929 = vsel %vm771, %v755, 0
      %v932 = vsel %vm771, %v756, 0
      %v935 = vsel %vm771, %v757, 0
      %v938 = vsel %vm771, %v758, 0
      %v941 = vsel %vm771, %v759, 0
      %v944 = vsel %vm771, %v760, 0
      %v947 = vsel %vm771, %v761, 0
      %v950 = vsel %vm771, %v762, 0
      %v953 = vsel %vm771, %v763, 0
      %v956 = vsel %vm771, %v764, 0
      %v959 = vsel %vm771, %v765, 0
      %v962 = vsel %vm771, %v766, 0
      %964 = vmatpush.msra.mxu0 0.0
      %965 = vmatpush.msra.mxu0 0.0
      %966 = vmatpush.msra.mxu0 0.0
      %967 = vmatpush.msra.mxu0 0.0
      %968 = vmatpush.msra.mxu0 0.0
      %969 = vmatpush.msra.mxu0 0.0
      %970 = vmatpush.msra.mxu0 0.0
      %971 = vmatpush.msra.mxu0 0.0
      %972 = vmatpush.msra.mxu0 0.0
      %973 = vmatpush.msra.mxu0 0.0
      %974 = vmatpush.msra.mxu0 0.0
      %975 = vmatpush.msra.mxu0 0.0
      %976 = vmatpush.msra.mxu0 %v770
      %977 = vmatpush.msra.mxu0 %v769
      %978 = vmatpush.msra.mxu0 %v768
      %979 = vmatpush.msra.mxu0 %v767
      %980 = vmatmul.f32.gmra.mxu0 %v773
      %v981 = vpop.f32.mrf.mxu0
      %v982 = vadd.f32 0.0, %v981
      %983 = vmatmul.f32.gmra.mxu0 %v776
      %v984 = vpop.f32.mrf.mxu0
      %v985 = vadd.f32 0.0, %v984
      %986 = vmatmul.f32.gmra.mxu0 %v779
      %v987 = vpop.f32.mrf.mxu0
      %v988 = vadd.f32 0.0, %v987
      %989 = vmatmul.f32.gmra.mxu0 %v782
      %v990 = vpop.f32.mrf.mxu0
      %v991 = vadd.f32 0.0, %v990
      %992 = vmatmul.f32.gmra.mxu0 %v785
      %v993 = vpop.f32.mrf.mxu0
      %v994 = vadd.f32 0.0, %v993
      %995 = vmatmul.f32.gmra.mxu0 %v788
      %v996 = vpop.f32.mrf.mxu0
      %v997 = vadd.f32 0.0, %v996
      %998 = vmatmul.f32.gmra.mxu0 %v791
      %v999 = vpop.f32.mrf.mxu0
      %v1000 = vadd.f32 0.0, %v999
      %1001 = vmatmul.f32.gmra.mxu0 %v794
      %v1002 = vpop.f32.mrf.mxu0
      %v1003 = vadd.f32 0.0, %v1002
      %1004 = vmatmul.f32.gmra.mxu0 %v797
      %v1005 = vpop.f32.mrf.mxu0
      %v1006 = vadd.f32 0.0, %v1005
      %1007 = vmatmul.f32.gmra.mxu0 %v800
      %v1008 = vpop.f32.mrf.mxu0
      %v1009 = vadd.f32 0.0, %v1008
      %1010 = vmatmul.f32.gmra.mxu0 %v803
      %v1011 = vpop.f32.mrf.mxu0
      %v1012 = vadd.f32 0.0, %v1011
      %1013 = vmatmul.f32.gmra.mxu0 %v806
      %v1014 = vpop.f32.mrf.mxu0
      %v1015 = vadd.f32 0.0, %v1014
      %1016 = vmatmul.f32.gmra.mxu0 %v809
      %v1017 = vpop.f32.mrf.mxu0
      %v1018 = vadd.f32 0.0, %v1017
      %1019 = vmatmul.f32.gmra.mxu0 %v812
      %v1020 = vpop.f32.mrf.mxu0
      %v1021 = vadd.f32 0.0, %v1020
      %1022 = vmatmul.f32.gmra.mxu0 %v815
      %v1023 = vpop.f32.mrf.mxu0
      %v1024 = vadd.f32 0.0, %v1023
      %1025 = vmatmul.f32.gmra.mxu0 %v818
      %v1026 = vpop.f32.mrf.mxu0
      %v1027 = vadd.f32 0.0, %v1026
      %1028 = vmatmul.f32.gmra.mxu0 %v821
      %v1029 = vpop.f32.mrf.mxu0
      %v1030 = vadd.f32 0.0, %v1029
      %1031 = vmatmul.f32.gmra.mxu0 %v824
      %v1032 = vpop.f32.mrf.mxu0
      %v1033 = vadd.f32 0.0, %v1032
      %1034 = vmatmul.f32.gmra.mxu0 %v827
      %v1035 = vpop.f32.mrf.mxu0
      %v1036 = vadd.f32 0.0, %v1035
      %1037 = vmatmul.f32.gmra.mxu0 %v830
      %v1038 = vpop.f32.mrf.mxu0
      %v1039 = vadd.f32 0.0, %v1038
      %1040 = vmatmul.f32.gmra.mxu0 %v833
      %v1041 = vpop.f32.mrf.mxu0
      %v1042 = vadd.f32 0.0, %v1041
      %1043 = vmatmul.f32.gmra.mxu0 %v836
      %v1044 = vpop.f32.mrf.mxu0
      %v1045 = vadd.f32 0.0, %v1044
      %1046 = vmatmul.f32.gmra.mxu0 %v839
      %v1047 = vpop.f32.mrf.mxu0
      %v1048 = vadd.f32 0.0, %v1047
      %1049 = vmatmul.f32.gmra.mxu0 %v842
      %v1050 = vpop.f32.mrf.mxu0
      %v1051 = vadd.f32 0.0, %v1050
      %1052 = vmatmul.f32.gmra.mxu0 %v845
      %v1053 = vpop.f32.mrf.mxu0
      %v1054 = vadd.f32 0.0, %v1053
      %1055 = vmatmul.f32.gmra.mxu0 %v848
      %v1056 = vpop.f32.mrf.mxu0
      %v1057 = vadd.f32 0.0, %v1056
      %1058 = vmatmul.f32.gmra.mxu0 %v851
      %v1059 = vpop.f32.mrf.mxu0
      %v1060 = vadd.f32 0.0, %v1059
      %1061 = vmatmul.f32.gmra.mxu0 %v854
      %v1062 = vpop.f32.mrf.mxu0
      %v1063 = vadd.f32 0.0, %v1062
      %1064 = vmatmul.f32.gmra.mxu0 %v857
      %v1065 = vpop.f32.mrf.mxu0
      %v1066 = vadd.f32 0.0, %v1065
      %1067 = vmatmul.f32.gmra.mxu0 %v860
      %v1068 = vpop.f32.mrf.mxu0
      %v1069 = vadd.f32 0.0, %v1068
      %1070 = vmatmul.f32.gmra.mxu0 %v863
      %v1071 = vpop.f32.mrf.mxu0
      %v1072 = vadd.f32 0.0, %v1071
      %1073 = vmatmul.f32.gmra.mxu0 %v866
      %v1074 = vpop.f32.mrf.mxu0
      %v1075 = vadd.f32 0.0, %v1074
      %1076 = vmatmul.f32.gmra.mxu0 %v869
      %v1077 = vpop.f32.mrf.mxu0
      %v1078 = vadd.f32 0.0, %v1077
      %1079 = vmatmul.f32.gmra.mxu0 %v872
      %v1080 = vpop.f32.mrf.mxu0
      %v1081 = vadd.f32 0.0, %v1080
      %1082 = vmatmul.f32.gmra.mxu0 %v875
      %v1083 = vpop.f32.mrf.mxu0
      %v1084 = vadd.f32 0.0, %v1083
      %1085 = vmatmul.f32.gmra.mxu0 %v878
      %v1086 = vpop.f32.mrf.mxu0
      %v1087 = vadd.f32 0.0, %v1086
      %1088 = vmatmul.f32.gmra.mxu0 %v881
      %v1089 = vpop.f32.mrf.mxu0
      %v1090 = vadd.f32 0.0, %v1089
      %1091 = vmatmul.f32.gmra.mxu0 %v884
      %v1092 = vpop.f32.mrf.mxu0
      %v1093 = vadd.f32 0.0, %v1092
      %1094 = vmatmul.f32.gmra.mxu0 %v887
      %v1095 = vpop.f32.mrf.mxu0
      %v1096 = vadd.f32 0.0, %v1095
      %1097 = vmatmul.f32.gmra.mxu0 %v890
      %v1098 = vpop.f32.mrf.mxu0
      %v1099 = vadd.f32 0.0, %v1098
      %1100 = vmatmul.f32.gmra.mxu0 %v893
      %v1101 = vpop.f32.mrf.mxu0
      %v1102 = vadd.f32 0.0, %v1101
      %1103 = vmatmul.f32.gmra.mxu0 %v896
      %v1104 = vpop.f32.mrf.mxu0
      %v1105 = vadd.f32 0.0, %v1104
      %1106 = vmatmul.f32.gmra.mxu0 %v899
      %v1107 = vpop.f32.mrf.mxu0
      %v1108 = vadd.f32 0.0, %v1107
      %1109 = vmatmul.f32.gmra.mxu0 %v902
      %v1110 = vpop.f32.mrf.mxu0
      %v1111 = vadd.f32 0.0, %v1110
      %1112 = vmatmul.f32.gmra.mxu0 %v905
      %v1113 = vpop.f32.mrf.mxu0
      %v1114 = vadd.f32 0.0, %v1113
      %1115 = vmatmul.f32.gmra.mxu0 %v908
      %v1116 = vpop.f32.mrf.mxu0
      %v1117 = vadd.f32 0.0, %v1116
      %1118 = vmatmul.f32.gmra.mxu0 %v911
      %v1119 = vpop.f32.mrf.mxu0
      %v1120 = vadd.f32 0.0, %v1119
      %1121 = vmatmul.f32.gmra.mxu0 %v914
      %v1122 = vpop.f32.mrf.mxu0
      %v1123 = vadd.f32 0.0, %v1122
      %1124 = vmatmul.f32.gmra.mxu0 %v917
      %v1125 = vpop.f32.mrf.mxu0
      %v1126 = vadd.f32 0.0, %v1125
      %1127 = vmatmul.f32.gmra.mxu0 %v920
      %v1128 = vpop.f32.mrf.mxu0
      %v1129 = vadd.f32 0.0, %v1128
      %1130 = vmatmul.f32.gmra.mxu0 %v923
      %v1131 = vpop.f32.mrf.mxu0
      %v1132 = vadd.f32 0.0, %v1131
      %1133 = vmatmul.f32.gmra.mxu0 %v926
      %v1134 = vpop.f32.mrf.mxu0
      %v1135 = vadd.f32 0.0, %v1134
      %1136 = vmatmul.f32.gmra.mxu0 %v929
      %v1137 = vpop.f32.mrf.mxu0
      %v1138 = vadd.f32 0.0, %v1137
      %1139 = vmatmul.f32.gmra.mxu0 %v932
      %v1140 = vpop.f32.mrf.mxu0
      %v1141 = vadd.f32 0.0, %v1140
      %1142 = vmatmul.f32.gmra.mxu0 %v935
      %v1143 = vpop.f32.mrf.mxu0
      %v1144 = vadd.f32 0.0, %v1143
      %1145 = vmatmul.f32.gmra.mxu0 %v938
      %v1146 = vpop.f32.mrf.mxu0
      %v1147 = vadd.f32 0.0, %v1146
      %1148 = vmatmul.f32.gmra.mxu0 %v941
      %v1149 = vpop.f32.mrf.mxu0
      %v1150 = vadd.f32 0.0, %v1149
      %1151 = vmatmul.f32.gmra.mxu0 %v944
      %v1152 = vpop.f32.mrf.mxu0
      %v1153 = vadd.f32 0.0, %v1152
      %1154 = vmatmul.f32.gmra.mxu0 %v947
      %v1155 = vpop.f32.mrf.mxu0
      %v1156 = vadd.f32 0.0, %v1155
      %1157 = vmatmul.f32.gmra.mxu0 %v950
      %v1158 = vpop.f32.mrf.mxu0
      %v1159 = vadd.f32 0.0, %v1158
      %1160 = vmatmul.f32.gmra.mxu0 %v953
      %v1161 = vpop.f32.mrf.mxu0
      %v1162 = vadd.f32 0.0, %v1161
      %1163 = vmatmul.f32.gmra.mxu0 %v956
      %v1164 = vpop.f32.mrf.mxu0
      %v1165 = vadd.f32 0.0, %v1164
      %1166 = vmatmul.f32.gmra.mxu0 %v959
      %v1167 = vpop.f32.mrf.mxu0
      %v1168 = vadd.f32 0.0, %v1167
      %1169 = vmatmul.f32.gmra.mxu0 %v962
      %v1170 = vpop.f32.mrf.mxu0
      %v1171 = vadd.f32 0.0, %v1170
      %1172 = vdwg.mxu0
      %v1173 = vadd.f32 %v703, %v982
      %v1174 = vadd.f32 %v704, %v985
      %v1175 = vadd.f32 %v705, %v988
      %v1176 = vadd.f32 %v706, %v991
      %v1177 = vadd.f32 %v707, %v994
      %v1178 = vadd.f32 %v708, %v997
      %v1179 = vadd.f32 %v709, %v1000
      %v1180 = vadd.f32 %v710, %v1003
      %v1181 = vadd.f32 %v711, %v1006
      %v1182 = vadd.f32 %v712, %v1009
      %v1183 = vadd.f32 %v713, %v1012
      %v1184 = vadd.f32 %v714, %v1015
      %v1185 = vadd.f32 %v715, %v1018
      %v1186 = vadd.f32 %v716, %v1021
      %v1187 = vadd.f32 %v717, %v1024
      %v1188 = vadd.f32 %v718, %v1027
      %v1189 = vadd.f32 %v719, %v1030
      %v1190 = vadd.f32 %v720, %v1033
      %v1191 = vadd.f32 %v721, %v1036
      %v1192 = vadd.f32 %v722, %v1039
      %v1193 = vadd.f32 %v723, %v1042
      %v1194 = vadd.f32 %v724, %v1045
      %v1195 = vadd.f32 %v725, %v1048
      %v1196 = vadd.f32 %v726, %v1051
      %v1197 = vadd.f32 %v727, %v1054
      %v1198 = vadd.f32 %v728, %v1057
      %v1199 = vadd.f32 %v729, %v1060
      %v1200 = vadd.f32 %v730, %v1063
      %v1201 = vadd.f32 %v731, %v1066
      %v1202 = vadd.f32 %v732, %v1069
      %v1203 = vadd.f32 %v733, %v1072
      %v1204 = vadd.f32 %v734, %v1075
      %v1205 = vadd.f32 %v735, %v1078
      %v1206 = vadd.f32 %v736, %v1081
      %v1207 = vadd.f32 %v737, %v1084
      %v1208 = vadd.f32 %v738, %v1087
      %v1209 = vadd.f32 %v739, %v1090
      %v1210 = vadd.f32 %v740, %v1093
      %v1211 = vadd.f32 %v741, %v1096
      %v1212 = vadd.f32 %v742, %v1099
      %v1213 = vadd.f32 %v743, %v1102
      %v1214 = vadd.f32 %v744, %v1105
      %v1215 = vadd.f32 %v745, %v1108
      %v1216 = vadd.f32 %v746, %v1111
      %v1217 = vadd.f32 %v747, %v1114
      %v1218 = vadd.f32 %v748, %v1117
      %v1219 = vadd.f32 %v749, %v1120
      %v1220 = vadd.f32 %v750, %v1123
      %v1221 = vadd.f32 %v751, %v1126
      %v1222 = vadd.f32 %v752, %v1129
      %v1223 = vadd.f32 %v753, %v1132
      %v1224 = vadd.f32 %v754, %v1135
      %v1225 = vadd.f32 %v755, %v1138
      %v1226 = vadd.f32 %v756, %v1141
      %v1227 = vadd.f32 %v757, %v1144
      %v1228 = vadd.f32 %v758, %v1147
      %v1229 = vadd.f32 %v759, %v1150
      %v1230 = vadd.f32 %v760, %v1153
      %v1231 = vadd.f32 %v761, %v1156
      %v1232 = vadd.f32 %v762, %v1159
      %v1233 = vadd.f32 %v763, %v1162
      %v1234 = vadd.f32 %v764, %v1165
      %v1235 = vadd.f32 %v765, %v1168
      %v1236 = vadd.f32 %v766, %v1171
      %v1237 = vld [vmem:[%s4] sm:$0x1]
      %v1239 = vperm.slane %v1237, 0
      %v1241 = vadd.f32 %v1173, %v1239
      %v1242 = vadd.f32 %v1174, %v1239
      %v1243 = vadd.f32 %v1175, %v1239
      %v1244 = vadd.f32 %v1176, %v1239
      %v1245 = vadd.f32 %v1177, %v1239
      %v1246 = vadd.f32 %v1178, %v1239
      %v1247 = vadd.f32 %v1179, %v1239
      %v1248 = vadd.f32 %v1180, %v1239
      %v1249 = vadd.f32 %v1181, %v1239
      %v1250 = vadd.f32 %v1182, %v1239
      %v1251 = vadd.f32 %v1183, %v1239
      %v1252 = vadd.f32 %v1184, %v1239
      %v1253 = vadd.f32 %v1185, %v1239
      %v1254 = vadd.f32 %v1186, %v1239
      %v1255 = vadd.f32 %v1187, %v1239
      %v1256 = vadd.f32 %v1188, %v1239
      %v1257 = vadd.f32 %v1189, %v1239
      %v1258 = vadd.f32 %v1190, %v1239
      %v1259 = vadd.f32 %v1191, %v1239
      %v1260 = vadd.f32 %v1192, %v1239
      %v1261 = vadd.f32 %v1193, %v1239
      %v1262 = vadd.f32 %v1194, %v1239
      %v1263 = vadd.f32 %v1195, %v1239
      %v1264 = vadd.f32 %v1196, %v1239
      %v1265 = vadd.f32 %v1197, %v1239
      %v1266 = vadd.f32 %v1198, %v1239
      %v1267 = vadd.f32 %v1199, %v1239
      %v1268 = vadd.f32 %v1200, %v1239
      %v1269 = vadd.f32 %v1201, %v1239
      %v1270 = vadd.f32 %v1202, %v1239
      %v1271 = vadd.f32 %v1203, %v1239
      %v1272 = vadd.f32 %v1204, %v1239
      %v1273 = vadd.f32 %v1205, %v1239
      %v1274 = vadd.f32 %v1206, %v1239
      %v1275 = vadd.f32 %v1207, %v1239
      %v1276 = vadd.f32 %v1208, %v1239
      %v1277 = vadd.f32 %v1209, %v1239
      %v1278 = vadd.f32 %v1210, %v1239
      %v1279 = vadd.f32 %v1211, %v1239
      %v1280 = vadd.f32 %v1212, %v1239
      %v1281 = vadd.f32 %v1213, %v1239
      %v1282 = vadd.f32 %v1214, %v1239
      %v1283 = vadd.f32 %v1215, %v1239
      %v1284 = vadd.f32 %v1216, %v1239
      %v1285 = vadd.f32 %v1217, %v1239
      %v1286 = vadd.f32 %v1218, %v1239
      %v1287 = vadd.f32 %v1219, %v1239
      %v1288 = vadd.f32 %v1220, %v1239
      %v1289 = vadd.f32 %v1221, %v1239
      %v1290 = vadd.f32 %v1222, %v1239
      %v1291 = vadd.f32 %v1223, %v1239
      %v1292 = vadd.f32 %v1224, %v1239
      %v1293 = vadd.f32 %v1225, %v1239
      %v1294 = vadd.f32 %v1226, %v1239
      %v1295 = vadd.f32 %v1227, %v1239
      %v1296 = vadd.f32 %v1228, %v1239
      %v1297 = vadd.f32 %v1229, %v1239
      %v1298 = vadd.f32 %v1230, %v1239
      %v1299 = vadd.f32 %v1231, %v1239
      %v1300 = vadd.f32 %v1232, %v1239
      %v1301 = vadd.f32 %v1233, %v1239
      %v1302 = vadd.f32 %v1234, %v1239
      %v1303 = vadd.f32 %v1235, %v1239
      %v1304 = vadd.f32 %v1236, %v1239
      %v1305 = vmax.f32 %v1241, 0.0
      %v1306 = vmax.f32 %v1242, 0.0
      %v1307 = vmax.f32 %v1243, 0.0
      %v1308 = vmax.f32 %v1244, 0.0
      %v1309 = vmax.f32 %v1245, 0.0
      %v1310 = vmax.f32 %v1246, 0.0
      %v1311 = vmax.f32 %v1247, 0.0
      %v1312 = vmax.f32 %v1248, 0.0
      %v1313 = vmax.f32 %v1249, 0.0
      %v1314 = vmax.f32 %v1250, 0.0
      %v1315 = vmax.f32 %v1251, 0.0
      %v1316 = vmax.f32 %v1252, 0.0
      %v1317 = vmax.f32 %v1253, 0.0
      %v1318 = vmax.f32 %v1254, 0.0
      %v1319 = vmax.f32 %v1255, 0.0
      %v1320 = vmax.f32 %v1256, 0.0
      %v1321 = vmax.f32 %v1257, 0.0
      %v1322 = vmax.f32 %v1258, 0.0
      %v1323 = vmax.f32 %v1259, 0.0
      %v1324 = vmax.f32 %v1260, 0.0
      %v1325 = vmax.f32 %v1261, 0.0
      %v1326 = vmax.f32 %v1262, 0.0
      %v1327 = vmax.f32 %v1263, 0.0
      %v1328 = vmax.f32 %v1264, 0.0
      %v1329 = vmax.f32 %v1265, 0.0
      %v1330 = vmax.f32 %v1266, 0.0
      %v1331 = vmax.f32 %v1267, 0.0
      %v1332 = vmax.f32 %v1268, 0.0
      %v1333 = vmax.f32 %v1269, 0.0
      %v1334 = vmax.f32 %v1270, 0.0
      %v1335 = vmax.f32 %v1271, 0.0
      %v1336 = vmax.f32 %v1272, 0.0
      %v1337 = vmax.f32 %v1273, 0.0
      %v1338 = vmax.f32 %v1274, 0.0
      %v1339 = vmax.f32 %v1275, 0.0
      %v1340 = vmax.f32 %v1276, 0.0
      %v1341 = vmax.f32 %v1277, 0.0
      %v1342 = vmax.f32 %v1278, 0.0
      %v1343 = vmax.f32 %v1279, 0.0
      %v1344 = vmax.f32 %v1280, 0.0
      %v1345 = vmax.f32 %v1281, 0.0
      %v1346 = vmax.f32 %v1282, 0.0
      %v1347 = vmax.f32 %v1283, 0.0
      %v1348 = vmax.f32 %v1284, 0.0
      %v1349 = vmax.f32 %v1285, 0.0
      %v1350 = vmax.f32 %v1286, 0.0
      %v1351 = vmax.f32 %v1287, 0.0
      %v1352 = vmax.f32 %v1288, 0.0
      %v1353 = vmax.f32 %v1289, 0.0
      %v1354 = vmax.f32 %v1290, 0.0
      %v1355 = vmax.f32 %v1291, 0.0
      %v1356 = vmax.f32 %v1292, 0.0
      %v1357 = vmax.f32 %v1293, 0.0
      %v1358 = vmax.f32 %v1294, 0.0
      %v1359 = vmax.f32 %v1295, 0.0
      %v1360 = vmax.f32 %v1296, 0.0
      %v1361 = vmax.f32 %v1297, 0.0
      %v1362 = vmax.f32 %v1298, 0.0
      %v1363 = vmax.f32 %v1299, 0.0
      %v1364 = vmax.f32 %v1300, 0.0
      %v1365 = vmax.f32 %v1301, 0.0
      %v1366 = vmax.f32 %v1302, 0.0
      %v1367 = vmax.f32 %v1303, 0.0
      %v1368 = vmax.f32 %v1304, 0.0
      %s1369 = scalar_lea.vmem %s3, 32
      %v1370 = vld [vmem:[%s1369] sm:$0xff]
      %v1371 = vld [vmem:[%s1369 + $0x8] sm:$0xff]
      %v1372 = vld [vmem:[%s1369 + $0x10] sm:$0xff]
      %v1373 = vld [vmem:[%s1369 + $0x18] sm:$0xff]
      %v1375 = vsel %vm771, %v1305, 0
      %v1378 = vsel %vm771, %v1306, 0
      %v1381 = vsel %vm771, %v1307, 0
      %v1384 = vsel %vm771, %v1308, 0
      %v1387 = vsel %vm771, %v1309, 0
      %v1390 = vsel %vm771, %v1310, 0
      %v1393 = vsel %vm771, %v1311, 0
      %v1396 = vsel %vm771, %v1312, 0
      %v1399 = vsel %vm771, %v1313, 0
      %v1402 = vsel %vm771, %v1314, 0
      %v1405 = vsel %vm771, %v1315, 0
      %v1408 = vsel %vm771, %v1316, 0
      %v1411 = vsel %vm771, %v1317, 0
      %v1414 = vsel %vm771, %v1318, 0
      %v1417 = vsel %vm771, %v1319, 0
      %v1420 = vsel %vm771, %v1320, 0
      %v1423 = vsel %vm771, %v1321, 0
      %v1426 = vsel %vm771, %v1322, 0
      %v1429 = vsel %vm771, %v1323, 0
      %v1432 = vsel %vm771, %v1324, 0
      %v1435 = vsel %vm771, %v1325, 0
      %v1438 = vsel %vm771, %v1326, 0
      %v1441 = vsel %vm771, %v1327, 0
      %v1444 = vsel %vm771, %v1328, 0
      %v1447 = vsel %vm771, %v1329, 0
      %v1450 = vsel %vm771, %v1330, 0
      %v1453 = vsel %vm771, %v1331, 0
      %v1456 = vsel %vm771, %v1332, 0
      %v1459 = vsel %vm771, %v1333, 0
      %v1462 = vsel %vm771, %v1334, 0
      %v1465 = vsel %vm771, %v1335, 0
      %v1468 = vsel %vm771, %v1336, 0
      %v1471 = vsel %vm771, %v1337, 0
      %v1474 = vsel %vm771, %v1338, 0
      %v1477 = vsel %vm771, %v1339, 0
      %v1480 = vsel %vm771, %v1340, 0
      %v1483 = vsel %vm771, %v1341, 0
      %v1486 = vsel %vm771, %v1342, 0
      %v1489 = vsel %vm771, %v1343, 0
      %v1492 = vsel %vm771, %v1344, 0
      %v1495 = vsel %vm771, %v1345, 0
      %v1498 = vsel %vm771, %v1346, 0
      %v1501 = vsel %vm771, %v1347, 0
      %v1504 = vsel %vm771, %v1348, 0
      %v1507 = vsel %vm771, %v1349, 0
      %v1510 = vsel %vm771, %v1350, 0
      %v1513 = vsel %vm771, %v1351, 0
      %v1516 = vsel %vm771, %v1352, 0
      %v1519 = vsel %vm771, %v1353, 0
      %v1522 = vsel %vm771, %v1354, 0
      %v1525 = vsel %vm771, %v1355, 0
      %v1528 = vsel %vm771, %v1356, 0
      %v1531 = vsel %vm771, %v1357, 0
      %v1534 = vsel %vm771, %v1358, 0
      %v1537 = vsel %vm771, %v1359, 0
      %v1540 = vsel %vm771, %v1360, 0
      %v1543 = vsel %vm771, %v1361, 0
      %v1546 = vsel %vm771, %v1362, 0
      %v1549 = vsel %vm771, %v1363, 0
      %v1552 = vsel %vm771, %v1364, 0
      %v1555 = vsel %vm771, %v1365, 0
      %v1558 = vsel %vm771, %v1366, 0
      %v1561 = vsel %vm771, %v1367, 0
      %v1564 = vsel %vm771, %v1368, 0
      %1566 = vmatpush.msra.mxu0 0.0
      %1567 = vmatpush.msra.mxu0 0.0
      %1568 = vmatpush.msra.mxu0 0.0
      %1569 = vmatpush.msra.mxu0 0.0
      %1570 = vmatpush.msra.mxu0 0.0
      %1571 = vmatpush.msra.mxu0 0.0
      %1572 = vmatpush.msra.mxu0 0.0
      %1573 = vmatpush.msra.mxu0 0.0
      %1574 = vmatpush.msra.mxu0 0.0
      %1575 = vmatpush.msra.mxu0 0.0
      %1576 = vmatpush.msra.mxu0 0.0
      %1577 = vmatpush.msra.mxu0 0.0
      %1578 = vmatpush.msra.mxu0 %v1373
      %1579 = vmatpush.msra.mxu0 %v1372
      %1580 = vmatpush.msra.mxu0 %v1371
      %1581 = vmatpush.msra.mxu0 %v1370
      %1582 = vmatmul.f32.gmra.mxu0 %v1375
      %v1583 = vpop.f32.mrf.mxu0
      %v1584 = vadd.f32 0.0, %v1583
      %1585 = vmatmul.f32.gmra.mxu0 %v1378
      %v1586 = vpop.f32.mrf.mxu0
      %v1587 = vadd.f32 0.0, %v1586
      %1588 = vmatmul.f32.gmra.mxu0 %v1381
      %v1589 = vpop.f32.mrf.mxu0
      %v1590 = vadd.f32 0.0, %v1589
      %1591 = vmatmul.f32.gmra.mxu0 %v1384
      %v1592 = vpop.f32.mrf.mxu0
      %v1593 = vadd.f32 0.0, %v1592
      %1594 = vmatmul.f32.gmra.mxu0 %v1387
      %v1595 = vpop.f32.mrf.mxu0
      %v1596 = vadd.f32 0.0, %v1595
      %1597 = vmatmul.f32.gmra.mxu0 %v1390
      %v1598 = vpop.f32.mrf.mxu0
      %v1599 = vadd.f32 0.0, %v1598
      %1600 = vmatmul.f32.gmra.mxu0 %v1393
      %v1601 = vpop.f32.mrf.mxu0
      %v1602 = vadd.f32 0.0, %v1601
      %1603 = vmatmul.f32.gmra.mxu0 %v1396
      %v1604 = vpop.f32.mrf.mxu0
      %v1605 = vadd.f32 0.0, %v1604
      %1606 = vmatmul.f32.gmra.mxu0 %v1399
      %v1607 = vpop.f32.mrf.mxu0
      %v1608 = vadd.f32 0.0, %v1607
      %1609 = vmatmul.f32.gmra.mxu0 %v1402
      %v1610 = vpop.f32.mrf.mxu0
      %v1611 = vadd.f32 0.0, %v1610
      %1612 = vmatmul.f32.gmra.mxu0 %v1405
      %v1613 = vpop.f32.mrf.mxu0
      %v1614 = vadd.f32 0.0, %v1613
      %1615 = vmatmul.f32.gmra.mxu0 %v1408
      %v1616 = vpop.f32.mrf.mxu0
      %v1617 = vadd.f32 0.0, %v1616
      %1618 = vmatmul.f32.gmra.mxu0 %v1411
      %v1619 = vpop.f32.mrf.mxu0
      %v1620 = vadd.f32 0.0, %v1619
      %1621 = vmatmul.f32.gmra.mxu0 %v1414
      %v1622 = vpop.f32.mrf.mxu0
      %v1623 = vadd.f32 0.0, %v1622
      %1624 = vmatmul.f32.gmra.mxu0 %v1417
      %v1625 = vpop.f32.mrf.mxu0
      %v1626 = vadd.f32 0.0, %v1625
      %1627 = vmatmul.f32.gmra.mxu0 %v1420
      %v1628 = vpop.f32.mrf.mxu0
      %v1629 = vadd.f32 0.0, %v1628
      %1630 = vmatmul.f32.gmra.mxu0 %v1423
      %v1631 = vpop.f32.mrf.mxu0
      %v1632 = vadd.f32 0.0, %v1631
      %1633 = vmatmul.f32.gmra.mxu0 %v1426
      %v1634 = vpop.f32.mrf.mxu0
      %v1635 = vadd.f32 0.0, %v1634
      %1636 = vmatmul.f32.gmra.mxu0 %v1429
      %v1637 = vpop.f32.mrf.mxu0
      %v1638 = vadd.f32 0.0, %v1637
      %1639 = vmatmul.f32.gmra.mxu0 %v1432
      %v1640 = vpop.f32.mrf.mxu0
      %v1641 = vadd.f32 0.0, %v1640
      %1642 = vmatmul.f32.gmra.mxu0 %v1435
      %v1643 = vpop.f32.mrf.mxu0
      %v1644 = vadd.f32 0.0, %v1643
      %1645 = vmatmul.f32.gmra.mxu0 %v1438
      %v1646 = vpop.f32.mrf.mxu0
      %v1647 = vadd.f32 0.0, %v1646
      %1648 = vmatmul.f32.gmra.mxu0 %v1441
      %v1649 = vpop.f32.mrf.mxu0
      %v1650 = vadd.f32 0.0, %v1649
      %1651 = vmatmul.f32.gmra.mxu0 %v1444
      %v1652 = vpop.f32.mrf.mxu0
      %v1653 = vadd.f32 0.0, %v1652
      %1654 = vmatmul.f32.gmra.mxu0 %v1447
      %v1655 = vpop.f32.mrf.mxu0
      %v1656 = vadd.f32 0.0, %v1655
      %1657 = vmatmul.f32.gmra.mxu0 %v1450
      %v1658 = vpop.f32.mrf.mxu0
      %v1659 = vadd.f32 0.0, %v1658
      %1660 = vmatmul.f32.gmra.mxu0 %v1453
      %v1661 = vpop.f32.mrf.mxu0
      %v1662 = vadd.f32 0.0, %v1661
      %1663 = vmatmul.f32.gmra.mxu0 %v1456
      %v1664 = vpop.f32.mrf.mxu0
      %v1665 = vadd.f32 0.0, %v1664
      %1666 = vmatmul.f32.gmra.mxu0 %v1459
      %v1667 = vpop.f32.mrf.mxu0
      %v1668 = vadd.f32 0.0, %v1667
      %1669 = vmatmul.f32.gmra.mxu0 %v1462
      %v1670 = vpop.f32.mrf.mxu0
      %v1671 = vadd.f32 0.0, %v1670
      %1672 = vmatmul.f32.gmra.mxu0 %v1465
      %v1673 = vpop.f32.mrf.mxu0
      %v1674 = vadd.f32 0.0, %v1673
      %1675 = vmatmul.f32.gmra.mxu0 %v1468
      %v1676 = vpop.f32.mrf.mxu0
      %v1677 = vadd.f32 0.0, %v1676
      %1678 = vmatmul.f32.gmra.mxu0 %v1471
      %v1679 = vpop.f32.mrf.mxu0
      %v1680 = vadd.f32 0.0, %v1679
      %1681 = vmatmul.f32.gmra.mxu0 %v1474
      %v1682 = vpop.f32.mrf.mxu0
      %v1683 = vadd.f32 0.0, %v1682
      %1684 = vmatmul.f32.gmra.mxu0 %v1477
      %v1685 = vpop.f32.mrf.mxu0
      %v1686 = vadd.f32 0.0, %v1685
      %1687 = vmatmul.f32.gmra.mxu0 %v1480
      %v1688 = vpop.f32.mrf.mxu0
      %v1689 = vadd.f32 0.0, %v1688
      %1690 = vmatmul.f32.gmra.mxu0 %v1483
      %v1691 = vpop.f32.mrf.mxu0
      %v1692 = vadd.f32 0.0, %v1691
      %1693 = vmatmul.f32.gmra.mxu0 %v1486
      %v1694 = vpop.f32.mrf.mxu0
      %v1695 = vadd.f32 0.0, %v1694
      %1696 = vmatmul.f32.gmra.mxu0 %v1489
      %v1697 = vpop.f32.mrf.mxu0
      %v1698 = vadd.f32 0.0, %v1697
      %1699 = vmatmul.f32.gmra.mxu0 %v1492
      %v1700 = vpop.f32.mrf.mxu0
      %v1701 = vadd.f32 0.0, %v1700
      %1702 = vmatmul.f32.gmra.mxu0 %v1495
      %v1703 = vpop.f32.mrf.mxu0
      %v1704 = vadd.f32 0.0, %v1703
      %1705 = vmatmul.f32.gmra.mxu0 %v1498
      %v1706 = vpop.f32.mrf.mxu0
      %v1707 = vadd.f32 0.0, %v1706
      %1708 = vmatmul.f32.gmra.mxu0 %v1501
      %v1709 = vpop.f32.mrf.mxu0
      %v1710 = vadd.f32 0.0, %v1709
      %1711 = vmatmul.f32.gmra.mxu0 %v1504
      %v1712 = vpop.f32.mrf.mxu0
      %v1713 = vadd.f32 0.0, %v1712
      %1714 = vmatmul.f32.gmra.mxu0 %v1507
      %v1715 = vpop.f32.mrf.mxu0
      %v1716 = vadd.f32 0.0, %v1715
      %1717 = vmatmul.f32.gmra.mxu0 %v1510
      %v1718 = vpop.f32.mrf.mxu0
      %v1719 = vadd.f32 0.0, %v1718
      %1720 = vmatmul.f32.gmra.mxu0 %v1513
      %v1721 = vpop.f32.mrf.mxu0
      %v1722 = vadd.f32 0.0, %v1721
      %1723 = vmatmul.f32.gmra.mxu0 %v1516
      %v1724 = vpop.f32.mrf.mxu0
      %v1725 = vadd.f32 0.0, %v1724
      %1726 = vmatmul.f32.gmra.mxu0 %v1519
      %v1727 = vpop.f32.mrf.mxu0
      %v1728 = vadd.f32 0.0, %v1727
      %1729 = vmatmul.f32.gmra.mxu0 %v1522
      %v1730 = vpop.f32.mrf.mxu0
      %v1731 = vadd.f32 0.0, %v1730
      %1732 = vmatmul.f32.gmra.mxu0 %v1525
      %v1733 = vpop.f32.mrf.mxu0
      %v1734 = vadd.f32 0.0, %v1733
      %1735 = vmatmul.f32.gmra.mxu0 %v1528
      %v1736 = vpop.f32.mrf.mxu0
      %v1737 = vadd.f32 0.0, %v1736
      %1738 = vmatmul.f32.gmra.mxu0 %v1531
      %v1739 = vpop.f32.mrf.mxu0
      %v1740 = vadd.f32 0.0, %v1739
      %1741 = vmatmul.f32.gmra.mxu0 %v1534
      %v1742 = vpop.f32.mrf.mxu0
      %v1743 = vadd.f32 0.0, %v1742
      %1744 = vmatmul.f32.gmra.mxu0 %v1537
      %v1745 = vpop.f32.mrf.mxu0
      %v1746 = vadd.f32 0.0, %v1745
      %1747 = vmatmul.f32.gmra.mxu0 %v1540
      %v1748 = vpop.f32.mrf.mxu0
      %v1749 = vadd.f32 0.0, %v1748
      %1750 = vmatmul.f32.gmra.mxu0 %v1543
      %v1751 = vpop.f32.mrf.mxu0
      %v1752 = vadd.f32 0.0, %v1751
      %1753 = vmatmul.f32.gmra.mxu0 %v1546
      %v1754 = vpop.f32.mrf.mxu0
      %v1755 = vadd.f32 0.0, %v1754
      %1756 = vmatmul.f32.gmra.mxu0 %v1549
      %v1757 = vpop.f32.mrf.mxu0
      %v1758 = vadd.f32 0.0, %v1757
      %1759 = vmatmul.f32.gmra.mxu0 %v1552
      %v1760 = vpop.f32.mrf.mxu0
      %v1761 = vadd.f32 0.0, %v1760
      %1762 = vmatmul.f32.gmra.mxu0 %v1555
      %v1763 = vpop.f32.mrf.mxu0
      %v1764 = vadd.f32 0.0, %v1763
      %1765 = vmatmul.f32.gmra.mxu0 %v1558
      %v1766 = vpop.f32.mrf.mxu0
      %v1767 = vadd.f32 0.0, %v1766
      %1768 = vmatmul.f32.gmra.mxu0 %v1561
      %v1769 = vpop.f32.mrf.mxu0
      %v1770 = vadd.f32 0.0, %v1769
      %1771 = vmatmul.f32.gmra.mxu0 %v1564
      %v1772 = vpop.f32.mrf.mxu0
      %v1773 = vadd.f32 0.0, %v1772
      %1774 = vdwg.mxu0
      %v1775 = vadd.f32 %v1305, %v1584
      %v1776 = vadd.f32 %v1306, %v1587
      %v1777 = vadd.f32 %v1307, %v1590
      %v1778 = vadd.f32 %v1308, %v1593
      %v1779 = vadd.f32 %v1309, %v1596
      %v1780 = vadd.f32 %v1310, %v1599
      %v1781 = vadd.f32 %v1311, %v1602
      %v1782 = vadd.f32 %v1312, %v1605
      %v1783 = vadd.f32 %v1313, %v1608
      %v1784 = vadd.f32 %v1314, %v1611
      %v1785 = vadd.f32 %v1315, %v1614
      %v1786 = vadd.f32 %v1316, %v1617
      %v1787 = vadd.f32 %v1317, %v1620
      %v1788 = vadd.f32 %v1318, %v1623
      %v1789 = vadd.f32 %v1319, %v1626
      %v1790 = vadd.f32 %v1320, %v1629
      %v1791 = vadd.f32 %v1321, %v1632
      %v1792 = vadd.f32 %v1322, %v1635
      %v1793 = vadd.f32 %v1323, %v1638
      %v1794 = vadd.f32 %v1324, %v1641
      %v1795 = vadd.f32 %v1325, %v1644
      %v1796 = vadd.f32 %v1326, %v1647
      %v1797 = vadd.f32 %v1327, %v1650
      %v1798 = vadd.f32 %v1328, %v1653
      %v1799 = vadd.f32 %v1329, %v1656
      %v1800 = vadd.f32 %v1330, %v1659
      %v1801 = vadd.f32 %v1331, %v1662
      %v1802 = vadd.f32 %v1332, %v1665
      %v1803 = vadd.f32 %v1333, %v1668
      %v1804 = vadd.f32 %v1334, %v1671
      %v1805 = vadd.f32 %v1335, %v1674
      %v1806 = vadd.f32 %v1336, %v1677
      %v1807 = vadd.f32 %v1337, %v1680
      %v1808 = vadd.f32 %v1338, %v1683
      %v1809 = vadd.f32 %v1339, %v1686
      %v1810 = vadd.f32 %v1340, %v1689
      %v1811 = vadd.f32 %v1341, %v1692
      %v1812 = vadd.f32 %v1342, %v1695
      %v1813 = vadd.f32 %v1343, %v1698
      %v1814 = vadd.f32 %v1344, %v1701
      %v1815 = vadd.f32 %v1345, %v1704
      %v1816 = vadd.f32 %v1346, %v1707
      %v1817 = vadd.f32 %v1347, %v1710
      %v1818 = vadd.f32 %v1348, %v1713
      %v1819 = vadd.f32 %v1349, %v1716
      %v1820 = vadd.f32 %v1350, %v1719
      %v1821 = vadd.f32 %v1351, %v1722
      %v1822 = vadd.f32 %v1352, %v1725
      %v1823 = vadd.f32 %v1353, %v1728
      %v1824 = vadd.f32 %v1354, %v1731
      %v1825 = vadd.f32 %v1355, %v1734
      %v1826 = vadd.f32 %v1356, %v1737
      %v1827 = vadd.f32 %v1357, %v1740
      %v1828 = vadd.f32 %v1358, %v1743
      %v1829 = vadd.f32 %v1359, %v1746
      %v1830 = vadd.f32 %v1360, %v1749
      %v1831 = vadd.f32 %v1361, %v1752
      %v1832 = vadd.f32 %v1362, %v1755
      %v1833 = vadd.f32 %v1363, %v1758
      %v1834 = vadd.f32 %v1364, %v1761
      %v1835 = vadd.f32 %v1365, %v1764
      %v1836 = vadd.f32 %v1366, %v1767
      %v1837 = vadd.f32 %v1367, %v1770
      %v1838 = vadd.f32 %v1368, %v1773
      %s1839 = scalar_lea.vmem %s4, 1
      %v1840 = vld [vmem:[%s1839] sm:$0x1]
      %v1842 = vperm.slane %v1840, 0
      %v1844 = vadd.f32 %v1775, %v1842
      %v1845 = vadd.f32 %v1776, %v1842
      %v1846 = vadd.f32 %v1777, %v1842
      %v1847 = vadd.f32 %v1778, %v1842
      %v1848 = vadd.f32 %v1779, %v1842
      %v1849 = vadd.f32 %v1780, %v1842
      %v1850 = vadd.f32 %v1781, %v1842
      %v1851 = vadd.f32 %v1782, %v1842
      %v1852 = vadd.f32 %v1783, %v1842
      %v1853 = vadd.f32 %v1784, %v1842
      %v1854 = vadd.f32 %v1785, %v1842
      %v1855 = vadd.f32 %v1786, %v1842
      %v1856 = vadd.f32 %v1787, %v1842
      %v1857 = vadd.f32 %v1788, %v1842
      %v1858 = vadd.f32 %v1789, %v1842
      %v1859 = vadd.f32 %v1790, %v1842
      %v1860 = vadd.f32 %v1791, %v1842
      %v1861 = vadd.f32 %v1792, %v1842
      %v1862 = vadd.f32 %v1793, %v1842
      %v1863 = vadd.f32 %v1794, %v1842
      %v1864 = vadd.f32 %v1795, %v1842
      %v1865 = vadd.f32 %v1796, %v1842
      %v1866 = vadd.f32 %v1797, %v1842
      %v1867 = vadd.f32 %v1798, %v1842
      %v1868 = vadd.f32 %v1799, %v1842
      %v1869 = vadd.f32 %v1800, %v1842
      %v1870 = vadd.f32 %v1801, %v1842
      %v1871 = vadd.f32 %v1802, %v1842
      %v1872 = vadd.f32 %v1803, %v1842
      %v1873 = vadd.f32 %v1804, %v1842
      %v1874 = vadd.f32 %v1805, %v1842
      %v1875 = vadd.f32 %v1806, %v1842
      %v1876 = vadd.f32 %v1807, %v1842
      %v1877 = vadd.f32 %v1808, %v1842
      %v1878 = vadd.f32 %v1809, %v1842
      %v1879 = vadd.f32 %v1810, %v1842
      %v1880 = vadd.f32 %v1811, %v1842
      %v1881 = vadd.f32 %v1812, %v1842
      %v1882 = vadd.f32 %v1813, %v1842
      %v1883 = vadd.f32 %v1814, %v1842
      %v1884 = vadd.f32 %v1815, %v1842
      %v1885 = vadd.f32 %v1816, %v1842
      %v1886 = vadd.f32 %v1817, %v1842
      %v1887 = vadd.f32 %v1818, %v1842
      %v1888 = vadd.f32 %v1819, %v1842
      %v1889 = vadd.f32 %v1820, %v1842
      %v1890 = vadd.f32 %v1821, %v1842
      %v1891 = vadd.f32 %v1822, %v1842
      %v1892 = vadd.f32 %v1823, %v1842
      %v1893 = vadd.f32 %v1824, %v1842
      %v1894 = vadd.f32 %v1825, %v1842
      %v1895 = vadd.f32 %v1826, %v1842
      %v1896 = vadd.f32 %v1827, %v1842
      %v1897 = vadd.f32 %v1828, %v1842
      %v1898 = vadd.f32 %v1829, %v1842
      %v1899 = vadd.f32 %v1830, %v1842
      %v1900 = vadd.f32 %v1831, %v1842
      %v1901 = vadd.f32 %v1832, %v1842
      %v1902 = vadd.f32 %v1833, %v1842
      %v1903 = vadd.f32 %v1834, %v1842
      %v1904 = vadd.f32 %v1835, %v1842
      %v1905 = vadd.f32 %v1836, %v1842
      %v1906 = vadd.f32 %v1837, %v1842
      %v1907 = vadd.f32 %v1838, %v1842
      %v1908 = vmax.f32 %v1844, 0.0
      %v1909 = vmax.f32 %v1845, 0.0
      %v1910 = vmax.f32 %v1846, 0.0
      %v1911 = vmax.f32 %v1847, 0.0
      %v1912 = vmax.f32 %v1848, 0.0
      %v1913 = vmax.f32 %v1849, 0.0
      %v1914 = vmax.f32 %v1850, 0.0
      %v1915 = vmax.f32 %v1851, 0.0
      %v1916 = vmax.f32 %v1852, 0.0
      %v1917 = vmax.f32 %v1853, 0.0
      %v1918 = vmax.f32 %v1854, 0.0
      %v1919 = vmax.f32 %v1855, 0.0
      %v1920 = vmax.f32 %v1856, 0.0
      %v1921 = vmax.f32 %v1857, 0.0
      %v1922 = vmax.f32 %v1858, 0.0
      %v1923 = vmax.f32 %v1859, 0.0
      %v1924 = vmax.f32 %v1860, 0.0
      %v1925 = vmax.f32 %v1861, 0.0
      %v1926 = vmax.f32 %v1862, 0.0
      %v1927 = vmax.f32 %v1863, 0.0
      %v1928 = vmax.f32 %v1864, 0.0
      %v1929 = vmax.f32 %v1865, 0.0
      %v1930 = vmax.f32 %v1866, 0.0
      %v1931 = vmax.f32 %v1867, 0.0
      %v1932 = vmax.f32 %v1868, 0.0
      %v1933 = vmax.f32 %v1869, 0.0
      %v1934 = vmax.f32 %v1870, 0.0
      %v1935 = vmax.f32 %v1871, 0.0
      %v1936 = vmax.f32 %v1872, 0.0
      %v1937 = vmax.f32 %v1873, 0.0
      %v1938 = vmax.f32 %v1874, 0.0
      %v1939 = vmax.f32 %v1875, 0.0
      %v1940 = vmax.f32 %v1876, 0.0
      %v1941 = vmax.f32 %v1877, 0.0
      %v1942 = vmax.f32 %v1878, 0.0
      %v1943 = vmax.f32 %v1879, 0.0
      %v1944 = vmax.f32 %v1880, 0.0
      %v1945 = vmax.f32 %v1881, 0.0
      %v1946 = vmax.f32 %v1882, 0.0
      %v1947 = vmax.f32 %v1883, 0.0
      %v1948 = vmax.f32 %v1884, 0.0
      %v1949 = vmax.f32 %v1885, 0.0
      %v1950 = vmax.f32 %v1886, 0.0
      %v1951 = vmax.f32 %v1887, 0.0
      %v1952 = vmax.f32 %v1888, 0.0
      %v1953 = vmax.f32 %v1889, 0.0
      %v1954 = vmax.f32 %v1890, 0.0
      %v1955 = vmax.f32 %v1891, 0.0
      %v1956 = vmax.f32 %v1892, 0.0
      %v1957 = vmax.f32 %v1893, 0.0
      %v1958 = vmax.f32 %v1894, 0.0
      %v1959 = vmax.f32 %v1895, 0.0
      %v1960 = vmax.f32 %v1896, 0.0
      %v1961 = vmax.f32 %v1897, 0.0
      %v1962 = vmax.f32 %v1898, 0.0
      %v1963 = vmax.f32 %v1899, 0.0
      %v1964 = vmax.f32 %v1900, 0.0
      %v1965 = vmax.f32 %v1901, 0.0
      %v1966 = vmax.f32 %v1902, 0.0
      %v1967 = vmax.f32 %v1903, 0.0
      %v1968 = vmax.f32 %v1904, 0.0
      %v1969 = vmax.f32 %v1905, 0.0
      %v1970 = vmax.f32 %v1906, 0.0
      %v1971 = vmax.f32 %v1907, 0.0
      %s1972 = scalar_lea.vmem %s3, 64
      %v1973 = vld [vmem:[%s1972] sm:$0xff]
      %v1974 = vld [vmem:[%s1972 + $0x8] sm:$0xff]
      %v1975 = vld [vmem:[%s1972 + $0x10] sm:$0xff]
      %v1976 = vld [vmem:[%s1972 + $0x18] sm:$0xff]
      %v1978 = vsel %vm771, %v1908, 0
      %v1981 = vsel %vm771, %v1909, 0
      %v1984 = vsel %vm771, %v1910, 0
      %v1987 = vsel %vm771, %v1911, 0
      %v1990 = vsel %vm771, %v1912, 0
      %v1993 = vsel %vm771, %v1913, 0
      %v1996 = vsel %vm771, %v1914, 0
      %v1999 = vsel %vm771, %v1915, 0
      %v2002 = vsel %vm771, %v1916, 0
      %v2005 = vsel %vm771, %v1917, 0
      %v2008 = vsel %vm771, %v1918, 0
      %v2011 = vsel %vm771, %v1919, 0
      %v2014 = vsel %vm771, %v1920, 0
      %v2017 = vsel %vm771, %v1921, 0
      %v2020 = vsel %vm771, %v1922, 0
      %v2023 = vsel %vm771, %v1923, 0
      %v2026 = vsel %vm771, %v1924, 0
      %v2029 = vsel %vm771, %v1925, 0
      %v2032 = vsel %vm771, %v1926, 0
      %v2035 = vsel %vm771, %v1927, 0
      %v2038 = vsel %vm771, %v1928, 0
      %v2041 = vsel %vm771, %v1929, 0
      %v2044 = vsel %vm771, %v1930, 0
      %v2047 = vsel %vm771, %v1931, 0
      %v2050 = vsel %vm771, %v1932, 0
      %v2053 = vsel %vm771, %v1933, 0
      %v2056 = vsel %vm771, %v1934, 0
      %v2059 = vsel %vm771, %v1935, 0
      %v2062 = vsel %vm771, %v1936, 0
      %v2065 = vsel %vm771, %v1937, 0
      %v2068 = vsel %vm771, %v1938, 0
      %v2071 = vsel %vm771, %v1939, 0
      %v2074 = vsel %vm771, %v1940, 0
      %v2077 = vsel %vm771, %v1941, 0
      %v2080 = vsel %vm771, %v1942, 0
      %v2083 = vsel %vm771, %v1943, 0
      %v2086 = vsel %vm771, %v1944, 0
      %v2089 = vsel %vm771, %v1945, 0
      %v2092 = vsel %vm771, %v1946, 0
      %v2095 = vsel %vm771, %v1947, 0
      %v2098 = vsel %vm771, %v1948, 0
      %v2101 = vsel %vm771, %v1949, 0
      %v2104 = vsel %vm771, %v1950, 0
      %v2107 = vsel %vm771, %v1951, 0
      %v2110 = vsel %vm771, %v1952, 0
      %v2113 = vsel %vm771, %v1953, 0
      %v2116 = vsel %vm771, %v1954, 0
      %v2119 = vsel %vm771, %v1955, 0
      %v2122 = vsel %vm771, %v1956, 0
      %v2125 = vsel %vm771, %v1957, 0
      %v2128 = vsel %vm771, %v1958, 0
      %v2131 = vsel %vm771, %v1959, 0
      %v2134 = vsel %vm771, %v1960, 0
      %v2137 = vsel %vm771, %v1961, 0
      %v2140 = vsel %vm771, %v1962, 0
      %v2143 = vsel %vm771, %v1963, 0
      %v2146 = vsel %vm771, %v1964, 0
      %v2149 = vsel %vm771, %v1965, 0
      %v2152 = vsel %vm771, %v1966, 0
      %v2155 = vsel %vm771, %v1967, 0
      %v2158 = vsel %vm771, %v1968, 0
      %v2161 = vsel %vm771, %v1969, 0
      %v2164 = vsel %vm771, %v1970, 0
      %v2167 = vsel %vm771, %v1971, 0
      %2169 = vmatpush.msra.mxu0 0.0
      %2170 = vmatpush.msra.mxu0 0.0
      %2171 = vmatpush.msra.mxu0 0.0
      %2172 = vmatpush.msra.mxu0 0.0
      %2173 = vmatpush.msra.mxu0 0.0
      %2174 = vmatpush.msra.mxu0 0.0
      %2175 = vmatpush.msra.mxu0 0.0
      %2176 = vmatpush.msra.mxu0 0.0
      %2177 = vmatpush.msra.mxu0 0.0
      %2178 = vmatpush.msra.mxu0 0.0
      %2179 = vmatpush.msra.mxu0 0.0
      %2180 = vmatpush.msra.mxu0 0.0
      %2181 = vmatpush.msra.mxu0 %v1976
      %2182 = vmatpush.msra.mxu0 %v1975
      %2183 = vmatpush.msra.mxu0 %v1974
      %2184 = vmatpush.msra.mxu0 %v1973
      %2185 = vmatmul.f32.gmra.mxu0 %v1978
      %v2186 = vpop.f32.mrf.mxu0
      %v2187 = vadd.f32 0.0, %v2186
      %2188 = vmatmul.f32.gmra.mxu0 %v1981
      %v2189 = vpop.f32.mrf.mxu0
      %v2190 = vadd.f32 0.0, %v2189
      %2191 = vmatmul.f32.gmra.mxu0 %v1984
      %v2192 = vpop.f32.mrf.mxu0
      %v2193 = vadd.f32 0.0, %v2192
      %2194 = vmatmul.f32.gmra.mxu0 %v1987
      %v2195 = vpop.f32.mrf.mxu0
      %v2196 = vadd.f32 0.0, %v2195
      %2197 = vmatmul.f32.gmra.mxu0 %v1990
      %v2198 = vpop.f32.mrf.mxu0
      %v2199 = vadd.f32 0.0, %v2198
      %2200 = vmatmul.f32.gmra.mxu0 %v1993
      %v2201 = vpop.f32.mrf.mxu0
      %v2202 = vadd.f32 0.0, %v2201
      %2203 = vmatmul.f32.gmra.mxu0 %v1996
      %v2204 = vpop.f32.mrf.mxu0
      %v2205 = vadd.f32 0.0, %v2204
      %2206 = vmatmul.f32.gmra.mxu0 %v1999
      %v2207 = vpop.f32.mrf.mxu0
      %v2208 = vadd.f32 0.0, %v2207
      %2209 = vmatmul.f32.gmra.mxu0 %v2002
      %v2210 = vpop.f32.mrf.mxu0
      %v2211 = vadd.f32 0.0, %v2210
      %2212 = vmatmul.f32.gmra.mxu0 %v2005
      %v2213 = vpop.f32.mrf.mxu0
      %v2214 = vadd.f32 0.0, %v2213
      %2215 = vmatmul.f32.gmra.mxu0 %v2008
      %v2216 = vpop.f32.mrf.mxu0
      %v2217 = vadd.f32 0.0, %v2216
      %2218 = vmatmul.f32.gmra.mxu0 %v2011
      %v2219 = vpop.f32.mrf.mxu0
      %v2220 = vadd.f32 0.0, %v2219
      %2221 = vmatmul.f32.gmra.mxu0 %v2014
      %v2222 = vpop.f32.mrf.mxu0
      %v2223 = vadd.f32 0.0, %v2222
      %2224 = vmatmul.f32.gmra.mxu0 %v2017
      %v2225 = vpop.f32.mrf.mxu0
      %v2226 = vadd.f32 0.0, %v2225
      %2227 = vmatmul.f32.gmra.mxu0 %v2020
      %v2228 = vpop.f32.mrf.mxu0
      %v2229 = vadd.f32 0.0, %v2228
      %2230 = vmatmul.f32.gmra.mxu0 %v2023
      %v2231 = vpop.f32.mrf.mxu0
      %v2232 = vadd.f32 0.0, %v2231
      %2233 = vmatmul.f32.gmra.mxu0 %v2026
      %v2234 = vpop.f32.mrf.mxu0
      %v2235 = vadd.f32 0.0, %v2234
      %2236 = vmatmul.f32.gmra.mxu0 %v2029
      %v2237 = vpop.f32.mrf.mxu0
      %v2238 = vadd.f32 0.0, %v2237
      %2239 = vmatmul.f32.gmra.mxu0 %v2032
      %v2240 = vpop.f32.mrf.mxu0
      %v2241 = vadd.f32 0.0, %v2240
      %2242 = vmatmul.f32.gmra.mxu0 %v2035
      %v2243 = vpop.f32.mrf.mxu0
      %v2244 = vadd.f32 0.0, %v2243
      %2245 = vmatmul.f32.gmra.mxu0 %v2038
      %v2246 = vpop.f32.mrf.mxu0
      %v2247 = vadd.f32 0.0, %v2246
      %2248 = vmatmul.f32.gmra.mxu0 %v2041
      %v2249 = vpop.f32.mrf.mxu0
      %v2250 = vadd.f32 0.0, %v2249
      %2251 = vmatmul.f32.gmra.mxu0 %v2044
      %v2252 = vpop.f32.mrf.mxu0
      %v2253 = vadd.f32 0.0, %v2252
      %2254 = vmatmul.f32.gmra.mxu0 %v2047
      %v2255 = vpop.f32.mrf.mxu0
      %v2256 = vadd.f32 0.0, %v2255
      %2257 = vmatmul.f32.gmra.mxu0 %v2050
      %v2258 = vpop.f32.mrf.mxu0
      %v2259 = vadd.f32 0.0, %v2258
      %2260 = vmatmul.f32.gmra.mxu0 %v2053
      %v2261 = vpop.f32.mrf.mxu0
      %v2262 = vadd.f32 0.0, %v2261
      %2263 = vmatmul.f32.gmra.mxu0 %v2056
      %v2264 = vpop.f32.mrf.mxu0
      %v2265 = vadd.f32 0.0, %v2264
      %2266 = vmatmul.f32.gmra.mxu0 %v2059
      %v2267 = vpop.f32.mrf.mxu0
      %v2268 = vadd.f32 0.0, %v2267
      %2269 = vmatmul.f32.gmra.mxu0 %v2062
      %v2270 = vpop.f32.mrf.mxu0
      %v2271 = vadd.f32 0.0, %v2270
      %2272 = vmatmul.f32.gmra.mxu0 %v2065
      %v2273 = vpop.f32.mrf.mxu0
      %v2274 = vadd.f32 0.0, %v2273
      %2275 = vmatmul.f32.gmra.mxu0 %v2068
      %v2276 = vpop.f32.mrf.mxu0
      %v2277 = vadd.f32 0.0, %v2276
      %2278 = vmatmul.f32.gmra.mxu0 %v2071
      %v2279 = vpop.f32.mrf.mxu0
      %v2280 = vadd.f32 0.0, %v2279
      %2281 = vmatmul.f32.gmra.mxu0 %v2074
      %v2282 = vpop.f32.mrf.mxu0
      %v2283 = vadd.f32 0.0, %v2282
      %2284 = vmatmul.f32.gmra.mxu0 %v2077
      %v2285 = vpop.f32.mrf.mxu0
      %v2286 = vadd.f32 0.0, %v2285
      %2287 = vmatmul.f32.gmra.mxu0 %v2080
      %v2288 = vpop.f32.mrf.mxu0
      %v2289 = vadd.f32 0.0, %v2288
      %2290 = vmatmul.f32.gmra.mxu0 %v2083
      %v2291 = vpop.f32.mrf.mxu0
      %v2292 = vadd.f32 0.0, %v2291
      %2293 = vmatmul.f32.gmra.mxu0 %v2086
      %v2294 = vpop.f32.mrf.mxu0
      %v2295 = vadd.f32 0.0, %v2294
      %2296 = vmatmul.f32.gmra.mxu0 %v2089
      %v2297 = vpop.f32.mrf.mxu0
      %v2298 = vadd.f32 0.0, %v2297
      %2299 = vmatmul.f32.gmra.mxu0 %v2092
      %v2300 = vpop.f32.mrf.mxu0
      %v2301 = vadd.f32 0.0, %v2300
      %2302 = vmatmul.f32.gmra.mxu0 %v2095
      %v2303 = vpop.f32.mrf.mxu0
      %v2304 = vadd.f32 0.0, %v2303
      %2305 = vmatmul.f32.gmra.mxu0 %v2098
      %v2306 = vpop.f32.mrf.mxu0
      %v2307 = vadd.f32 0.0, %v2306
      %2308 = vmatmul.f32.gmra.mxu0 %v2101
      %v2309 = vpop.f32.mrf.mxu0
      %v2310 = vadd.f32 0.0, %v2309
      %2311 = vmatmul.f32.gmra.mxu0 %v2104
      %v2312 = vpop.f32.mrf.mxu0
      %v2313 = vadd.f32 0.0, %v2312
      %2314 = vmatmul.f32.gmra.mxu0 %v2107
      %v2315 = vpop.f32.mrf.mxu0
      %v2316 = vadd.f32 0.0, %v2315
      %2317 = vmatmul.f32.gmra.mxu0 %v2110
      %v2318 = vpop.f32.mrf.mxu0
      %v2319 = vadd.f32 0.0, %v2318
      %2320 = vmatmul.f32.gmra.mxu0 %v2113
      %v2321 = vpop.f32.mrf.mxu0
      %v2322 = vadd.f32 0.0, %v2321
      %2323 = vmatmul.f32.gmra.mxu0 %v2116
      %v2324 = vpop.f32.mrf.mxu0
      %v2325 = vadd.f32 0.0, %v2324
      %2326 = vmatmul.f32.gmra.mxu0 %v2119
      %v2327 = vpop.f32.mrf.mxu0
      %v2328 = vadd.f32 0.0, %v2327
      %2329 = vmatmul.f32.gmra.mxu0 %v2122
      %v2330 = vpop.f32.mrf.mxu0
      %v2331 = vadd.f32 0.0, %v2330
      %2332 = vmatmul.f32.gmra.mxu0 %v2125
      %v2333 = vpop.f32.mrf.mxu0
      %v2334 = vadd.f32 0.0, %v2333
      %2335 = vmatmul.f32.gmra.mxu0 %v2128
      %v2336 = vpop.f32.mrf.mxu0
      %v2337 = vadd.f32 0.0, %v2336
      %2338 = vmatmul.f32.gmra.mxu0 %v2131
      %v2339 = vpop.f32.mrf.mxu0
      %v2340 = vadd.f32 0.0, %v2339
      %2341 = vmatmul.f32.gmra.mxu0 %v2134
      %v2342 = vpop.f32.mrf.mxu0
      %v2343 = vadd.f32 0.0, %v2342
      %2344 = vmatmul.f32.gmra.mxu0 %v2137
      %v2345 = vpop.f32.mrf.mxu0
      %v2346 = vadd.f32 0.0, %v2345
      %2347 = vmatmul.f32.gmra.mxu0 %v2140
      %v2348 = vpop.f32.mrf.mxu0
      %v2349 = vadd.f32 0.0, %v2348
      %2350 = vmatmul.f32.gmra.mxu0 %v2143
      %v2351 = vpop.f32.mrf.mxu0
      %v2352 = vadd.f32 0.0, %v2351
      %2353 = vmatmul.f32.gmra.mxu0 %v2146
      %v2354 = vpop.f32.mrf.mxu0
      %v2355 = vadd.f32 0.0, %v2354
      %2356 = vmatmul.f32.gmra.mxu0 %v2149
      %v2357 = vpop.f32.mrf.mxu0
      %v2358 = vadd.f32 0.0, %v2357
      %2359 = vmatmul.f32.gmra.mxu0 %v2152
      %v2360 = vpop.f32.mrf.mxu0
      %v2361 = vadd.f32 0.0, %v2360
      %2362 = vmatmul.f32.gmra.mxu0 %v2155
      %v2363 = vpop.f32.mrf.mxu0
      %v2364 = vadd.f32 0.0, %v2363
      %2365 = vmatmul.f32.gmra.mxu0 %v2158
      %v2366 = vpop.f32.mrf.mxu0
      %v2367 = vadd.f32 0.0, %v2366
      %2368 = vmatmul.f32.gmra.mxu0 %v2161
      %v2369 = vpop.f32.mrf.mxu0
      %v2370 = vadd.f32 0.0, %v2369
      %2371 = vmatmul.f32.gmra.mxu0 %v2164
      %v2372 = vpop.f32.mrf.mxu0
      %v2373 = vadd.f32 0.0, %v2372
      %2374 = vmatmul.f32.gmra.mxu0 %v2167
      %v2375 = vpop.f32.mrf.mxu0
      %v2376 = vadd.f32 0.0, %v2375
      %2377 = vdwg.mxu0
      %v2378 = vadd.f32 %v1908, %v2187
      %v2379 = vadd.f32 %v1909, %v2190
      %v2380 = vadd.f32 %v1910, %v2193
      %v2381 = vadd.f32 %v1911, %v2196
      %v2382 = vadd.f32 %v1912, %v2199
      %v2383 = vadd.f32 %v1913, %v2202
      %v2384 = vadd.f32 %v1914, %v2205
      %v2385 = vadd.f32 %v1915, %v2208
      %v2386 = vadd.f32 %v1916, %v2211
      %v2387 = vadd.f32 %v1917, %v2214
      %v2388 = vadd.f32 %v1918, %v2217
      %v2389 = vadd.f32 %v1919, %v2220
      %v2390 = vadd.f32 %v1920, %v2223
      %v2391 = vadd.f32 %v1921, %v2226
      %v2392 = vadd.f32 %v1922, %v2229
      %v2393 = vadd.f32 %v1923, %v2232
      %v2394 = vadd.f32 %v1924, %v2235
      %v2395 = vadd.f32 %v1925, %v2238
      %v2396 = vadd.f32 %v1926, %v2241
      %v2397 = vadd.f32 %v1927, %v2244
      %v2398 = vadd.f32 %v1928, %v2247
      %v2399 = vadd.f32 %v1929, %v2250
      %v2400 = vadd.f32 %v1930, %v2253
      %v2401 = vadd.f32 %v1931, %v2256
      %v2402 = vadd.f32 %v1932, %v2259
      %v2403 = vadd.f32 %v1933, %v2262
      %v2404 = vadd.f32 %v1934, %v2265
      %v2405 = vadd.f32 %v1935, %v2268
      %v2406 = vadd.f32 %v1936, %v2271
      %v2407 = vadd.f32 %v1937, %v2274
      %v2408 = vadd.f32 %v1938, %v2277
      %v2409 = vadd.f32 %v1939, %v2280
      %v2410 = vadd.f32 %v1940, %v2283
      %v2411 = vadd.f32 %v1941, %v2286
      %v2412 = vadd.f32 %v1942, %v2289
      %v2413 = vadd.f32 %v1943, %v2292
      %v2414 = vadd.f32 %v1944, %v2295
      %v2415 = vadd.f32 %v1945, %v2298
      %v2416 = vadd.f32 %v1946, %v2301
      %v2417 = vadd.f32 %v1947, %v2304
      %v2418 = vadd.f32 %v1948, %v2307
      %v2419 = vadd.f32 %v1949, %v2310
      %v2420 = vadd.f32 %v1950, %v2313
      %v2421 = vadd.f32 %v1951, %v2316
      %v2422 = vadd.f32 %v1952, %v2319
      %v2423 = vadd.f32 %v1953, %v2322
      %v2424 = vadd.f32 %v1954, %v2325
      %v2425 = vadd.f32 %v1955, %v2328
      %v2426 = vadd.f32 %v1956, %v2331
      %v2427 = vadd.f32 %v1957, %v2334
      %v2428 = vadd.f32 %v1958, %v2337
      %v2429 = vadd.f32 %v1959, %v2340
      %v2430 = vadd.f32 %v1960, %v2343
      %v2431 = vadd.f32 %v1961, %v2346
      %v2432 = vadd.f32 %v1962, %v2349
      %v2433 = vadd.f32 %v1963, %v2352
      %v2434 = vadd.f32 %v1964, %v2355
      %v2435 = vadd.f32 %v1965, %v2358
      %v2436 = vadd.f32 %v1966, %v2361
      %v2437 = vadd.f32 %v1967, %v2364
      %v2438 = vadd.f32 %v1968, %v2367
      %v2439 = vadd.f32 %v1969, %v2370
      %v2440 = vadd.f32 %v1970, %v2373
      %v2441 = vadd.f32 %v1971, %v2376
      %s2442 = scalar_lea.vmem %s4, 2
      %v2443 = vld [vmem:[%s2442] sm:$0x1]
      %v2445 = vperm.slane %v2443, 0
      %v2447 = vadd.f32 %v2378, %v2445
      %v2448 = vadd.f32 %v2379, %v2445
      %v2449 = vadd.f32 %v2380, %v2445
      %v2450 = vadd.f32 %v2381, %v2445
      %v2451 = vadd.f32 %v2382, %v2445
      %v2452 = vadd.f32 %v2383, %v2445
      %v2453 = vadd.f32 %v2384, %v2445
      %v2454 = vadd.f32 %v2385, %v2445
      %v2455 = vadd.f32 %v2386, %v2445
      %v2456 = vadd.f32 %v2387, %v2445
      %v2457 = vadd.f32 %v2388, %v2445
      %v2458 = vadd.f32 %v2389, %v2445
      %v2459 = vadd.f32 %v2390, %v2445
      %v2460 = vadd.f32 %v2391, %v2445
      %v2461 = vadd.f32 %v2392, %v2445
      %v2462 = vadd.f32 %v2393, %v2445
      %v2463 = vadd.f32 %v2394, %v2445
      %v2464 = vadd.f32 %v2395, %v2445
      %v2465 = vadd.f32 %v2396, %v2445
      %v2466 = vadd.f32 %v2397, %v2445
      %v2467 = vadd.f32 %v2398, %v2445
      %v2468 = vadd.f32 %v2399, %v2445
      %v2469 = vadd.f32 %v2400, %v2445
      %v2470 = vadd.f32 %v2401, %v2445
      %v2471 = vadd.f32 %v2402, %v2445
      %v2472 = vadd.f32 %v2403, %v2445
      %v2473 = vadd.f32 %v2404, %v2445
      %v2474 = vadd.f32 %v2405, %v2445
      %v2475 = vadd.f32 %v2406, %v2445
      %v2476 = vadd.f32 %v2407, %v2445
      %v2477 = vadd.f32 %v2408, %v2445
      %v2478 = vadd.f32 %v2409, %v2445
      %v2479 = vadd.f32 %v2410, %v2445
      %v2480 = vadd.f32 %v2411, %v2445
      %v2481 = vadd.f32 %v2412, %v2445
      %v2482 = vadd.f32 %v2413, %v2445
      %v2483 = vadd.f32 %v2414, %v2445
      %v2484 = vadd.f32 %v2415, %v2445
      %v2485 = vadd.f32 %v2416, %v2445
      %v2486 = vadd.f32 %v2417, %v2445
      %v2487 = vadd.f32 %v2418, %v2445
      %v2488 = vadd.f32 %v2419, %v2445
      %v2489 = vadd.f32 %v2420, %v2445
      %v2490 = vadd.f32 %v2421, %v2445
      %v2491 = vadd.f32 %v2422, %v2445
      %v2492 = vadd.f32 %v2423, %v2445
      %v2493 = vadd.f32 %v2424, %v2445
      %v2494 = vadd.f32 %v2425, %v2445
      %v2495 = vadd.f32 %v2426, %v2445
      %v2496 = vadd.f32 %v2427, %v2445
      %v2497 = vadd.f32 %v2428, %v2445
      %v2498 = vadd.f32 %v2429, %v2445
      %v2499 = vadd.f32 %v2430, %v2445
      %v2500 = vadd.f32 %v2431, %v2445
      %v2501 = vadd.f32 %v2432, %v2445
      %v2502 = vadd.f32 %v2433, %v2445
      %v2503 = vadd.f32 %v2434, %v2445
      %v2504 = vadd.f32 %v2435, %v2445
      %v2505 = vadd.f32 %v2436, %v2445
      %v2506 = vadd.f32 %v2437, %v2445
      %v2507 = vadd.f32 %v2438, %v2445
      %v2508 = vadd.f32 %v2439, %v2445
      %v2509 = vadd.f32 %v2440, %v2445
      %v2510 = vadd.f32 %v2441, %v2445
      %v2511 = vmax.f32 %v2447, 0.0
      %v2512 = vmax.f32 %v2448, 0.0
      %v2513 = vmax.f32 %v2449, 0.0
      %v2514 = vmax.f32 %v2450, 0.0
      %v2515 = vmax.f32 %v2451, 0.0
      %v2516 = vmax.f32 %v2452, 0.0
      %v2517 = vmax.f32 %v2453, 0.0
      %v2518 = vmax.f32 %v2454, 0.0
      %v2519 = vmax.f32 %v2455, 0.0
      %v2520 = vmax.f32 %v2456, 0.0
      %v2521 = vmax.f32 %v2457, 0.0
      %v2522 = vmax.f32 %v2458, 0.0
      %v2523 = vmax.f32 %v2459, 0.0
      %v2524 = vmax.f32 %v2460, 0.0
      %v2525 = vmax.f32 %v2461, 0.0
      %v2526 = vmax.f32 %v2462, 0.0
      %v2527 = vmax.f32 %v2463, 0.0
      %v2528 = vmax.f32 %v2464, 0.0
      %v2529 = vmax.f32 %v2465, 0.0
      %v2530 = vmax.f32 %v2466, 0.0
      %v2531 = vmax.f32 %v2467, 0.0
      %v2532 = vmax.f32 %v2468, 0.0
      %v2533 = vmax.f32 %v2469, 0.0
      %v2534 = vmax.f32 %v2470, 0.0
      %v2535 = vmax.f32 %v2471, 0.0
      %v2536 = vmax.f32 %v2472, 0.0
      %v2537 = vmax.f32 %v2473, 0.0
      %v2538 = vmax.f32 %v2474, 0.0
      %v2539 = vmax.f32 %v2475, 0.0
      %v2540 = vmax.f32 %v2476, 0.0
      %v2541 = vmax.f32 %v2477, 0.0
      %v2542 = vmax.f32 %v2478, 0.0
      %v2543 = vmax.f32 %v2479, 0.0
      %v2544 = vmax.f32 %v2480, 0.0
      %v2545 = vmax.f32 %v2481, 0.0
      %v2546 = vmax.f32 %v2482, 0.0
      %v2547 = vmax.f32 %v2483, 0.0
      %v2548 = vmax.f32 %v2484, 0.0
      %v2549 = vmax.f32 %v2485, 0.0
      %v2550 = vmax.f32 %v2486, 0.0
      %v2551 = vmax.f32 %v2487, 0.0
      %v2552 = vmax.f32 %v2488, 0.0
      %v2553 = vmax.f32 %v2489, 0.0
      %v2554 = vmax.f32 %v2490, 0.0
      %v2555 = vmax.f32 %v2491, 0.0
      %v2556 = vmax.f32 %v2492, 0.0
      %v2557 = vmax.f32 %v2493, 0.0
      %v2558 = vmax.f32 %v2494, 0.0
      %v2559 = vmax.f32 %v2495, 0.0
      %v2560 = vmax.f32 %v2496, 0.0
      %v2561 = vmax.f32 %v2497, 0.0
      %v2562 = vmax.f32 %v2498, 0.0
      %v2563 = vmax.f32 %v2499, 0.0
      %v2564 = vmax.f32 %v2500, 0.0
      %v2565 = vmax.f32 %v2501, 0.0
      %v2566 = vmax.f32 %v2502, 0.0
      %v2567 = vmax.f32 %v2503, 0.0
      %v2568 = vmax.f32 %v2504, 0.0
      %v2569 = vmax.f32 %v2505, 0.0
      %v2570 = vmax.f32 %v2506, 0.0
      %v2571 = vmax.f32 %v2507, 0.0
      %v2572 = vmax.f32 %v2508, 0.0
      %v2573 = vmax.f32 %v2509, 0.0
      %v2574 = vmax.f32 %v2510, 0.0
      %s2575 = scalar_lea.vmem %s3, 96
      %v2576 = vld [vmem:[%s2575] sm:$0xff]
      %v2577 = vld [vmem:[%s2575 + $0x8] sm:$0xff]
      %v2578 = vld [vmem:[%s2575 + $0x10] sm:$0xff]
      %v2579 = vld [vmem:[%s2575 + $0x18] sm:$0xff]
      %v2581 = vsel %vm771, %v2511, 0
      %v2584 = vsel %vm771, %v2512, 0
      %v2587 = vsel %vm771, %v2513, 0
      %v2590 = vsel %vm771, %v2514, 0
      %v2593 = vsel %vm771, %v2515, 0
      %v2596 = vsel %vm771, %v2516, 0
      %v2599 = vsel %vm771, %v2517, 0
      %v2602 = vsel %vm771, %v2518, 0
      %v2605 = vsel %vm771, %v2519, 0
      %v2608 = vsel %vm771, %v2520, 0
      %v2611 = vsel %vm771, %v2521, 0
      %v2614 = vsel %vm771, %v2522, 0
      %v2617 = vsel %vm771, %v2523, 0
      %v2620 = vsel %vm771, %v2524, 0
      %v2623 = vsel %vm771, %v2525, 0
      %v2626 = vsel %vm771, %v2526, 0
      %v2629 = vsel %vm771, %v2527, 0
      %v2632 = vsel %vm771, %v2528, 0
      %v2635 = vsel %vm771, %v2529, 0
      %v2638 = vsel %vm771, %v2530, 0
      %v2641 = vsel %vm771, %v2531, 0
      %v2644 = vsel %vm771, %v2532, 0
      %v2647 = vsel %vm771, %v2533, 0
      %v2650 = vsel %vm771, %v2534, 0
      %v2653 = vsel %vm771, %v2535, 0
      %v2656 = vsel %vm771, %v2536, 0
      %v2659 = vsel %vm771, %v2537, 0
      %v2662 = vsel %vm771, %v2538, 0
      %v2665 = vsel %vm771, %v2539, 0
      %v2668 = vsel %vm771, %v2540, 0
      %v2671 = vsel %vm771, %v2541, 0
      %v2674 = vsel %vm771, %v2542, 0
      %v2677 = vsel %vm771, %v2543, 0
      %v2680 = vsel %vm771, %v2544, 0
      %v2683 = vsel %vm771, %v2545, 0
      %v2686 = vsel %vm771, %v2546, 0
      %v2689 = vsel %vm771, %v2547, 0
      %v2692 = vsel %vm771, %v2548, 0
      %v2695 = vsel %vm771, %v2549, 0
      %v2698 = vsel %vm771, %v2550, 0
      %v2701 = vsel %vm771, %v2551, 0
      %v2704 = vsel %vm771, %v2552, 0
      %v2707 = vsel %vm771, %v2553, 0
      %v2710 = vsel %vm771, %v2554, 0
      %v2713 = vsel %vm771, %v2555, 0
      %v2716 = vsel %vm771, %v2556, 0
      %v2719 = vsel %vm771, %v2557, 0
      %v2722 = vsel %vm771, %v2558, 0
      %v2725 = vsel %vm771, %v2559, 0
      %v2728 = vsel %vm771, %v2560, 0
      %v2731 = vsel %vm771, %v2561, 0
      %v2734 = vsel %vm771, %v2562, 0
      %v2737 = vsel %vm771, %v2563, 0
      %v2740 = vsel %vm771, %v2564, 0
      %v2743 = vsel %vm771, %v2565, 0
      %v2746 = vsel %vm771, %v2566, 0
      %v2749 = vsel %vm771, %v2567, 0
      %v2752 = vsel %vm771, %v2568, 0
      %v2755 = vsel %vm771, %v2569, 0
      %v2758 = vsel %vm771, %v2570, 0
      %v2761 = vsel %vm771, %v2571, 0
      %v2764 = vsel %vm771, %v2572, 0
      %v2767 = vsel %vm771, %v2573, 0
      %v2770 = vsel %vm771, %v2574, 0
      %2772 = vmatpush.msra.mxu0 0.0
      %2773 = vmatpush.msra.mxu0 0.0
      %2774 = vmatpush.msra.mxu0 0.0
      %2775 = vmatpush.msra.mxu0 0.0
      %2776 = vmatpush.msra.mxu0 0.0
      %2777 = vmatpush.msra.mxu0 0.0
      %2778 = vmatpush.msra.mxu0 0.0
      %2779 = vmatpush.msra.mxu0 0.0
      %2780 = vmatpush.msra.mxu0 0.0
      %2781 = vmatpush.msra.mxu0 0.0
      %2782 = vmatpush.msra.mxu0 0.0
      %2783 = vmatpush.msra.mxu0 0.0
      %2784 = vmatpush.msra.mxu0 %v2579
      %2785 = vmatpush.msra.mxu0 %v2578
      %2786 = vmatpush.msra.mxu0 %v2577
      %2787 = vmatpush.msra.mxu0 %v2576
      %2788 = vmatmul.f32.gmra.mxu0 %v2581
      %v2789 = vpop.f32.mrf.mxu0
      %v2790 = vadd.f32 0.0, %v2789
      %2791 = vmatmul.f32.gmra.mxu0 %v2584
      %v2792 = vpop.f32.mrf.mxu0
      %v2793 = vadd.f32 0.0, %v2792
      %2794 = vmatmul.f32.gmra.mxu0 %v2587
      %v2795 = vpop.f32.mrf.mxu0
      %v2796 = vadd.f32 0.0, %v2795
      %2797 = vmatmul.f32.gmra.mxu0 %v2590
      %v2798 = vpop.f32.mrf.mxu0
      %v2799 = vadd.f32 0.0, %v2798
      %2800 = vmatmul.f32.gmra.mxu0 %v2593
      %v2801 = vpop.f32.mrf.mxu0
      %v2802 = vadd.f32 0.0, %v2801
      %2803 = vmatmul.f32.gmra.mxu0 %v2596
      %v2804 = vpop.f32.mrf.mxu0
      %v2805 = vadd.f32 0.0, %v2804
      %2806 = vmatmul.f32.gmra.mxu0 %v2599
      %v2807 = vpop.f32.mrf.mxu0
      %v2808 = vadd.f32 0.0, %v2807
      %2809 = vmatmul.f32.gmra.mxu0 %v2602
      %v2810 = vpop.f32.mrf.mxu0
      %v2811 = vadd.f32 0.0, %v2810
      %2812 = vmatmul.f32.gmra.mxu0 %v2605
      %v2813 = vpop.f32.mrf.mxu0
      %v2814 = vadd.f32 0.0, %v2813
      %2815 = vmatmul.f32.gmra.mxu0 %v2608
      %v2816 = vpop.f32.mrf.mxu0
      %v2817 = vadd.f32 0.0, %v2816
      %2818 = vmatmul.f32.gmra.mxu0 %v2611
      %v2819 = vpop.f32.mrf.mxu0
      %v2820 = vadd.f32 0.0, %v2819
      %2821 = vmatmul.f32.gmra.mxu0 %v2614
      %v2822 = vpop.f32.mrf.mxu0
      %v2823 = vadd.f32 0.0, %v2822
      %2824 = vmatmul.f32.gmra.mxu0 %v2617
      %v2825 = vpop.f32.mrf.mxu0
      %v2826 = vadd.f32 0.0, %v2825
      %2827 = vmatmul.f32.gmra.mxu0 %v2620
      %v2828 = vpop.f32.mrf.mxu0
      %v2829 = vadd.f32 0.0, %v2828
      %2830 = vmatmul.f32.gmra.mxu0 %v2623
      %v2831 = vpop.f32.mrf.mxu0
      %v2832 = vadd.f32 0.0, %v2831
      %2833 = vmatmul.f32.gmra.mxu0 %v2626
      %v2834 = vpop.f32.mrf.mxu0
      %v2835 = vadd.f32 0.0, %v2834
      %2836 = vmatmul.f32.gmra.mxu0 %v2629
      %v2837 = vpop.f32.mrf.mxu0
      %v2838 = vadd.f32 0.0, %v2837
      %2839 = vmatmul.f32.gmra.mxu0 %v2632
      %v2840 = vpop.f32.mrf.mxu0
      %v2841 = vadd.f32 0.0, %v2840
      %2842 = vmatmul.f32.gmra.mxu0 %v2635
      %v2843 = vpop.f32.mrf.mxu0
      %v2844 = vadd.f32 0.0, %v2843
      %2845 = vmatmul.f32.gmra.mxu0 %v2638
      %v2846 = vpop.f32.mrf.mxu0
      %v2847 = vadd.f32 0.0, %v2846
      %2848 = vmatmul.f32.gmra.mxu0 %v2641
      %v2849 = vpop.f32.mrf.mxu0
      %v2850 = vadd.f32 0.0, %v2849
      %2851 = vmatmul.f32.gmra.mxu0 %v2644
      %v2852 = vpop.f32.mrf.mxu0
      %v2853 = vadd.f32 0.0, %v2852
      %2854 = vmatmul.f32.gmra.mxu0 %v2647
      %v2855 = vpop.f32.mrf.mxu0
      %v2856 = vadd.f32 0.0, %v2855
      %2857 = vmatmul.f32.gmra.mxu0 %v2650
      %v2858 = vpop.f32.mrf.mxu0
      %v2859 = vadd.f32 0.0, %v2858
      %2860 = vmatmul.f32.gmra.mxu0 %v2653
      %v2861 = vpop.f32.mrf.mxu0
      %v2862 = vadd.f32 0.0, %v2861
      %2863 = vmatmul.f32.gmra.mxu0 %v2656
      %v2864 = vpop.f32.mrf.mxu0
      %v2865 = vadd.f32 0.0, %v2864
      %2866 = vmatmul.f32.gmra.mxu0 %v2659
      %v2867 = vpop.f32.mrf.mxu0
      %v2868 = vadd.f32 0.0, %v2867
      %2869 = vmatmul.f32.gmra.mxu0 %v2662
      %v2870 = vpop.f32.mrf.mxu0
      %v2871 = vadd.f32 0.0, %v2870
      %2872 = vmatmul.f32.gmra.mxu0 %v2665
      %v2873 = vpop.f32.mrf.mxu0
      %v2874 = vadd.f32 0.0, %v2873
      %2875 = vmatmul.f32.gmra.mxu0 %v2668
      %v2876 = vpop.f32.mrf.mxu0
      %v2877 = vadd.f32 0.0, %v2876
      %2878 = vmatmul.f32.gmra.mxu0 %v2671
      %v2879 = vpop.f32.mrf.mxu0
      %v2880 = vadd.f32 0.0, %v2879
      %2881 = vmatmul.f32.gmra.mxu0 %v2674
      %v2882 = vpop.f32.mrf.mxu0
      %v2883 = vadd.f32 0.0, %v2882
      %2884 = vmatmul.f32.gmra.mxu0 %v2677
      %v2885 = vpop.f32.mrf.mxu0
      %v2886 = vadd.f32 0.0, %v2885
      %2887 = vmatmul.f32.gmra.mxu0 %v2680
      %v2888 = vpop.f32.mrf.mxu0
      %v2889 = vadd.f32 0.0, %v2888
      %2890 = vmatmul.f32.gmra.mxu0 %v2683
      %v2891 = vpop.f32.mrf.mxu0
      %v2892 = vadd.f32 0.0, %v2891
      %2893 = vmatmul.f32.gmra.mxu0 %v2686
      %v2894 = vpop.f32.mrf.mxu0
      %v2895 = vadd.f32 0.0, %v2894
      %2896 = vmatmul.f32.gmra.mxu0 %v2689
      %v2897 = vpop.f32.mrf.mxu0
      %v2898 = vadd.f32 0.0, %v2897
      %2899 = vmatmul.f32.gmra.mxu0 %v2692
      %v2900 = vpop.f32.mrf.mxu0
      %v2901 = vadd.f32 0.0, %v2900
      %2902 = vmatmul.f32.gmra.mxu0 %v2695
      %v2903 = vpop.f32.mrf.mxu0
      %v2904 = vadd.f32 0.0, %v2903
      %2905 = vmatmul.f32.gmra.mxu0 %v2698
      %v2906 = vpop.f32.mrf.mxu0
      %v2907 = vadd.f32 0.0, %v2906
      %2908 = vmatmul.f32.gmra.mxu0 %v2701
      %v2909 = vpop.f32.mrf.mxu0
      %v2910 = vadd.f32 0.0, %v2909
      %2911 = vmatmul.f32.gmra.mxu0 %v2704
      %v2912 = vpop.f32.mrf.mxu0
      %v2913 = vadd.f32 0.0, %v2912
      %2914 = vmatmul.f32.gmra.mxu0 %v2707
      %v2915 = vpop.f32.mrf.mxu0
      %v2916 = vadd.f32 0.0, %v2915
      %2917 = vmatmul.f32.gmra.mxu0 %v2710
      %v2918 = vpop.f32.mrf.mxu0
      %v2919 = vadd.f32 0.0, %v2918
      %2920 = vmatmul.f32.gmra.mxu0 %v2713
      %v2921 = vpop.f32.mrf.mxu0
      %v2922 = vadd.f32 0.0, %v2921
      %2923 = vmatmul.f32.gmra.mxu0 %v2716
      %v2924 = vpop.f32.mrf.mxu0
      %v2925 = vadd.f32 0.0, %v2924
      %2926 = vmatmul.f32.gmra.mxu0 %v2719
      %v2927 = vpop.f32.mrf.mxu0
      %v2928 = vadd.f32 0.0, %v2927
      %2929 = vmatmul.f32.gmra.mxu0 %v2722
      %v2930 = vpop.f32.mrf.mxu0
      %v2931 = vadd.f32 0.0, %v2930
      %2932 = vmatmul.f32.gmra.mxu0 %v2725
      %v2933 = vpop.f32.mrf.mxu0
      %v2934 = vadd.f32 0.0, %v2933
      %2935 = vmatmul.f32.gmra.mxu0 %v2728
      %v2936 = vpop.f32.mrf.mxu0
      %v2937 = vadd.f32 0.0, %v2936
      %2938 = vmatmul.f32.gmra.mxu0 %v2731
      %v2939 = vpop.f32.mrf.mxu0
      %v2940 = vadd.f32 0.0, %v2939
      %2941 = vmatmul.f32.gmra.mxu0 %v2734
      %v2942 = vpop.f32.mrf.mxu0
      %v2943 = vadd.f32 0.0, %v2942
      %2944 = vmatmul.f32.gmra.mxu0 %v2737
      %v2945 = vpop.f32.mrf.mxu0
      %v2946 = vadd.f32 0.0, %v2945
      %2947 = vmatmul.f32.gmra.mxu0 %v2740
      %v2948 = vpop.f32.mrf.mxu0
      %v2949 = vadd.f32 0.0, %v2948
      %2950 = vmatmul.f32.gmra.mxu0 %v2743
      %v2951 = vpop.f32.mrf.mxu0
      %v2952 = vadd.f32 0.0, %v2951
      %2953 = vmatmul.f32.gmra.mxu0 %v2746
      %v2954 = vpop.f32.mrf.mxu0
      %v2955 = vadd.f32 0.0, %v2954
      %2956 = vmatmul.f32.gmra.mxu0 %v2749
      %v2957 = vpop.f32.mrf.mxu0
      %v2958 = vadd.f32 0.0, %v2957
      %2959 = vmatmul.f32.gmra.mxu0 %v2752
      %v2960 = vpop.f32.mrf.mxu0
      %v2961 = vadd.f32 0.0, %v2960
      %2962 = vmatmul.f32.gmra.mxu0 %v2755
      %v2963 = vpop.f32.mrf.mxu0
      %v2964 = vadd.f32 0.0, %v2963
      %2965 = vmatmul.f32.gmra.mxu0 %v2758
      %v2966 = vpop.f32.mrf.mxu0
      %v2967 = vadd.f32 0.0, %v2966
      %2968 = vmatmul.f32.gmra.mxu0 %v2761
      %v2969 = vpop.f32.mrf.mxu0
      %v2970 = vadd.f32 0.0, %v2969
      %2971 = vmatmul.f32.gmra.mxu0 %v2764
      %v2972 = vpop.f32.mrf.mxu0
      %v2973 = vadd.f32 0.0, %v2972
      %2974 = vmatmul.f32.gmra.mxu0 %v2767
      %v2975 = vpop.f32.mrf.mxu0
      %v2976 = vadd.f32 0.0, %v2975
      %2977 = vmatmul.f32.gmra.mxu0 %v2770
      %v2978 = vpop.f32.mrf.mxu0
      %v2979 = vadd.f32 0.0, %v2978
      %2980 = vdwg.mxu0
      %v2981 = vadd.f32 %v2511, %v2790
      %v2982 = vadd.f32 %v2512, %v2793
      %v2983 = vadd.f32 %v2513, %v2796
      %v2984 = vadd.f32 %v2514, %v2799
      %v2985 = vadd.f32 %v2515, %v2802
      %v2986 = vadd.f32 %v2516, %v2805
      %v2987 = vadd.f32 %v2517, %v2808
      %v2988 = vadd.f32 %v2518, %v2811
      %v2989 = vadd.f32 %v2519, %v2814
      %v2990 = vadd.f32 %v2520, %v2817
      %v2991 = vadd.f32 %v2521, %v2820
      %v2992 = vadd.f32 %v2522, %v2823
      %v2993 = vadd.f32 %v2523, %v2826
      %v2994 = vadd.f32 %v2524, %v2829
      %v2995 = vadd.f32 %v2525, %v2832
      %v2996 = vadd.f32 %v2526, %v2835
      %v2997 = vadd.f32 %v2527, %v2838
      %v2998 = vadd.f32 %v2528, %v2841
      %v2999 = vadd.f32 %v2529, %v2844
      %v3000 = vadd.f32 %v2530, %v2847
      %v3001 = vadd.f32 %v2531, %v2850
      %v3002 = vadd.f32 %v2532, %v2853
      %v3003 = vadd.f32 %v2533, %v2856
      %v3004 = vadd.f32 %v2534, %v2859
      %v3005 = vadd.f32 %v2535, %v2862
      %v3006 = vadd.f32 %v2536, %v2865
      %v3007 = vadd.f32 %v2537, %v2868
      %v3008 = vadd.f32 %v2538, %v2871
      %v3009 = vadd.f32 %v2539, %v2874
      %v3010 = vadd.f32 %v2540, %v2877
      %v3011 = vadd.f32 %v2541, %v2880
      %v3012 = vadd.f32 %v2542, %v2883
      %v3013 = vadd.f32 %v2543, %v2886
      %v3014 = vadd.f32 %v2544, %v2889
      %v3015 = vadd.f32 %v2545, %v2892
      %v3016 = vadd.f32 %v2546, %v2895
      %v3017 = vadd.f32 %v2547, %v2898
      %v3018 = vadd.f32 %v2548, %v2901
      %v3019 = vadd.f32 %v2549, %v2904
      %v3020 = vadd.f32 %v2550, %v2907
      %v3021 = vadd.f32 %v2551, %v2910
      %v3022 = vadd.f32 %v2552, %v2913
      %v3023 = vadd.f32 %v2553, %v2916
      %v3024 = vadd.f32 %v2554, %v2919
      %v3025 = vadd.f32 %v2555, %v2922
      %v3026 = vadd.f32 %v2556, %v2925
      %v3027 = vadd.f32 %v2557, %v2928
      %v3028 = vadd.f32 %v2558, %v2931
      %v3029 = vadd.f32 %v2559, %v2934
      %v3030 = vadd.f32 %v2560, %v2937
      %v3031 = vadd.f32 %v2561, %v2940
      %v3032 = vadd.f32 %v2562, %v2943
      %v3033 = vadd.f32 %v2563, %v2946
      %v3034 = vadd.f32 %v2564, %v2949
      %v3035 = vadd.f32 %v2565, %v2952
      %v3036 = vadd.f32 %v2566, %v2955
      %v3037 = vadd.f32 %v2567, %v2958
      %v3038 = vadd.f32 %v2568, %v2961
      %v3039 = vadd.f32 %v2569, %v2964
      %v3040 = vadd.f32 %v2570, %v2967
      %v3041 = vadd.f32 %v2571, %v2970
      %v3042 = vadd.f32 %v2572, %v2973
      %v3043 = vadd.f32 %v2573, %v2976
      %v3044 = vadd.f32 %v2574, %v2979
      %s3045 = scalar_lea.vmem %s4, 3
      %v3046 = vld [vmem:[%s3045] sm:$0x1]
      %v3048 = vperm.slane %v3046, 0
      %v3050 = vadd.f32 %v2981, %v3048
      %v3051 = vadd.f32 %v2982, %v3048
      %v3052 = vadd.f32 %v2983, %v3048
      %v3053 = vadd.f32 %v2984, %v3048
      %v3054 = vadd.f32 %v2985, %v3048
      %v3055 = vadd.f32 %v2986, %v3048
      %v3056 = vadd.f32 %v2987, %v3048
      %v3057 = vadd.f32 %v2988, %v3048
      %v3058 = vadd.f32 %v2989, %v3048
      %v3059 = vadd.f32 %v2990, %v3048
      %v3060 = vadd.f32 %v2991, %v3048
      %v3061 = vadd.f32 %v2992, %v3048
      %v3062 = vadd.f32 %v2993, %v3048
      %v3063 = vadd.f32 %v2994, %v3048
      %v3064 = vadd.f32 %v2995, %v3048
      %v3065 = vadd.f32 %v2996, %v3048
      %v3066 = vadd.f32 %v2997, %v3048
      %v3067 = vadd.f32 %v2998, %v3048
      %v3068 = vadd.f32 %v2999, %v3048
      %v3069 = vadd.f32 %v3000, %v3048
      %v3070 = vadd.f32 %v3001, %v3048
      %v3071 = vadd.f32 %v3002, %v3048
      %v3072 = vadd.f32 %v3003, %v3048
      %v3073 = vadd.f32 %v3004, %v3048
      %v3074 = vadd.f32 %v3005, %v3048
      %v3075 = vadd.f32 %v3006, %v3048
      %v3076 = vadd.f32 %v3007, %v3048
      %v3077 = vadd.f32 %v3008, %v3048
      %v3078 = vadd.f32 %v3009, %v3048
      %v3079 = vadd.f32 %v3010, %v3048
      %v3080 = vadd.f32 %v3011, %v3048
      %v3081 = vadd.f32 %v3012, %v3048
      %v3082 = vadd.f32 %v3013, %v3048
      %v3083 = vadd.f32 %v3014, %v3048
      %v3084 = vadd.f32 %v3015, %v3048
      %v3085 = vadd.f32 %v3016, %v3048
      %v3086 = vadd.f32 %v3017, %v3048
      %v3087 = vadd.f32 %v3018, %v3048
      %v3088 = vadd.f32 %v3019, %v3048
      %v3089 = vadd.f32 %v3020, %v3048
      %v3090 = vadd.f32 %v3021, %v3048
      %v3091 = vadd.f32 %v3022, %v3048
      %v3092 = vadd.f32 %v3023, %v3048
      %v3093 = vadd.f32 %v3024, %v3048
      %v3094 = vadd.f32 %v3025, %v3048
      %v3095 = vadd.f32 %v3026, %v3048
      %v3096 = vadd.f32 %v3027, %v3048
      %v3097 = vadd.f32 %v3028, %v3048
      %v3098 = vadd.f32 %v3029, %v3048
      %v3099 = vadd.f32 %v3030, %v3048
      %v3100 = vadd.f32 %v3031, %v3048
      %v3101 = vadd.f32 %v3032, %v3048
      %v3102 = vadd.f32 %v3033, %v3048
      %v3103 = vadd.f32 %v3034, %v3048
      %v3104 = vadd.f32 %v3035, %v3048
      %v3105 = vadd.f32 %v3036, %v3048
      %v3106 = vadd.f32 %v3037, %v3048
      %v3107 = vadd.f32 %v3038, %v3048
      %v3108 = vadd.f32 %v3039, %v3048
      %v3109 = vadd.f32 %v3040, %v3048
      %v3110 = vadd.f32 %v3041, %v3048
      %v3111 = vadd.f32 %v3042, %v3048
      %v3112 = vadd.f32 %v3043, %v3048
      %v3113 = vadd.f32 %v3044, %v3048
      %v3114 = vmax.f32 %v3050, 0.0
      %v3115 = vmax.f32 %v3051, 0.0
      %v3116 = vmax.f32 %v3052, 0.0
      %v3117 = vmax.f32 %v3053, 0.0
      %v3118 = vmax.f32 %v3054, 0.0
      %v3119 = vmax.f32 %v3055, 0.0
      %v3120 = vmax.f32 %v3056, 0.0
      %v3121 = vmax.f32 %v3057, 0.0
      %v3122 = vmax.f32 %v3058, 0.0
      %v3123 = vmax.f32 %v3059, 0.0
      %v3124 = vmax.f32 %v3060, 0.0
      %v3125 = vmax.f32 %v3061, 0.0
      %v3126 = vmax.f32 %v3062, 0.0
      %v3127 = vmax.f32 %v3063, 0.0
      %v3128 = vmax.f32 %v3064, 0.0
      %v3129 = vmax.f32 %v3065, 0.0
      %v3130 = vmax.f32 %v3066, 0.0
      %v3131 = vmax.f32 %v3067, 0.0
      %v3132 = vmax.f32 %v3068, 0.0
      %v3133 = vmax.f32 %v3069, 0.0
      %v3134 = vmax.f32 %v3070, 0.0
      %v3135 = vmax.f32 %v3071, 0.0
      %v3136 = vmax.f32 %v3072, 0.0
      %v3137 = vmax.f32 %v3073, 0.0
      %v3138 = vmax.f32 %v3074, 0.0
      %v3139 = vmax.f32 %v3075, 0.0
      %v3140 = vmax.f32 %v3076, 0.0
      %v3141 = vmax.f32 %v3077, 0.0
      %v3142 = vmax.f32 %v3078, 0.0
      %v3143 = vmax.f32 %v3079, 0.0
      %v3144 = vmax.f32 %v3080, 0.0
      %v3145 = vmax.f32 %v3081, 0.0
      %v3146 = vmax.f32 %v3082, 0.0
      %v3147 = vmax.f32 %v3083, 0.0
      %v3148 = vmax.f32 %v3084, 0.0
      %v3149 = vmax.f32 %v3085, 0.0
      %v3150 = vmax.f32 %v3086, 0.0
      %v3151 = vmax.f32 %v3087, 0.0
      %v3152 = vmax.f32 %v3088, 0.0
      %v3153 = vmax.f32 %v3089, 0.0
      %v3154 = vmax.f32 %v3090, 0.0
      %v3155 = vmax.f32 %v3091, 0.0
      %v3156 = vmax.f32 %v3092, 0.0
      %v3157 = vmax.f32 %v3093, 0.0
      %v3158 = vmax.f32 %v3094, 0.0
      %v3159 = vmax.f32 %v3095, 0.0
      %v3160 = vmax.f32 %v3096, 0.0
      %v3161 = vmax.f32 %v3097, 0.0
      %v3162 = vmax.f32 %v3098, 0.0
      %v3163 = vmax.f32 %v3099, 0.0
      %v3164 = vmax.f32 %v3100, 0.0
      %v3165 = vmax.f32 %v3101, 0.0
      %v3166 = vmax.f32 %v3102, 0.0
      %v3167 = vmax.f32 %v3103, 0.0
      %v3168 = vmax.f32 %v3104, 0.0
      %v3169 = vmax.f32 %v3105, 0.0
      %v3170 = vmax.f32 %v3106, 0.0
      %v3171 = vmax.f32 %v3107, 0.0
      %v3172 = vmax.f32 %v3108, 0.0
      %v3173 = vmax.f32 %v3109, 0.0
      %v3174 = vmax.f32 %v3110, 0.0
      %v3175 = vmax.f32 %v3111, 0.0
      %v3176 = vmax.f32 %v3112, 0.0
      %v3177 = vmax.f32 %v3113, 0.0
      %3178 = vst.msk [vmem:[%s226] sm:$0xff] %vm771, %v3114
      %3179 = vst.msk [vmem:[%s226 + $0x8] sm:$0xff] %vm771, %v3115
      %3180 = vst.msk [vmem:[%s226 + $0x10] sm:$0xff] %vm771, %v3116
      %3181 = vst.msk [vmem:[%s226 + $0x18] sm:$0xff] %vm771, %v3117
      %3182 = vst.msk [vmem:[%s226 + $0x20] sm:$0xff] %vm771, %v3118
      %3183 = vst.msk [vmem:[%s226 + $0x28] sm:$0xff] %vm771, %v3119
      %3184 = vst.msk [vmem:[%s226 + $0x30] sm:$0xff] %vm771, %v3120
      %3185 = vst.msk [vmem:[%s226 + $0x38] sm:$0xff] %vm771, %v3121
      %3186 = vst.msk [vmem:[%s226 + $0x40] sm:$0xff] %vm771, %v3122
      %3187 = vst.msk [vmem:[%s226 + $0x48] sm:$0xff] %vm771, %v3123
      %3188 = vst.msk [vmem:[%s226 + $0x50] sm:$0xff] %vm771, %v3124
      %3189 = vst.msk [vmem:[%s226 + $0x58] sm:$0xff] %vm771, %v3125
      %3190 = vst.msk [vmem:[%s226 + $0x60] sm:$0xff] %vm771, %v3126
      %3191 = vst.msk [vmem:[%s226 + $0x68] sm:$0xff] %vm771, %v3127
      %3192 = vst.msk [vmem:[%s226 + $0x70] sm:$0xff] %vm771, %v3128
      %3193 = vst.msk [vmem:[%s226 + $0x78] sm:$0xff] %vm771, %v3129
      %3194 = vst.msk [vmem:[%s226 + $0x80] sm:$0xff] %vm771, %v3130
      %3195 = vst.msk [vmem:[%s226 + $0x88] sm:$0xff] %vm771, %v3131
      %3196 = vst.msk [vmem:[%s226 + $0x90] sm:$0xff] %vm771, %v3132
      %3197 = vst.msk [vmem:[%s226 + $0x98] sm:$0xff] %vm771, %v3133
      %3198 = vst.msk [vmem:[%s226 + $0xa0] sm:$0xff] %vm771, %v3134
      %3199 = vst.msk [vmem:[%s226 + $0xa8] sm:$0xff] %vm771, %v3135
      %3200 = vst.msk [vmem:[%s226 + $0xb0] sm:$0xff] %vm771, %v3136
      %3201 = vst.msk [vmem:[%s226 + $0xb8] sm:$0xff] %vm771, %v3137
      %3202 = vst.msk [vmem:[%s226 + $0xc0] sm:$0xff] %vm771, %v3138
      %3203 = vst.msk [vmem:[%s226 + $0xc8] sm:$0xff] %vm771, %v3139
      %3204 = vst.msk [vmem:[%s226 + $0xd0] sm:$0xff] %vm771, %v3140
      %3205 = vst.msk [vmem:[%s226 + $0xd8] sm:$0xff] %vm771, %v3141
      %3206 = vst.msk [vmem:[%s226 + $0xe0] sm:$0xff] %vm771, %v3142
      %3207 = vst.msk [vmem:[%s226 + $0xe8] sm:$0xff] %vm771, %v3143
      %3208 = vst.msk [vmem:[%s226 + $0xf0] sm:$0xff] %vm771, %v3144
      %3209 = vst.msk [vmem:[%s226 + $0xf8] sm:$0xff] %vm771, %v3145
      %3210 = vst.msk [vmem:[%s226 + $0x100] sm:$0xff] %vm771, %v3146
      %3211 = vst.msk [vmem:[%s226 + $0x108] sm:$0xff] %vm771, %v3147
      %3212 = vst.msk [vmem:[%s226 + $0x110] sm:$0xff] %vm771, %v3148
      %3213 = vst.msk [vmem:[%s226 + $0x118] sm:$0xff] %vm771, %v3149
      %3214 = vst.msk [vmem:[%s226 + $0x120] sm:$0xff] %vm771, %v3150
      %3215 = vst.msk [vmem:[%s226 + $0x128] sm:$0xff] %vm771, %v3151
      %3216 = vst.msk [vmem:[%s226 + $0x130] sm:$0xff] %vm771, %v3152
      %3217 = vst.msk [vmem:[%s226 + $0x138] sm:$0xff] %vm771, %v3153
      %3218 = vst.msk [vmem:[%s226 + $0x140] sm:$0xff] %vm771, %v3154
      %3219 = vst.msk [vmem:[%s226 + $0x148] sm:$0xff] %vm771, %v3155
      %3220 = vst.msk [vmem:[%s226 + $0x150] sm:$0xff] %vm771, %v3156
      %3221 = vst.msk [vmem:[%s226 + $0x158] sm:$0xff] %vm771, %v3157
      %3222 = vst.msk [vmem:[%s226 + $0x160] sm:$0xff] %vm771, %v3158
      %3223 = vst.msk [vmem:[%s226 + $0x168] sm:$0xff] %vm771, %v3159
      %3224 = vst.msk [vmem:[%s226 + $0x170] sm:$0xff] %vm771, %v3160
      %3225 = vst.msk [vmem:[%s226 + $0x178] sm:$0xff] %vm771, %v3161
      %3226 = vst.msk [vmem:[%s226 + $0x180] sm:$0xff] %vm771, %v3162
      %3227 = vst.msk [vmem:[%s226 + $0x188] sm:$0xff] %vm771, %v3163
      %3228 = vst.msk [vmem:[%s226 + $0x190] sm:$0xff] %vm771, %v3164
      %3229 = vst.msk [vmem:[%s226 + $0x198] sm:$0xff] %vm771, %v3165
      %3230 = vst.msk [vmem:[%s226 + $0x1a0] sm:$0xff] %vm771, %v3166
      %3231 = vst.msk [vmem:[%s226 + $0x1a8] sm:$0xff] %vm771, %v3167
      %3232 = vst.msk [vmem:[%s226 + $0x1b0] sm:$0xff] %vm771, %v3168
      %3233 = vst.msk [vmem:[%s226 + $0x1b8] sm:$0xff] %vm771, %v3169
      %3234 = vst.msk [vmem:[%s226 + $0x1c0] sm:$0xff] %vm771, %v3170
      %3235 = vst.msk [vmem:[%s226 + $0x1c8] sm:$0xff] %vm771, %v3171
      %3236 = vst.msk [vmem:[%s226 + $0x1d0] sm:$0xff] %vm771, %v3172
      %3237 = vst.msk [vmem:[%s226 + $0x1d8] sm:$0xff] %vm771, %v3173
      %3238 = vst.msk [vmem:[%s226 + $0x1e0] sm:$0xff] %vm771, %v3174
      %3239 = vst.msk [vmem:[%s226 + $0x1e8] sm:$0xff] %vm771, %v3175
      %3240 = vst.msk [vmem:[%s226 + $0x1f0] sm:$0xff] %vm771, %v3176
      %3241 = vst.msk [vmem:[%s226 + $0x1f8] sm:$0xff] %vm771, %v3177
      %s3242 = smul.u32 64, %s16
      %p3243 = scmp.lt.s32.totalorder %s3242, 127
      %s3244 = scalar_select %p3243, %s3242, 127
      %s3245 = smul.addr %s3244, 8
      %s3246 = scalar_lea.vmem %s5, %s3245
      // Predicated region
      $region41: #{reg_flat_niid_forward.8} parent=39 // pred_check
        %p3247 = pneg %p144
      $region42: #{reg_flat_niid_forward.8} parent=39 // pred_check_branch
        %3249 = sbr.rel (%p3247) target = $region44
      $region43: #{reg_flat_niid_forward.8} parent=39 // pred_region
        %s3250 = smul.u32 64, %s16
      $region44: #{reg_flat_niid_forward.8} parent=39 // pred_fallthru
        _
    $region40: #{reg_flat_niid_forward.8} parent=5 // pred_fallthru
      _
    %p3251 = scmp.le.s32.totalorder 2, %s11
    // Predicated region
    $region45: #{reg_flat_niid_forward.8} parent=5 // pred_check
      %p3252 = pneg %p3251
    $region46: #{reg_flat_niid_forward.8} parent=5 // pred_check_branch
      %3254 = sbr.rel (%p3252) target = $region48
    $region47: #{reg_flat_niid_forward.8} parent=5 // pred_region
      %s3255 = ssub.s32 %s11, 2
      // Predicated region
      $region49: #{reg_flat_niid_forward.8} parent=47 // pred_check
        %p3256 = pneg %p150
      $region50: #{reg_flat_niid_forward.8} parent=47 // pred_check_branch
        %3258 = sbr.rel (%p3256) target = $region52
      $region51: #{reg_flat_niid_forward.8} parent=47 // pred_region
        %s3259 = smul.u32 64, %s17
        %p3260 = scmp.lt.s32.totalorder %s3259, 127
        %s3261 = scalar_select %p3260, %s3259, 127
        %s3262 = smul.addr %s3261, 8
        %s3263 = scalar_lea.vmem %s5, %s3262
      $region52: #{reg_flat_niid_forward.8} parent=47 // pred_fallthru
        _
    $region48: #{reg_flat_niid_forward.8} parent=5 // pred_fallthru
      _
  $region6: #{reg_flat_niid_forward.8} parent=0 // loop_footer
    %s15 = sadd.s32 1, %s11
  $region7: #{reg_flat_niid_forward.8} parent=0 // loop_footer_branch
    %10 = sbr.rel target = $region3
  $region8: #{reg_flat_niid_forward.8} parent=0 // loop_exit
    _

// kernel: reg_flat_niid_forward.11
$region0: #{reg_flat_niid_forward.11}
  #allocation0 [shape = 'u32[]', space=smem, size = 0x4, offset = 0x4, fixed_abs, tag = 'smem constant byte address 0x4 - core index']
  #allocation1 [shape = 'u32[72,128]{1,0:T(1,128)}', space=vmem, size = 0x9000, scoped, tag = 'internal scratch']
  %s0 = inlined_call_operand.vmem [shape: f32[1024,32], index: 0, kind: input, shape index: {}]
  %s1 = inlined_call_operand.vmem [shape: f32[32,128], index: 1, kind: input, shape index: {}]
  %s2 = inlined_call_operand.vmem [shape: f32[1,128], index: 2, kind: input, shape index: {}]
  %s3 = inlined_call_operand.vmem [shape: f32[128,32], index: 3, kind: input, shape index: {}]
  %s4 = inlined_call_operand.vmem [shape: f32[1,32], index: 4, kind: input, shape index: {}]
  %s5 = inlined_call_operand.vmem [shape: f32[1,32], index: 5, kind: input, shape index: {}]
  %s6 = inlined_call_operand.vmem [shape: f32[1,32], index: 6, kind: input, shape index: {}]
  %s7 = inlined_call_operand.vmem [shape: f32[1024,32], index: 7, kind: output, shape index: {}]
  %s8 = sld [smem:[#allocation0]]
  $region61: #{reg_flat_niid_forward.11} parent=0
    _
  %s10 = ssub.s32 1, %s8
  %s11 = scalar_select 0, %s10, %s8
  loop: start=0, step=1, limit=4
  $region2: #{reg_flat_niid_forward.11} parent=0 // loop_pre_header
    _
  $region3: #{reg_flat_niid_forward.11} parent=0 // loop_header
    %s13 = sphi 0, %s17
    %p14 = scmp.ge.s32.totalorder %s13, 4
    %s23 = sphi 0, %s25
    %s26 = sphi 0, %s23
    %s27 = sphi 0, %s26
    %s43 = sphi 0, %s27
    %s47 = sphi 0, %s47
    %s49 = sphi 0, %s47
    %s50 = sphi 0, %s49
    %s64 = sphi 0, %s50
    %s68 = sphi 0, %s68
    %s70 = sphi 0, %s68
    %s71 = sphi 0, %s70
    %s85 = sphi 0, %s71
    %s89 = sphi 0, %s89
    %s91 = sphi 0, %s89
    %s92 = sphi 0, %s91
    %s106 = sphi 0, %s92
    %s110 = sphi 0, %s110
    %s112 = sphi 0, %s110
    %s113 = sphi 0, %s112
    %s127 = sphi 0, %s113
    %s131 = sphi 0, %s131
    %s133 = sphi 0, %s131
    %s134 = sphi 0, %s133
    %s148 = sphi 0, %s134
    %s152 = sphi 0, %s152
    %s154 = sphi 0, %s152
    %s155 = sphi 0, %s154
    %s169 = sphi 0, %s155
    %s175 = sphi 0, %s177
    %s178 = sphi 0, %s175
    %s179 = sphi 0, %s178
    %s195 = sphi 0, %s179
  $region4: #{reg_flat_niid_forward.11} parent=0 // loop_header_branch
    %16 = sbr.rel (%p14) target = $region8
  $region5: #{reg_flat_niid_forward.11} parent=0 // loop_body
    %s18 = ssub.s32 %s13, 1
    %s19 = ssub.s32 %s13, 2
    %s20 = sadd.s32 %s13, 1
    %s21 = ssub.s32 %s13, %s20
    %p22 = scmp.eq.s32.totalorder %s21, 0
    %s24 = sadd.s32 %s23, 1
    %s25 = scalar_select %p22, %s23, %s24
    %p28 = pneg %p22
    %p29 = scmp.eq.s32.totalorder %s13, 1
    %p30 = por %p28, %p29
    %p31 = scmp.ne.s32.totalorder %s23, %s26
    %p32 = scmp.eq.s32.totalorder %s13, 0
    %p33 = por %p31, %p32
    %p34 = scmp.ne.s32.totalorder %s23, %s26
    %p35 = scmp.eq.s32.totalorder %s18, 1
    %p36 = por %p34, %p35
    %p37 = scmp.ne.s32.totalorder %s26, %s27
    %p38 = scmp.eq.s32.totalorder %s18, 0
    %p39 = por %p37, %p38
    %p40 = scmp.ne.s32.totalorder %s26, %s27
    %p41 = scmp.eq.s32.totalorder %s19, 1
    %p42 = por %p40, %p41
    %p44 = scmp.ne.s32.totalorder %s27, %s43
    %p45 = scmp.eq.s32.totalorder %s19, 0
    %p46 = por %p44, %p45
    %s48 = sadd.s32 %s47, 1
    %p51 = scmp.eq.s32.totalorder %s13, 1
    %p52 = scmp.ne.s32.totalorder %s47, %s49
    %p53 = scmp.eq.s32.totalorder %s13, 0
    %p54 = por %p52, %p53
    %p55 = scmp.ne.s32.totalorder %s47, %s49
    %p56 = scmp.eq.s32.totalorder %s18, 1
    %p57 = por %p55, %p56
    %p58 = scmp.ne.s32.totalorder %s49, %s50
    %p59 = scmp.eq.s32.totalorder %s18, 0
    %p60 = por %p58, %p59
    %p61 = scmp.ne.s32.totalorder %s49, %s50
    %p62 = scmp.eq.s32.totalorder %s19, 1
    %p63 = por %p61, %p62
    %p65 = scmp.ne.s32.totalorder %s50, %s64
    %p66 = scmp.eq.s32.totalorder %s19, 0
    %p67 = por %p65, %p66
    %s69 = sadd.s32 %s68, 1
    %p72 = scmp.eq.s32.totalorder %s13, 1
    %p73 = scmp.ne.s32.totalorder %s68, %s70
    %p74 = scmp.eq.s32.totalorder %s13, 0
    %p75 = por %p73, %p74
    %p76 = scmp.ne.s32.totalorder %s68, %s70
    %p77 = scmp.eq.s32.totalorder %s18, 1
    %p78 = por %p76, %p77
    %p79 = scmp.ne.s32.totalorder %s70, %s71
    %p80 = scmp.eq.s32.totalorder %s18, 0
    %p81 = por %p79, %p80
    %p82 = scmp.ne.s32.totalorder %s70, %s71
    %p83 = scmp.eq.s32.totalorder %s19, 1
    %p84 = por %p82, %p83
    %p86 = scmp.ne.s32.totalorder %s71, %s85
    %p87 = scmp.eq.s32.totalorder %s19, 0
    %p88 = por %p86, %p87
    %s90 = sadd.s32 %s89, 1
    %p93 = scmp.eq.s32.totalorder %s13, 1
    %p94 = scmp.ne.s32.totalorder %s89, %s91
    %p95 = scmp.eq.s32.totalorder %s13, 0
    %p96 = por %p94, %p95
    %p97 = scmp.ne.s32.totalorder %s89, %s91
    %p98 = scmp.eq.s32.totalorder %s18, 1
    %p99 = por %p97, %p98
    %p100 = scmp.ne.s32.totalorder %s91, %s92
    %p101 = scmp.eq.s32.totalorder %s18, 0
    %p102 = por %p100, %p101
    %p103 = scmp.ne.s32.totalorder %s91, %s92
    %p104 = scmp.eq.s32.totalorder %s19, 1
    %p105 = por %p103, %p104
    %p107 = scmp.ne.s32.totalorder %s92, %s106
    %p108 = scmp.eq.s32.totalorder %s19, 0
    %p109 = por %p107, %p108
    %s111 = sadd.s32 %s110, 1
    %p114 = scmp.eq.s32.totalorder %s13, 1
    %p115 = scmp.ne.s32.totalorder %s110, %s112
    %p116 = scmp.eq.s32.totalorder %s13, 0
    %p117 = por %p115, %p116
    %p118 = scmp.ne.s32.totalorder %s110, %s112
    %p119 = scmp.eq.s32.totalorder %s18, 1
    %p120 = por %p118, %p119
    %p121 = scmp.ne.s32.totalorder %s112, %s113
    %p122 = scmp.eq.s32.totalorder %s18, 0
    %p123 = por %p121, %p122
    %p124 = scmp.ne.s32.totalorder %s112, %s113
    %p125 = scmp.eq.s32.totalorder %s19, 1
    %p126 = por %p124, %p125
    %p128 = scmp.ne.s32.totalorder %s113, %s127
    %p129 = scmp.eq.s32.totalorder %s19, 0
    %p130 = por %p128, %p129
    %s132 = sadd.s32 %s131, 1
    %p135 = scmp.eq.s32.totalorder %s13, 1
    %p136 = scmp.ne.s32.totalorder %s131, %s133
    %p137 = scmp.eq.s32.totalorder %s13, 0
    %p138 = por %p136, %p137
    %p139 = scmp.ne.s32.totalorder %s131, %s133
    %p140 = scmp.eq.s32.totalorder %s18, 1
    %p141 = por %p139, %p140
    %p142 = scmp.ne.s32.totalorder %s133, %s134
    %p143 = scmp.eq.s32.totalorder %s18, 0
    %p144 = por %p142, %p143
    %p145 = scmp.ne.s32.totalorder %s133, %s134
    %p146 = scmp.eq.s32.totalorder %s19, 1
    %p147 = por %p145, %p146
    %p149 = scmp.ne.s32.totalorder %s134, %s148
    %p150 = scmp.eq.s32.totalorder %s19, 0
    %p151 = por %p149, %p150
    %s153 = sadd.s32 %s152, 1
    %p156 = scmp.eq.s32.totalorder %s13, 1
    %p157 = scmp.ne.s32.totalorder %s152, %s154
    %p158 = scmp.eq.s32.totalorder %s13, 0
    %p159 = por %p157, %p158
    %p160 = scmp.ne.s32.totalorder %s152, %s154
    %p161 = scmp.eq.s32.totalorder %s18, 1
    %p162 = por %p160, %p161
    %p163 = scmp.ne.s32.totalorder %s154, %s155
    %p164 = scmp.eq.s32.totalorder %s18, 0
    %p165 = por %p163, %p164
    %p166 = scmp.ne.s32.totalorder %s154, %s155
    %p167 = scmp.eq.s32.totalorder %s19, 1
    %p168 = por %p166, %p167
    %p170 = scmp.ne.s32.totalorder %s155, %s169
    %p171 = scmp.eq.s32.totalorder %s19, 0
    %p172 = por %p170, %p171
    %s173 = ssub.s32 %s13, %s20
    %p174 = scmp.eq.s32.totalorder %s173, 0
    %s176 = sadd.s32 %s175, 1
    %s177 = scalar_select %p174, %s175, %s176
    %p180 = pneg %p174
    %p181 = scmp.eq.s32.totalorder %s13, 1
    %p182 = por %p180, %p181
    %p183 = scmp.ne.s32.totalorder %s175, %s178
    %p184 = scmp.eq.s32.totalorder %s13, 0
    %p185 = por %p183, %p184
    %p186 = scmp.ne.s32.totalorder %s175, %s178
    %p187 = scmp.eq.s32.totalorder %s18, 1
    %p188 = por %p186, %p187
    %p189 = scmp.ne.s32.totalorder %s178, %s179
    %p190 = scmp.eq.s32.totalorder %s18, 0
    %p191 = por %p189, %p190
    %p192 = scmp.ne.s32.totalorder %s178, %s179
    %p193 = scmp.eq.s32.totalorder %s19, 1
    %p194 = por %p192, %p193
    %p196 = scmp.ne.s32.totalorder %s179, %s195
    %p197 = scmp.eq.s32.totalorder %s19, 0
    %p198 = por %p196, %p197
    %p199 = scmp.le.s32.totalorder 1, %s13
    %p200 = scmp.lt.s32.totalorder %s13, 3
    %p201 = pnand %p199, %p200
    %p202 = pneg %p201
    // Predicated region
    $region9: #{reg_flat_niid_forward.11} parent=5 // pred_check
      _
    $region10: #{reg_flat_niid_forward.11} parent=5 // pred_check_branch
      %204 = sbr.rel (%p201) target = $region12
    $region11: #{reg_flat_niid_forward.11} parent=5 // pred_region
      %s205 = ssub.s32 %s13, 1
      // Predicated region
      $region13: #{reg_flat_niid_forward.11} parent=11 // pred_check
        %p206 = pneg %p60
      $region14: #{reg_flat_niid_forward.11} parent=11 // pred_check_branch
        %208 = sbr.rel (%p206) target = $region16
      $region15: #{reg_flat_niid_forward.11} parent=11 // pred_region
        _
      $region16: #{reg_flat_niid_forward.11} parent=11 // pred_fallthru
        _
      // Predicated region
      $region17: #{reg_flat_niid_forward.11} parent=11 // pred_check
        %p209 = pneg %p81
      $region18: #{reg_flat_niid_forward.11} parent=11 // pred_check_branch
        %211 = sbr.rel (%p209) target = $region20
      $region19: #{reg_flat_niid_forward.11} parent=11 // pred_region
        _
      $region20: #{reg_flat_niid_forward.11} parent=11 // pred_fallthru
        _
      // Predicated region
      $region21: #{reg_flat_niid_forward.11} parent=11 // pred_check
        %p212 = pneg %p102
      $region22: #{reg_flat_niid_forward.11} parent=11 // pred_check_branch
        %214 = sbr.rel (%p212) target = $region24
      $region23: #{reg_flat_niid_forward.11} parent=11 // pred_region
        _
      $region24: #{reg_flat_niid_forward.11} parent=11 // pred_fallthru
        _
      // Predicated region
      $region25: #{reg_flat_niid_forward.11} parent=11 // pred_check
        %p215 = pneg %p123
      $region26: #{reg_flat_niid_forward.11} parent=11 // pred_check_branch
        %217 = sbr.rel (%p215) target = $region28
      $region27: #{reg_flat_niid_forward.11} parent=11 // pred_region
        _
      $region28: #{reg_flat_niid_forward.11} parent=11 // pred_fallthru
        _
      // Predicated region
      $region29: #{reg_flat_niid_forward.11} parent=11 // pred_check
        %p218 = pneg %p144
      $region30: #{reg_flat_niid_forward.11} parent=11 // pred_check_branch
        %220 = sbr.rel (%p218) target = $region32
      $region31: #{reg_flat_niid_forward.11} parent=11 // pred_region
        _
      $region32: #{reg_flat_niid_forward.11} parent=11 // pred_fallthru
        _
      // Predicated region
      $region33: #{reg_flat_niid_forward.11} parent=11 // pred_check
        %p221 = pneg %p165
      $region34: #{reg_flat_niid_forward.11} parent=11 // pred_check_branch
        %223 = sbr.rel (%p221) target = $region36
      $region35: #{reg_flat_niid_forward.11} parent=11 // pred_region
        _
      $region36: #{reg_flat_niid_forward.11} parent=11 // pred_fallthru
        _
    $region12: #{reg_flat_niid_forward.11} parent=5 // pred_fallthru
      _
    %p224 = scmp.lt.s32.totalorder %s13, 2
    // Predicated region
    $region37: #{reg_flat_niid_forward.11} parent=5 // pred_check
      %p225 = pneg %p224
    $region38: #{reg_flat_niid_forward.11} parent=5 // pred_check_branch
      %227 = sbr.rel (%p225) target = $region40
    $region39: #{reg_flat_niid_forward.11} parent=5 // pred_region
      // Predicated region
      $region41: #{reg_flat_niid_forward.11} parent=39 // pred_check
        %p228 = pneg %p33
      $region42: #{reg_flat_niid_forward.11} parent=39 // pred_check_branch
        %230 = sbr.rel (%p228) target = $region44
      $region43: #{reg_flat_niid_forward.11} parent=39 // pred_region
        %s231 = smul.u32 64, %s13
        %p232 = scmp.lt.s32.totalorder %s231, 127
        %s233 = scalar_select %p232, %s231, 127
        %s234 = smul.addr %s233, 8
        %s235 = scalar_lea.vmem %s0, %s234
        %s236 = smul.u32 64, %s13
      $region44: #{reg_flat_niid_forward.11} parent=39 // pred_fallthru
        _
    $region40: #{reg_flat_niid_forward.11} parent=5 // pred_fallthru
      _
    %p237 = scmp.le.s32.totalorder 1, %s13
    %p238 = scmp.lt.s32.totalorder %s13, 3
    %p239 = pnand %p237, %p238
    %p240 = pneg %p239
    // Predicated region
    $region45: #{reg_flat_niid_forward.11} parent=5 // pred_check
      _
    $region46: #{reg_flat_niid_forward.11} parent=5 // pred_check_branch
      %242 = sbr.rel (%p239) target = $region48
    $region47: #{reg_flat_niid_forward.11} parent=5 // pred_region
      %s243 = ssub.s32 %s13, 1
      %s244 = smul.u32 64, %s18
      %p245 = scmp.lt.s32.totalorder %s244, 127
      %s246 = scalar_select %p245, %s244, 127
      %s247 = smul.addr %s246, 8
      %s248 = scalar_lea.vmem %s0, %s247
      %p249 = pneg %p39
      %p250 = pneg %p36
      %p251 = pneg %p60
      %p252 = pneg %p57
      %p253 = pneg %p81
      %p254 = pneg %p78
      %p255 = pneg %p102
      %p256 = pneg %p99
      %p257 = pneg %p123
      %p258 = pneg %p120
      %p259 = pneg %p144
      %p260 = pneg %p141
      %p261 = pneg %p165
      %p262 = pneg %p162
      %p263 = pneg %p191
      %p264 = pneg %p188
      %s265 = smul.u32 64, %s18
      %p266 = scmp.lt.s32.totalorder %s265, 127
      %s267 = scalar_select %p266, %s265, 127
      %s268 = smul.addr %s267, 8
      %s269 = scalar_lea.vmem %s7, %s268
      %s270 = smul.u32 64, %s18
      %p271 = scmp.lt.s32.totalorder %s270, 127
      %s272 = scalar_select %p271, %s270, 127
      %s273 = smul.addr %s272, 8
      %s274 = scalar_lea.vmem %s0, %s273
      %s275 = smul.u32 64, %s18
      %s276 = smul.u32 64, %s18
      %p277 = scmp.lt.s32.totalorder %s276, 127
      %s278 = scalar_select %p277, %s276, 127
      %s279 = smul.addr %s278, 8
      %s280 = scalar_lea.vmem %s7, %s279
      %s281 = smul.u32 64, %s18
      %v282 = vld [vmem:[%s274] sm:$0xff]
      %v283 = vld [vmem:[%s274 + $0x8] sm:$0xff]
      %v284 = vld [vmem:[%s274 + $0x10] sm:$0xff]
      %v285 = vld [vmem:[%s274 + $0x18] sm:$0xff]
      %v286 = vld [vmem:[%s274 + $0x20] sm:$0xff]
      %v287 = vld [vmem:[%s274 + $0x28] sm:$0xff]
      %v288 = vld [vmem:[%s274 + $0x30] sm:$0xff]
      %v289 = vld [vmem:[%s274 + $0x38] sm:$0xff]
      %v290 = vld [vmem:[%s274 + $0x40] sm:$0xff]
      %v291 = vld [vmem:[%s274 + $0x48] sm:$0xff]
      %v292 = vld [vmem:[%s274 + $0x50] sm:$0xff]
      %v293 = vld [vmem:[%s274 + $0x58] sm:$0xff]
      %v294 = vld [vmem:[%s274 + $0x60] sm:$0xff]
      %v295 = vld [vmem:[%s274 + $0x68] sm:$0xff]
      %v296 = vld [vmem:[%s274 + $0x70] sm:$0xff]
      %v297 = vld [vmem:[%s274 + $0x78] sm:$0xff]
      %v298 = vld [vmem:[%s274 + $0x80] sm:$0xff]
      %v299 = vld [vmem:[%s274 + $0x88] sm:$0xff]
      %v300 = vld [vmem:[%s274 + $0x90] sm:$0xff]
      %v301 = vld [vmem:[%s274 + $0x98] sm:$0xff]
      %v302 = vld [vmem:[%s274 + $0xa0] sm:$0xff]
      %v303 = vld [vmem:[%s274 + $0xa8] sm:$0xff]
      %v304 = vld [vmem:[%s274 + $0xb0] sm:$0xff]
      %v305 = vld [vmem:[%s274 + $0xb8] sm:$0xff]
      %v306 = vld [vmem:[%s274 + $0xc0] sm:$0xff]
      %v307 = vld [vmem:[%s274 + $0xc8] sm:$0xff]
      %v308 = vld [vmem:[%s274 + $0xd0] sm:$0xff]
      %v309 = vld [vmem:[%s274 + $0xd8] sm:$0xff]
      %v310 = vld [vmem:[%s274 + $0xe0] sm:$0xff]
      %v311 = vld [vmem:[%s274 + $0xe8] sm:$0xff]
      %v312 = vld [vmem:[%s274 + $0xf0] sm:$0xff]
      %v313 = vld [vmem:[%s274 + $0xf8] sm:$0xff]
      %v314 = vld [vmem:[%s274 + $0x100] sm:$0xff]
      %v315 = vld [vmem:[%s274 + $0x108] sm:$0xff]
      %v316 = vld [vmem:[%s274 + $0x110] sm:$0xff]
      %v317 = vld [vmem:[%s274 + $0x118] sm:$0xff]
      %v318 = vld [vmem:[%s274 + $0x120] sm:$0xff]
      %v319 = vld [vmem:[%s274 + $0x128] sm:$0xff]
      %v320 = vld [vmem:[%s274 + $0x130] sm:$0xff]
      %v321 = vld [vmem:[%s274 + $0x138] sm:$0xff]
      %v322 = vld [vmem:[%s274 + $0x140] sm:$0xff]
      %v323 = vld [vmem:[%s274 + $0x148] sm:$0xff]
      %v324 = vld [vmem:[%s274 + $0x150] sm:$0xff]
      %v325 = vld [vmem:[%s274 + $0x158] sm:$0xff]
      %v326 = vld [vmem:[%s274 + $0x160] sm:$0xff]
      %v327 = vld [vmem:[%s274 + $0x168] sm:$0xff]
      %v328 = vld [vmem:[%s274 + $0x170] sm:$0xff]
      %v329 = vld [vmem:[%s274 + $0x178] sm:$0xff]
      %v330 = vld [vmem:[%s274 + $0x180] sm:$0xff]
      %v331 = vld [vmem:[%s274 + $0x188] sm:$0xff]
      %v332 = vld [vmem:[%s274 + $0x190] sm:$0xff]
      %v333 = vld [vmem:[%s274 + $0x198] sm:$0xff]
      %v334 = vld [vmem:[%s274 + $0x1a0] sm:$0xff]
      %v335 = vld [vmem:[%s274 + $0x1a8] sm:$0xff]
      %v336 = vld [vmem:[%s274 + $0x1b0] sm:$0xff]
      %v337 = vld [vmem:[%s274 + $0x1b8] sm:$0xff]
      %v338 = vld [vmem:[%s274 + $0x1c0] sm:$0xff]
      %v339 = vld [vmem:[%s274 + $0x1c8] sm:$0xff]
      %v340 = vld [vmem:[%s274 + $0x1d0] sm:$0xff]
      %v341 = vld [vmem:[%s274 + $0x1d8] sm:$0xff]
      %v342 = vld [vmem:[%s274 + $0x1e0] sm:$0xff]
      %v343 = vld [vmem:[%s274 + $0x1e8] sm:$0xff]
      %v344 = vld [vmem:[%s274 + $0x1f0] sm:$0xff]
      %v345 = vld [vmem:[%s274 + $0x1f8] sm:$0xff]
      %v346 = vld [vmem:[%s1] sm:$0xff]
      %v347 = vld [vmem:[%s1 + $0x8] sm:$0xff]
      %v348 = vld [vmem:[%s1 + $0x10] sm:$0xff]
      %v349 = vld [vmem:[%s1 + $0x18] sm:$0xff]
      %v350 = vld [vmem:[%s2] sm:$0x1]
      %v352 = vperm.slane %v350, 0
      %vm354 = vcmask 261120
      %v356 = vsel %vm354, %v282, 0
      %v359 = vsel %vm354, %v283, 0
      %v362 = vsel %vm354, %v284, 0
      %v365 = vsel %vm354, %v285, 0
      %v368 = vsel %vm354, %v286, 0
      %v371 = vsel %vm354, %v287, 0
      %v374 = vsel %vm354, %v288, 0
      %v377 = vsel %vm354, %v289, 0
      %v380 = vsel %vm354, %v290, 0
      %v383 = vsel %vm354, %v291, 0
      %v386 = vsel %vm354, %v292, 0
      %v389 = vsel %vm354, %v293, 0
      %v392 = vsel %vm354, %v294, 0
      %v395 = vsel %vm354, %v295, 0
      %v398 = vsel %vm354, %v296, 0
      %v401 = vsel %vm354, %v297, 0
      %v404 = vsel %vm354, %v298, 0
      %v407 = vsel %vm354, %v299, 0
      %v410 = vsel %vm354, %v300, 0
      %v413 = vsel %vm354, %v301, 0
      %v416 = vsel %vm354, %v302, 0
      %v419 = vsel %vm354, %v303, 0
      %v422 = vsel %vm354, %v304, 0
      %v425 = vsel %vm354, %v305, 0
      %v428 = vsel %vm354, %v306, 0
      %v431 = vsel %vm354, %v307, 0
      %v434 = vsel %vm354, %v308, 0
      %v437 = vsel %vm354, %v309, 0
      %v440 = vsel %vm354, %v310, 0
      %v443 = vsel %vm354, %v311, 0
      %v446 = vsel %vm354, %v312, 0
      %v449 = vsel %vm354, %v313, 0
      %v452 = vsel %vm354, %v314, 0
      %v455 = vsel %vm354, %v315, 0
      %v458 = vsel %vm354, %v316, 0
      %v461 = vsel %vm354, %v317, 0
      %v464 = vsel %vm354, %v318, 0
      %v467 = vsel %vm354, %v319, 0
      %v470 = vsel %vm354, %v320, 0
      %v473 = vsel %vm354, %v321, 0
      %v476 = vsel %vm354, %v322, 0
      %v479 = vsel %vm354, %v323, 0
      %v482 = vsel %vm354, %v324, 0
      %v485 = vsel %vm354, %v325, 0
      %v488 = vsel %vm354, %v326, 0
      %v491 = vsel %vm354, %v327, 0
      %v494 = vsel %vm354, %v328, 0
      %v497 = vsel %vm354, %v329, 0
      %v500 = vsel %vm354, %v330, 0
      %v503 = vsel %vm354, %v331, 0
      %v506 = vsel %vm354, %v332, 0
      %v509 = vsel %vm354, %v333, 0
      %v512 = vsel %vm354, %v334, 0
      %v515 = vsel %vm354, %v335, 0
      %v518 = vsel %vm354, %v336, 0
      %v521 = vsel %vm354, %v337, 0
      %v524 = vsel %vm354, %v338, 0
      %v527 = vsel %vm354, %v339, 0
      %v530 = vsel %vm354, %v340, 0
      %v533 = vsel %vm354, %v341, 0
      %v536 = vsel %vm354, %v342, 0
      %v539 = vsel %vm354, %v343, 0
      %v542 = vsel %vm354, %v344, 0
      %v545 = vsel %vm354, %v345, 0
      %547 = vmatpush.msra.mxu0 0.0
      %548 = vmatpush.msra.mxu0 0.0
      %549 = vmatpush.msra.mxu0 0.0
      %550 = vmatpush.msra.mxu0 0.0
      %551 = vmatpush.msra.mxu0 0.0
      %552 = vmatpush.msra.mxu0 0.0
      %553 = vmatpush.msra.mxu0 0.0
      %554 = vmatpush.msra.mxu0 0.0
      %555 = vmatpush.msra.mxu0 0.0
      %556 = vmatpush.msra.mxu0 0.0
      %557 = vmatpush.msra.mxu0 0.0
      %558 = vmatpush.msra.mxu0 0.0
      %559 = vmatpush.msra.mxu0 %v349
      %560 = vmatpush.msra.mxu0 %v348
      %561 = vmatpush.msra.mxu0 %v347
      %562 = vmatpush.msra.mxu0 %v346
      %563 = vmatmul.f32.gmra.mxu0 %v356
      %v564 = vpop.f32.mrf.mxu0
      %v565 = vadd.f32 %v352, %v564
      %566 = vmatmul.f32.gmra.mxu0 %v359
      %v567 = vpop.f32.mrf.mxu0
      %v568 = vadd.f32 %v352, %v567
      %569 = vmatmul.f32.gmra.mxu0 %v362
      %v570 = vpop.f32.mrf.mxu0
      %v571 = vadd.f32 %v352, %v570
      %572 = vmatmul.f32.gmra.mxu0 %v365
      %v573 = vpop.f32.mrf.mxu0
      %v574 = vadd.f32 %v352, %v573
      %575 = vmatmul.f32.gmra.mxu0 %v368
      %v576 = vpop.f32.mrf.mxu0
      %v577 = vadd.f32 %v352, %v576
      %578 = vmatmul.f32.gmra.mxu0 %v371
      %v579 = vpop.f32.mrf.mxu0
      %v580 = vadd.f32 %v352, %v579
      %581 = vmatmul.f32.gmra.mxu0 %v374
      %v582 = vpop.f32.mrf.mxu0
      %v583 = vadd.f32 %v352, %v582
      %584 = vmatmul.f32.gmra.mxu0 %v377
      %v585 = vpop.f32.mrf.mxu0
      %v586 = vadd.f32 %v352, %v585
      %587 = vmatmul.f32.gmra.mxu0 %v380
      %v588 = vpop.f32.mrf.mxu0
      %v589 = vadd.f32 %v352, %v588
      %590 = vmatmul.f32.gmra.mxu0 %v383
      %v591 = vpop.f32.mrf.mxu0
      %v592 = vadd.f32 %v352, %v591
      %593 = vmatmul.f32.gmra.mxu0 %v386
      %v594 = vpop.f32.mrf.mxu0
      %v595 = vadd.f32 %v352, %v594
      %596 = vmatmul.f32.gmra.mxu0 %v389
      %v597 = vpop.f32.mrf.mxu0
      %v598 = vadd.f32 %v352, %v597
      %599 = vmatmul.f32.gmra.mxu0 %v392
      %v600 = vpop.f32.mrf.mxu0
      %v601 = vadd.f32 %v352, %v600
      %602 = vmatmul.f32.gmra.mxu0 %v395
      %v603 = vpop.f32.mrf.mxu0
      %v604 = vadd.f32 %v352, %v603
      %605 = vmatmul.f32.gmra.mxu0 %v398
      %v606 = vpop.f32.mrf.mxu0
      %v607 = vadd.f32 %v352, %v606
      %608 = vmatmul.f32.gmra.mxu0 %v401
      %v609 = vpop.f32.mrf.mxu0
      %v610 = vadd.f32 %v352, %v609
      %611 = vmatmul.f32.gmra.mxu0 %v404
      %v612 = vpop.f32.mrf.mxu0
      %v613 = vadd.f32 %v352, %v612
      %614 = vmatmul.f32.gmra.mxu0 %v407
      %v615 = vpop.f32.mrf.mxu0
      %v616 = vadd.f32 %v352, %v615
      %617 = vmatmul.f32.gmra.mxu0 %v410
      %v618 = vpop.f32.mrf.mxu0
      %v619 = vadd.f32 %v352, %v618
      %620 = vmatmul.f32.gmra.mxu0 %v413
      %v621 = vpop.f32.mrf.mxu0
      %v622 = vadd.f32 %v352, %v621
      %623 = vmatmul.f32.gmra.mxu0 %v416
      %v624 = vpop.f32.mrf.mxu0
      %v625 = vadd.f32 %v352, %v624
      %626 = vmatmul.f32.gmra.mxu0 %v419
      %v627 = vpop.f32.mrf.mxu0
      %v628 = vadd.f32 %v352, %v627
      %629 = vmatmul.f32.gmra.mxu0 %v422
      %v630 = vpop.f32.mrf.mxu0
      %v631 = vadd.f32 %v352, %v630
      %632 = vmatmul.f32.gmra.mxu0 %v425
      %v633 = vpop.f32.mrf.mxu0
      %v634 = vadd.f32 %v352, %v633
      %635 = vmatmul.f32.gmra.mxu0 %v428
      %v636 = vpop.f32.mrf.mxu0
      %v637 = vadd.f32 %v352, %v636
      %638 = vmatmul.f32.gmra.mxu0 %v431
      %v639 = vpop.f32.mrf.mxu0
      %v640 = vadd.f32 %v352, %v639
      %641 = vmatmul.f32.gmra.mxu0 %v434
      %v642 = vpop.f32.mrf.mxu0
      %v643 = vadd.f32 %v352, %v642
      %644 = vmatmul.f32.gmra.mxu0 %v437
      %v645 = vpop.f32.mrf.mxu0
      %v646 = vadd.f32 %v352, %v645
      %647 = vmatmul.f32.gmra.mxu0 %v440
      %v648 = vpop.f32.mrf.mxu0
      %v649 = vadd.f32 %v352, %v648
      %650 = vmatmul.f32.gmra.mxu0 %v443
      %v651 = vpop.f32.mrf.mxu0
      %v652 = vadd.f32 %v352, %v651
      %653 = vmatmul.f32.gmra.mxu0 %v446
      %v654 = vpop.f32.mrf.mxu0
      %v655 = vadd.f32 %v352, %v654
      %656 = vmatmul.f32.gmra.mxu0 %v449
      %v657 = vpop.f32.mrf.mxu0
      %v658 = vadd.f32 %v352, %v657
      %659 = vmatmul.f32.gmra.mxu0 %v452
      %v660 = vpop.f32.mrf.mxu0
      %v661 = vadd.f32 %v352, %v660
      %662 = vmatmul.f32.gmra.mxu0 %v455
      %v663 = vpop.f32.mrf.mxu0
      %v664 = vadd.f32 %v352, %v663
      %665 = vmatmul.f32.gmra.mxu0 %v458
      %v666 = vpop.f32.mrf.mxu0
      %v667 = vadd.f32 %v352, %v666
      %668 = vmatmul.f32.gmra.mxu0 %v461
      %v669 = vpop.f32.mrf.mxu0
      %v670 = vadd.f32 %v352, %v669
      %671 = vmatmul.f32.gmra.mxu0 %v464
      %v672 = vpop.f32.mrf.mxu0
      %v673 = vadd.f32 %v352, %v672
      %674 = vmatmul.f32.gmra.mxu0 %v467
      %v675 = vpop.f32.mrf.mxu0
      %v676 = vadd.f32 %v352, %v675
      %677 = vmatmul.f32.gmra.mxu0 %v470
      %v678 = vpop.f32.mrf.mxu0
      %v679 = vadd.f32 %v352, %v678
      %680 = vmatmul.f32.gmra.mxu0 %v473
      %v681 = vpop.f32.mrf.mxu0
      %v682 = vadd.f32 %v352, %v681
      %683 = vmatmul.f32.gmra.mxu0 %v476
      %v684 = vpop.f32.mrf.mxu0
      %v685 = vadd.f32 %v352, %v684
      %686 = vmatmul.f32.gmra.mxu0 %v479
      %v687 = vpop.f32.mrf.mxu0
      %v688 = vadd.f32 %v352, %v687
      %689 = vmatmul.f32.gmra.mxu0 %v482
      %v690 = vpop.f32.mrf.mxu0
      %v691 = vadd.f32 %v352, %v690
      %692 = vmatmul.f32.gmra.mxu0 %v485
      %v693 = vpop.f32.mrf.mxu0
      %v694 = vadd.f32 %v352, %v693
      %695 = vmatmul.f32.gmra.mxu0 %v488
      %v696 = vpop.f32.mrf.mxu0
      %v697 = vadd.f32 %v352, %v696
      %698 = vmatmul.f32.gmra.mxu0 %v491
      %v699 = vpop.f32.mrf.mxu0
      %v700 = vadd.f32 %v352, %v699
      %701 = vmatmul.f32.gmra.mxu0 %v494
      %v702 = vpop.f32.mrf.mxu0
      %v703 = vadd.f32 %v352, %v702
      %704 = vmatmul.f32.gmra.mxu0 %v497
      %v705 = vpop.f32.mrf.mxu0
      %v706 = vadd.f32 %v352, %v705
      %707 = vmatmul.f32.gmra.mxu0 %v500
      %v708 = vpop.f32.mrf.mxu0
      %v709 = vadd.f32 %v352, %v708
      %710 = vmatmul.f32.gmra.mxu0 %v503
      %v711 = vpop.f32.mrf.mxu0
      %v712 = vadd.f32 %v352, %v711
      %713 = vmatmul.f32.gmra.mxu0 %v506
      %v714 = vpop.f32.mrf.mxu0
      %v715 = vadd.f32 %v352, %v714
      %716 = vmatmul.f32.gmra.mxu0 %v509
      %v717 = vpop.f32.mrf.mxu0
      %v718 = vadd.f32 %v352, %v717
      %719 = vmatmul.f32.gmra.mxu0 %v512
      %v720 = vpop.f32.mrf.mxu0
      %v721 = vadd.f32 %v352, %v720
      %722 = vmatmul.f32.gmra.mxu0 %v515
      %v723 = vpop.f32.mrf.mxu0
      %v724 = vadd.f32 %v352, %v723
      %725 = vmatmul.f32.gmra.mxu0 %v518
      %v726 = vpop.f32.mrf.mxu0
      %v727 = vadd.f32 %v352, %v726
      %728 = vmatmul.f32.gmra.mxu0 %v521
      %v729 = vpop.f32.mrf.mxu0
      %v730 = vadd.f32 %v352, %v729
      %731 = vmatmul.f32.gmra.mxu0 %v524
      %v732 = vpop.f32.mrf.mxu0
      %v733 = vadd.f32 %v352, %v732
      %734 = vmatmul.f32.gmra.mxu0 %v527
      %v735 = vpop.f32.mrf.mxu0
      %v736 = vadd.f32 %v352, %v735
      %737 = vmatmul.f32.gmra.mxu0 %v530
      %v738 = vpop.f32.mrf.mxu0
      %v739 = vadd.f32 %v352, %v738
      %740 = vmatmul.f32.gmra.mxu0 %v533
      %v741 = vpop.f32.mrf.mxu0
      %v742 = vadd.f32 %v352, %v741
      %743 = vmatmul.f32.gmra.mxu0 %v536
      %v744 = vpop.f32.mrf.mxu0
      %v745 = vadd.f32 %v352, %v744
      %746 = vmatmul.f32.gmra.mxu0 %v539
      %v747 = vpop.f32.mrf.mxu0
      %v748 = vadd.f32 %v352, %v747
      %749 = vmatmul.f32.gmra.mxu0 %v542
      %v750 = vpop.f32.mrf.mxu0
      %v751 = vadd.f32 %v352, %v750
      %752 = vmatmul.f32.gmra.mxu0 %v545
      %v753 = vpop.f32.mrf.mxu0
      %v754 = vadd.f32 %v352, %v753
      %755 = vdwg.mxu0
      %v756 = vmax.f32 %v565, 0.0
      %v757 = vmax.f32 %v568, 0.0
      %v758 = vmax.f32 %v571, 0.0
      %v759 = vmax.f32 %v574, 0.0
      %v760 = vmax.f32 %v577, 0.0
      %v761 = vmax.f32 %v580, 0.0
      %v762 = vmax.f32 %v583, 0.0
      %v763 = vmax.f32 %v586, 0.0
      %v764 = vmax.f32 %v589, 0.0
      %v765 = vmax.f32 %v592, 0.0
      %v766 = vmax.f32 %v595, 0.0
      %v767 = vmax.f32 %v598, 0.0
      %v768 = vmax.f32 %v601, 0.0
      %v769 = vmax.f32 %v604, 0.0
      %v770 = vmax.f32 %v607, 0.0
      %v771 = vmax.f32 %v610, 0.0
      %v772 = vmax.f32 %v613, 0.0
      %v773 = vmax.f32 %v616, 0.0
      %v774 = vmax.f32 %v619, 0.0
      %v775 = vmax.f32 %v622, 0.0
      %v776 = vmax.f32 %v625, 0.0
      %v777 = vmax.f32 %v628, 0.0
      %v778 = vmax.f32 %v631, 0.0
      %v779 = vmax.f32 %v634, 0.0
      %v780 = vmax.f32 %v637, 0.0
      %v781 = vmax.f32 %v640, 0.0
      %v782 = vmax.f32 %v643, 0.0
      %v783 = vmax.f32 %v646, 0.0
      %v784 = vmax.f32 %v649, 0.0
      %v785 = vmax.f32 %v652, 0.0
      %v786 = vmax.f32 %v655, 0.0
      %v787 = vmax.f32 %v658, 0.0
      %v788 = vmax.f32 %v661, 0.0
      %v789 = vmax.f32 %v664, 0.0
      %v790 = vmax.f32 %v667, 0.0
      %v791 = vmax.f32 %v670, 0.0
      %v792 = vmax.f32 %v673, 0.0
      %v793 = vmax.f32 %v676, 0.0
      %v794 = vmax.f32 %v679, 0.0
      %v795 = vmax.f32 %v682, 0.0
      %v796 = vmax.f32 %v685, 0.0
      %v797 = vmax.f32 %v688, 0.0
      %v798 = vmax.f32 %v691, 0.0
      %v799 = vmax.f32 %v694, 0.0
      %v800 = vmax.f32 %v697, 0.0
      %v801 = vmax.f32 %v700, 0.0
      %v802 = vmax.f32 %v703, 0.0
      %v803 = vmax.f32 %v706, 0.0
      %v804 = vmax.f32 %v709, 0.0
      %v805 = vmax.f32 %v712, 0.0
      %v806 = vmax.f32 %v715, 0.0
      %v807 = vmax.f32 %v718, 0.0
      %v808 = vmax.f32 %v721, 0.0
      %v809 = vmax.f32 %v724, 0.0
      %v810 = vmax.f32 %v727, 0.0
      %v811 = vmax.f32 %v730, 0.0
      %v812 = vmax.f32 %v733, 0.0
      %v813 = vmax.f32 %v736, 0.0
      %v814 = vmax.f32 %v739, 0.0
      %v815 = vmax.f32 %v742, 0.0
      %v816 = vmax.f32 %v745, 0.0
      %v817 = vmax.f32 %v748, 0.0
      %v818 = vmax.f32 %v751, 0.0
      %v819 = vmax.f32 %v754, 0.0
      %v820 = vld [vmem:[%s3] sm:$0xff]
      %v821 = vld [vmem:[%s3 + $0x8] sm:$0xff]
      %v822 = vld [vmem:[%s3 + $0x10] sm:$0xff]
      %v823 = vld [vmem:[%s3 + $0x18] sm:$0xff]
      %v824 = vld [vmem:[%s3 + $0x20] sm:$0xff]
      %v825 = vld [vmem:[%s3 + $0x28] sm:$0xff]
      %v826 = vld [vmem:[%s3 + $0x30] sm:$0xff]
      %v827 = vld [vmem:[%s3 + $0x38] sm:$0xff]
      %v828 = vld [vmem:[%s3 + $0x40] sm:$0xff]
      %v829 = vld [vmem:[%s3 + $0x48] sm:$0xff]
      %v830 = vld [vmem:[%s3 + $0x50] sm:$0xff]
      %v831 = vld [vmem:[%s3 + $0x58] sm:$0xff]
      %v832 = vld [vmem:[%s3 + $0x60] sm:$0xff]
      %v833 = vld [vmem:[%s3 + $0x68] sm:$0xff]
      %v834 = vld [vmem:[%s3 + $0x70] sm:$0xff]
      %v835 = vld [vmem:[%s3 + $0x78] sm:$0xff]
      %v836 = vld [vmem:[%s4] sm:$0x1]
      %v838 = vperm.slane %v836, 0
      %840 = vmatpush.msra.mxu0 %v835
      %841 = vmatpush.msra.mxu0 %v834
      %842 = vmatpush.msra.mxu0 %v833
      %843 = vmatpush.msra.mxu0 %v832
      %844 = vmatpush.msra.mxu0 %v831
      %845 = vmatpush.msra.mxu0 %v830
      %846 = vmatpush.msra.mxu0 %v829
      %847 = vmatpush.msra.mxu0 %v828
      %848 = vmatpush.msra.mxu0 %v827
      %849 = vmatpush.msra.mxu0 %v826
      %850 = vmatpush.msra.mxu0 %v825
      %851 = vmatpush.msra.mxu0 %v824
      %852 = vmatpush.msra.mxu0 %v823
      %853 = vmatpush.msra.mxu0 %v822
      %854 = vmatpush.msra.mxu0 %v821
      %855 = vmatpush.msra.mxu0 %v820
      %856 = vmatmul.f32.gmra.mxu0 %v756
      %v857 = vpop.f32.mrf.mxu0
      %v858 = vadd.f32 %v838, %v857
      %859 = vmatmul.f32.gmra.mxu0 %v757
      %v860 = vpop.f32.mrf.mxu0
      %v861 = vadd.f32 %v838, %v860
      %862 = vmatmul.f32.gmra.mxu0 %v758
      %v863 = vpop.f32.mrf.mxu0
      %v864 = vadd.f32 %v838, %v863
      %865 = vmatmul.f32.gmra.mxu0 %v759
      %v866 = vpop.f32.mrf.mxu0
      %v867 = vadd.f32 %v838, %v866
      %868 = vmatmul.f32.gmra.mxu0 %v760
      %v869 = vpop.f32.mrf.mxu0
      %v870 = vadd.f32 %v838, %v869
      %871 = vmatmul.f32.gmra.mxu0 %v761
      %v872 = vpop.f32.mrf.mxu0
      %v873 = vadd.f32 %v838, %v872
      %874 = vmatmul.f32.gmra.mxu0 %v762
      %v875 = vpop.f32.mrf.mxu0
      %v876 = vadd.f32 %v838, %v875
      %877 = vmatmul.f32.gmra.mxu0 %v763
      %v878 = vpop.f32.mrf.mxu0
      %v879 = vadd.f32 %v838, %v878
      %880 = vmatmul.f32.gmra.mxu0 %v764
      %v881 = vpop.f32.mrf.mxu0
      %v882 = vadd.f32 %v838, %v881
      %883 = vmatmul.f32.gmra.mxu0 %v765
      %v884 = vpop.f32.mrf.mxu0
      %v885 = vadd.f32 %v838, %v884
      %886 = vmatmul.f32.gmra.mxu0 %v766
      %v887 = vpop.f32.mrf.mxu0
      %v888 = vadd.f32 %v838, %v887
      %889 = vmatmul.f32.gmra.mxu0 %v767
      %v890 = vpop.f32.mrf.mxu0
      %v891 = vadd.f32 %v838, %v890
      %892 = vmatmul.f32.gmra.mxu0 %v768
      %v893 = vpop.f32.mrf.mxu0
      %v894 = vadd.f32 %v838, %v893
      %895 = vmatmul.f32.gmra.mxu0 %v769
      %v896 = vpop.f32.mrf.mxu0
      %v897 = vadd.f32 %v838, %v896
      %898 = vmatmul.f32.gmra.mxu0 %v770
      %v899 = vpop.f32.mrf.mxu0
      %v900 = vadd.f32 %v838, %v899
      %901 = vmatmul.f32.gmra.mxu0 %v771
      %v902 = vpop.f32.mrf.mxu0
      %v903 = vadd.f32 %v838, %v902
      %904 = vmatmul.f32.gmra.mxu0 %v772
      %v905 = vpop.f32.mrf.mxu0
      %v906 = vadd.f32 %v838, %v905
      %907 = vmatmul.f32.gmra.mxu0 %v773
      %v908 = vpop.f32.mrf.mxu0
      %v909 = vadd.f32 %v838, %v908
      %910 = vmatmul.f32.gmra.mxu0 %v774
      %v911 = vpop.f32.mrf.mxu0
      %v912 = vadd.f32 %v838, %v911
      %913 = vmatmul.f32.gmra.mxu0 %v775
      %v914 = vpop.f32.mrf.mxu0
      %v915 = vadd.f32 %v838, %v914
      %916 = vmatmul.f32.gmra.mxu0 %v776
      %v917 = vpop.f32.mrf.mxu0
      %v918 = vadd.f32 %v838, %v917
      %919 = vmatmul.f32.gmra.mxu0 %v777
      %v920 = vpop.f32.mrf.mxu0
      %v921 = vadd.f32 %v838, %v920
      %922 = vmatmul.f32.gmra.mxu0 %v778
      %v923 = vpop.f32.mrf.mxu0
      %v924 = vadd.f32 %v838, %v923
      %925 = vmatmul.f32.gmra.mxu0 %v779
      %v926 = vpop.f32.mrf.mxu0
      %v927 = vadd.f32 %v838, %v926
      %928 = vmatmul.f32.gmra.mxu0 %v780
      %v929 = vpop.f32.mrf.mxu0
      %v930 = vadd.f32 %v838, %v929
      %931 = vmatmul.f32.gmra.mxu0 %v781
      %v932 = vpop.f32.mrf.mxu0
      %v933 = vadd.f32 %v838, %v932
      %934 = vmatmul.f32.gmra.mxu0 %v782
      %v935 = vpop.f32.mrf.mxu0
      %v936 = vadd.f32 %v838, %v935
      %937 = vmatmul.f32.gmra.mxu0 %v783
      %v938 = vpop.f32.mrf.mxu0
      %v939 = vadd.f32 %v838, %v938
      %940 = vmatmul.f32.gmra.mxu0 %v784
      %v941 = vpop.f32.mrf.mxu0
      %v942 = vadd.f32 %v838, %v941
      %943 = vmatmul.f32.gmra.mxu0 %v785
      %v944 = vpop.f32.mrf.mxu0
      %v945 = vadd.f32 %v838, %v944
      %946 = vmatmul.f32.gmra.mxu0 %v786
      %v947 = vpop.f32.mrf.mxu0
      %v948 = vadd.f32 %v838, %v947
      %949 = vmatmul.f32.gmra.mxu0 %v787
      %v950 = vpop.f32.mrf.mxu0
      %v951 = vadd.f32 %v838, %v950
      %952 = vmatmul.f32.gmra.mxu0 %v788
      %v953 = vpop.f32.mrf.mxu0
      %v954 = vadd.f32 %v838, %v953
      %955 = vmatmul.f32.gmra.mxu0 %v789
      %v956 = vpop.f32.mrf.mxu0
      %v957 = vadd.f32 %v838, %v956
      %958 = vmatmul.f32.gmra.mxu0 %v790
      %v959 = vpop.f32.mrf.mxu0
      %v960 = vadd.f32 %v838, %v959
      %961 = vmatmul.f32.gmra.mxu0 %v791
      %v962 = vpop.f32.mrf.mxu0
      %v963 = vadd.f32 %v838, %v962
      %964 = vmatmul.f32.gmra.mxu0 %v792
      %v965 = vpop.f32.mrf.mxu0
      %v966 = vadd.f32 %v838, %v965
      %967 = vmatmul.f32.gmra.mxu0 %v793
      %v968 = vpop.f32.mrf.mxu0
      %v969 = vadd.f32 %v838, %v968
      %970 = vmatmul.f32.gmra.mxu0 %v794
      %v971 = vpop.f32.mrf.mxu0
      %v972 = vadd.f32 %v838, %v971
      %973 = vmatmul.f32.gmra.mxu0 %v795
      %v974 = vpop.f32.mrf.mxu0
      %v975 = vadd.f32 %v838, %v974
      %976 = vmatmul.f32.gmra.mxu0 %v796
      %v977 = vpop.f32.mrf.mxu0
      %v978 = vadd.f32 %v838, %v977
      %979 = vmatmul.f32.gmra.mxu0 %v797
      %v980 = vpop.f32.mrf.mxu0
      %v981 = vadd.f32 %v838, %v980
      %982 = vmatmul.f32.gmra.mxu0 %v798
      %v983 = vpop.f32.mrf.mxu0
      %v984 = vadd.f32 %v838, %v983
      %985 = vmatmul.f32.gmra.mxu0 %v799
      %v986 = vpop.f32.mrf.mxu0
      %v987 = vadd.f32 %v838, %v986
      %988 = vmatmul.f32.gmra.mxu0 %v800
      %v989 = vpop.f32.mrf.mxu0
      %v990 = vadd.f32 %v838, %v989
      %991 = vmatmul.f32.gmra.mxu0 %v801
      %v992 = vpop.f32.mrf.mxu0
      %v993 = vadd.f32 %v838, %v992
      %994 = vmatmul.f32.gmra.mxu0 %v802
      %v995 = vpop.f32.mrf.mxu0
      %v996 = vadd.f32 %v838, %v995
      %997 = vmatmul.f32.gmra.mxu0 %v803
      %v998 = vpop.f32.mrf.mxu0
      %v999 = vadd.f32 %v838, %v998
      %1000 = vmatmul.f32.gmra.mxu0 %v804
      %v1001 = vpop.f32.mrf.mxu0
      %v1002 = vadd.f32 %v838, %v1001
      %1003 = vmatmul.f32.gmra.mxu0 %v805
      %v1004 = vpop.f32.mrf.mxu0
      %v1005 = vadd.f32 %v838, %v1004
      %1006 = vmatmul.f32.gmra.mxu0 %v806
      %v1007 = vpop.f32.mrf.mxu0
      %v1008 = vadd.f32 %v838, %v1007
      %1009 = vmatmul.f32.gmra.mxu0 %v807
      %v1010 = vpop.f32.mrf.mxu0
      %v1011 = vadd.f32 %v838, %v1010
      %1012 = vmatmul.f32.gmra.mxu0 %v808
      %v1013 = vpop.f32.mrf.mxu0
      %v1014 = vadd.f32 %v838, %v1013
      %1015 = vmatmul.f32.gmra.mxu0 %v809
      %v1016 = vpop.f32.mrf.mxu0
      %v1017 = vadd.f32 %v838, %v1016
      %1018 = vmatmul.f32.gmra.mxu0 %v810
      %v1019 = vpop.f32.mrf.mxu0
      %v1020 = vadd.f32 %v838, %v1019
      %1021 = vmatmul.f32.gmra.mxu0 %v811
      %v1022 = vpop.f32.mrf.mxu0
      %v1023 = vadd.f32 %v838, %v1022
      %1024 = vmatmul.f32.gmra.mxu0 %v812
      %v1025 = vpop.f32.mrf.mxu0
      %v1026 = vadd.f32 %v838, %v1025
      %1027 = vmatmul.f32.gmra.mxu0 %v813
      %v1028 = vpop.f32.mrf.mxu0
      %v1029 = vadd.f32 %v838, %v1028
      %1030 = vmatmul.f32.gmra.mxu0 %v814
      %v1031 = vpop.f32.mrf.mxu0
      %v1032 = vadd.f32 %v838, %v1031
      %1033 = vmatmul.f32.gmra.mxu0 %v815
      %v1034 = vpop.f32.mrf.mxu0
      %v1035 = vadd.f32 %v838, %v1034
      %1036 = vmatmul.f32.gmra.mxu0 %v816
      %v1037 = vpop.f32.mrf.mxu0
      %v1038 = vadd.f32 %v838, %v1037
      %1039 = vmatmul.f32.gmra.mxu0 %v817
      %v1040 = vpop.f32.mrf.mxu0
      %v1041 = vadd.f32 %v838, %v1040
      %1042 = vmatmul.f32.gmra.mxu0 %v818
      %v1043 = vpop.f32.mrf.mxu0
      %v1044 = vadd.f32 %v838, %v1043
      %1045 = vmatmul.f32.gmra.mxu0 %v819
      %v1046 = vpop.f32.mrf.mxu0
      %v1047 = vadd.f32 %v838, %v1046
      %1048 = vdwg.mxu0
      %v1049 = vadd.f32 %v282, %v858
      %v1050 = vadd.f32 %v283, %v861
      %v1051 = vadd.f32 %v284, %v864
      %v1052 = vadd.f32 %v285, %v867
      %v1053 = vadd.f32 %v286, %v870
      %v1054 = vadd.f32 %v287, %v873
      %v1055 = vadd.f32 %v288, %v876
      %v1056 = vadd.f32 %v289, %v879
      %v1057 = vadd.f32 %v290, %v882
      %v1058 = vadd.f32 %v291, %v885
      %v1059 = vadd.f32 %v292, %v888
      %v1060 = vadd.f32 %v293, %v891
      %v1061 = vadd.f32 %v294, %v894
      %v1062 = vadd.f32 %v295, %v897
      %v1063 = vadd.f32 %v296, %v900
      %v1064 = vadd.f32 %v297, %v903
      %v1065 = vadd.f32 %v298, %v906
      %v1066 = vadd.f32 %v299, %v909
      %v1067 = vadd.f32 %v300, %v912
      %v1068 = vadd.f32 %v301, %v915
      %v1069 = vadd.f32 %v302, %v918
      %v1070 = vadd.f32 %v303, %v921
      %v1071 = vadd.f32 %v304, %v924
      %v1072 = vadd.f32 %v305, %v927
      %v1073 = vadd.f32 %v306, %v930
      %v1074 = vadd.f32 %v307, %v933
      %v1075 = vadd.f32 %v308, %v936
      %v1076 = vadd.f32 %v309, %v939
      %v1077 = vadd.f32 %v310, %v942
      %v1078 = vadd.f32 %v311, %v945
      %v1079 = vadd.f32 %v312, %v948
      %v1080 = vadd.f32 %v313, %v951
      %v1081 = vadd.f32 %v314, %v954
      %v1082 = vadd.f32 %v315, %v957
      %v1083 = vadd.f32 %v316, %v960
      %v1084 = vadd.f32 %v317, %v963
      %v1085 = vadd.f32 %v318, %v966
      %v1086 = vadd.f32 %v319, %v969
      %v1087 = vadd.f32 %v320, %v972
      %v1088 = vadd.f32 %v321, %v975
      %v1089 = vadd.f32 %v322, %v978
      %v1090 = vadd.f32 %v323, %v981
      %v1091 = vadd.f32 %v324, %v984
      %v1092 = vadd.f32 %v325, %v987
      %v1093 = vadd.f32 %v326, %v990
      %v1094 = vadd.f32 %v327, %v993
      %v1095 = vadd.f32 %v328, %v996
      %v1096 = vadd.f32 %v329, %v999
      %v1097 = vadd.f32 %v330, %v1002
      %v1098 = vadd.f32 %v331, %v1005
      %v1099 = vadd.f32 %v332, %v1008
      %v1100 = vadd.f32 %v333, %v1011
      %v1101 = vadd.f32 %v334, %v1014
      %v1102 = vadd.f32 %v335, %v1017
      %v1103 = vadd.f32 %v336, %v1020
      %v1104 = vadd.f32 %v337, %v1023
      %v1105 = vadd.f32 %v338, %v1026
      %v1106 = vadd.f32 %v339, %v1029
      %v1107 = vadd.f32 %v340, %v1032
      %v1108 = vadd.f32 %v341, %v1035
      %v1109 = vadd.f32 %v342, %v1038
      %v1110 = vadd.f32 %v343, %v1041
      %v1111 = vadd.f32 %v344, %v1044
      %v1112 = vadd.f32 %v345, %v1047
      %v1113 = vsel %vm354, %v1049, 0.0
      %1114 = vadd.xlane.f32.xlu0 %v1113
      %v1115 = vpop.xlane.xlu0 %1114
      %v1116 = vsel %vm354, %v1050, 0.0
      %1117 = vadd.xlane.f32.xlu0 %v1116
      %v1118 = vpop.xlane.xlu0 %1117
      %v1119 = vsel %vm354, %v1051, 0.0
      %1120 = vadd.xlane.f32.xlu0 %v1119
      %v1121 = vpop.xlane.xlu0 %1120
      %v1122 = vsel %vm354, %v1052, 0.0
      %1123 = vadd.xlane.f32.xlu0 %v1122
      %v1124 = vpop.xlane.xlu0 %1123
      %v1125 = vsel %vm354, %v1053, 0.0
      %1126 = vadd.xlane.f32.xlu0 %v1125
      %v1127 = vpop.xlane.xlu0 %1126
      %v1128 = vsel %vm354, %v1054, 0.0
      %1129 = vadd.xlane.f32.xlu0 %v1128
      %v1130 = vpop.xlane.xlu0 %1129
      %v1131 = vsel %vm354, %v1055, 0.0
      %1132 = vadd.xlane.f32.xlu0 %v1131
      %v1133 = vpop.xlane.xlu0 %1132
      %v1134 = vsel %vm354, %v1056, 0.0
      %1135 = vadd.xlane.f32.xlu0 %v1134
      %v1136 = vpop.xlane.xlu0 %1135
      %v1137 = vsel %vm354, %v1057, 0.0
      %1138 = vadd.xlane.f32.xlu0 %v1137
      %v1139 = vpop.xlane.xlu0 %1138
      %v1140 = vsel %vm354, %v1058, 0.0
      %1141 = vadd.xlane.f32.xlu0 %v1140
      %v1142 = vpop.xlane.xlu0 %1141
      %v1143 = vsel %vm354, %v1059, 0.0
      %1144 = vadd.xlane.f32.xlu0 %v1143
      %v1145 = vpop.xlane.xlu0 %1144
      %v1146 = vsel %vm354, %v1060, 0.0
      %1147 = vadd.xlane.f32.xlu0 %v1146
      %v1148 = vpop.xlane.xlu0 %1147
      %v1149 = vsel %vm354, %v1061, 0.0
      %1150 = vadd.xlane.f32.xlu0 %v1149
      %v1151 = vpop.xlane.xlu0 %1150
      %v1152 = vsel %vm354, %v1062, 0.0
      %1153 = vadd.xlane.f32.xlu0 %v1152
      %v1154 = vpop.xlane.xlu0 %1153
      %v1155 = vsel %vm354, %v1063, 0.0
      %1156 = vadd.xlane.f32.xlu0 %v1155
      %v1157 = vpop.xlane.xlu0 %1156
      %v1158 = vsel %vm354, %v1064, 0.0
      %1159 = vadd.xlane.f32.xlu0 %v1158
      %v1160 = vpop.xlane.xlu0 %1159
      %v1161 = vsel %vm354, %v1065, 0.0
      %1162 = vadd.xlane.f32.xlu0 %v1161
      %v1163 = vpop.xlane.xlu0 %1162
      %v1164 = vsel %vm354, %v1066, 0.0
      %1165 = vadd.xlane.f32.xlu0 %v1164
      %v1166 = vpop.xlane.xlu0 %1165
      %v1167 = vsel %vm354, %v1067, 0.0
      %1168 = vadd.xlane.f32.xlu0 %v1167
      %v1169 = vpop.xlane.xlu0 %1168
      %v1170 = vsel %vm354, %v1068, 0.0
      %1171 = vadd.xlane.f32.xlu0 %v1170
      %v1172 = vpop.xlane.xlu0 %1171
      %v1173 = vsel %vm354, %v1069, 0.0
      %1174 = vadd.xlane.f32.xlu0 %v1173
      %v1175 = vpop.xlane.xlu0 %1174
      %v1176 = vsel %vm354, %v1070, 0.0
      %1177 = vadd.xlane.f32.xlu0 %v1176
      %v1178 = vpop.xlane.xlu0 %1177
      %v1179 = vsel %vm354, %v1071, 0.0
      %1180 = vadd.xlane.f32.xlu0 %v1179
      %v1181 = vpop.xlane.xlu0 %1180
      %v1182 = vsel %vm354, %v1072, 0.0
      %1183 = vadd.xlane.f32.xlu0 %v1182
      %v1184 = vpop.xlane.xlu0 %1183
      %v1185 = vsel %vm354, %v1073, 0.0
      %1186 = vadd.xlane.f32.xlu0 %v1185
      %v1187 = vpop.xlane.xlu0 %1186
      %v1188 = vsel %vm354, %v1074, 0.0
      %1189 = vadd.xlane.f32.xlu0 %v1188
      %v1190 = vpop.xlane.xlu0 %1189
      %v1191 = vsel %vm354, %v1075, 0.0
      %1192 = vadd.xlane.f32.xlu0 %v1191
      %v1193 = vpop.xlane.xlu0 %1192
      %v1194 = vsel %vm354, %v1076, 0.0
      %1195 = vadd.xlane.f32.xlu0 %v1194
      %v1196 = vpop.xlane.xlu0 %1195
      %v1197 = vsel %vm354, %v1077, 0.0
      %1198 = vadd.xlane.f32.xlu0 %v1197
      %v1199 = vpop.xlane.xlu0 %1198
      %v1200 = vsel %vm354, %v1078, 0.0
      %1201 = vadd.xlane.f32.xlu0 %v1200
      %v1202 = vpop.xlane.xlu0 %1201
      %v1203 = vsel %vm354, %v1079, 0.0
      %1204 = vadd.xlane.f32.xlu0 %v1203
      %v1205 = vpop.xlane.xlu0 %1204
      %v1206 = vsel %vm354, %v1080, 0.0
      %1207 = vadd.xlane.f32.xlu0 %v1206
      %v1208 = vpop.xlane.xlu0 %1207
      %v1209 = vsel %vm354, %v1081, 0.0
      %1210 = vadd.xlane.f32.xlu0 %v1209
      %v1211 = vpop.xlane.xlu0 %1210
      %v1212 = vsel %vm354, %v1082, 0.0
      %1213 = vadd.xlane.f32.xlu0 %v1212
      %v1214 = vpop.xlane.xlu0 %1213
      %v1215 = vsel %vm354, %v1083, 0.0
      %1216 = vadd.xlane.f32.xlu0 %v1215
      %v1217 = vpop.xlane.xlu0 %1216
      %v1218 = vsel %vm354, %v1084, 0.0
      %1219 = vadd.xlane.f32.xlu0 %v1218
      %v1220 = vpop.xlane.xlu0 %1219
      %v1221 = vsel %vm354, %v1085, 0.0
      %1222 = vadd.xlane.f32.xlu0 %v1221
      %v1223 = vpop.xlane.xlu0 %1222
      %v1224 = vsel %vm354, %v1086, 0.0
      %1225 = vadd.xlane.f32.xlu0 %v1224
      %v1226 = vpop.xlane.xlu0 %1225
      %v1227 = vsel %vm354, %v1087, 0.0
      %1228 = vadd.xlane.f32.xlu0 %v1227
      %v1229 = vpop.xlane.xlu0 %1228
      %v1230 = vsel %vm354, %v1088, 0.0
      %1231 = vadd.xlane.f32.xlu0 %v1230
      %v1232 = vpop.xlane.xlu0 %1231
      %v1233 = vsel %vm354, %v1089, 0.0
      %1234 = vadd.xlane.f32.xlu0 %v1233
      %v1235 = vpop.xlane.xlu0 %1234
      %v1236 = vsel %vm354, %v1090, 0.0
      %1237 = vadd.xlane.f32.xlu0 %v1236
      %v1238 = vpop.xlane.xlu0 %1237
      %v1239 = vsel %vm354, %v1091, 0.0
      %1240 = vadd.xlane.f32.xlu0 %v1239
      %v1241 = vpop.xlane.xlu0 %1240
      %v1242 = vsel %vm354, %v1092, 0.0
      %1243 = vadd.xlane.f32.xlu0 %v1242
      %v1244 = vpop.xlane.xlu0 %1243
      %v1245 = vsel %vm354, %v1093, 0.0
      %1246 = vadd.xlane.f32.xlu0 %v1245
      %v1247 = vpop.xlane.xlu0 %1246
      %v1248 = vsel %vm354, %v1094, 0.0
      %1249 = vadd.xlane.f32.xlu0 %v1248
      %v1250 = vpop.xlane.xlu0 %1249
      %v1251 = vsel %vm354, %v1095, 0.0
      %1252 = vadd.xlane.f32.xlu0 %v1251
      %v1253 = vpop.xlane.xlu0 %1252
      %v1254 = vsel %vm354, %v1096, 0.0
      %1255 = vadd.xlane.f32.xlu0 %v1254
      %v1256 = vpop.xlane.xlu0 %1255
      %v1257 = vsel %vm354, %v1097, 0.0
      %1258 = vadd.xlane.f32.xlu0 %v1257
      %v1259 = vpop.xlane.xlu0 %1258
      %v1260 = vsel %vm354, %v1098, 0.0
      %1261 = vadd.xlane.f32.xlu0 %v1260
      %v1262 = vpop.xlane.xlu0 %1261
      %v1263 = vsel %vm354, %v1099, 0.0
      %1264 = vadd.xlane.f32.xlu0 %v1263
      %v1265 = vpop.xlane.xlu0 %1264
      %v1266 = vsel %vm354, %v1100, 0.0
      %1267 = vadd.xlane.f32.xlu0 %v1266
      %v1268 = vpop.xlane.xlu0 %1267
      %v1269 = vsel %vm354, %v1101, 0.0
      %1270 = vadd.xlane.f32.xlu0 %v1269
      %v1271 = vpop.xlane.xlu0 %1270
      %v1272 = vsel %vm354, %v1102, 0.0
      %1273 = vadd.xlane.f32.xlu0 %v1272
      %v1274 = vpop.xlane.xlu0 %1273
      %v1275 = vsel %vm354, %v1103, 0.0
      %1276 = vadd.xlane.f32.xlu0 %v1275
      %v1277 = vpop.xlane.xlu0 %1276
      %v1278 = vsel %vm354, %v1104, 0.0
      %1279 = vadd.xlane.f32.xlu0 %v1278
      %v1280 = vpop.xlane.xlu0 %1279
      %v1281 = vsel %vm354, %v1105, 0.0
      %1282 = vadd.xlane.f32.xlu0 %v1281
      %v1283 = vpop.xlane.xlu0 %1282
      %v1284 = vsel %vm354, %v1106, 0.0
      %1285 = vadd.xlane.f32.xlu0 %v1284
      %v1286 = vpop.xlane.xlu0 %1285
      %v1287 = vsel %vm354, %v1107, 0.0
      %1288 = vadd.xlane.f32.xlu0 %v1287
      %v1289 = vpop.xlane.xlu0 %1288
      %v1290 = vsel %vm354, %v1108, 0.0
      %1291 = vadd.xlane.f32.xlu0 %v1290
      %v1292 = vpop.xlane.xlu0 %1291
      %v1293 = vsel %vm354, %v1109, 0.0
      %1294 = vadd.xlane.f32.xlu0 %v1293
      %v1295 = vpop.xlane.xlu0 %1294
      %v1296 = vsel %vm354, %v1110, 0.0
      %1297 = vadd.xlane.f32.xlu0 %v1296
      %v1298 = vpop.xlane.xlu0 %1297
      %v1299 = vsel %vm354, %v1111, 0.0
      %1300 = vadd.xlane.f32.xlu0 %v1299
      %v1301 = vpop.xlane.xlu0 %1300
      %v1302 = vsel %vm354, %v1112, 0.0
      %1303 = vadd.xlane.f32.xlu0 %v1302
      %v1304 = vpop.xlane.xlu0 %1303
      %v1305 = vrcp.pop 32.0
      %v1306 = vmul.f32 32.0, %v1305
      %v1307 = vsub.f32 1.0, %v1306
      %v1308 = vmul.f32 %v1305, %v1307
      %v1309 = vadd.f32 %v1305, %v1308
      %vm1310 = vweird.f32 %v1305
      %v1311 = vsel %vm1310, %v1305, %v1309
      %v1312 = vmul.f32 %v1115, %v1311
      %v1313 = vmul.f32 %v1118, %v1311
      %v1314 = vmul.f32 %v1121, %v1311
      %v1315 = vmul.f32 %v1124, %v1311
      %v1316 = vmul.f32 %v1127, %v1311
      %v1317 = vmul.f32 %v1130, %v1311
      %v1318 = vmul.f32 %v1133, %v1311
      %v1319 = vmul.f32 %v1136, %v1311
      %v1320 = vmul.f32 %v1139, %v1311
      %v1321 = vmul.f32 %v1142, %v1311
      %v1322 = vmul.f32 %v1145, %v1311
      %v1323 = vmul.f32 %v1148, %v1311
      %v1324 = vmul.f32 %v1151, %v1311
      %v1325 = vmul.f32 %v1154, %v1311
      %v1326 = vmul.f32 %v1157, %v1311
      %v1327 = vmul.f32 %v1160, %v1311
      %v1328 = vmul.f32 %v1163, %v1311
      %v1329 = vmul.f32 %v1166, %v1311
      %v1330 = vmul.f32 %v1169, %v1311
      %v1331 = vmul.f32 %v1172, %v1311
      %v1332 = vmul.f32 %v1175, %v1311
      %v1333 = vmul.f32 %v1178, %v1311
      %v1334 = vmul.f32 %v1181, %v1311
      %v1335 = vmul.f32 %v1184, %v1311
      %v1336 = vmul.f32 %v1187, %v1311
      %v1337 = vmul.f32 %v1190, %v1311
      %v1338 = vmul.f32 %v1193, %v1311
      %v1339 = vmul.f32 %v1196, %v1311
      %v1340 = vmul.f32 %v1199, %v1311
      %v1341 = vmul.f32 %v1202, %v1311
      %v1342 = vmul.f32 %v1205, %v1311
      %v1343 = vmul.f32 %v1208, %v1311
      %v1344 = vmul.f32 %v1211, %v1311
      %v1345 = vmul.f32 %v1214, %v1311
      %v1346 = vmul.f32 %v1217, %v1311
      %v1347 = vmul.f32 %v1220, %v1311
      %v1348 = vmul.f32 %v1223, %v1311
      %v1349 = vmul.f32 %v1226, %v1311
      %v1350 = vmul.f32 %v1229, %v1311
      %v1351 = vmul.f32 %v1232, %v1311
      %v1352 = vmul.f32 %v1235, %v1311
      %v1353 = vmul.f32 %v1238, %v1311
      %v1354 = vmul.f32 %v1241, %v1311
      %v1355 = vmul.f32 %v1244, %v1311
      %v1356 = vmul.f32 %v1247, %v1311
      %v1357 = vmul.f32 %v1250, %v1311
      %v1358 = vmul.f32 %v1253, %v1311
      %v1359 = vmul.f32 %v1256, %v1311
      %v1360 = vmul.f32 %v1259, %v1311
      %v1361 = vmul.f32 %v1262, %v1311
      %v1362 = vmul.f32 %v1265, %v1311
      %v1363 = vmul.f32 %v1268, %v1311
      %v1364 = vmul.f32 %v1271, %v1311
      %v1365 = vmul.f32 %v1274, %v1311
      %v1366 = vmul.f32 %v1277, %v1311
      %v1367 = vmul.f32 %v1280, %v1311
      %v1368 = vmul.f32 %v1283, %v1311
      %v1369 = vmul.f32 %v1286, %v1311
      %v1370 = vmul.f32 %v1289, %v1311
      %v1371 = vmul.f32 %v1292, %v1311
      %v1372 = vmul.f32 %v1295, %v1311
      %v1373 = vmul.f32 %v1298, %v1311
      %v1374 = vmul.f32 %v1301, %v1311
      %v1375 = vmul.f32 %v1304, %v1311
      %v1376 = vsub.f32 %v1049, %v1312
      %v1377 = vsub.f32 %v1050, %v1313
      %v1378 = vsub.f32 %v1051, %v1314
      %v1379 = vsub.f32 %v1052, %v1315
      %v1380 = vsub.f32 %v1053, %v1316
      %v1381 = vsub.f32 %v1054, %v1317
      %v1382 = vsub.f32 %v1055, %v1318
      %v1383 = vsub.f32 %v1056, %v1319
      %v1384 = vsub.f32 %v1057, %v1320
      %v1385 = vsub.f32 %v1058, %v1321
      %v1386 = vsub.f32 %v1059, %v1322
      %v1387 = vsub.f32 %v1060, %v1323
      %v1388 = vsub.f32 %v1061, %v1324
      %v1389 = vsub.f32 %v1062, %v1325
      %v1390 = vsub.f32 %v1063, %v1326
      %v1391 = vsub.f32 %v1064, %v1327
      %v1392 = vsub.f32 %v1065, %v1328
      %v1393 = vsub.f32 %v1066, %v1329
      %v1394 = vsub.f32 %v1067, %v1330
      %v1395 = vsub.f32 %v1068, %v1331
      %v1396 = vsub.f32 %v1069, %v1332
      %v1397 = vsub.f32 %v1070, %v1333
      %v1398 = vsub.f32 %v1071, %v1334
      %v1399 = vsub.f32 %v1072, %v1335
      %v1400 = vsub.f32 %v1073, %v1336
      %v1401 = vsub.f32 %v1074, %v1337
      %v1402 = vsub.f32 %v1075, %v1338
      %v1403 = vsub.f32 %v1076, %v1339
      %v1404 = vsub.f32 %v1077, %v1340
      %v1405 = vsub.f32 %v1078, %v1341
      %v1406 = vsub.f32 %v1079, %v1342
      %v1407 = vsub.f32 %v1080, %v1343
      %v1408 = vsub.f32 %v1081, %v1344
      %v1409 = vsub.f32 %v1082, %v1345
      %v1410 = vsub.f32 %v1083, %v1346
      %v1411 = vsub.f32 %v1084, %v1347
      %v1412 = vsub.f32 %v1085, %v1348
      %v1413 = vsub.f32 %v1086, %v1349
      %v1414 = vsub.f32 %v1087, %v1350
      %v1415 = vsub.f32 %v1088, %v1351
      %v1416 = vsub.f32 %v1089, %v1352
      %v1417 = vsub.f32 %v1090, %v1353
      %v1418 = vsub.f32 %v1091, %v1354
      %v1419 = vsub.f32 %v1092, %v1355
      %v1420 = vsub.f32 %v1093, %v1356
      %v1421 = vsub.f32 %v1094, %v1357
      %v1422 = vsub.f32 %v1095, %v1358
      %v1423 = vsub.f32 %v1096, %v1359
      %v1424 = vsub.f32 %v1097, %v1360
      %v1425 = vsub.f32 %v1098, %v1361
      %v1426 = vsub.f32 %v1099, %v1362
      %v1427 = vsub.f32 %v1100, %v1363
      %v1428 = vsub.f32 %v1101, %v1364
      %v1429 = vsub.f32 %v1102, %v1365
      %v1430 = vsub.f32 %v1103, %v1366
      %v1431 = vsub.f32 %v1104, %v1367
      %v1432 = vsub.f32 %v1105, %v1368
      %v1433 = vsub.f32 %v1106, %v1369
      %v1434 = vsub.f32 %v1107, %v1370
      %v1435 = vsub.f32 %v1108, %v1371
      %v1436 = vsub.f32 %v1109, %v1372
      %v1437 = vsub.f32 %v1110, %v1373
      %v1438 = vsub.f32 %v1111, %v1374
      %v1439 = vsub.f32 %v1112, %v1375
      %v1440 = vmul.f32 %v1376, %v1376
      %v1441 = vmul.f32 %v1377, %v1377
      %v1442 = vmul.f32 %v1378, %v1378
      %v1443 = vmul.f32 %v1379, %v1379
      %v1444 = vmul.f32 %v1380, %v1380
      %v1445 = vmul.f32 %v1381, %v1381
      %v1446 = vmul.f32 %v1382, %v1382
      %v1447 = vmul.f32 %v1383, %v1383
      %v1448 = vmul.f32 %v1384, %v1384
      %v1449 = vmul.f32 %v1385, %v1385
      %v1450 = vmul.f32 %v1386, %v1386
      %v1451 = vmul.f32 %v1387, %v1387
      %v1452 = vmul.f32 %v1388, %v1388
      %v1453 = vmul.f32 %v1389, %v1389
      %v1454 = vmul.f32 %v1390, %v1390
      %v1455 = vmul.f32 %v1391, %v1391
      %v1456 = vmul.f32 %v1392, %v1392
      %v1457 = vmul.f32 %v1393, %v1393
      %v1458 = vmul.f32 %v1394, %v1394
      %v1459 = vmul.f32 %v1395, %v1395
      %v1460 = vmul.f32 %v1396, %v1396
      %v1461 = vmul.f32 %v1397, %v1397
      %v1462 = vmul.f32 %v1398, %v1398
      %v1463 = vmul.f32 %v1399, %v1399
      %v1464 = vmul.f32 %v1400, %v1400
      %v1465 = vmul.f32 %v1401, %v1401
      %v1466 = vmul.f32 %v1402, %v1402
      %v1467 = vmul.f32 %v1403, %v1403
      %v1468 = vmul.f32 %v1404, %v1404
      %v1469 = vmul.f32 %v1405, %v1405
      %v1470 = vmul.f32 %v1406, %v1406
      %v1471 = vmul.f32 %v1407, %v1407
      %v1472 = vmul.f32 %v1408, %v1408
      %v1473 = vmul.f32 %v1409, %v1409
      %v1474 = vmul.f32 %v1410, %v1410
      %v1475 = vmul.f32 %v1411, %v1411
      %v1476 = vmul.f32 %v1412, %v1412
      %v1477 = vmul.f32 %v1413, %v1413
      %v1478 = vmul.f32 %v1414, %v1414
      %v1479 = vmul.f32 %v1415, %v1415
      %v1480 = vmul.f32 %v1416, %v1416
      %v1481 = vmul.f32 %v1417, %v1417
      %v1482 = vmul.f32 %v1418, %v1418
      %v1483 = vmul.f32 %v1419, %v1419
      %v1484 = vmul.f32 %v1420, %v1420
      %v1485 = vmul.f32 %v1421, %v1421
      %v1486 = vmul.f32 %v1422, %v1422
      %v1487 = vmul.f32 %v1423, %v1423
      %v1488 = vmul.f32 %v1424, %v1424
      %v1489 = vmul.f32 %v1425, %v1425
      %v1490 = vmul.f32 %v1426, %v1426
      %v1491 = vmul.f32 %v1427, %v1427
      %v1492 = vmul.f32 %v1428, %v1428
      %v1493 = vmul.f32 %v1429, %v1429
      %v1494 = vmul.f32 %v1430, %v1430
      %v1495 = vmul.f32 %v1431, %v1431
      %v1496 = vmul.f32 %v1432, %v1432
      %v1497 = vmul.f32 %v1433, %v1433
      %v1498 = vmul.f32 %v1434, %v1434
      %v1499 = vmul.f32 %v1435, %v1435
      %v1500 = vmul.f32 %v1436, %v1436
      %v1501 = vmul.f32 %v1437, %v1437
      %v1502 = vmul.f32 %v1438, %v1438
      %v1503 = vmul.f32 %v1439, %v1439
      %v1504 = vsel %vm354, %v1440, 0.0
      %1505 = vadd.xlane.f32.xlu0 %v1504
      %v1506 = vpop.xlane.xlu0 %1505
      %v1507 = vsel %vm354, %v1441, 0.0
      %1508 = vadd.xlane.f32.xlu0 %v1507
      %v1509 = vpop.xlane.xlu0 %1508
      %v1510 = vsel %vm354, %v1442, 0.0
      %1511 = vadd.xlane.f32.xlu0 %v1510
      %v1512 = vpop.xlane.xlu0 %1511
      %v1513 = vsel %vm354, %v1443, 0.0
      %1514 = vadd.xlane.f32.xlu0 %v1513
      %v1515 = vpop.xlane.xlu0 %1514
      %v1516 = vsel %vm354, %v1444, 0.0
      %1517 = vadd.xlane.f32.xlu0 %v1516
      %v1518 = vpop.xlane.xlu0 %1517
      %v1519 = vsel %vm354, %v1445, 0.0
      %1520 = vadd.xlane.f32.xlu0 %v1519
      %v1521 = vpop.xlane.xlu0 %1520
      %v1522 = vsel %vm354, %v1446, 0.0
      %1523 = vadd.xlane.f32.xlu0 %v1522
      %v1524 = vpop.xlane.xlu0 %1523
      %v1525 = vsel %vm354, %v1447, 0.0
      %1526 = vadd.xlane.f32.xlu0 %v1525
      %v1527 = vpop.xlane.xlu0 %1526
      %v1528 = vsel %vm354, %v1448, 0.0
      %1529 = vadd.xlane.f32.xlu0 %v1528
      %v1530 = vpop.xlane.xlu0 %1529
      %v1531 = vsel %vm354, %v1449, 0.0
      %1532 = vadd.xlane.f32.xlu0 %v1531
      %v1533 = vpop.xlane.xlu0 %1532
      %v1534 = vsel %vm354, %v1450, 0.0
      %1535 = vadd.xlane.f32.xlu0 %v1534
      %v1536 = vpop.xlane.xlu0 %1535
      %v1537 = vsel %vm354, %v1451, 0.0
      %1538 = vadd.xlane.f32.xlu0 %v1537
      %v1539 = vpop.xlane.xlu0 %1538
      %v1540 = vsel %vm354, %v1452, 0.0
      %1541 = vadd.xlane.f32.xlu0 %v1540
      %v1542 = vpop.xlane.xlu0 %1541
      %v1543 = vsel %vm354, %v1453, 0.0
      %1544 = vadd.xlane.f32.xlu0 %v1543
      %v1545 = vpop.xlane.xlu0 %1544
      %v1546 = vsel %vm354, %v1454, 0.0
      %1547 = vadd.xlane.f32.xlu0 %v1546
      %v1548 = vpop.xlane.xlu0 %1547
      %v1549 = vsel %vm354, %v1455, 0.0
      %1550 = vadd.xlane.f32.xlu0 %v1549
      %v1551 = vpop.xlane.xlu0 %1550
      %v1552 = vsel %vm354, %v1456, 0.0
      %1553 = vadd.xlane.f32.xlu0 %v1552
      %v1554 = vpop.xlane.xlu0 %1553
      %v1555 = vsel %vm354, %v1457, 0.0
      %1556 = vadd.xlane.f32.xlu0 %v1555
      %v1557 = vpop.xlane.xlu0 %1556
      %v1558 = vsel %vm354, %v1458, 0.0
      %1559 = vadd.xlane.f32.xlu0 %v1558
      %v1560 = vpop.xlane.xlu0 %1559
      %v1561 = vsel %vm354, %v1459, 0.0
      %1562 = vadd.xlane.f32.xlu0 %v1561
      %v1563 = vpop.xlane.xlu0 %1562
      %v1564 = vsel %vm354, %v1460, 0.0
      %1565 = vadd.xlane.f32.xlu0 %v1564
      %v1566 = vpop.xlane.xlu0 %1565
      %v1567 = vsel %vm354, %v1461, 0.0
      %1568 = vadd.xlane.f32.xlu0 %v1567
      %v1569 = vpop.xlane.xlu0 %1568
      %v1570 = vsel %vm354, %v1462, 0.0
      %1571 = vadd.xlane.f32.xlu0 %v1570
      %v1572 = vpop.xlane.xlu0 %1571
      %v1573 = vsel %vm354, %v1463, 0.0
      %1574 = vadd.xlane.f32.xlu0 %v1573
      %v1575 = vpop.xlane.xlu0 %1574
      %v1576 = vsel %vm354, %v1464, 0.0
      %1577 = vadd.xlane.f32.xlu0 %v1576
      %v1578 = vpop.xlane.xlu0 %1577
      %v1579 = vsel %vm354, %v1465, 0.0
      %1580 = vadd.xlane.f32.xlu0 %v1579
      %v1581 = vpop.xlane.xlu0 %1580
      %v1582 = vsel %vm354, %v1466, 0.0
      %1583 = vadd.xlane.f32.xlu0 %v1582
      %v1584 = vpop.xlane.xlu0 %1583
      %v1585 = vsel %vm354, %v1467, 0.0
      %1586 = vadd.xlane.f32.xlu0 %v1585
      %v1587 = vpop.xlane.xlu0 %1586
      %v1588 = vsel %vm354, %v1468, 0.0
      %1589 = vadd.xlane.f32.xlu0 %v1588
      %v1590 = vpop.xlane.xlu0 %1589
      %v1591 = vsel %vm354, %v1469, 0.0
      %1592 = vadd.xlane.f32.xlu0 %v1591
      %v1593 = vpop.xlane.xlu0 %1592
      %v1594 = vsel %vm354, %v1470, 0.0
      %1595 = vadd.xlane.f32.xlu0 %v1594
      %v1596 = vpop.xlane.xlu0 %1595
      %v1597 = vsel %vm354, %v1471, 0.0
      %1598 = vadd.xlane.f32.xlu0 %v1597
      %v1599 = vpop.xlane.xlu0 %1598
      %v1600 = vsel %vm354, %v1472, 0.0
      %1601 = vadd.xlane.f32.xlu0 %v1600
      %v1602 = vpop.xlane.xlu0 %1601
      %v1603 = vsel %vm354, %v1473, 0.0
      %1604 = vadd.xlane.f32.xlu0 %v1603
      %v1605 = vpop.xlane.xlu0 %1604
      %v1606 = vsel %vm354, %v1474, 0.0
      %1607 = vadd.xlane.f32.xlu0 %v1606
      %v1608 = vpop.xlane.xlu0 %1607
      %v1609 = vsel %vm354, %v1475, 0.0
      %1610 = vadd.xlane.f32.xlu0 %v1609
      %v1611 = vpop.xlane.xlu0 %1610
      %v1612 = vsel %vm354, %v1476, 0.0
      %1613 = vadd.xlane.f32.xlu0 %v1612
      %v1614 = vpop.xlane.xlu0 %1613
      %v1615 = vsel %vm354, %v1477, 0.0
      %1616 = vadd.xlane.f32.xlu0 %v1615
      %v1617 = vpop.xlane.xlu0 %1616
      %v1618 = vsel %vm354, %v1478, 0.0
      %1619 = vadd.xlane.f32.xlu0 %v1618
      %v1620 = vpop.xlane.xlu0 %1619
      %v1621 = vsel %vm354, %v1479, 0.0
      %1622 = vadd.xlane.f32.xlu0 %v1621
      %v1623 = vpop.xlane.xlu0 %1622
      %v1624 = vsel %vm354, %v1480, 0.0
      %1625 = vadd.xlane.f32.xlu0 %v1624
      %v1626 = vpop.xlane.xlu0 %1625
      %v1627 = vsel %vm354, %v1481, 0.0
      %1628 = vadd.xlane.f32.xlu0 %v1627
      %v1629 = vpop.xlane.xlu0 %1628
      %v1630 = vsel %vm354, %v1482, 0.0
      %1631 = vadd.xlane.f32.xlu0 %v1630
      %v1632 = vpop.xlane.xlu0 %1631
      %v1633 = vsel %vm354, %v1483, 0.0
      %1634 = vadd.xlane.f32.xlu0 %v1633
      %v1635 = vpop.xlane.xlu0 %1634
      %v1636 = vsel %vm354, %v1484, 0.0
      %1637 = vadd.xlane.f32.xlu0 %v1636
      %v1638 = vpop.xlane.xlu0 %1637
      %v1639 = vsel %vm354, %v1485, 0.0
      %1640 = vadd.xlane.f32.xlu0 %v1639
      %v1641 = vpop.xlane.xlu0 %1640
      %v1642 = vsel %vm354, %v1486, 0.0
      %1643 = vadd.xlane.f32.xlu0 %v1642
      %v1644 = vpop.xlane.xlu0 %1643
      %v1645 = vsel %vm354, %v1487, 0.0
      %1646 = vadd.xlane.f32.xlu0 %v1645
      %v1647 = vpop.xlane.xlu0 %1646
      %v1648 = vsel %vm354, %v1488, 0.0
      %1649 = vadd.xlane.f32.xlu0 %v1648
      %v1650 = vpop.xlane.xlu0 %1649
      %v1651 = vsel %vm354, %v1489, 0.0
      %1652 = vadd.xlane.f32.xlu0 %v1651
      %v1653 = vpop.xlane.xlu0 %1652
      %v1654 = vsel %vm354, %v1490, 0.0
      %1655 = vadd.xlane.f32.xlu0 %v1654
      %v1656 = vpop.xlane.xlu0 %1655
      %v1657 = vsel %vm354, %v1491, 0.0
      %1658 = vadd.xlane.f32.xlu0 %v1657
      %v1659 = vpop.xlane.xlu0 %1658
      %v1660 = vsel %vm354, %v1492, 0.0
      %1661 = vadd.xlane.f32.xlu0 %v1660
      %v1662 = vpop.xlane.xlu0 %1661
      %v1663 = vsel %vm354, %v1493, 0.0
      %1664 = vadd.xlane.f32.xlu0 %v1663
      %v1665 = vpop.xlane.xlu0 %1664
      %v1666 = vsel %vm354, %v1494, 0.0
      %1667 = vadd.xlane.f32.xlu0 %v1666
      %v1668 = vpop.xlane.xlu0 %1667
      %v1669 = vsel %vm354, %v1495, 0.0
      %1670 = vadd.xlane.f32.xlu0 %v1669
      %v1671 = vpop.xlane.xlu0 %1670
      %v1672 = vsel %vm354, %v1496, 0.0
      %1673 = vadd.xlane.f32.xlu0 %v1672
      %v1674 = vpop.xlane.xlu0 %1673
      %v1675 = vsel %vm354, %v1497, 0.0
      %1676 = vadd.xlane.f32.xlu0 %v1675
      %v1677 = vpop.xlane.xlu0 %1676
      %v1678 = vsel %vm354, %v1498, 0.0
      %1679 = vadd.xlane.f32.xlu0 %v1678
      %v1680 = vpop.xlane.xlu0 %1679
      %v1681 = vsel %vm354, %v1499, 0.0
      %1682 = vadd.xlane.f32.xlu0 %v1681
      %v1683 = vpop.xlane.xlu0 %1682
      %v1684 = vsel %vm354, %v1500, 0.0
      %1685 = vadd.xlane.f32.xlu0 %v1684
      %v1686 = vpop.xlane.xlu0 %1685
      %v1687 = vsel %vm354, %v1501, 0.0
      %1688 = vadd.xlane.f32.xlu0 %v1687
      %v1689 = vpop.xlane.xlu0 %1688
      %v1690 = vsel %vm354, %v1502, 0.0
      %1691 = vadd.xlane.f32.xlu0 %v1690
      %v1692 = vpop.xlane.xlu0 %1691
      %v1693 = vsel %vm354, %v1503, 0.0
      %1694 = vadd.xlane.f32.xlu0 %v1693
      %v1695 = vpop.xlane.xlu0 %1694
      %v1696 = vmul.f32 %v1506, %v1311
      %v1697 = vmul.f32 %v1509, %v1311
      %v1698 = vmul.f32 %v1512, %v1311
      %v1699 = vmul.f32 %v1515, %v1311
      %v1700 = vmul.f32 %v1518, %v1311
      %v1701 = vmul.f32 %v1521, %v1311
      %v1702 = vmul.f32 %v1524, %v1311
      %v1703 = vmul.f32 %v1527, %v1311
      %v1704 = vmul.f32 %v1530, %v1311
      %v1705 = vmul.f32 %v1533, %v1311
      %v1706 = vmul.f32 %v1536, %v1311
      %v1707 = vmul.f32 %v1539, %v1311
      %v1708 = vmul.f32 %v1542, %v1311
      %v1709 = vmul.f32 %v1545, %v1311
      %v1710 = vmul.f32 %v1548, %v1311
      %v1711 = vmul.f32 %v1551, %v1311
      %v1712 = vmul.f32 %v1554, %v1311
      %v1713 = vmul.f32 %v1557, %v1311
      %v1714 = vmul.f32 %v1560, %v1311
      %v1715 = vmul.f32 %v1563, %v1311
      %v1716 = vmul.f32 %v1566, %v1311
      %v1717 = vmul.f32 %v1569, %v1311
      %v1718 = vmul.f32 %v1572, %v1311
      %v1719 = vmul.f32 %v1575, %v1311
      %v1720 = vmul.f32 %v1578, %v1311
      %v1721 = vmul.f32 %v1581, %v1311
      %v1722 = vmul.f32 %v1584, %v1311
      %v1723 = vmul.f32 %v1587, %v1311
      %v1724 = vmul.f32 %v1590, %v1311
      %v1725 = vmul.f32 %v1593, %v1311
      %v1726 = vmul.f32 %v1596, %v1311
      %v1727 = vmul.f32 %v1599, %v1311
      %v1728 = vmul.f32 %v1602, %v1311
      %v1729 = vmul.f32 %v1605, %v1311
      %v1730 = vmul.f32 %v1608, %v1311
      %v1731 = vmul.f32 %v1611, %v1311
      %v1732 = vmul.f32 %v1614, %v1311
      %v1733 = vmul.f32 %v1617, %v1311
      %v1734 = vmul.f32 %v1620, %v1311
      %v1735 = vmul.f32 %v1623, %v1311
      %v1736 = vmul.f32 %v1626, %v1311
      %v1737 = vmul.f32 %v1629, %v1311
      %v1738 = vmul.f32 %v1632, %v1311
      %v1739 = vmul.f32 %v1635, %v1311
      %v1740 = vmul.f32 %v1638, %v1311
      %v1741 = vmul.f32 %v1641, %v1311
      %v1742 = vmul.f32 %v1644, %v1311
      %v1743 = vmul.f32 %v1647, %v1311
      %v1744 = vmul.f32 %v1650, %v1311
      %v1745 = vmul.f32 %v1653, %v1311
      %v1746 = vmul.f32 %v1656, %v1311
      %v1747 = vmul.f32 %v1659, %v1311
      %v1748 = vmul.f32 %v1662, %v1311
      %v1749 = vmul.f32 %v1665, %v1311
      %v1750 = vmul.f32 %v1668, %v1311
      %v1751 = vmul.f32 %v1671, %v1311
      %v1752 = vmul.f32 %v1674, %v1311
      %v1753 = vmul.f32 %v1677, %v1311
      %v1754 = vmul.f32 %v1680, %v1311
      %v1755 = vmul.f32 %v1683, %v1311
      %v1756 = vmul.f32 %v1686, %v1311
      %v1757 = vmul.f32 %v1689, %v1311
      %v1758 = vmul.f32 %v1692, %v1311
      %v1759 = vmul.f32 %v1695, %v1311
      %v1760 = vadd.f32 %v1696, 1e-05
      %v1761 = vadd.f32 %v1697, 1e-05
      %v1762 = vadd.f32 %v1698, 1e-05
      %v1763 = vadd.f32 %v1699, 1e-05
      %v1764 = vadd.f32 %v1700, 1e-05
      %v1765 = vadd.f32 %v1701, 1e-05
      %v1766 = vadd.f32 %v1702, 1e-05
      %v1767 = vadd.f32 %v1703, 1e-05
      %v1768 = vadd.f32 %v1704, 1e-05
      %v1769 = vadd.f32 %v1705, 1e-05
      %v1770 = vadd.f32 %v1706, 1e-05
      %v1771 = vadd.f32 %v1707, 1e-05
      %v1772 = vadd.f32 %v1708, 1e-05
      %v1773 = vadd.f32 %v1709, 1e-05
      %v1774 = vadd.f32 %v1710, 1e-05
      %v1775 = vadd.f32 %v1711, 1e-05
      %v1776 = vadd.f32 %v1712, 1e-05
      %v1777 = vadd.f32 %v1713, 1e-05
      %v1778 = vadd.f32 %v1714, 1e-05
      %v1779 = vadd.f32 %v1715, 1e-05
      %v1780 = vadd.f32 %v1716, 1e-05
      %v1781 = vadd.f32 %v1717, 1e-05
      %v1782 = vadd.f32 %v1718, 1e-05
      %v1783 = vadd.f32 %v1719, 1e-05
      %v1784 = vadd.f32 %v1720, 1e-05
      %v1785 = vadd.f32 %v1721, 1e-05
      %v1786 = vadd.f32 %v1722, 1e-05
      %v1787 = vadd.f32 %v1723, 1e-05
      %v1788 = vadd.f32 %v1724, 1e-05
      %v1789 = vadd.f32 %v1725, 1e-05
      %v1790 = vadd.f32 %v1726, 1e-05
      %v1791 = vadd.f32 %v1727, 1e-05
      %v1792 = vadd.f32 %v1728, 1e-05
      %v1793 = vadd.f32 %v1729, 1e-05
      %v1794 = vadd.f32 %v1730, 1e-05
      %v1795 = vadd.f32 %v1731, 1e-05
      %v1796 = vadd.f32 %v1732, 1e-05
      %v1797 = vadd.f32 %v1733, 1e-05
      %v1798 = vadd.f32 %v1734, 1e-05
      %v1799 = vadd.f32 %v1735, 1e-05
      %v1800 = vadd.f32 %v1736, 1e-05
      %v1801 = vadd.f32 %v1737, 1e-05
      %v1802 = vadd.f32 %v1738, 1e-05
      %v1803 = vadd.f32 %v1739, 1e-05
      %v1804 = vadd.f32 %v1740, 1e-05
      %v1805 = vadd.f32 %v1741, 1e-05
      %v1806 = vadd.f32 %v1742, 1e-05
      %v1807 = vadd.f32 %v1743, 1e-05
      %v1808 = vadd.f32 %v1744, 1e-05
      %v1809 = vadd.f32 %v1745, 1e-05
      %v1810 = vadd.f32 %v1746, 1e-05
      %v1811 = vadd.f32 %v1747, 1e-05
      %v1812 = vadd.f32 %v1748, 1e-05
      %v1813 = vadd.f32 %v1749, 1e-05
      %v1814 = vadd.f32 %v1750, 1e-05
      %v1815 = vadd.f32 %v1751, 1e-05
      %v1816 = vadd.f32 %v1752, 1e-05
      %v1817 = vadd.f32 %v1753, 1e-05
      %v1818 = vadd.f32 %v1754, 1e-05
      %v1819 = vadd.f32 %v1755, 1e-05
      %v1820 = vadd.f32 %v1756, 1e-05
      %v1821 = vadd.f32 %v1757, 1e-05
      %v1822 = vadd.f32 %v1758, 1e-05
      %v1823 = vadd.f32 %v1759, 1e-05
      %v1824 = vrsqrt.pop %v1760
      %v1825 = vmul.f32 %v1824, %v1760
      %v1826 = vmul.f32 %v1825, %v1824
      %v1827 = vmul.f32 0.5, %v1826
      %v1828 = vsub.f32 1.5, %v1827
      %v1829 = vmul.f32 %v1824, %v1828
      %vm1830 = vweird.f32 %v1760
      %vm1831 = vweird.f32 %v1824
      %vm1832 = vmor %vm1830, %vm1831
      %v1833 = vsel %vm1832, %v1824, %v1829
      %v1834 = vrsqrt.pop %v1761
      %v1835 = vmul.f32 %v1834, %v1761
      %v1836 = vmul.f32 %v1835, %v1834
      %v1837 = vmul.f32 0.5, %v1836
      %v1838 = vsub.f32 1.5, %v1837
      %v1839 = vmul.f32 %v1834, %v1838
      %vm1840 = vweird.f32 %v1761
      %vm1841 = vweird.f32 %v1834
      %vm1842 = vmor %vm1840, %vm1841
      %v1843 = vsel %vm1842, %v1834, %v1839
      %v1844 = vrsqrt.pop %v1762
      %v1845 = vmul.f32 %v1844, %v1762
      %v1846 = vmul.f32 %v1845, %v1844
      %v1847 = vmul.f32 0.5, %v1846
      %v1848 = vsub.f32 1.5, %v1847
      %v1849 = vmul.f32 %v1844, %v1848
      %vm1850 = vweird.f32 %v1762
      %vm1851 = vweird.f32 %v1844
      %vm1852 = vmor %vm1850, %vm1851
      %v1853 = vsel %vm1852, %v1844, %v1849
      %v1854 = vrsqrt.pop %v1763
      %v1855 = vmul.f32 %v1854, %v1763
      %v1856 = vmul.f32 %v1855, %v1854
      %v1857 = vmul.f32 0.5, %v1856
      %v1858 = vsub.f32 1.5, %v1857
      %v1859 = vmul.f32 %v1854, %v1858
      %vm1860 = vweird.f32 %v1763
      %vm1861 = vweird.f32 %v1854
      %vm1862 = vmor %vm1860, %vm1861
      %v1863 = vsel %vm1862, %v1854, %v1859
      %v1864 = vrsqrt.pop %v1764
      %v1865 = vmul.f32 %v1864, %v1764
      %v1866 = vmul.f32 %v1865, %v1864
      %v1867 = vmul.f32 0.5, %v1866
      %v1868 = vsub.f32 1.5, %v1867
      %v1869 = vmul.f32 %v1864, %v1868
      %vm1870 = vweird.f32 %v1764
      %vm1871 = vweird.f32 %v1864
      %vm1872 = vmor %vm1870, %vm1871
      %v1873 = vsel %vm1872, %v1864, %v1869
      %v1874 = vrsqrt.pop %v1765
      %v1875 = vmul.f32 %v1874, %v1765
      %v1876 = vmul.f32 %v1875, %v1874
      %v1877 = vmul.f32 0.5, %v1876
      %v1878 = vsub.f32 1.5, %v1877
      %v1879 = vmul.f32 %v1874, %v1878
      %vm1880 = vweird.f32 %v1765
      %vm1881 = vweird.f32 %v1874
      %vm1882 = vmor %vm1880, %vm1881
      %v1883 = vsel %vm1882, %v1874, %v1879
      %v1884 = vrsqrt.pop %v1766
      %v1885 = vmul.f32 %v1884, %v1766
      %v1886 = vmul.f32 %v1885, %v1884
      %v1887 = vmul.f32 0.5, %v1886
      %v1888 = vsub.f32 1.5, %v1887
      %v1889 = vmul.f32 %v1884, %v1888
      %vm1890 = vweird.f32 %v1766
      %vm1891 = vweird.f32 %v1884
      %vm1892 = vmor %vm1890, %vm1891
      %v1893 = vsel %vm1892, %v1884, %v1889
      %v1894 = vrsqrt.pop %v1767
      %v1895 = vmul.f32 %v1894, %v1767
      %v1896 = vmul.f32 %v1895, %v1894
      %v1897 = vmul.f32 0.5, %v1896
      %v1898 = vsub.f32 1.5, %v1897
      %v1899 = vmul.f32 %v1894, %v1898
      %vm1900 = vweird.f32 %v1767
      %vm1901 = vweird.f32 %v1894
      %vm1902 = vmor %vm1900, %vm1901
      %v1903 = vsel %vm1902, %v1894, %v1899
      %v1904 = vrsqrt.pop %v1768
      %v1905 = vmul.f32 %v1904, %v1768
      %v1906 = vmul.f32 %v1905, %v1904
      %v1907 = vmul.f32 0.5, %v1906
      %v1908 = vsub.f32 1.5, %v1907
      %v1909 = vmul.f32 %v1904, %v1908
      %vm1910 = vweird.f32 %v1768
      %vm1911 = vweird.f32 %v1904
      %vm1912 = vmor %vm1910, %vm1911
      %v1913 = vsel %vm1912, %v1904, %v1909
      %v1914 = vrsqrt.pop %v1769
      %v1915 = vmul.f32 %v1914, %v1769
      %v1916 = vmul.f32 %v1915, %v1914
      %v1917 = vmul.f32 0.5, %v1916
      %v1918 = vsub.f32 1.5, %v1917
      %v1919 = vmul.f32 %v1914, %v1918
      %vm1920 = vweird.f32 %v1769
      %vm1921 = vweird.f32 %v1914
      %vm1922 = vmor %vm1920, %vm1921
      %v1923 = vsel %vm1922, %v1914, %v1919
      %v1924 = vrsqrt.pop %v1770
      %v1925 = vmul.f32 %v1924, %v1770
      %v1926 = vmul.f32 %v1925, %v1924
      %v1927 = vmul.f32 0.5, %v1926
      %v1928 = vsub.f32 1.5, %v1927
      %v1929 = vmul.f32 %v1924, %v1928
      %vm1930 = vweird.f32 %v1770
      %vm1931 = vweird.f32 %v1924
      %vm1932 = vmor %vm1930, %vm1931
      %v1933 = vsel %vm1932, %v1924, %v1929
      %v1934 = vrsqrt.pop %v1771
      %v1935 = vmul.f32 %v1934, %v1771
      %v1936 = vmul.f32 %v1935, %v1934
      %v1937 = vmul.f32 0.5, %v1936
      %v1938 = vsub.f32 1.5, %v1937
      %v1939 = vmul.f32 %v1934, %v1938
      %vm1940 = vweird.f32 %v1771
      %vm1941 = vweird.f32 %v1934
      %vm1942 = vmor %vm1940, %vm1941
      %v1943 = vsel %vm1942, %v1934, %v1939
      %v1944 = vrsqrt.pop %v1772
      %v1945 = vmul.f32 %v1944, %v1772
      %v1946 = vmul.f32 %v1945, %v1944
      %v1947 = vmul.f32 0.5, %v1946
      %v1948 = vsub.f32 1.5, %v1947
      %v1949 = vmul.f32 %v1944, %v1948
      %vm1950 = vweird.f32 %v1772
      %vm1951 = vweird.f32 %v1944
      %vm1952 = vmor %vm1950, %vm1951
      %v1953 = vsel %vm1952, %v1944, %v1949
      %v1954 = vrsqrt.pop %v1773
      %v1955 = vmul.f32 %v1954, %v1773
      %v1956 = vmul.f32 %v1955, %v1954
      %v1957 = vmul.f32 0.5, %v1956
      %v1958 = vsub.f32 1.5, %v1957
      %v1959 = vmul.f32 %v1954, %v1958
      %vm1960 = vweird.f32 %v1773
      %vm1961 = vweird.f32 %v1954
      %vm1962 = vmor %vm1960, %vm1961
      %v1963 = vsel %vm1962, %v1954, %v1959
      %v1964 = vrsqrt.pop %v1774
      %v1965 = vmul.f32 %v1964, %v1774
      %v1966 = vmul.f32 %v1965, %v1964
      %v1967 = vmul.f32 0.5, %v1966
      %v1968 = vsub.f32 1.5, %v1967
      %v1969 = vmul.f32 %v1964, %v1968
      %vm1970 = vweird.f32 %v1774
      %vm1971 = vweird.f32 %v1964
      %vm1972 = vmor %vm1970, %vm1971
      %v1973 = vsel %vm1972, %v1964, %v1969
      %v1974 = vrsqrt.pop %v1775
      %v1975 = vmul.f32 %v1974, %v1775
      %v1976 = vmul.f32 %v1975, %v1974
      %v1977 = vmul.f32 0.5, %v1976
      %v1978 = vsub.f32 1.5, %v1977
      %v1979 = vmul.f32 %v1974, %v1978
      %vm1980 = vweird.f32 %v1775
      %vm1981 = vweird.f32 %v1974
      %vm1982 = vmor %vm1980, %vm1981
      %v1983 = vsel %vm1982, %v1974, %v1979
      %v1984 = vrsqrt.pop %v1776
      %v1985 = vmul.f32 %v1984, %v1776
      %v1986 = vmul.f32 %v1985, %v1984
      %v1987 = vmul.f32 0.5, %v1986
      %v1988 = vsub.f32 1.5, %v1987
      %v1989 = vmul.f32 %v1984, %v1988
      %vm1990 = vweird.f32 %v1776
      %vm1991 = vweird.f32 %v1984
      %vm1992 = vmor %vm1990, %vm1991
      %v1993 = vsel %vm1992, %v1984, %v1989
      %v1994 = vrsqrt.pop %v1777
      %v1995 = vmul.f32 %v1994, %v1777
      %v1996 = vmul.f32 %v1995, %v1994
      %v1997 = vmul.f32 0.5, %v1996
      %v1998 = vsub.f32 1.5, %v1997
      %v1999 = vmul.f32 %v1994, %v1998
      %vm2000 = vweird.f32 %v1777
      %vm2001 = vweird.f32 %v1994
      %vm2002 = vmor %vm2000, %vm2001
      %v2003 = vsel %vm2002, %v1994, %v1999
      %v2004 = vrsqrt.pop %v1778
      %v2005 = vmul.f32 %v2004, %v1778
      %v2006 = vmul.f32 %v2005, %v2004
      %v2007 = vmul.f32 0.5, %v2006
      %v2008 = vsub.f32 1.5, %v2007
      %v2009 = vmul.f32 %v2004, %v2008
      %vm2010 = vweird.f32 %v1778
      %vm2011 = vweird.f32 %v2004
      %vm2012 = vmor %vm2010, %vm2011
      %v2013 = vsel %vm2012, %v2004, %v2009
      %v2014 = vrsqrt.pop %v1779
      %v2015 = vmul.f32 %v2014, %v1779
      %v2016 = vmul.f32 %v2015, %v2014
      %v2017 = vmul.f32 0.5, %v2016
      %v2018 = vsub.f32 1.5, %v2017
      %v2019 = vmul.f32 %v2014, %v2018
      %vm2020 = vweird.f32 %v1779
      %vm2021 = vweird.f32 %v2014
      %vm2022 = vmor %vm2020, %vm2021
      %v2023 = vsel %vm2022, %v2014, %v2019
      %v2024 = vrsqrt.pop %v1780
      %v2025 = vmul.f32 %v2024, %v1780
      %v2026 = vmul.f32 %v2025, %v2024
      %v2027 = vmul.f32 0.5, %v2026
      %v2028 = vsub.f32 1.5, %v2027
      %v2029 = vmul.f32 %v2024, %v2028
      %vm2030 = vweird.f32 %v1780
      %vm2031 = vweird.f32 %v2024
      %vm2032 = vmor %vm2030, %vm2031
      %v2033 = vsel %vm2032, %v2024, %v2029
      %v2034 = vrsqrt.pop %v1781
      %v2035 = vmul.f32 %v2034, %v1781
      %v2036 = vmul.f32 %v2035, %v2034
      %v2037 = vmul.f32 0.5, %v2036
      %v2038 = vsub.f32 1.5, %v2037
      %v2039 = vmul.f32 %v2034, %v2038
      %vm2040 = vweird.f32 %v1781
      %vm2041 = vweird.f32 %v2034
      %vm2042 = vmor %vm2040, %vm2041
      %v2043 = vsel %vm2042, %v2034, %v2039
      %v2044 = vrsqrt.pop %v1782
      %v2045 = vmul.f32 %v2044, %v1782
      %v2046 = vmul.f32 %v2045, %v2044
      %v2047 = vmul.f32 0.5, %v2046
      %v2048 = vsub.f32 1.5, %v2047
      %v2049 = vmul.f32 %v2044, %v2048
      %vm2050 = vweird.f32 %v1782
      %vm2051 = vweird.f32 %v2044
      %vm2052 = vmor %vm2050, %vm2051
      %v2053 = vsel %vm2052, %v2044, %v2049
      %v2054 = vrsqrt.pop %v1783
      %v2055 = vmul.f32 %v2054, %v1783
      %v2056 = vmul.f32 %v2055, %v2054
      %v2057 = vmul.f32 0.5, %v2056
      %v2058 = vsub.f32 1.5, %v2057
      %v2059 = vmul.f32 %v2054, %v2058
      %vm2060 = vweird.f32 %v1783
      %vm2061 = vweird.f32 %v2054
      %vm2062 = vmor %vm2060, %vm2061
      %v2063 = vsel %vm2062, %v2054, %v2059
      %v2064 = vrsqrt.pop %v1784
      %v2065 = vmul.f32 %v2064, %v1784
      %v2066 = vmul.f32 %v2065, %v2064
      %v2067 = vmul.f32 0.5, %v2066
      %v2068 = vsub.f32 1.5, %v2067
      %v2069 = vmul.f32 %v2064, %v2068
      %vm2070 = vweird.f32 %v1784
      %vm2071 = vweird.f32 %v2064
      %vm2072 = vmor %vm2070, %vm2071
      %v2073 = vsel %vm2072, %v2064, %v2069
      %v2074 = vrsqrt.pop %v1785
      %v2075 = vmul.f32 %v2074, %v1785
      %v2076 = vmul.f32 %v2075, %v2074
      %v2077 = vmul.f32 0.5, %v2076
      %v2078 = vsub.f32 1.5, %v2077
      %v2079 = vmul.f32 %v2074, %v2078
      %vm2080 = vweird.f32 %v1785
      %vm2081 = vweird.f32 %v2074
      %vm2082 = vmor %vm2080, %vm2081
      %v2083 = vsel %vm2082, %v2074, %v2079
      %v2084 = vrsqrt.pop %v1786
      %v2085 = vmul.f32 %v2084, %v1786
      %v2086 = vmul.f32 %v2085, %v2084
      %v2087 = vmul.f32 0.5, %v2086
      %v2088 = vsub.f32 1.5, %v2087
      %v2089 = vmul.f32 %v2084, %v2088
      %vm2090 = vweird.f32 %v1786
      %vm2091 = vweird.f32 %v2084
      %vm2092 = vmor %vm2090, %vm2091
      %v2093 = vsel %vm2092, %v2084, %v2089
      %v2094 = vrsqrt.pop %v1787
      %v2095 = vmul.f32 %v2094, %v1787
      %v2096 = vmul.f32 %v2095, %v2094
      %v2097 = vmul.f32 0.5, %v2096
      %v2098 = vsub.f32 1.5, %v2097
      %v2099 = vmul.f32 %v2094, %v2098
      %vm2100 = vweird.f32 %v1787
      %vm2101 = vweird.f32 %v2094
      %vm2102 = vmor %vm2100, %vm2101
      %v2103 = vsel %vm2102, %v2094, %v2099
      %v2104 = vrsqrt.pop %v1788
      %v2105 = vmul.f32 %v2104, %v1788
      %v2106 = vmul.f32 %v2105, %v2104
      %v2107 = vmul.f32 0.5, %v2106
      %v2108 = vsub.f32 1.5, %v2107
      %v2109 = vmul.f32 %v2104, %v2108
      %vm2110 = vweird.f32 %v1788
      %vm2111 = vweird.f32 %v2104
      %vm2112 = vmor %vm2110, %vm2111
      %v2113 = vsel %vm2112, %v2104, %v2109
      %v2114 = vrsqrt.pop %v1789
      %v2115 = vmul.f32 %v2114, %v1789
      %v2116 = vmul.f32 %v2115, %v2114
      %v2117 = vmul.f32 0.5, %v2116
      %v2118 = vsub.f32 1.5, %v2117
      %v2119 = vmul.f32 %v2114, %v2118
      %vm2120 = vweird.f32 %v1789
      %vm2121 = vweird.f32 %v2114
      %vm2122 = vmor %vm2120, %vm2121
      %v2123 = vsel %vm2122, %v2114, %v2119
      %v2124 = vrsqrt.pop %v1790
      %v2125 = vmul.f32 %v2124, %v1790
      %v2126 = vmul.f32 %v2125, %v2124
      %v2127 = vmul.f32 0.5, %v2126
      %v2128 = vsub.f32 1.5, %v2127
      %v2129 = vmul.f32 %v2124, %v2128
      %vm2130 = vweird.f32 %v1790
      %vm2131 = vweird.f32 %v2124
      %vm2132 = vmor %vm2130, %vm2131
      %v2133 = vsel %vm2132, %v2124, %v2129
      %v2134 = vrsqrt.pop %v1791
      %v2135 = vmul.f32 %v2134, %v1791
      %v2136 = vmul.f32 %v2135, %v2134
      %v2137 = vmul.f32 0.5, %v2136
      %v2138 = vsub.f32 1.5, %v2137
      %v2139 = vmul.f32 %v2134, %v2138
      %vm2140 = vweird.f32 %v1791
      %vm2141 = vweird.f32 %v2134
      %vm2142 = vmor %vm2140, %vm2141
      %v2143 = vsel %vm2142, %v2134, %v2139
      %v2144 = vrsqrt.pop %v1792
      %v2145 = vmul.f32 %v2144, %v1792
      %v2146 = vmul.f32 %v2145, %v2144
      %v2147 = vmul.f32 0.5, %v2146
      %v2148 = vsub.f32 1.5, %v2147
      %v2149 = vmul.f32 %v2144, %v2148
      %vm2150 = vweird.f32 %v1792
      %vm2151 = vweird.f32 %v2144
      %vm2152 = vmor %vm2150, %vm2151
      %v2153 = vsel %vm2152, %v2144, %v2149
      %v2154 = vrsqrt.pop %v1793
      %v2155 = vmul.f32 %v2154, %v1793
      %v2156 = vmul.f32 %v2155, %v2154
      %v2157 = vmul.f32 0.5, %v2156
      %v2158 = vsub.f32 1.5, %v2157
      %v2159 = vmul.f32 %v2154, %v2158
      %vm2160 = vweird.f32 %v1793
      %vm2161 = vweird.f32 %v2154
      %vm2162 = vmor %vm2160, %vm2161
      %v2163 = vsel %vm2162, %v2154, %v2159
      %v2164 = vrsqrt.pop %v1794
      %v2165 = vmul.f32 %v2164, %v1794
      %v2166 = vmul.f32 %v2165, %v2164
      %v2167 = vmul.f32 0.5, %v2166
      %v2168 = vsub.f32 1.5, %v2167
      %v2169 = vmul.f32 %v2164, %v2168
      %vm2170 = vweird.f32 %v1794
      %vm2171 = vweird.f32 %v2164
      %vm2172 = vmor %vm2170, %vm2171
      %v2173 = vsel %vm2172, %v2164, %v2169
      %v2174 = vrsqrt.pop %v1795
      %v2175 = vmul.f32 %v2174, %v1795
      %v2176 = vmul.f32 %v2175, %v2174
      %v2177 = vmul.f32 0.5, %v2176
      %v2178 = vsub.f32 1.5, %v2177
      %v2179 = vmul.f32 %v2174, %v2178
      %vm2180 = vweird.f32 %v1795
      %vm2181 = vweird.f32 %v2174
      %vm2182 = vmor %vm2180, %vm2181
      %v2183 = vsel %vm2182, %v2174, %v2179
      %v2184 = vrsqrt.pop %v1796
      %v2185 = vmul.f32 %v2184, %v1796
      %v2186 = vmul.f32 %v2185, %v2184
      %v2187 = vmul.f32 0.5, %v2186
      %v2188 = vsub.f32 1.5, %v2187
      %v2189 = vmul.f32 %v2184, %v2188
      %vm2190 = vweird.f32 %v1796
      %vm2191 = vweird.f32 %v2184
      %vm2192 = vmor %vm2190, %vm2191
      %v2193 = vsel %vm2192, %v2184, %v2189
      %v2194 = vrsqrt.pop %v1797
      %v2195 = vmul.f32 %v2194, %v1797
      %v2196 = vmul.f32 %v2195, %v2194
      %v2197 = vmul.f32 0.5, %v2196
      %v2198 = vsub.f32 1.5, %v2197
      %v2199 = vmul.f32 %v2194, %v2198
      %vm2200 = vweird.f32 %v1797
      %vm2201 = vweird.f32 %v2194
      %vm2202 = vmor %vm2200, %vm2201
      %v2203 = vsel %vm2202, %v2194, %v2199
      %v2204 = vrsqrt.pop %v1798
      %v2205 = vmul.f32 %v2204, %v1798
      %v2206 = vmul.f32 %v2205, %v2204
      %v2207 = vmul.f32 0.5, %v2206
      %v2208 = vsub.f32 1.5, %v2207
      %v2209 = vmul.f32 %v2204, %v2208
      %vm2210 = vweird.f32 %v1798
      %vm2211 = vweird.f32 %v2204
      %vm2212 = vmor %vm2210, %vm2211
      %v2213 = vsel %vm2212, %v2204, %v2209
      %v2214 = vrsqrt.pop %v1799
      %v2215 = vmul.f32 %v2214, %v1799
      %v2216 = vmul.f32 %v2215, %v2214
      %v2217 = vmul.f32 0.5, %v2216
      %v2218 = vsub.f32 1.5, %v2217
      %v2219 = vmul.f32 %v2214, %v2218
      %vm2220 = vweird.f32 %v1799
      %vm2221 = vweird.f32 %v2214
      %vm2222 = vmor %vm2220, %vm2221
      %v2223 = vsel %vm2222, %v2214, %v2219
      %v2224 = vrsqrt.pop %v1800
      %v2225 = vmul.f32 %v2224, %v1800
      %v2226 = vmul.f32 %v2225, %v2224
      %v2227 = vmul.f32 0.5, %v2226
      %v2228 = vsub.f32 1.5, %v2227
      %v2229 = vmul.f32 %v2224, %v2228
      %vm2230 = vweird.f32 %v1800
      %vm2231 = vweird.f32 %v2224
      %vm2232 = vmor %vm2230, %vm2231
      %v2233 = vsel %vm2232, %v2224, %v2229
      %v2234 = vrsqrt.pop %v1801
      %v2235 = vmul.f32 %v2234, %v1801
      %v2236 = vmul.f32 %v2235, %v2234
      %v2237 = vmul.f32 0.5, %v2236
      %v2238 = vsub.f32 1.5, %v2237
      %v2239 = vmul.f32 %v2234, %v2238
      %vm2240 = vweird.f32 %v1801
      %vm2241 = vweird.f32 %v2234
      %vm2242 = vmor %vm2240, %vm2241
      %v2243 = vsel %vm2242, %v2234, %v2239
      %v2244 = vrsqrt.pop %v1802
      %v2245 = vmul.f32 %v2244, %v1802
      %v2246 = vmul.f32 %v2245, %v2244
      %v2247 = vmul.f32 0.5, %v2246
      %v2248 = vsub.f32 1.5, %v2247
      %v2249 = vmul.f32 %v2244, %v2248
      %vm2250 = vweird.f32 %v1802
      %vm2251 = vweird.f32 %v2244
      %vm2252 = vmor %vm2250, %vm2251
      %v2253 = vsel %vm2252, %v2244, %v2249
      %v2254 = vrsqrt.pop %v1803
      %v2255 = vmul.f32 %v2254, %v1803
      %v2256 = vmul.f32 %v2255, %v2254
      %v2257 = vmul.f32 0.5, %v2256
      %v2258 = vsub.f32 1.5, %v2257
      %v2259 = vmul.f32 %v2254, %v2258
      %vm2260 = vweird.f32 %v1803
      %vm2261 = vweird.f32 %v2254
      %vm2262 = vmor %vm2260, %vm2261
      %v2263 = vsel %vm2262, %v2254, %v2259
      %v2264 = vrsqrt.pop %v1804
      %v2265 = vmul.f32 %v2264, %v1804
      %v2266 = vmul.f32 %v2265, %v2264
      %v2267 = vmul.f32 0.5, %v2266
      %v2268 = vsub.f32 1.5, %v2267
      %v2269 = vmul.f32 %v2264, %v2268
      %vm2270 = vweird.f32 %v1804
      %vm2271 = vweird.f32 %v2264
      %vm2272 = vmor %vm2270, %vm2271
      %v2273 = vsel %vm2272, %v2264, %v2269
      %v2274 = vrsqrt.pop %v1805
      %v2275 = vmul.f32 %v2274, %v1805
      %v2276 = vmul.f32 %v2275, %v2274
      %v2277 = vmul.f32 0.5, %v2276
      %v2278 = vsub.f32 1.5, %v2277
      %v2279 = vmul.f32 %v2274, %v2278
      %vm2280 = vweird.f32 %v1805
      %vm2281 = vweird.f32 %v2274
      %vm2282 = vmor %vm2280, %vm2281
      %v2283 = vsel %vm2282, %v2274, %v2279
      %v2284 = vrsqrt.pop %v1806
      %v2285 = vmul.f32 %v2284, %v1806
      %v2286 = vmul.f32 %v2285, %v2284
      %v2287 = vmul.f32 0.5, %v2286
      %v2288 = vsub.f32 1.5, %v2287
      %v2289 = vmul.f32 %v2284, %v2288
      %vm2290 = vweird.f32 %v1806
      %vm2291 = vweird.f32 %v2284
      %vm2292 = vmor %vm2290, %vm2291
      %v2293 = vsel %vm2292, %v2284, %v2289
      %v2294 = vrsqrt.pop %v1807
      %v2295 = vmul.f32 %v2294, %v1807
      %v2296 = vmul.f32 %v2295, %v2294
      %v2297 = vmul.f32 0.5, %v2296
      %v2298 = vsub.f32 1.5, %v2297
      %v2299 = vmul.f32 %v2294, %v2298
      %vm2300 = vweird.f32 %v1807
      %vm2301 = vweird.f32 %v2294
      %vm2302 = vmor %vm2300, %vm2301
      %v2303 = vsel %vm2302, %v2294, %v2299
      %v2304 = vrsqrt.pop %v1808
      %v2305 = vmul.f32 %v2304, %v1808
      %v2306 = vmul.f32 %v2305, %v2304
      %v2307 = vmul.f32 0.5, %v2306
      %v2308 = vsub.f32 1.5, %v2307
      %v2309 = vmul.f32 %v2304, %v2308
      %vm2310 = vweird.f32 %v1808
      %vm2311 = vweird.f32 %v2304
      %vm2312 = vmor %vm2310, %vm2311
      %v2313 = vsel %vm2312, %v2304, %v2309
      %v2314 = vrsqrt.pop %v1809
      %v2315 = vmul.f32 %v2314, %v1809
      %v2316 = vmul.f32 %v2315, %v2314
      %v2317 = vmul.f32 0.5, %v2316
      %v2318 = vsub.f32 1.5, %v2317
      %v2319 = vmul.f32 %v2314, %v2318
      %vm2320 = vweird.f32 %v1809
      %vm2321 = vweird.f32 %v2314
      %vm2322 = vmor %vm2320, %vm2321
      %v2323 = vsel %vm2322, %v2314, %v2319
      %v2324 = vrsqrt.pop %v1810
      %v2325 = vmul.f32 %v2324, %v1810
      %v2326 = vmul.f32 %v2325, %v2324
      %v2327 = vmul.f32 0.5, %v2326
      %v2328 = vsub.f32 1.5, %v2327
      %v2329 = vmul.f32 %v2324, %v2328
      %vm2330 = vweird.f32 %v1810
      %vm2331 = vweird.f32 %v2324
      %vm2332 = vmor %vm2330, %vm2331
      %v2333 = vsel %vm2332, %v2324, %v2329
      %v2334 = vrsqrt.pop %v1811
      %v2335 = vmul.f32 %v2334, %v1811
      %v2336 = vmul.f32 %v2335, %v2334
      %v2337 = vmul.f32 0.5, %v2336
      %v2338 = vsub.f32 1.5, %v2337
      %v2339 = vmul.f32 %v2334, %v2338
      %vm2340 = vweird.f32 %v1811
      %vm2341 = vweird.f32 %v2334
      %vm2342 = vmor %vm2340, %vm2341
      %v2343 = vsel %vm2342, %v2334, %v2339
      %v2344 = vrsqrt.pop %v1812
      %v2345 = vmul.f32 %v2344, %v1812
      %v2346 = vmul.f32 %v2345, %v2344
      %v2347 = vmul.f32 0.5, %v2346
      %v2348 = vsub.f32 1.5, %v2347
      %v2349 = vmul.f32 %v2344, %v2348
      %vm2350 = vweird.f32 %v1812
      %vm2351 = vweird.f32 %v2344
      %vm2352 = vmor %vm2350, %vm2351
      %v2353 = vsel %vm2352, %v2344, %v2349
      %v2354 = vrsqrt.pop %v1813
      %v2355 = vmul.f32 %v2354, %v1813
      %v2356 = vmul.f32 %v2355, %v2354
      %v2357 = vmul.f32 0.5, %v2356
      %v2358 = vsub.f32 1.5, %v2357
      %v2359 = vmul.f32 %v2354, %v2358
      %vm2360 = vweird.f32 %v1813
      %vm2361 = vweird.f32 %v2354
      %vm2362 = vmor %vm2360, %vm2361
      %v2363 = vsel %vm2362, %v2354, %v2359
      %v2364 = vrsqrt.pop %v1814
      %v2365 = vmul.f32 %v2364, %v1814
      %v2366 = vmul.f32 %v2365, %v2364
      %v2367 = vmul.f32 0.5, %v2366
      %v2368 = vsub.f32 1.5, %v2367
      %v2369 = vmul.f32 %v2364, %v2368
      %vm2370 = vweird.f32 %v1814
      %vm2371 = vweird.f32 %v2364
      %vm2372 = vmor %vm2370, %vm2371
      %v2373 = vsel %vm2372, %v2364, %v2369
      %v2374 = vrsqrt.pop %v1815
      %v2375 = vmul.f32 %v2374, %v1815
      %v2376 = vmul.f32 %v2375, %v2374
      %v2377 = vmul.f32 0.5, %v2376
      %v2378 = vsub.f32 1.5, %v2377
      %v2379 = vmul.f32 %v2374, %v2378
      %vm2380 = vweird.f32 %v1815
      %vm2381 = vweird.f32 %v2374
      %vm2382 = vmor %vm2380, %vm2381
      %v2383 = vsel %vm2382, %v2374, %v2379
      %v2384 = vrsqrt.pop %v1816
      %v2385 = vmul.f32 %v2384, %v1816
      %v2386 = vmul.f32 %v2385, %v2384
      %v2387 = vmul.f32 0.5, %v2386
      %v2388 = vsub.f32 1.5, %v2387
      %v2389 = vmul.f32 %v2384, %v2388
      %vm2390 = vweird.f32 %v1816
      %vm2391 = vweird.f32 %v2384
      %vm2392 = vmor %vm2390, %vm2391
      %v2393 = vsel %vm2392, %v2384, %v2389
      %v2394 = vrsqrt.pop %v1817
      %v2395 = vmul.f32 %v2394, %v1817
      %v2396 = vmul.f32 %v2395, %v2394
      %v2397 = vmul.f32 0.5, %v2396
      %v2398 = vsub.f32 1.5, %v2397
      %v2399 = vmul.f32 %v2394, %v2398
      %vm2400 = vweird.f32 %v1817
      %vm2401 = vweird.f32 %v2394
      %vm2402 = vmor %vm2400, %vm2401
      %v2403 = vsel %vm2402, %v2394, %v2399
      %v2404 = vrsqrt.pop %v1818
      %v2405 = vmul.f32 %v2404, %v1818
      %v2406 = vmul.f32 %v2405, %v2404
      %v2407 = vmul.f32 0.5, %v2406
      %v2408 = vsub.f32 1.5, %v2407
      %v2409 = vmul.f32 %v2404, %v2408
      %vm2410 = vweird.f32 %v1818
      %vm2411 = vweird.f32 %v2404
      %vm2412 = vmor %vm2410, %vm2411
      %v2413 = vsel %vm2412, %v2404, %v2409
      %v2414 = vrsqrt.pop %v1819
      %v2415 = vmul.f32 %v2414, %v1819
      %v2416 = vmul.f32 %v2415, %v2414
      %v2417 = vmul.f32 0.5, %v2416
      %v2418 = vsub.f32 1.5, %v2417
      %v2419 = vmul.f32 %v2414, %v2418
      %vm2420 = vweird.f32 %v1819
      %vm2421 = vweird.f32 %v2414
      %vm2422 = vmor %vm2420, %vm2421
      %v2423 = vsel %vm2422, %v2414, %v2419
      %v2424 = vrsqrt.pop %v1820
      %v2425 = vmul.f32 %v2424, %v1820
      %v2426 = vmul.f32 %v2425, %v2424
      %v2427 = vmul.f32 0.5, %v2426
      %v2428 = vsub.f32 1.5, %v2427
      %v2429 = vmul.f32 %v2424, %v2428
      %vm2430 = vweird.f32 %v1820
      %vm2431 = vweird.f32 %v2424
      %vm2432 = vmor %vm2430, %vm2431
      %v2433 = vsel %vm2432, %v2424, %v2429
      %v2434 = vrsqrt.pop %v1821
      %v2435 = vmul.f32 %v2434, %v1821
      %v2436 = vmul.f32 %v2435, %v2434
      %v2437 = vmul.f32 0.5, %v2436
      %v2438 = vsub.f32 1.5, %v2437
      %v2439 = vmul.f32 %v2434, %v2438
      %vm2440 = vweird.f32 %v1821
      %vm2441 = vweird.f32 %v2434
      %vm2442 = vmor %vm2440, %vm2441
      %v2443 = vsel %vm2442, %v2434, %v2439
      %v2444 = vrsqrt.pop %v1822
      %v2445 = vmul.f32 %v2444, %v1822
      %v2446 = vmul.f32 %v2445, %v2444
      %v2447 = vmul.f32 0.5, %v2446
      %v2448 = vsub.f32 1.5, %v2447
      %v2449 = vmul.f32 %v2444, %v2448
      %vm2450 = vweird.f32 %v1822
      %vm2451 = vweird.f32 %v2444
      %vm2452 = vmor %vm2450, %vm2451
      %v2453 = vsel %vm2452, %v2444, %v2449
      %v2454 = vrsqrt.pop %v1823
      %v2455 = vmul.f32 %v2454, %v1823
      %v2456 = vmul.f32 %v2455, %v2454
      %v2457 = vmul.f32 0.5, %v2456
      %v2458 = vsub.f32 1.5, %v2457
      %v2459 = vmul.f32 %v2454, %v2458
      %vm2460 = vweird.f32 %v1823
      %vm2461 = vweird.f32 %v2454
      %vm2462 = vmor %vm2460, %vm2461
      %v2463 = vsel %vm2462, %v2454, %v2459
      %v2464 = vmul.f32 %v1376, %v1833
      %v2465 = vmul.f32 %v1377, %v1843
      %v2466 = vmul.f32 %v1378, %v1853
      %v2467 = vmul.f32 %v1379, %v1863
      %v2468 = vmul.f32 %v1380, %v1873
      %v2469 = vmul.f32 %v1381, %v1883
      %v2470 = vmul.f32 %v1382, %v1893
      %v2471 = vmul.f32 %v1383, %v1903
      %v2472 = vmul.f32 %v1384, %v1913
      %v2473 = vmul.f32 %v1385, %v1923
      %v2474 = vmul.f32 %v1386, %v1933
      %v2475 = vmul.f32 %v1387, %v1943
      %v2476 = vmul.f32 %v1388, %v1953
      %v2477 = vmul.f32 %v1389, %v1963
      %v2478 = vmul.f32 %v1390, %v1973
      %v2479 = vmul.f32 %v1391, %v1983
      %v2480 = vmul.f32 %v1392, %v1993
      %v2481 = vmul.f32 %v1393, %v2003
      %v2482 = vmul.f32 %v1394, %v2013
      %v2483 = vmul.f32 %v1395, %v2023
      %v2484 = vmul.f32 %v1396, %v2033
      %v2485 = vmul.f32 %v1397, %v2043
      %v2486 = vmul.f32 %v1398, %v2053
      %v2487 = vmul.f32 %v1399, %v2063
      %v2488 = vmul.f32 %v1400, %v2073
      %v2489 = vmul.f32 %v1401, %v2083
      %v2490 = vmul.f32 %v1402, %v2093
      %v2491 = vmul.f32 %v1403, %v2103
      %v2492 = vmul.f32 %v1404, %v2113
      %v2493 = vmul.f32 %v1405, %v2123
      %v2494 = vmul.f32 %v1406, %v2133
      %v2495 = vmul.f32 %v1407, %v2143
      %v2496 = vmul.f32 %v1408, %v2153
      %v2497 = vmul.f32 %v1409, %v2163
      %v2498 = vmul.f32 %v1410, %v2173
      %v2499 = vmul.f32 %v1411, %v2183
      %v2500 = vmul.f32 %v1412, %v2193
      %v2501 = vmul.f32 %v1413, %v2203
      %v2502 = vmul.f32 %v1414, %v2213
      %v2503 = vmul.f32 %v1415, %v2223
      %v2504 = vmul.f32 %v1416, %v2233
      %v2505 = vmul.f32 %v1417, %v2243
      %v2506 = vmul.f32 %v1418, %v2253
      %v2507 = vmul.f32 %v1419, %v2263
      %v2508 = vmul.f32 %v1420, %v2273
      %v2509 = vmul.f32 %v1421, %v2283
      %v2510 = vmul.f32 %v1422, %v2293
      %v2511 = vmul.f32 %v1423, %v2303
      %v2512 = vmul.f32 %v1424, %v2313
      %v2513 = vmul.f32 %v1425, %v2323
      %v2514 = vmul.f32 %v1426, %v2333
      %v2515 = vmul.f32 %v1427, %v2343
      %v2516 = vmul.f32 %v1428, %v2353
      %v2517 = vmul.f32 %v1429, %v2363
      %v2518 = vmul.f32 %v1430, %v2373
      %v2519 = vmul.f32 %v1431, %v2383
      %v2520 = vmul.f32 %v1432, %v2393
      %v2521 = vmul.f32 %v1433, %v2403
      %v2522 = vmul.f32 %v1434, %v2413
      %v2523 = vmul.f32 %v1435, %v2423
      %v2524 = vmul.f32 %v1436, %v2433
      %v2525 = vmul.f32 %v1437, %v2443
      %v2526 = vmul.f32 %v1438, %v2453
      %v2527 = vmul.f32 %v1439, %v2463
      %v2528 = vld [vmem:[%s5] sm:$0x1]
      %v2530 = vperm.slane %v2528, 0
      %v2532 = vmul.f32 %v2464, %v2530
      %v2533 = vmul.f32 %v2465, %v2530
      %v2534 = vmul.f32 %v2466, %v2530
      %v2535 = vmul.f32 %v2467, %v2530
      %v2536 = vmul.f32 %v2468, %v2530
      %v2537 = vmul.f32 %v2469, %v2530
      %v2538 = vmul.f32 %v2470, %v2530
      %v2539 = vmul.f32 %v2471, %v2530
      %v2540 = vmul.f32 %v2472, %v2530
      %v2541 = vmul.f32 %v2473, %v2530
      %v2542 = vmul.f32 %v2474, %v2530
      %v2543 = vmul.f32 %v2475, %v2530
      %v2544 = vmul.f32 %v2476, %v2530
      %v2545 = vmul.f32 %v2477, %v2530
      %v2546 = vmul.f32 %v2478, %v2530
      %v2547 = vmul.f32 %v2479, %v2530
      %v2548 = vmul.f32 %v2480, %v2530
      %v2549 = vmul.f32 %v2481, %v2530
      %v2550 = vmul.f32 %v2482, %v2530
      %v2551 = vmul.f32 %v2483, %v2530
      %v2552 = vmul.f32 %v2484, %v2530
      %v2553 = vmul.f32 %v2485, %v2530
      %v2554 = vmul.f32 %v2486, %v2530
      %v2555 = vmul.f32 %v2487, %v2530
      %v2556 = vmul.f32 %v2488, %v2530
      %v2557 = vmul.f32 %v2489, %v2530
      %v2558 = vmul.f32 %v2490, %v2530
      %v2559 = vmul.f32 %v2491, %v2530
      %v2560 = vmul.f32 %v2492, %v2530
      %v2561 = vmul.f32 %v2493, %v2530
      %v2562 = vmul.f32 %v2494, %v2530
      %v2563 = vmul.f32 %v2495, %v2530
      %v2564 = vmul.f32 %v2496, %v2530
      %v2565 = vmul.f32 %v2497, %v2530
      %v2566 = vmul.f32 %v2498, %v2530
      %v2567 = vmul.f32 %v2499, %v2530
      %v2568 = vmul.f32 %v2500, %v2530
      %v2569 = vmul.f32 %v2501, %v2530
      %v2570 = vmul.f32 %v2502, %v2530
      %v2571 = vmul.f32 %v2503, %v2530
      %v2572 = vmul.f32 %v2504, %v2530
      %v2573 = vmul.f32 %v2505, %v2530
      %v2574 = vmul.f32 %v2506, %v2530
      %v2575 = vmul.f32 %v2507, %v2530
      %v2576 = vmul.f32 %v2508, %v2530
      %v2577 = vmul.f32 %v2509, %v2530
      %v2578 = vmul.f32 %v2510, %v2530
      %v2579 = vmul.f32 %v2511, %v2530
      %v2580 = vmul.f32 %v2512, %v2530
      %v2581 = vmul.f32 %v2513, %v2530
      %v2582 = vmul.f32 %v2514, %v2530
      %v2583 = vmul.f32 %v2515, %v2530
      %v2584 = vmul.f32 %v2516, %v2530
      %v2585 = vmul.f32 %v2517, %v2530
      %v2586 = vmul.f32 %v2518, %v2530
      %v2587 = vmul.f32 %v2519, %v2530
      %v2588 = vmul.f32 %v2520, %v2530
      %v2589 = vmul.f32 %v2521, %v2530
      %v2590 = vmul.f32 %v2522, %v2530
      %v2591 = vmul.f32 %v2523, %v2530
      %v2592 = vmul.f32 %v2524, %v2530
      %v2593 = vmul.f32 %v2525, %v2530
      %v2594 = vmul.f32 %v2526, %v2530
      %v2595 = vmul.f32 %v2527, %v2530
      %v2596 = vld [vmem:[%s6] sm:$0x1]
      %v2598 = vperm.slane %v2596, 0
      %v2600 = vadd.f32 %v2532, %v2598
      %v2601 = vadd.f32 %v2533, %v2598
      %v2602 = vadd.f32 %v2534, %v2598
      %v2603 = vadd.f32 %v2535, %v2598
      %v2604 = vadd.f32 %v2536, %v2598
      %v2605 = vadd.f32 %v2537, %v2598
      %v2606 = vadd.f32 %v2538, %v2598
      %v2607 = vadd.f32 %v2539, %v2598
      %v2608 = vadd.f32 %v2540, %v2598
      %v2609 = vadd.f32 %v2541, %v2598
      %v2610 = vadd.f32 %v2542, %v2598
      %v2611 = vadd.f32 %v2543, %v2598
      %v2612 = vadd.f32 %v2544, %v2598
      %v2613 = vadd.f32 %v2545, %v2598
      %v2614 = vadd.f32 %v2546, %v2598
      %v2615 = vadd.f32 %v2547, %v2598
      %v2616 = vadd.f32 %v2548, %v2598
      %v2617 = vadd.f32 %v2549, %v2598
      %v2618 = vadd.f32 %v2550, %v2598
      %v2619 = vadd.f32 %v2551, %v2598
      %v2620 = vadd.f32 %v2552, %v2598
      %v2621 = vadd.f32 %v2553, %v2598
      %v2622 = vadd.f32 %v2554, %v2598
      %v2623 = vadd.f32 %v2555, %v2598
      %v2624 = vadd.f32 %v2556, %v2598
      %v2625 = vadd.f32 %v2557, %v2598
      %v2626 = vadd.f32 %v2558, %v2598
      %v2627 = vadd.f32 %v2559, %v2598
      %v2628 = vadd.f32 %v2560, %v2598
      %v2629 = vadd.f32 %v2561, %v2598
      %v2630 = vadd.f32 %v2562, %v2598
      %v2631 = vadd.f32 %v2563, %v2598
      %v2632 = vadd.f32 %v2564, %v2598
      %v2633 = vadd.f32 %v2565, %v2598
      %v2634 = vadd.f32 %v2566, %v2598
      %v2635 = vadd.f32 %v2567, %v2598
      %v2636 = vadd.f32 %v2568, %v2598
      %v2637 = vadd.f32 %v2569, %v2598
      %v2638 = vadd.f32 %v2570, %v2598
      %v2639 = vadd.f32 %v2571, %v2598
      %v2640 = vadd.f32 %v2572, %v2598
      %v2641 = vadd.f32 %v2573, %v2598
      %v2642 = vadd.f32 %v2574, %v2598
      %v2643 = vadd.f32 %v2575, %v2598
      %v2644 = vadd.f32 %v2576, %v2598
      %v2645 = vadd.f32 %v2577, %v2598
      %v2646 = vadd.f32 %v2578, %v2598
      %v2647 = vadd.f32 %v2579, %v2598
      %v2648 = vadd.f32 %v2580, %v2598
      %v2649 = vadd.f32 %v2581, %v2598
      %v2650 = vadd.f32 %v2582, %v2598
      %v2651 = vadd.f32 %v2583, %v2598
      %v2652 = vadd.f32 %v2584, %v2598
      %v2653 = vadd.f32 %v2585, %v2598
      %v2654 = vadd.f32 %v2586, %v2598
      %v2655 = vadd.f32 %v2587, %v2598
      %v2656 = vadd.f32 %v2588, %v2598
      %v2657 = vadd.f32 %v2589, %v2598
      %v2658 = vadd.f32 %v2590, %v2598
      %v2659 = vadd.f32 %v2591, %v2598
      %v2660 = vadd.f32 %v2592, %v2598
      %v2661 = vadd.f32 %v2593, %v2598
      %v2662 = vadd.f32 %v2594, %v2598
      %v2663 = vadd.f32 %v2595, %v2598
      %2664 = vst.msk [vmem:[%s280] sm:$0xff] %vm354, %v2600
      %2665 = vst.msk [vmem:[%s280 + $0x8] sm:$0xff] %vm354, %v2601
      %2666 = vst.msk [vmem:[%s280 + $0x10] sm:$0xff] %vm354, %v2602
      %2667 = vst.msk [vmem:[%s280 + $0x18] sm:$0xff] %vm354, %v2603
      %2668 = vst.msk [vmem:[%s280 + $0x20] sm:$0xff] %vm354, %v2604
      %2669 = vst.msk [vmem:[%s280 + $0x28] sm:$0xff] %vm354, %v2605
      %2670 = vst.msk [vmem:[%s280 + $0x30] sm:$0xff] %vm354, %v2606
      %2671 = vst.msk [vmem:[%s280 + $0x38] sm:$0xff] %vm354, %v2607
      %2672 = vst.msk [vmem:[%s280 + $0x40] sm:$0xff] %vm354, %v2608
      %2673 = vst.msk [vmem:[%s280 + $0x48] sm:$0xff] %vm354, %v2609
      %2674 = vst.msk [vmem:[%s280 + $0x50] sm:$0xff] %vm354, %v2610
      %2675 = vst.msk [vmem:[%s280 + $0x58] sm:$0xff] %vm354, %v2611
      %2676 = vst.msk [vmem:[%s280 + $0x60] sm:$0xff] %vm354, %v2612
      %2677 = vst.msk [vmem:[%s280 + $0x68] sm:$0xff] %vm354, %v2613
      %2678 = vst.msk [vmem:[%s280 + $0x70] sm:$0xff] %vm354, %v2614
      %2679 = vst.msk [vmem:[%s280 + $0x78] sm:$0xff] %vm354, %v2615
      %2680 = vst.msk [vmem:[%s280 + $0x80] sm:$0xff] %vm354, %v2616
      %2681 = vst.msk [vmem:[%s280 + $0x88] sm:$0xff] %vm354, %v2617
      %2682 = vst.msk [vmem:[%s280 + $0x90] sm:$0xff] %vm354, %v2618
      %2683 = vst.msk [vmem:[%s280 + $0x98] sm:$0xff] %vm354, %v2619
      %2684 = vst.msk [vmem:[%s280 + $0xa0] sm:$0xff] %vm354, %v2620
      %2685 = vst.msk [vmem:[%s280 + $0xa8] sm:$0xff] %vm354, %v2621
      %2686 = vst.msk [vmem:[%s280 + $0xb0] sm:$0xff] %vm354, %v2622
      %2687 = vst.msk [vmem:[%s280 + $0xb8] sm:$0xff] %vm354, %v2623
      %2688 = vst.msk [vmem:[%s280 + $0xc0] sm:$0xff] %vm354, %v2624
      %2689 = vst.msk [vmem:[%s280 + $0xc8] sm:$0xff] %vm354, %v2625
      %2690 = vst.msk [vmem:[%s280 + $0xd0] sm:$0xff] %vm354, %v2626
      %2691 = vst.msk [vmem:[%s280 + $0xd8] sm:$0xff] %vm354, %v2627
      %2692 = vst.msk [vmem:[%s280 + $0xe0] sm:$0xff] %vm354, %v2628
      %2693 = vst.msk [vmem:[%s280 + $0xe8] sm:$0xff] %vm354, %v2629
      %2694 = vst.msk [vmem:[%s280 + $0xf0] sm:$0xff] %vm354, %v2630
      %2695 = vst.msk [vmem:[%s280 + $0xf8] sm:$0xff] %vm354, %v2631
      %2696 = vst.msk [vmem:[%s280 + $0x100] sm:$0xff] %vm354, %v2632
      %2697 = vst.msk [vmem:[%s280 + $0x108] sm:$0xff] %vm354, %v2633
      %2698 = vst.msk [vmem:[%s280 + $0x110] sm:$0xff] %vm354, %v2634
      %2699 = vst.msk [vmem:[%s280 + $0x118] sm:$0xff] %vm354, %v2635
      %2700 = vst.msk [vmem:[%s280 + $0x120] sm:$0xff] %vm354, %v2636
      %2701 = vst.msk [vmem:[%s280 + $0x128] sm:$0xff] %vm354, %v2637
      %2702 = vst.msk [vmem:[%s280 + $0x130] sm:$0xff] %vm354, %v2638
      %2703 = vst.msk [vmem:[%s280 + $0x138] sm:$0xff] %vm354, %v2639
      %2704 = vst.msk [vmem:[%s280 + $0x140] sm:$0xff] %vm354, %v2640
      %2705 = vst.msk [vmem:[%s280 + $0x148] sm:$0xff] %vm354, %v2641
      %2706 = vst.msk [vmem:[%s280 + $0x150] sm:$0xff] %vm354, %v2642
      %2707 = vst.msk [vmem:[%s280 + $0x158] sm:$0xff] %vm354, %v2643
      %2708 = vst.msk [vmem:[%s280 + $0x160] sm:$0xff] %vm354, %v2644
      %2709 = vst.msk [vmem:[%s280 + $0x168] sm:$0xff] %vm354, %v2645
      %2710 = vst.msk [vmem:[%s280 + $0x170] sm:$0xff] %vm354, %v2646
      %2711 = vst.msk [vmem:[%s280 + $0x178] sm:$0xff] %vm354, %v2647
      %2712 = vst.msk [vmem:[%s280 + $0x180] sm:$0xff] %vm354, %v2648
      %2713 = vst.msk [vmem:[%s280 + $0x188] sm:$0xff] %vm354, %v2649
      %2714 = vst.msk [vmem:[%s280 + $0x190] sm:$0xff] %vm354, %v2650
      %2715 = vst.msk [vmem:[%s280 + $0x198] sm:$0xff] %vm354, %v2651
      %2716 = vst.msk [vmem:[%s280 + $0x1a0] sm:$0xff] %vm354, %v2652
      %2717 = vst.msk [vmem:[%s280 + $0x1a8] sm:$0xff] %vm354, %v2653
      %2718 = vst.msk [vmem:[%s280 + $0x1b0] sm:$0xff] %vm354, %v2654
      %2719 = vst.msk [vmem:[%s280 + $0x1b8] sm:$0xff] %vm354, %v2655
      %2720 = vst.msk [vmem:[%s280 + $0x1c0] sm:$0xff] %vm354, %v2656
      %2721 = vst.msk [vmem:[%s280 + $0x1c8] sm:$0xff] %vm354, %v2657
      %2722 = vst.msk [vmem:[%s280 + $0x1d0] sm:$0xff] %vm354, %v2658
      %2723 = vst.msk [vmem:[%s280 + $0x1d8] sm:$0xff] %vm354, %v2659
      %2724 = vst.msk [vmem:[%s280 + $0x1e0] sm:$0xff] %vm354, %v2660
      %2725 = vst.msk [vmem:[%s280 + $0x1e8] sm:$0xff] %vm354, %v2661
      %2726 = vst.msk [vmem:[%s280 + $0x1f0] sm:$0xff] %vm354, %v2662
      %2727 = vst.msk [vmem:[%s280 + $0x1f8] sm:$0xff] %vm354, %v2663
      %s2728 = smul.u32 64, %s18
      %p2729 = scmp.lt.s32.totalorder %s2728, 127
      %s2730 = scalar_select %p2729, %s2728, 127
      %s2731 = smul.addr %s2730, 8
      %s2732 = scalar_lea.vmem %s7, %s2731
      // Predicated region
      $region49: #{reg_flat_niid_forward.11} parent=47 // pred_check
        %p2733 = pneg %p188
      $region50: #{reg_flat_niid_forward.11} parent=47 // pred_check_branch
        %2735 = sbr.rel (%p2733) target = $region52
      $region51: #{reg_flat_niid_forward.11} parent=47 // pred_region
        %s2736 = smul.u32 64, %s18
      $region52: #{reg_flat_niid_forward.11} parent=47 // pred_fallthru
        _
    $region48: #{reg_flat_niid_forward.11} parent=5 // pred_fallthru
      _
    %p2737 = scmp.le.s32.totalorder 2, %s13
    // Predicated region
    $region53: #{reg_flat_niid_forward.11} parent=5 // pred_check
      %p2738 = pneg %p2737
    $region54: #{reg_flat_niid_forward.11} parent=5 // pred_check_branch
      %2740 = sbr.rel (%p2738) target = $region56
    $region55: #{reg_flat_niid_forward.11} parent=5 // pred_region
      %s2741 = ssub.s32 %s13, 2
      // Predicated region
      $region57: #{reg_flat_niid_forward.11} parent=55 // pred_check
        %p2742 = pneg %p194
      $region58: #{reg_flat_niid_forward.11} parent=55 // pred_check_branch
        %2744 = sbr.rel (%p2742) target = $region60
      $region59: #{reg_flat_niid_forward.11} parent=55 // pred_region
        %s2745 = smul.u32 64, %s19
        %p2746 = scmp.lt.s32.totalorder %s2745, 127
        %s2747 = scalar_select %p2746, %s2745, 127
        %s2748 = smul.addr %s2747, 8
        %s2749 = scalar_lea.vmem %s7, %s2748
      $region60: #{reg_flat_niid_forward.11} parent=55 // pred_fallthru
        _
    $region56: #{reg_flat_niid_forward.11} parent=5 // pred_fallthru
      _
  $region6: #{reg_flat_niid_forward.11} parent=0 // loop_footer
    %s17 = sadd.s32 1, %s13
  $region7: #{reg_flat_niid_forward.11} parent=0 // loop_footer_branch
    %12 = sbr.rel target = $region3
  $region8: #{reg_flat_niid_forward.11} parent=0 // loop_exit
    _

// kernel: reg_flat_niid_forward.15
$region0: #{reg_flat_niid_forward.15}
  #allocation0 [shape = 'u32[]', space=smem, size = 0x4, offset = 0x4, fixed_abs, tag = 'smem constant byte address 0x4 - core index']
  #allocation1 [shape = 'u32[72,128]{1,0:T(1,128)}', space=vmem, size = 0x9000, scoped, tag = 'internal scratch']
  %s0 = inlined_call_operand.vmem [shape: f32[8,128,32], index: 0, kind: input, shape index: {}]
  %s1 = inlined_call_operand.vmem [shape: f32[8,128], index: 1, kind: input, shape index: {}]
  %s2 = inlined_call_operand.vmem [shape: f32[32,32], index: 2, kind: input, shape index: {}]
  %s3 = inlined_call_operand.vmem [shape: f32[1,32], index: 3, kind: input, shape index: {}]
  %s4 = inlined_call_operand.vmem [shape: f32[32,3], index: 4, kind: input, shape index: {}]
  %s5 = inlined_call_operand.vmem [shape: f32[1,3], index: 5, kind: input, shape index: {}]
  %s6 = inlined_call_operand.vmem [shape: f32[8,3], index: 6, kind: output, shape index: {}]
  %s7 = sld [smem:[#allocation0]]
  $region34: #{reg_flat_niid_forward.15} parent=0
    _
  %s9 = ssub.s32 1, %s7
  %s10 = scalar_select 0, %s9, %s7
  // Predicated region
  $region2: #{reg_flat_niid_forward.15} parent=0 // pred_check
    _
  $region3: #{reg_flat_niid_forward.15} parent=0 // pred_check_branch
    %12 = sbr.rel (0) target = $region5
  $region4: #{reg_flat_niid_forward.15} parent=0 // pred_region
    _
  $region5: #{reg_flat_niid_forward.15} parent=0 // pred_fallthru
    _
  // Predicated region
  $region6: #{reg_flat_niid_forward.15} parent=0 // pred_check
    _
  $region7: #{reg_flat_niid_forward.15} parent=0 // pred_check_branch
    %14 = sbr.rel (0) target = $region9
  $region8: #{reg_flat_niid_forward.15} parent=0 // pred_region
    _
  $region9: #{reg_flat_niid_forward.15} parent=0 // pred_fallthru
    _
  // Predicated region
  $region10: #{reg_flat_niid_forward.15} parent=0 // pred_check
    _
  $region11: #{reg_flat_niid_forward.15} parent=0 // pred_check_branch
    %16 = sbr.rel (0) target = $region13
  $region12: #{reg_flat_niid_forward.15} parent=0 // pred_region
    _
  $region13: #{reg_flat_niid_forward.15} parent=0 // pred_fallthru
    _
  // Predicated region
  $region14: #{reg_flat_niid_forward.15} parent=0 // pred_check
    _
  $region15: #{reg_flat_niid_forward.15} parent=0 // pred_check_branch
    %18 = sbr.rel (0) target = $region17
  $region16: #{reg_flat_niid_forward.15} parent=0 // pred_region
    _
  $region17: #{reg_flat_niid_forward.15} parent=0 // pred_fallthru
    _
  // Predicated region
  $region18: #{reg_flat_niid_forward.15} parent=0 // pred_check
    _
  $region19: #{reg_flat_niid_forward.15} parent=0 // pred_check_branch
    %20 = sbr.rel (0) target = $region21
  $region20: #{reg_flat_niid_forward.15} parent=0 // pred_region
    _
  $region21: #{reg_flat_niid_forward.15} parent=0 // pred_fallthru
    _
  // Predicated region
  $region22: #{reg_flat_niid_forward.15} parent=0 // pred_check
    _
  $region23: #{reg_flat_niid_forward.15} parent=0 // pred_check_branch
    %22 = sbr.rel (0) target = $region25
  $region24: #{reg_flat_niid_forward.15} parent=0 // pred_region
    _
  $region25: #{reg_flat_niid_forward.15} parent=0 // pred_fallthru
    _
  %v23 = vld [vmem:[%s0] sm:$0xff]
  %v24 = vld [vmem:[%s0 + $0x8] sm:$0xff]
  %v25 = vld [vmem:[%s0 + $0x10] sm:$0xff]
  %v26 = vld [vmem:[%s0 + $0x18] sm:$0xff]
  %v27 = vld [vmem:[%s0 + $0x20] sm:$0xff]
  %v28 = vld [vmem:[%s0 + $0x28] sm:$0xff]
  %v29 = vld [vmem:[%s0 + $0x30] sm:$0xff]
  %v30 = vld [vmem:[%s0 + $0x38] sm:$0xff]
  %v31 = vld [vmem:[%s0 + $0x40] sm:$0xff]
  %v32 = vld [vmem:[%s0 + $0x48] sm:$0xff]
  %v33 = vld [vmem:[%s0 + $0x50] sm:$0xff]
  %v34 = vld [vmem:[%s0 + $0x58] sm:$0xff]
  %v35 = vld [vmem:[%s0 + $0x60] sm:$0xff]
  %v36 = vld [vmem:[%s0 + $0x68] sm:$0xff]
  %v37 = vld [vmem:[%s0 + $0x70] sm:$0xff]
  %v38 = vld [vmem:[%s0 + $0x78] sm:$0xff]
  %v39 = vld [vmem:[%s0 + $0x80] sm:$0xff]
  %v40 = vld [vmem:[%s0 + $0x88] sm:$0xff]
  %v41 = vld [vmem:[%s0 + $0x90] sm:$0xff]
  %v42 = vld [vmem:[%s0 + $0x98] sm:$0xff]
  %v43 = vld [vmem:[%s0 + $0xa0] sm:$0xff]
  %v44 = vld [vmem:[%s0 + $0xa8] sm:$0xff]
  %v45 = vld [vmem:[%s0 + $0xb0] sm:$0xff]
  %v46 = vld [vmem:[%s0 + $0xb8] sm:$0xff]
  %v47 = vld [vmem:[%s0 + $0xc0] sm:$0xff]
  %v48 = vld [vmem:[%s0 + $0xc8] sm:$0xff]
  %v49 = vld [vmem:[%s0 + $0xd0] sm:$0xff]
  %v50 = vld [vmem:[%s0 + $0xd8] sm:$0xff]
  %v51 = vld [vmem:[%s0 + $0xe0] sm:$0xff]
  %v52 = vld [vmem:[%s0 + $0xe8] sm:$0xff]
  %v53 = vld [vmem:[%s0 + $0xf0] sm:$0xff]
  %v54 = vld [vmem:[%s0 + $0xf8] sm:$0xff]
  %v55 = vld [vmem:[%s0 + $0x100] sm:$0xff]
  %v56 = vld [vmem:[%s0 + $0x108] sm:$0xff]
  %v57 = vld [vmem:[%s0 + $0x110] sm:$0xff]
  %v58 = vld [vmem:[%s0 + $0x118] sm:$0xff]
  %v59 = vld [vmem:[%s0 + $0x120] sm:$0xff]
  %v60 = vld [vmem:[%s0 + $0x128] sm:$0xff]
  %v61 = vld [vmem:[%s0 + $0x130] sm:$0xff]
  %v62 = vld [vmem:[%s0 + $0x138] sm:$0xff]
  %v63 = vld [vmem:[%s0 + $0x140] sm:$0xff]
  %v64 = vld [vmem:[%s0 + $0x148] sm:$0xff]
  %v65 = vld [vmem:[%s0 + $0x150] sm:$0xff]
  %v66 = vld [vmem:[%s0 + $0x158] sm:$0xff]
  %v67 = vld [vmem:[%s0 + $0x160] sm:$0xff]
  %v68 = vld [vmem:[%s0 + $0x168] sm:$0xff]
  %v69 = vld [vmem:[%s0 + $0x170] sm:$0xff]
  %v70 = vld [vmem:[%s0 + $0x178] sm:$0xff]
  %v71 = vld [vmem:[%s0 + $0x180] sm:$0xff]
  %v72 = vld [vmem:[%s0 + $0x188] sm:$0xff]
  %v73 = vld [vmem:[%s0 + $0x190] sm:$0xff]
  %v74 = vld [vmem:[%s0 + $0x198] sm:$0xff]
  %v75 = vld [vmem:[%s0 + $0x1a0] sm:$0xff]
  %v76 = vld [vmem:[%s0 + $0x1a8] sm:$0xff]
  %v77 = vld [vmem:[%s0 + $0x1b0] sm:$0xff]
  %v78 = vld [vmem:[%s0 + $0x1b8] sm:$0xff]
  %v79 = vld [vmem:[%s0 + $0x1c0] sm:$0xff]
  %v80 = vld [vmem:[%s0 + $0x1c8] sm:$0xff]
  %v81 = vld [vmem:[%s0 + $0x1d0] sm:$0xff]
  %v82 = vld [vmem:[%s0 + $0x1d8] sm:$0xff]
  %v83 = vld [vmem:[%s0 + $0x1e0] sm:$0xff]
  %v84 = vld [vmem:[%s0 + $0x1e8] sm:$0xff]
  %v85 = vld [vmem:[%s0 + $0x1f0] sm:$0xff]
  %v86 = vld [vmem:[%s0 + $0x1f8] sm:$0xff]
  %v87 = vld [vmem:[%s0 + $0x200] sm:$0xff]
  %v88 = vld [vmem:[%s0 + $0x208] sm:$0xff]
  %v89 = vld [vmem:[%s0 + $0x210] sm:$0xff]
  %v90 = vld [vmem:[%s0 + $0x218] sm:$0xff]
  %v91 = vld [vmem:[%s0 + $0x220] sm:$0xff]
  %v92 = vld [vmem:[%s0 + $0x228] sm:$0xff]
  %v93 = vld [vmem:[%s0 + $0x230] sm:$0xff]
  %v94 = vld [vmem:[%s0 + $0x238] sm:$0xff]
  %v95 = vld [vmem:[%s0 + $0x240] sm:$0xff]
  %v96 = vld [vmem:[%s0 + $0x248] sm:$0xff]
  %v97 = vld [vmem:[%s0 + $0x250] sm:$0xff]
  %v98 = vld [vmem:[%s0 + $0x258] sm:$0xff]
  %v99 = vld [vmem:[%s0 + $0x260] sm:$0xff]
  %v100 = vld [vmem:[%s0 + $0x268] sm:$0xff]
  %v101 = vld [vmem:[%s0 + $0x270] sm:$0xff]
  %v102 = vld [vmem:[%s0 + $0x278] sm:$0xff]
  %v103 = vld [vmem:[%s0 + $0x280] sm:$0xff]
  %v104 = vld [vmem:[%s0 + $0x288] sm:$0xff]
  %v105 = vld [vmem:[%s0 + $0x290] sm:$0xff]
  %v106 = vld [vmem:[%s0 + $0x298] sm:$0xff]
  %v107 = vld [vmem:[%s0 + $0x2a0] sm:$0xff]
  %v108 = vld [vmem:[%s0 + $0x2a8] sm:$0xff]
  %v109 = vld [vmem:[%s0 + $0x2b0] sm:$0xff]
  %v110 = vld [vmem:[%s0 + $0x2b8] sm:$0xff]
  %v111 = vld [vmem:[%s0 + $0x2c0] sm:$0xff]
  %v112 = vld [vmem:[%s0 + $0x2c8] sm:$0xff]
  %v113 = vld [vmem:[%s0 + $0x2d0] sm:$0xff]
  %v114 = vld [vmem:[%s0 + $0x2d8] sm:$0xff]
  %v115 = vld [vmem:[%s0 + $0x2e0] sm:$0xff]
  %v116 = vld [vmem:[%s0 + $0x2e8] sm:$0xff]
  %v117 = vld [vmem:[%s0 + $0x2f0] sm:$0xff]
  %v118 = vld [vmem:[%s0 + $0x2f8] sm:$0xff]
  %v119 = vld [vmem:[%s0 + $0x300] sm:$0xff]
  %v120 = vld [vmem:[%s0 + $0x308] sm:$0xff]
  %v121 = vld [vmem:[%s0 + $0x310] sm:$0xff]
  %v122 = vld [vmem:[%s0 + $0x318] sm:$0xff]
  %v123 = vld [vmem:[%s0 + $0x320] sm:$0xff]
  %v124 = vld [vmem:[%s0 + $0x328] sm:$0xff]
  %v125 = vld [vmem:[%s0 + $0x330] sm:$0xff]
  %v126 = vld [vmem:[%s0 + $0x338] sm:$0xff]
  %v127 = vld [vmem:[%s0 + $0x340] sm:$0xff]
  %v128 = vld [vmem:[%s0 + $0x348] sm:$0xff]
  %v129 = vld [vmem:[%s0 + $0x350] sm:$0xff]
  %v130 = vld [vmem:[%s0 + $0x358] sm:$0xff]
  %v131 = vld [vmem:[%s0 + $0x360] sm:$0xff]
  %v132 = vld [vmem:[%s0 + $0x368] sm:$0xff]
  %v133 = vld [vmem:[%s0 + $0x370] sm:$0xff]
  %v134 = vld [vmem:[%s0 + $0x378] sm:$0xff]
  %v135 = vld [vmem:[%s0 + $0x380] sm:$0xff]
  %v136 = vld [vmem:[%s0 + $0x388] sm:$0xff]
  %v137 = vld [vmem:[%s0 + $0x390] sm:$0xff]
  %v138 = vld [vmem:[%s0 + $0x398] sm:$0xff]
  %v139 = vld [vmem:[%s0 + $0x3a0] sm:$0xff]
  %v140 = vld [vmem:[%s0 + $0x3a8] sm:$0xff]
  %v141 = vld [vmem:[%s0 + $0x3b0] sm:$0xff]
  %v142 = vld [vmem:[%s0 + $0x3b8] sm:$0xff]
  %v143 = vld [vmem:[%s0 + $0x3c0] sm:$0xff]
  %v144 = vld [vmem:[%s0 + $0x3c8] sm:$0xff]
  %v145 = vld [vmem:[%s0 + $0x3d0] sm:$0xff]
  %v146 = vld [vmem:[%s0 + $0x3d8] sm:$0xff]
  %v147 = vld [vmem:[%s0 + $0x3e0] sm:$0xff]
  %v148 = vld [vmem:[%s0 + $0x3e8] sm:$0xff]
  %v149 = vld [vmem:[%s0 + $0x3f0] sm:$0xff]
  %v150 = vld [vmem:[%s0 + $0x3f8] sm:$0xff]
  %v151 = vld [vmem:[%s1] sm:$0xff]
  %v152 = vperm.slane %v151, 0
  %v153 = vlaneseq
  %v154 = vshrl.u32 %v153, 7
  %156 = vset.pattern.permute.xlu0 %v154
  %157 = vperm.xlu0 %156, %v152
  %v158 = vpop.permute.xlu0 %157
  %v159 = vlaneseq
  %v160 = vshrl.u32 %v159, 7
  %v161 = vadd.s32 %v160, 8
  %162 = vset.pattern.permute.xlu0 %v161
  %163 = vperm.xlu0 %162, %v152
  %v164 = vpop.permute.xlu0 %163
  %v165 = vlaneseq
  %v166 = vshrl.u32 %v165, 7
  %v167 = vadd.s32 %v166, 16
  %168 = vset.pattern.permute.xlu0 %v167
  %169 = vperm.xlu0 %168, %v152
  %v170 = vpop.permute.xlu0 %169
  %v171 = vlaneseq
  %v172 = vshrl.u32 %v171, 7
  %v173 = vadd.s32 %v172, 24
  %174 = vset.pattern.permute.xlu0 %v173
  %175 = vperm.xlu0 %174, %v152
  %v176 = vpop.permute.xlu0 %175
  %v177 = vlaneseq
  %v178 = vshrl.u32 %v177, 7
  %v179 = vadd.s32 %v178, 32
  %180 = vset.pattern.permute.xlu0 %v179
  %181 = vperm.xlu0 %180, %v152
  %v182 = vpop.permute.xlu0 %181
  %v183 = vlaneseq
  %v184 = vshrl.u32 %v183, 7
  %v185 = vadd.s32 %v184, 40
  %186 = vset.pattern.permute.xlu0 %v185
  %187 = vperm.xlu0 %186, %v152
  %v188 = vpop.permute.xlu0 %187
  %v189 = vlaneseq
  %v190 = vshrl.u32 %v189, 7
  %v191 = vadd.s32 %v190, 48
  %192 = vset.pattern.permute.xlu0 %v191
  %193 = vperm.xlu0 %192, %v152
  %v194 = vpop.permute.xlu0 %193
  %v195 = vlaneseq
  %v196 = vshrl.u32 %v195, 7
  %v197 = vadd.s32 %v196, 56
  %198 = vset.pattern.permute.xlu0 %v197
  %199 = vperm.xlu0 %198, %v152
  %v200 = vpop.permute.xlu0 %199
  %v201 = vlaneseq
  %v202 = vshrl.u32 %v201, 7
  %v203 = vadd.s32 %v202, 64
  %204 = vset.pattern.permute.xlu0 %v203
  %205 = vperm.xlu0 %204, %v152
  %v206 = vpop.permute.xlu0 %205
  %v207 = vlaneseq
  %v208 = vshrl.u32 %v207, 7
  %v209 = vadd.s32 %v208, 72
  %210 = vset.pattern.permute.xlu0 %v209
  %211 = vperm.xlu0 %210, %v152
  %v212 = vpop.permute.xlu0 %211
  %v213 = vlaneseq
  %v214 = vshrl.u32 %v213, 7
  %v215 = vadd.s32 %v214, 80
  %216 = vset.pattern.permute.xlu0 %v215
  %217 = vperm.xlu0 %216, %v152
  %v218 = vpop.permute.xlu0 %217
  %v219 = vlaneseq
  %v220 = vshrl.u32 %v219, 7
  %v221 = vadd.s32 %v220, 88
  %222 = vset.pattern.permute.xlu0 %v221
  %223 = vperm.xlu0 %222, %v152
  %v224 = vpop.permute.xlu0 %223
  %v225 = vlaneseq
  %v226 = vshrl.u32 %v225, 7
  %v227 = vadd.s32 %v226, 96
  %228 = vset.pattern.permute.xlu0 %v227
  %229 = vperm.xlu0 %228, %v152
  %v230 = vpop.permute.xlu0 %229
  %v231 = vlaneseq
  %v232 = vshrl.u32 %v231, 7
  %v233 = vadd.s32 %v232, 104
  %234 = vset.pattern.permute.xlu0 %v233
  %235 = vperm.xlu0 %234, %v152
  %v236 = vpop.permute.xlu0 %235
  %v237 = vlaneseq
  %v238 = vshrl.u32 %v237, 7
  %v239 = vadd.s32 %v238, 112
  %240 = vset.pattern.permute.xlu0 %v239
  %241 = vperm.xlu0 %240, %v152
  %v242 = vpop.permute.xlu0 %241
  %v243 = vlaneseq
  %v244 = vshrl.u32 %v243, 7
  %v245 = vadd.s32 %v244, 120
  %246 = vset.pattern.permute.xlu0 %v245
  %247 = vperm.xlu0 %246, %v152
  %v248 = vpop.permute.xlu0 %247
  %v249 = vperm.slane %v151, 1
  %v250 = vlaneseq
  %v251 = vshrl.u32 %v250, 7
  %253 = vset.pattern.permute.xlu0 %v251
  %254 = vperm.xlu0 %253, %v249
  %v255 = vpop.permute.xlu0 %254
  %v256 = vlaneseq
  %v257 = vshrl.u32 %v256, 7
  %v258 = vadd.s32 %v257, 8
  %259 = vset.pattern.permute.xlu0 %v258
  %260 = vperm.xlu0 %259, %v249
  %v261 = vpop.permute.xlu0 %260
  %v262 = vlaneseq
  %v263 = vshrl.u32 %v262, 7
  %v264 = vadd.s32 %v263, 16
  %265 = vset.pattern.permute.xlu0 %v264
  %266 = vperm.xlu0 %265, %v249
  %v267 = vpop.permute.xlu0 %266
  %v268 = vlaneseq
  %v269 = vshrl.u32 %v268, 7
  %v270 = vadd.s32 %v269, 24
  %271 = vset.pattern.permute.xlu0 %v270
  %272 = vperm.xlu0 %271, %v249
  %v273 = vpop.permute.xlu0 %272
  %v274 = vlaneseq
  %v275 = vshrl.u32 %v274, 7
  %v276 = vadd.s32 %v275, 32
  %277 = vset.pattern.permute.xlu0 %v276
  %278 = vperm.xlu0 %277, %v249
  %v279 = vpop.permute.xlu0 %278
  %v280 = vlaneseq
  %v281 = vshrl.u32 %v280, 7
  %v282 = vadd.s32 %v281, 40
  %283 = vset.pattern.permute.xlu0 %v282
  %284 = vperm.xlu0 %283, %v249
  %v285 = vpop.permute.xlu0 %284
  %v286 = vlaneseq
  %v287 = vshrl.u32 %v286, 7
  %v288 = vadd.s32 %v287, 48
  %289 = vset.pattern.permute.xlu0 %v288
  %290 = vperm.xlu0 %289, %v249
  %v291 = vpop.permute.xlu0 %290
  %v292 = vlaneseq
  %v293 = vshrl.u32 %v292, 7
  %v294 = vadd.s32 %v293, 56
  %295 = vset.pattern.permute.xlu0 %v294
  %296 = vperm.xlu0 %295, %v249
  %v297 = vpop.permute.xlu0 %296
  %v298 = vlaneseq
  %v299 = vshrl.u32 %v298, 7
  %v300 = vadd.s32 %v299, 64
  %301 = vset.pattern.permute.xlu0 %v300
  %302 = vperm.xlu0 %301, %v249
  %v303 = vpop.permute.xlu0 %302
  %v304 = vlaneseq
  %v305 = vshrl.u32 %v304, 7
  %v306 = vadd.s32 %v305, 72
  %307 = vset.pattern.permute.xlu0 %v306
  %308 = vperm.xlu0 %307, %v249
  %v309 = vpop.permute.xlu0 %308
  %v310 = vlaneseq
  %v311 = vshrl.u32 %v310, 7
  %v312 = vadd.s32 %v311, 80
  %313 = vset.pattern.permute.xlu0 %v312
  %314 = vperm.xlu0 %313, %v249
  %v315 = vpop.permute.xlu0 %314
  %v316 = vlaneseq
  %v317 = vshrl.u32 %v316, 7
  %v318 = vadd.s32 %v317, 88
  %319 = vset.pattern.permute.xlu0 %v318
  %320 = vperm.xlu0 %319, %v249
  %v321 = vpop.permute.xlu0 %320
  %v322 = vlaneseq
  %v323 = vshrl.u32 %v322, 7
  %v324 = vadd.s32 %v323, 96
  %325 = vset.pattern.permute.xlu0 %v324
  %326 = vperm.xlu0 %325, %v249
  %v327 = vpop.permute.xlu0 %326
  %v328 = vlaneseq
  %v329 = vshrl.u32 %v328, 7
  %v330 = vadd.s32 %v329, 104
  %331 = vset.pattern.permute.xlu0 %v330
  %332 = vperm.xlu0 %331, %v249
  %v333 = vpop.permute.xlu0 %332
  %v334 = vlaneseq
  %v335 = vshrl.u32 %v334, 7
  %v336 = vadd.s32 %v335, 112
  %337 = vset.pattern.permute.xlu0 %v336
  %338 = vperm.xlu0 %337, %v249
  %v339 = vpop.permute.xlu0 %338
  %v340 = vlaneseq
  %v341 = vshrl.u32 %v340, 7
  %v342 = vadd.s32 %v341, 120
  %343 = vset.pattern.permute.xlu0 %v342
  %344 = vperm.xlu0 %343, %v249
  %v345 = vpop.permute.xlu0 %344
  %v346 = vperm.slane %v151, 2
  %v347 = vlaneseq
  %v348 = vshrl.u32 %v347, 7
  %350 = vset.pattern.permute.xlu0 %v348
  %351 = vperm.xlu0 %350, %v346
  %v352 = vpop.permute.xlu0 %351
  %v353 = vlaneseq
  %v354 = vshrl.u32 %v353, 7
  %v355 = vadd.s32 %v354, 8
  %356 = vset.pattern.permute.xlu0 %v355
  %357 = vperm.xlu0 %356, %v346
  %v358 = vpop.permute.xlu0 %357
  %v359 = vlaneseq
  %v360 = vshrl.u32 %v359, 7
  %v361 = vadd.s32 %v360, 16
  %362 = vset.pattern.permute.xlu0 %v361
  %363 = vperm.xlu0 %362, %v346
  %v364 = vpop.permute.xlu0 %363
  %v365 = vlaneseq
  %v366 = vshrl.u32 %v365, 7
  %v367 = vadd.s32 %v366, 24
  %368 = vset.pattern.permute.xlu0 %v367
  %369 = vperm.xlu0 %368, %v346
  %v370 = vpop.permute.xlu0 %369
  %v371 = vlaneseq
  %v372 = vshrl.u32 %v371, 7
  %v373 = vadd.s32 %v372, 32
  %374 = vset.pattern.permute.xlu0 %v373
  %375 = vperm.xlu0 %374, %v346
  %v376 = vpop.permute.xlu0 %375
  %v377 = vlaneseq
  %v378 = vshrl.u32 %v377, 7
  %v379 = vadd.s32 %v378, 40
  %380 = vset.pattern.permute.xlu0 %v379
  %381 = vperm.xlu0 %380, %v346
  %v382 = vpop.permute.xlu0 %381
  %v383 = vlaneseq
  %v384 = vshrl.u32 %v383, 7
  %v385 = vadd.s32 %v384, 48
  %386 = vset.pattern.permute.xlu0 %v385
  %387 = vperm.xlu0 %386, %v346
  %v388 = vpop.permute.xlu0 %387
  %v389 = vlaneseq
  %v390 = vshrl.u32 %v389, 7
  %v391 = vadd.s32 %v390, 56
  %392 = vset.pattern.permute.xlu0 %v391
  %393 = vperm.xlu0 %392, %v346
  %v394 = vpop.permute.xlu0 %393
  %v395 = vlaneseq
  %v396 = vshrl.u32 %v395, 7
  %v397 = vadd.s32 %v396, 64
  %398 = vset.pattern.permute.xlu0 %v397
  %399 = vperm.xlu0 %398, %v346
  %v400 = vpop.permute.xlu0 %399
  %v401 = vlaneseq
  %v402 = vshrl.u32 %v401, 7
  %v403 = vadd.s32 %v402, 72
  %404 = vset.pattern.permute.xlu0 %v403
  %405 = vperm.xlu0 %404, %v346
  %v406 = vpop.permute.xlu0 %405
  %v407 = vlaneseq
  %v408 = vshrl.u32 %v407, 7
  %v409 = vadd.s32 %v408, 80
  %410 = vset.pattern.permute.xlu0 %v409
  %411 = vperm.xlu0 %410, %v346
  %v412 = vpop.permute.xlu0 %411
  %v413 = vlaneseq
  %v414 = vshrl.u32 %v413, 7
  %v415 = vadd.s32 %v414, 88
  %416 = vset.pattern.permute.xlu0 %v415
  %417 = vperm.xlu0 %416, %v346
  %v418 = vpop.permute.xlu0 %417
  %v419 = vlaneseq
  %v420 = vshrl.u32 %v419, 7
  %v421 = vadd.s32 %v420, 96
  %422 = vset.pattern.permute.xlu0 %v421
  %423 = vperm.xlu0 %422, %v346
  %v424 = vpop.permute.xlu0 %423
  %v425 = vlaneseq
  %v426 = vshrl.u32 %v425, 7
  %v427 = vadd.s32 %v426, 104
  %428 = vset.pattern.permute.xlu0 %v427
  %429 = vperm.xlu0 %428, %v346
  %v430 = vpop.permute.xlu0 %429
  %v431 = vlaneseq
  %v432 = vshrl.u32 %v431, 7
  %v433 = vadd.s32 %v432, 112
  %434 = vset.pattern.permute.xlu0 %v433
  %435 = vperm.xlu0 %434, %v346
  %v436 = vpop.permute.xlu0 %435
  %v437 = vlaneseq
  %v438 = vshrl.u32 %v437, 7
  %v439 = vadd.s32 %v438, 120
  %440 = vset.pattern.permute.xlu0 %v439
  %441 = vperm.xlu0 %440, %v346
  %v442 = vpop.permute.xlu0 %441
  %v443 = vperm.slane %v151, 3
  %v444 = vlaneseq
  %v445 = vshrl.u32 %v444, 7
  %447 = vset.pattern.permute.xlu0 %v445
  %448 = vperm.xlu0 %447, %v443
  %v449 = vpop.permute.xlu0 %448
  %v450 = vlaneseq
  %v451 = vshrl.u32 %v450, 7
  %v452 = vadd.s32 %v451, 8
  %453 = vset.pattern.permute.xlu0 %v452
  %454 = vperm.xlu0 %453, %v443
  %v455 = vpop.permute.xlu0 %454
  %v456 = vlaneseq
  %v457 = vshrl.u32 %v456, 7
  %v458 = vadd.s32 %v457, 16
  %459 = vset.pattern.permute.xlu0 %v458
  %460 = vperm.xlu0 %459, %v443
  %v461 = vpop.permute.xlu0 %460
  %v462 = vlaneseq
  %v463 = vshrl.u32 %v462, 7
  %v464 = vadd.s32 %v463, 24
  %465 = vset.pattern.permute.xlu0 %v464
  %466 = vperm.xlu0 %465, %v443
  %v467 = vpop.permute.xlu0 %466
  %v468 = vlaneseq
  %v469 = vshrl.u32 %v468, 7
  %v470 = vadd.s32 %v469, 32
  %471 = vset.pattern.permute.xlu0 %v470
  %472 = vperm.xlu0 %471, %v443
  %v473 = vpop.permute.xlu0 %472
  %v474 = vlaneseq
  %v475 = vshrl.u32 %v474, 7
  %v476 = vadd.s32 %v475, 40
  %477 = vset.pattern.permute.xlu0 %v476
  %478 = vperm.xlu0 %477, %v443
  %v479 = vpop.permute.xlu0 %478
  %v480 = vlaneseq
  %v481 = vshrl.u32 %v480, 7
  %v482 = vadd.s32 %v481, 48
  %483 = vset.pattern.permute.xlu0 %v482
  %484 = vperm.xlu0 %483, %v443
  %v485 = vpop.permute.xlu0 %484
  %v486 = vlaneseq
  %v487 = vshrl.u32 %v486, 7
  %v488 = vadd.s32 %v487, 56
  %489 = vset.pattern.permute.xlu0 %v488
  %490 = vperm.xlu0 %489, %v443
  %v491 = vpop.permute.xlu0 %490
  %v492 = vlaneseq
  %v493 = vshrl.u32 %v492, 7
  %v494 = vadd.s32 %v493, 64
  %495 = vset.pattern.permute.xlu0 %v494
  %496 = vperm.xlu0 %495, %v443
  %v497 = vpop.permute.xlu0 %496
  %v498 = vlaneseq
  %v499 = vshrl.u32 %v498, 7
  %v500 = vadd.s32 %v499, 72
  %501 = vset.pattern.permute.xlu0 %v500
  %502 = vperm.xlu0 %501, %v443
  %v503 = vpop.permute.xlu0 %502
  %v504 = vlaneseq
  %v505 = vshrl.u32 %v504, 7
  %v506 = vadd.s32 %v505, 80
  %507 = vset.pattern.permute.xlu0 %v506
  %508 = vperm.xlu0 %507, %v443
  %v509 = vpop.permute.xlu0 %508
  %v510 = vlaneseq
  %v511 = vshrl.u32 %v510, 7
  %v512 = vadd.s32 %v511, 88
  %513 = vset.pattern.permute.xlu0 %v512
  %514 = vperm.xlu0 %513, %v443
  %v515 = vpop.permute.xlu0 %514
  %v516 = vlaneseq
  %v517 = vshrl.u32 %v516, 7
  %v518 = vadd.s32 %v517, 96
  %519 = vset.pattern.permute.xlu0 %v518
  %520 = vperm.xlu0 %519, %v443
  %v521 = vpop.permute.xlu0 %520
  %v522 = vlaneseq
  %v523 = vshrl.u32 %v522, 7
  %v524 = vadd.s32 %v523, 104
  %525 = vset.pattern.permute.xlu0 %v524
  %526 = vperm.xlu0 %525, %v443
  %v527 = vpop.permute.xlu0 %526
  %v528 = vlaneseq
  %v529 = vshrl.u32 %v528, 7
  %v530 = vadd.s32 %v529, 112
  %531 = vset.pattern.permute.xlu0 %v530
  %532 = vperm.xlu0 %531, %v443
  %v533 = vpop.permute.xlu0 %532
  %v534 = vlaneseq
  %v535 = vshrl.u32 %v534, 7
  %v536 = vadd.s32 %v535, 120
  %537 = vset.pattern.permute.xlu0 %v536
  %538 = vperm.xlu0 %537, %v443
  %v539 = vpop.permute.xlu0 %538
  %v540 = vperm.slane %v151, 4
  %v541 = vlaneseq
  %v542 = vshrl.u32 %v541, 7
  %544 = vset.pattern.permute.xlu0 %v542
  %545 = vperm.xlu0 %544, %v540
  %v546 = vpop.permute.xlu0 %545
  %v547 = vlaneseq
  %v548 = vshrl.u32 %v547, 7
  %v549 = vadd.s32 %v548, 8
  %550 = vset.pattern.permute.xlu0 %v549
  %551 = vperm.xlu0 %550, %v540
  %v552 = vpop.permute.xlu0 %551
  %v553 = vlaneseq
  %v554 = vshrl.u32 %v553, 7
  %v555 = vadd.s32 %v554, 16
  %556 = vset.pattern.permute.xlu0 %v555
  %557 = vperm.xlu0 %556, %v540
  %v558 = vpop.permute.xlu0 %557
  %v559 = vlaneseq
  %v560 = vshrl.u32 %v559, 7
  %v561 = vadd.s32 %v560, 24
  %562 = vset.pattern.permute.xlu0 %v561
  %563 = vperm.xlu0 %562, %v540
  %v564 = vpop.permute.xlu0 %563
  %v565 = vlaneseq
  %v566 = vshrl.u32 %v565, 7
  %v567 = vadd.s32 %v566, 32
  %568 = vset.pattern.permute.xlu0 %v567
  %569 = vperm.xlu0 %568, %v540
  %v570 = vpop.permute.xlu0 %569
  %v571 = vlaneseq
  %v572 = vshrl.u32 %v571, 7
  %v573 = vadd.s32 %v572, 40
  %574 = vset.pattern.permute.xlu0 %v573
  %575 = vperm.xlu0 %574, %v540
  %v576 = vpop.permute.xlu0 %575
  %v577 = vlaneseq
  %v578 = vshrl.u32 %v577, 7
  %v579 = vadd.s32 %v578, 48
  %580 = vset.pattern.permute.xlu0 %v579
  %581 = vperm.xlu0 %580, %v540
  %v582 = vpop.permute.xlu0 %581
  %v583 = vlaneseq
  %v584 = vshrl.u32 %v583, 7
  %v585 = vadd.s32 %v584, 56
  %586 = vset.pattern.permute.xlu0 %v585
  %587 = vperm.xlu0 %586, %v540
  %v588 = vpop.permute.xlu0 %587
  %v589 = vlaneseq
  %v590 = vshrl.u32 %v589, 7
  %v591 = vadd.s32 %v590, 64
  %592 = vset.pattern.permute.xlu0 %v591
  %593 = vperm.xlu0 %592, %v540
  %v594 = vpop.permute.xlu0 %593
  %v595 = vlaneseq
  %v596 = vshrl.u32 %v595, 7
  %v597 = vadd.s32 %v596, 72
  %598 = vset.pattern.permute.xlu0 %v597
  %599 = vperm.xlu0 %598, %v540
  %v600 = vpop.permute.xlu0 %599
  %v601 = vlaneseq
  %v602 = vshrl.u32 %v601, 7
  %v603 = vadd.s32 %v602, 80
  %604 = vset.pattern.permute.xlu0 %v603
  %605 = vperm.xlu0 %604, %v540
  %v606 = vpop.permute.xlu0 %605
  %v607 = vlaneseq
  %v608 = vshrl.u32 %v607, 7
  %v609 = vadd.s32 %v608, 88
  %610 = vset.pattern.permute.xlu0 %v609
  %611 = vperm.xlu0 %610, %v540
  %v612 = vpop.permute.xlu0 %611
  %v613 = vlaneseq
  %v614 = vshrl.u32 %v613, 7
  %v615 = vadd.s32 %v614, 96
  %616 = vset.pattern.permute.xlu0 %v615
  %617 = vperm.xlu0 %616, %v540
  %v618 = vpop.permute.xlu0 %617
  %v619 = vlaneseq
  %v620 = vshrl.u32 %v619, 7
  %v621 = vadd.s32 %v620, 104
  %622 = vset.pattern.permute.xlu0 %v621
  %623 = vperm.xlu0 %622, %v540
  %v624 = vpop.permute.xlu0 %623
  %v625 = vlaneseq
  %v626 = vshrl.u32 %v625, 7
  %v627 = vadd.s32 %v626, 112
  %628 = vset.pattern.permute.xlu0 %v627
  %629 = vperm.xlu0 %628, %v540
  %v630 = vpop.permute.xlu0 %629
  %v631 = vlaneseq
  %v632 = vshrl.u32 %v631, 7
  %v633 = vadd.s32 %v632, 120
  %634 = vset.pattern.permute.xlu0 %v633
  %635 = vperm.xlu0 %634, %v540
  %v636 = vpop.permute.xlu0 %635
  %v637 = vperm.slane %v151, 5
  %v638 = vlaneseq
  %v639 = vshrl.u32 %v638, 7
  %641 = vset.pattern.permute.xlu0 %v639
  %642 = vperm.xlu0 %641, %v637
  %v643 = vpop.permute.xlu0 %642
  %v644 = vlaneseq
  %v645 = vshrl.u32 %v644, 7
  %v646 = vadd.s32 %v645, 8
  %647 = vset.pattern.permute.xlu0 %v646
  %648 = vperm.xlu0 %647, %v637
  %v649 = vpop.permute.xlu0 %648
  %v650 = vlaneseq
  %v651 = vshrl.u32 %v650, 7
  %v652 = vadd.s32 %v651, 16
  %653 = vset.pattern.permute.xlu0 %v652
  %654 = vperm.xlu0 %653, %v637
  %v655 = vpop.permute.xlu0 %654
  %v656 = vlaneseq
  %v657 = vshrl.u32 %v656, 7
  %v658 = vadd.s32 %v657, 24
  %659 = vset.pattern.permute.xlu0 %v658
  %660 = vperm.xlu0 %659, %v637
  %v661 = vpop.permute.xlu0 %660
  %v662 = vlaneseq
  %v663 = vshrl.u32 %v662, 7
  %v664 = vadd.s32 %v663, 32
  %665 = vset.pattern.permute.xlu0 %v664
  %666 = vperm.xlu0 %665, %v637
  %v667 = vpop.permute.xlu0 %666
  %v668 = vlaneseq
  %v669 = vshrl.u32 %v668, 7
  %v670 = vadd.s32 %v669, 40
  %671 = vset.pattern.permute.xlu0 %v670
  %672 = vperm.xlu0 %671, %v637
  %v673 = vpop.permute.xlu0 %672
  %v674 = vlaneseq
  %v675 = vshrl.u32 %v674, 7
  %v676 = vadd.s32 %v675, 48
  %677 = vset.pattern.permute.xlu0 %v676
  %678 = vperm.xlu0 %677, %v637
  %v679 = vpop.permute.xlu0 %678
  %v680 = vlaneseq
  %v681 = vshrl.u32 %v680, 7
  %v682 = vadd.s32 %v681, 56
  %683 = vset.pattern.permute.xlu0 %v682
  %684 = vperm.xlu0 %683, %v637
  %v685 = vpop.permute.xlu0 %684
  %v686 = vlaneseq
  %v687 = vshrl.u32 %v686, 7
  %v688 = vadd.s32 %v687, 64
  %689 = vset.pattern.permute.xlu0 %v688
  %690 = vperm.xlu0 %689, %v637
  %v691 = vpop.permute.xlu0 %690
  %v692 = vlaneseq
  %v693 = vshrl.u32 %v692, 7
  %v694 = vadd.s32 %v693, 72
  %695 = vset.pattern.permute.xlu0 %v694
  %696 = vperm.xlu0 %695, %v637
  %v697 = vpop.permute.xlu0 %696
  %v698 = vlaneseq
  %v699 = vshrl.u32 %v698, 7
  %v700 = vadd.s32 %v699, 80
  %701 = vset.pattern.permute.xlu0 %v700
  %702 = vperm.xlu0 %701, %v637
  %v703 = vpop.permute.xlu0 %702
  %v704 = vlaneseq
  %v705 = vshrl.u32 %v704, 7
  %v706 = vadd.s32 %v705, 88
  %707 = vset.pattern.permute.xlu0 %v706
  %708 = vperm.xlu0 %707, %v637
  %v709 = vpop.permute.xlu0 %708
  %v710 = vlaneseq
  %v711 = vshrl.u32 %v710, 7
  %v712 = vadd.s32 %v711, 96
  %713 = vset.pattern.permute.xlu0 %v712
  %714 = vperm.xlu0 %713, %v637
  %v715 = vpop.permute.xlu0 %714
  %v716 = vlaneseq
  %v717 = vshrl.u32 %v716, 7
  %v718 = vadd.s32 %v717, 104
  %719 = vset.pattern.permute.xlu0 %v718
  %720 = vperm.xlu0 %719, %v637
  %v721 = vpop.permute.xlu0 %720
  %v722 = vlaneseq
  %v723 = vshrl.u32 %v722, 7
  %v724 = vadd.s32 %v723, 112
  %725 = vset.pattern.permute.xlu0 %v724
  %726 = vperm.xlu0 %725, %v637
  %v727 = vpop.permute.xlu0 %726
  %v728 = vlaneseq
  %v729 = vshrl.u32 %v728, 7
  %v730 = vadd.s32 %v729, 120
  %731 = vset.pattern.permute.xlu0 %v730
  %732 = vperm.xlu0 %731, %v637
  %v733 = vpop.permute.xlu0 %732
  %v734 = vperm.slane %v151, 6
  %v735 = vlaneseq
  %v736 = vshrl.u32 %v735, 7
  %738 = vset.pattern.permute.xlu0 %v736
  %739 = vperm.xlu0 %738, %v734
  %v740 = vpop.permute.xlu0 %739
  %v741 = vlaneseq
  %v742 = vshrl.u32 %v741, 7
  %v743 = vadd.s32 %v742, 8
  %744 = vset.pattern.permute.xlu0 %v743
  %745 = vperm.xlu0 %744, %v734
  %v746 = vpop.permute.xlu0 %745
  %v747 = vlaneseq
  %v748 = vshrl.u32 %v747, 7
  %v749 = vadd.s32 %v748, 16
  %750 = vset.pattern.permute.xlu0 %v749
  %751 = vperm.xlu0 %750, %v734
  %v752 = vpop.permute.xlu0 %751
  %v753 = vlaneseq
  %v754 = vshrl.u32 %v753, 7
  %v755 = vadd.s32 %v754, 24
  %756 = vset.pattern.permute.xlu0 %v755
  %757 = vperm.xlu0 %756, %v734
  %v758 = vpop.permute.xlu0 %757
  %v759 = vlaneseq
  %v760 = vshrl.u32 %v759, 7
  %v761 = vadd.s32 %v760, 32
  %762 = vset.pattern.permute.xlu0 %v761
  %763 = vperm.xlu0 %762, %v734
  %v764 = vpop.permute.xlu0 %763
  %v765 = vlaneseq
  %v766 = vshrl.u32 %v765, 7
  %v767 = vadd.s32 %v766, 40
  %768 = vset.pattern.permute.xlu0 %v767
  %769 = vperm.xlu0 %768, %v734
  %v770 = vpop.permute.xlu0 %769
  %v771 = vlaneseq
  %v772 = vshrl.u32 %v771, 7
  %v773 = vadd.s32 %v772, 48
  %774 = vset.pattern.permute.xlu0 %v773
  %775 = vperm.xlu0 %774, %v734
  %v776 = vpop.permute.xlu0 %775
  %v777 = vlaneseq
  %v778 = vshrl.u32 %v777, 7
  %v779 = vadd.s32 %v778, 56
  %780 = vset.pattern.permute.xlu0 %v779
  %781 = vperm.xlu0 %780, %v734
  %v782 = vpop.permute.xlu0 %781
  %v783 = vlaneseq
  %v784 = vshrl.u32 %v783, 7
  %v785 = vadd.s32 %v784, 64
  %786 = vset.pattern.permute.xlu0 %v785
  %787 = vperm.xlu0 %786, %v734
  %v788 = vpop.permute.xlu0 %787
  %v789 = vlaneseq
  %v790 = vshrl.u32 %v789, 7
  %v791 = vadd.s32 %v790, 72
  %792 = vset.pattern.permute.xlu0 %v791
  %793 = vperm.xlu0 %792, %v734
  %v794 = vpop.permute.xlu0 %793
  %v795 = vlaneseq
  %v796 = vshrl.u32 %v795, 7
  %v797 = vadd.s32 %v796, 80
  %798 = vset.pattern.permute.xlu0 %v797
  %799 = vperm.xlu0 %798, %v734
  %v800 = vpop.permute.xlu0 %799
  %v801 = vlaneseq
  %v802 = vshrl.u32 %v801, 7
  %v803 = vadd.s32 %v802, 88
  %804 = vset.pattern.permute.xlu0 %v803
  %805 = vperm.xlu0 %804, %v734
  %v806 = vpop.permute.xlu0 %805
  %v807 = vlaneseq
  %v808 = vshrl.u32 %v807, 7
  %v809 = vadd.s32 %v808, 96
  %810 = vset.pattern.permute.xlu0 %v809
  %811 = vperm.xlu0 %810, %v734
  %v812 = vpop.permute.xlu0 %811
  %v813 = vlaneseq
  %v814 = vshrl.u32 %v813, 7
  %v815 = vadd.s32 %v814, 104
  %816 = vset.pattern.permute.xlu0 %v815
  %817 = vperm.xlu0 %816, %v734
  %v818 = vpop.permute.xlu0 %817
  %v819 = vlaneseq
  %v820 = vshrl.u32 %v819, 7
  %v821 = vadd.s32 %v820, 112
  %822 = vset.pattern.permute.xlu0 %v821
  %823 = vperm.xlu0 %822, %v734
  %v824 = vpop.permute.xlu0 %823
  %v825 = vlaneseq
  %v826 = vshrl.u32 %v825, 7
  %v827 = vadd.s32 %v826, 120
  %828 = vset.pattern.permute.xlu0 %v827
  %829 = vperm.xlu0 %828, %v734
  %v830 = vpop.permute.xlu0 %829
  %v831 = vperm.slane %v151, 7
  %v832 = vlaneseq
  %v833 = vshrl.u32 %v832, 7
  %835 = vset.pattern.permute.xlu0 %v833
  %836 = vperm.xlu0 %835, %v831
  %v837 = vpop.permute.xlu0 %836
  %v838 = vlaneseq
  %v839 = vshrl.u32 %v838, 7
  %v840 = vadd.s32 %v839, 8
  %841 = vset.pattern.permute.xlu0 %v840
  %842 = vperm.xlu0 %841, %v831
  %v843 = vpop.permute.xlu0 %842
  %v844 = vlaneseq
  %v845 = vshrl.u32 %v844, 7
  %v846 = vadd.s32 %v845, 16
  %847 = vset.pattern.permute.xlu0 %v846
  %848 = vperm.xlu0 %847, %v831
  %v849 = vpop.permute.xlu0 %848
  %v850 = vlaneseq
  %v851 = vshrl.u32 %v850, 7
  %v852 = vadd.s32 %v851, 24
  %853 = vset.pattern.permute.xlu0 %v852
  %854 = vperm.xlu0 %853, %v831
  %v855 = vpop.permute.xlu0 %854
  %v856 = vlaneseq
  %v857 = vshrl.u32 %v856, 7
  %v858 = vadd.s32 %v857, 32
  %859 = vset.pattern.permute.xlu0 %v858
  %860 = vperm.xlu0 %859, %v831
  %v861 = vpop.permute.xlu0 %860
  %v862 = vlaneseq
  %v863 = vshrl.u32 %v862, 7
  %v864 = vadd.s32 %v863, 40
  %865 = vset.pattern.permute.xlu0 %v864
  %866 = vperm.xlu0 %865, %v831
  %v867 = vpop.permute.xlu0 %866
  %v868 = vlaneseq
  %v869 = vshrl.u32 %v868, 7
  %v870 = vadd.s32 %v869, 48
  %871 = vset.pattern.permute.xlu0 %v870
  %872 = vperm.xlu0 %871, %v831
  %v873 = vpop.permute.xlu0 %872
  %v874 = vlaneseq
  %v875 = vshrl.u32 %v874, 7
  %v876 = vadd.s32 %v875, 56
  %877 = vset.pattern.permute.xlu0 %v876
  %878 = vperm.xlu0 %877, %v831
  %v879 = vpop.permute.xlu0 %878
  %v880 = vlaneseq
  %v881 = vshrl.u32 %v880, 7
  %v882 = vadd.s32 %v881, 64
  %883 = vset.pattern.permute.xlu0 %v882
  %884 = vperm.xlu0 %883, %v831
  %v885 = vpop.permute.xlu0 %884
  %v886 = vlaneseq
  %v887 = vshrl.u32 %v886, 7
  %v888 = vadd.s32 %v887, 72
  %889 = vset.pattern.permute.xlu0 %v888
  %890 = vperm.xlu0 %889, %v831
  %v891 = vpop.permute.xlu0 %890
  %v892 = vlaneseq
  %v893 = vshrl.u32 %v892, 7
  %v894 = vadd.s32 %v893, 80
  %895 = vset.pattern.permute.xlu0 %v894
  %896 = vperm.xlu0 %895, %v831
  %v897 = vpop.permute.xlu0 %896
  %v898 = vlaneseq
  %v899 = vshrl.u32 %v898, 7
  %v900 = vadd.s32 %v899, 88
  %901 = vset.pattern.permute.xlu0 %v900
  %902 = vperm.xlu0 %901, %v831
  %v903 = vpop.permute.xlu0 %902
  %v904 = vlaneseq
  %v905 = vshrl.u32 %v904, 7
  %v906 = vadd.s32 %v905, 96
  %907 = vset.pattern.permute.xlu0 %v906
  %908 = vperm.xlu0 %907, %v831
  %v909 = vpop.permute.xlu0 %908
  %v910 = vlaneseq
  %v911 = vshrl.u32 %v910, 7
  %v912 = vadd.s32 %v911, 104
  %913 = vset.pattern.permute.xlu0 %v912
  %914 = vperm.xlu0 %913, %v831
  %v915 = vpop.permute.xlu0 %914
  %v916 = vlaneseq
  %v917 = vshrl.u32 %v916, 7
  %v918 = vadd.s32 %v917, 112
  %919 = vset.pattern.permute.xlu0 %v918
  %920 = vperm.xlu0 %919, %v831
  %v921 = vpop.permute.xlu0 %920
  %v922 = vlaneseq
  %v923 = vshrl.u32 %v922, 7
  %v924 = vadd.s32 %v923, 120
  %925 = vset.pattern.permute.xlu0 %v924
  %926 = vperm.xlu0 %925, %v831
  %v927 = vpop.permute.xlu0 %926
  %v928 = vmul.f32 %v23, %v158
  %v929 = vmul.f32 %v24, %v164
  %v930 = vmul.f32 %v25, %v170
  %v931 = vmul.f32 %v26, %v176
  %v932 = vmul.f32 %v27, %v182
  %v933 = vmul.f32 %v28, %v188
  %v934 = vmul.f32 %v29, %v194
  %v935 = vmul.f32 %v30, %v200
  %v936 = vmul.f32 %v31, %v206
  %v937 = vmul.f32 %v32, %v212
  %v938 = vmul.f32 %v33, %v218
  %v939 = vmul.f32 %v34, %v224
  %v940 = vmul.f32 %v35, %v230
  %v941 = vmul.f32 %v36, %v236
  %v942 = vmul.f32 %v37, %v242
  %v943 = vmul.f32 %v38, %v248
  %v944 = vmul.f32 %v39, %v255
  %v945 = vmul.f32 %v40, %v261
  %v946 = vmul.f32 %v41, %v267
  %v947 = vmul.f32 %v42, %v273
  %v948 = vmul.f32 %v43, %v279
  %v949 = vmul.f32 %v44, %v285
  %v950 = vmul.f32 %v45, %v291
  %v951 = vmul.f32 %v46, %v297
  %v952 = vmul.f32 %v47, %v303
  %v953 = vmul.f32 %v48, %v309
  %v954 = vmul.f32 %v49, %v315
  %v955 = vmul.f32 %v50, %v321
  %v956 = vmul.f32 %v51, %v327
  %v957 = vmul.f32 %v52, %v333
  %v958 = vmul.f32 %v53, %v339
  %v959 = vmul.f32 %v54, %v345
  %v960 = vmul.f32 %v55, %v352
  %v961 = vmul.f32 %v56, %v358
  %v962 = vmul.f32 %v57, %v364
  %v963 = vmul.f32 %v58, %v370
  %v964 = vmul.f32 %v59, %v376
  %v965 = vmul.f32 %v60, %v382
  %v966 = vmul.f32 %v61, %v388
  %v967 = vmul.f32 %v62, %v394
  %v968 = vmul.f32 %v63, %v400
  %v969 = vmul.f32 %v64, %v406
  %v970 = vmul.f32 %v65, %v412
  %v971 = vmul.f32 %v66, %v418
  %v972 = vmul.f32 %v67, %v424
  %v973 = vmul.f32 %v68, %v430
  %v974 = vmul.f32 %v69, %v436
  %v975 = vmul.f32 %v70, %v442
  %v976 = vmul.f32 %v71, %v449
  %v977 = vmul.f32 %v72, %v455
  %v978 = vmul.f32 %v73, %v461
  %v979 = vmul.f32 %v74, %v467
  %v980 = vmul.f32 %v75, %v473
  %v981 = vmul.f32 %v76, %v479
  %v982 = vmul.f32 %v77, %v485
  %v983 = vmul.f32 %v78, %v491
  %v984 = vmul.f32 %v79, %v497
  %v985 = vmul.f32 %v80, %v503
  %v986 = vmul.f32 %v81, %v509
  %v987 = vmul.f32 %v82, %v515
  %v988 = vmul.f32 %v83, %v521
  %v989 = vmul.f32 %v84, %v527
  %v990 = vmul.f32 %v85, %v533
  %v991 = vmul.f32 %v86, %v539
  %v992 = vmul.f32 %v87, %v546
  %v993 = vmul.f32 %v88, %v552
  %v994 = vmul.f32 %v89, %v558
  %v995 = vmul.f32 %v90, %v564
  %v996 = vmul.f32 %v91, %v570
  %v997 = vmul.f32 %v92, %v576
  %v998 = vmul.f32 %v93, %v582
  %v999 = vmul.f32 %v94, %v588
  %v1000 = vmul.f32 %v95, %v594
  %v1001 = vmul.f32 %v96, %v600
  %v1002 = vmul.f32 %v97, %v606
  %v1003 = vmul.f32 %v98, %v612
  %v1004 = vmul.f32 %v99, %v618
  %v1005 = vmul.f32 %v100, %v624
  %v1006 = vmul.f32 %v101, %v630
  %v1007 = vmul.f32 %v102, %v636
  %v1008 = vmul.f32 %v103, %v643
  %v1009 = vmul.f32 %v104, %v649
  %v1010 = vmul.f32 %v105, %v655
  %v1011 = vmul.f32 %v106, %v661
  %v1012 = vmul.f32 %v107, %v667
  %v1013 = vmul.f32 %v108, %v673
  %v1014 = vmul.f32 %v109, %v679
  %v1015 = vmul.f32 %v110, %v685
  %v1016 = vmul.f32 %v111, %v691
  %v1017 = vmul.f32 %v112, %v697
  %v1018 = vmul.f32 %v113, %v703
  %v1019 = vmul.f32 %v114, %v709
  %v1020 = vmul.f32 %v115, %v715
  %v1021 = vmul.f32 %v116, %v721
  %v1022 = vmul.f32 %v117, %v727
  %v1023 = vmul.f32 %v118, %v733
  %v1024 = vmul.f32 %v119, %v740
  %v1025 = vmul.f32 %v120, %v746
  %v1026 = vmul.f32 %v121, %v752
  %v1027 = vmul.f32 %v122, %v758
  %v1028 = vmul.f32 %v123, %v764
  %v1029 = vmul.f32 %v124, %v770
  %v1030 = vmul.f32 %v125, %v776
  %v1031 = vmul.f32 %v126, %v782
  %v1032 = vmul.f32 %v127, %v788
  %v1033 = vmul.f32 %v128, %v794
  %v1034 = vmul.f32 %v129, %v800
  %v1035 = vmul.f32 %v130, %v806
  %v1036 = vmul.f32 %v131, %v812
  %v1037 = vmul.f32 %v132, %v818
  %v1038 = vmul.f32 %v133, %v824
  %v1039 = vmul.f32 %v134, %v830
  %v1040 = vmul.f32 %v135, %v837
  %v1041 = vmul.f32 %v136, %v843
  %v1042 = vmul.f32 %v137, %v849
  %v1043 = vmul.f32 %v138, %v855
  %v1044 = vmul.f32 %v139, %v861
  %v1045 = vmul.f32 %v140, %v867
  %v1046 = vmul.f32 %v141, %v873
  %v1047 = vmul.f32 %v142, %v879
  %v1048 = vmul.f32 %v143, %v885
  %v1049 = vmul.f32 %v144, %v891
  %v1050 = vmul.f32 %v145, %v897
  %v1051 = vmul.f32 %v146, %v903
  %v1052 = vmul.f32 %v147, %v909
  %v1053 = vmul.f32 %v148, %v915
  %v1054 = vmul.f32 %v149, %v921
  %v1055 = vmul.f32 %v150, %v927
  %vm1056 = vcmask 261120
  %v1057 = vsel %vm1056, %v928, 0.0
  %v1058 = vsel %vm1056, %v929, 0.0
  %v1059 = vadd.f32 %v1057, %v1058
  %v1060 = vsel %vm1056, %v930, 0.0
  %v1061 = vadd.f32 %v1059, %v1060
  %v1062 = vsel %vm1056, %v931, 0.0
  %v1063 = vadd.f32 %v1061, %v1062
  %v1064 = vsel %vm1056, %v932, 0.0
  %v1065 = vadd.f32 %v1063, %v1064
  %v1066 = vsel %vm1056, %v933, 0.0
  %v1067 = vadd.f32 %v1065, %v1066
  %v1068 = vsel %vm1056, %v934, 0.0
  %v1069 = vadd.f32 %v1067, %v1068
  %v1070 = vsel %vm1056, %v935, 0.0
  %v1071 = vadd.f32 %v1069, %v1070
  %v1072 = vsel %vm1056, %v936, 0.0
  %v1073 = vadd.f32 %v1071, %v1072
  %v1074 = vsel %vm1056, %v937, 0.0
  %v1075 = vadd.f32 %v1073, %v1074
  %v1076 = vsel %vm1056, %v938, 0.0
  %v1077 = vadd.f32 %v1075, %v1076
  %v1078 = vsel %vm1056, %v939, 0.0
  %v1079 = vadd.f32 %v1077, %v1078
  %v1080 = vsel %vm1056, %v940, 0.0
  %v1081 = vadd.f32 %v1079, %v1080
  %v1082 = vsel %vm1056, %v941, 0.0
  %v1083 = vadd.f32 %v1081, %v1082
  %v1084 = vsel %vm1056, %v942, 0.0
  %v1085 = vadd.f32 %v1083, %v1084
  %v1086 = vsel %vm1056, %v943, 0.0
  %v1087 = vadd.f32 %v1085, %v1086
  %v1088 = vrot.slane %v1087, 4
  %v1089 = vadd.f32 %v1087, %v1088
  %v1090 = vrot.slane %v1089, 2
  %v1091 = vadd.f32 %v1089, %v1090
  %v1092 = vrot.slane %v1091, 1
  %v1093 = vadd.f32 %v1091, %v1092
  %v1094 = vsel %vm1056, %v944, 0.0
  %v1095 = vsel %vm1056, %v945, 0.0
  %v1096 = vadd.f32 %v1094, %v1095
  %v1097 = vsel %vm1056, %v946, 0.0
  %v1098 = vadd.f32 %v1096, %v1097
  %v1099 = vsel %vm1056, %v947, 0.0
  %v1100 = vadd.f32 %v1098, %v1099
  %v1101 = vsel %vm1056, %v948, 0.0
  %v1102 = vadd.f32 %v1100, %v1101
  %v1103 = vsel %vm1056, %v949, 0.0
  %v1104 = vadd.f32 %v1102, %v1103
  %v1105 = vsel %vm1056, %v950, 0.0
  %v1106 = vadd.f32 %v1104, %v1105
  %v1107 = vsel %vm1056, %v951, 0.0
  %v1108 = vadd.f32 %v1106, %v1107
  %v1109 = vsel %vm1056, %v952, 0.0
  %v1110 = vadd.f32 %v1108, %v1109
  %v1111 = vsel %vm1056, %v953, 0.0
  %v1112 = vadd.f32 %v1110, %v1111
  %v1113 = vsel %vm1056, %v954, 0.0
  %v1114 = vadd.f32 %v1112, %v1113
  %v1115 = vsel %vm1056, %v955, 0.0
  %v1116 = vadd.f32 %v1114, %v1115
  %v1117 = vsel %vm1056, %v956, 0.0
  %v1118 = vadd.f32 %v1116, %v1117
  %v1119 = vsel %vm1056, %v957, 0.0
  %v1120 = vadd.f32 %v1118, %v1119
  %v1121 = vsel %vm1056, %v958, 0.0
  %v1122 = vadd.f32 %v1120, %v1121
  %v1123 = vsel %vm1056, %v959, 0.0
  %v1124 = vadd.f32 %v1122, %v1123
  %v1125 = vrot.slane %v1124, 4
  %v1126 = vadd.f32 %v1124, %v1125
  %v1127 = vrot.slane %v1126, 2
  %v1128 = vadd.f32 %v1126, %v1127
  %v1129 = vrot.slane %v1128, 1
  %v1130 = vadd.f32 %v1128, %v1129
  %v1131 = vsel %vm1056, %v960, 0.0
  %v1132 = vsel %vm1056, %v961, 0.0
  %v1133 = vadd.f32 %v1131, %v1132
  %v1134 = vsel %vm1056, %v962, 0.0
  %v1135 = vadd.f32 %v1133, %v1134
  %v1136 = vsel %vm1056, %v963, 0.0
  %v1137 = vadd.f32 %v1135, %v1136
  %v1138 = vsel %vm1056, %v964, 0.0
  %v1139 = vadd.f32 %v1137, %v1138
  %v1140 = vsel %vm1056, %v965, 0.0
  %v1141 = vadd.f32 %v1139, %v1140
  %v1142 = vsel %vm1056, %v966, 0.0
  %v1143 = vadd.f32 %v1141, %v1142
  %v1144 = vsel %vm1056, %v967, 0.0
  %v1145 = vadd.f32 %v1143, %v1144
  %v1146 = vsel %vm1056, %v968, 0.0
  %v1147 = vadd.f32 %v1145, %v1146
  %v1148 = vsel %vm1056, %v969, 0.0
  %v1149 = vadd.f32 %v1147, %v1148
  %v1150 = vsel %vm1056, %v970, 0.0
  %v1151 = vadd.f32 %v1149, %v1150
  %v1152 = vsel %vm1056, %v971, 0.0
  %v1153 = vadd.f32 %v1151, %v1152
  %v1154 = vsel %vm1056, %v972, 0.0
  %v1155 = vadd.f32 %v1153, %v1154
  %v1156 = vsel %vm1056, %v973, 0.0
  %v1157 = vadd.f32 %v1155, %v1156
  %v1158 = vsel %vm1056, %v974, 0.0
  %v1159 = vadd.f32 %v1157, %v1158
  %v1160 = vsel %vm1056, %v975, 0.0
  %v1161 = vadd.f32 %v1159, %v1160
  %v1162 = vrot.slane %v1161, 4
  %v1163 = vadd.f32 %v1161, %v1162
  %v1164 = vrot.slane %v1163, 2
  %v1165 = vadd.f32 %v1163, %v1164
  %v1166 = vrot.slane %v1165, 1
  %v1167 = vadd.f32 %v1165, %v1166
  %v1168 = vsel %vm1056, %v976, 0.0
  %v1169 = vsel %vm1056, %v977, 0.0
  %v1170 = vadd.f32 %v1168, %v1169
  %v1171 = vsel %vm1056, %v978, 0.0
  %v1172 = vadd.f32 %v1170, %v1171
  %v1173 = vsel %vm1056, %v979, 0.0
  %v1174 = vadd.f32 %v1172, %v1173
  %v1175 = vsel %vm1056, %v980, 0.0
  %v1176 = vadd.f32 %v1174, %v1175
  %v1177 = vsel %vm1056, %v981, 0.0
  %v1178 = vadd.f32 %v1176, %v1177
  %v1179 = vsel %vm1056, %v982, 0.0
  %v1180 = vadd.f32 %v1178, %v1179
  %v1181 = vsel %vm1056, %v983, 0.0
  %v1182 = vadd.f32 %v1180, %v1181
  %v1183 = vsel %vm1056, %v984, 0.0
  %v1184 = vadd.f32 %v1182, %v1183
  %v1185 = vsel %vm1056, %v985, 0.0
  %v1186 = vadd.f32 %v1184, %v1185
  %v1187 = vsel %vm1056, %v986, 0.0
  %v1188 = vadd.f32 %v1186, %v1187
  %v1189 = vsel %vm1056, %v987, 0.0
  %v1190 = vadd.f32 %v1188, %v1189
  %v1191 = vsel %vm1056, %v988, 0.0
  %v1192 = vadd.f32 %v1190, %v1191
  %v1193 = vsel %vm1056, %v989, 0.0
  %v1194 = vadd.f32 %v1192, %v1193
  %v1195 = vsel %vm1056, %v990, 0.0
  %v1196 = vadd.f32 %v1194, %v1195
  %v1197 = vsel %vm1056, %v991, 0.0
  %v1198 = vadd.f32 %v1196, %v1197
  %v1199 = vrot.slane %v1198, 4
  %v1200 = vadd.f32 %v1198, %v1199
  %v1201 = vrot.slane %v1200, 2
  %v1202 = vadd.f32 %v1200, %v1201
  %v1203 = vrot.slane %v1202, 1
  %v1204 = vadd.f32 %v1202, %v1203
  %v1205 = vsel %vm1056, %v992, 0.0
  %v1206 = vsel %vm1056, %v993, 0.0
  %v1207 = vadd.f32 %v1205, %v1206
  %v1208 = vsel %vm1056, %v994, 0.0
  %v1209 = vadd.f32 %v1207, %v1208
  %v1210 = vsel %vm1056, %v995, 0.0
  %v1211 = vadd.f32 %v1209, %v1210
  %v1212 = vsel %vm1056, %v996, 0.0
  %v1213 = vadd.f32 %v1211, %v1212
  %v1214 = vsel %vm1056, %v997, 0.0
  %v1215 = vadd.f32 %v1213, %v1214
  %v1216 = vsel %vm1056, %v998, 0.0
  %v1217 = vadd.f32 %v1215, %v1216
  %v1218 = vsel %vm1056, %v999, 0.0
  %v1219 = vadd.f32 %v1217, %v1218
  %v1220 = vsel %vm1056, %v1000, 0.0
  %v1221 = vadd.f32 %v1219, %v1220
  %v1222 = vsel %vm1056, %v1001, 0.0
  %v1223 = vadd.f32 %v1221, %v1222
  %v1224 = vsel %vm1056, %v1002, 0.0
  %v1225 = vadd.f32 %v1223, %v1224
  %v1226 = vsel %vm1056, %v1003, 0.0
  %v1227 = vadd.f32 %v1225, %v1226
  %v1228 = vsel %vm1056, %v1004, 0.0
  %v1229 = vadd.f32 %v1227, %v1228
  %v1230 = vsel %vm1056, %v1005, 0.0
  %v1231 = vadd.f32 %v1229, %v1230
  %v1232 = vsel %vm1056, %v1006, 0.0
  %v1233 = vadd.f32 %v1231, %v1232
  %v1234 = vsel %vm1056, %v1007, 0.0
  %v1235 = vadd.f32 %v1233, %v1234
  %v1236 = vrot.slane %v1235, 4
  %v1237 = vadd.f32 %v1235, %v1236
  %v1238 = vrot.slane %v1237, 2
  %v1239 = vadd.f32 %v1237, %v1238
  %v1240 = vrot.slane %v1239, 1
  %v1241 = vadd.f32 %v1239, %v1240
  %v1242 = vsel %vm1056, %v1008, 0.0
  %v1243 = vsel %vm1056, %v1009, 0.0
  %v1244 = vadd.f32 %v1242, %v1243
  %v1245 = vsel %vm1056, %v1010, 0.0
  %v1246 = vadd.f32 %v1244, %v1245
  %v1247 = vsel %vm1056, %v1011, 0.0
  %v1248 = vadd.f32 %v1246, %v1247
  %v1249 = vsel %vm1056, %v1012, 0.0
  %v1250 = vadd.f32 %v1248, %v1249
  %v1251 = vsel %vm1056, %v1013, 0.0
  %v1252 = vadd.f32 %v1250, %v1251
  %v1253 = vsel %vm1056, %v1014, 0.0
  %v1254 = vadd.f32 %v1252, %v1253
  %v1255 = vsel %vm1056, %v1015, 0.0
  %v1256 = vadd.f32 %v1254, %v1255
  %v1257 = vsel %vm1056, %v1016, 0.0
  %v1258 = vadd.f32 %v1256, %v1257
  %v1259 = vsel %vm1056, %v1017, 0.0
  %v1260 = vadd.f32 %v1258, %v1259
  %v1261 = vsel %vm1056, %v1018, 0.0
  %v1262 = vadd.f32 %v1260, %v1261
  %v1263 = vsel %vm1056, %v1019, 0.0
  %v1264 = vadd.f32 %v1262, %v1263
  %v1265 = vsel %vm1056, %v1020, 0.0
  %v1266 = vadd.f32 %v1264, %v1265
  %v1267 = vsel %vm1056, %v1021, 0.0
  %v1268 = vadd.f32 %v1266, %v1267
  %v1269 = vsel %vm1056, %v1022, 0.0
  %v1270 = vadd.f32 %v1268, %v1269
  %v1271 = vsel %vm1056, %v1023, 0.0
  %v1272 = vadd.f32 %v1270, %v1271
  %v1273 = vrot.slane %v1272, 4
  %v1274 = vadd.f32 %v1272, %v1273
  %v1275 = vrot.slane %v1274, 2
  %v1276 = vadd.f32 %v1274, %v1275
  %v1277 = vrot.slane %v1276, 1
  %v1278 = vadd.f32 %v1276, %v1277
  %v1279 = vsel %vm1056, %v1024, 0.0
  %v1280 = vsel %vm1056, %v1025, 0.0
  %v1281 = vadd.f32 %v1279, %v1280
  %v1282 = vsel %vm1056, %v1026, 0.0
  %v1283 = vadd.f32 %v1281, %v1282
  %v1284 = vsel %vm1056, %v1027, 0.0
  %v1285 = vadd.f32 %v1283, %v1284
  %v1286 = vsel %vm1056, %v1028, 0.0
  %v1287 = vadd.f32 %v1285, %v1286
  %v1288 = vsel %vm1056, %v1029, 0.0
  %v1289 = vadd.f32 %v1287, %v1288
  %v1290 = vsel %vm1056, %v1030, 0.0
  %v1291 = vadd.f32 %v1289, %v1290
  %v1292 = vsel %vm1056, %v1031, 0.0
  %v1293 = vadd.f32 %v1291, %v1292
  %v1294 = vsel %vm1056, %v1032, 0.0
  %v1295 = vadd.f32 %v1293, %v1294
  %v1296 = vsel %vm1056, %v1033, 0.0
  %v1297 = vadd.f32 %v1295, %v1296
  %v1298 = vsel %vm1056, %v1034, 0.0
  %v1299 = vadd.f32 %v1297, %v1298
  %v1300 = vsel %vm1056, %v1035, 0.0
  %v1301 = vadd.f32 %v1299, %v1300
  %v1302 = vsel %vm1056, %v1036, 0.0
  %v1303 = vadd.f32 %v1301, %v1302
  %v1304 = vsel %vm1056, %v1037, 0.0
  %v1305 = vadd.f32 %v1303, %v1304
  %v1306 = vsel %vm1056, %v1038, 0.0
  %v1307 = vadd.f32 %v1305, %v1306
  %v1308 = vsel %vm1056, %v1039, 0.0
  %v1309 = vadd.f32 %v1307, %v1308
  %v1310 = vrot.slane %v1309, 4
  %v1311 = vadd.f32 %v1309, %v1310
  %v1312 = vrot.slane %v1311, 2
  %v1313 = vadd.f32 %v1311, %v1312
  %v1314 = vrot.slane %v1313, 1
  %v1315 = vadd.f32 %v1313, %v1314
  %v1316 = vsel %vm1056, %v1040, 0.0
  %v1317 = vsel %vm1056, %v1041, 0.0
  %v1318 = vadd.f32 %v1316, %v1317
  %v1319 = vsel %vm1056, %v1042, 0.0
  %v1320 = vadd.f32 %v1318, %v1319
  %v1321 = vsel %vm1056, %v1043, 0.0
  %v1322 = vadd.f32 %v1320, %v1321
  %v1323 = vsel %vm1056, %v1044, 0.0
  %v1324 = vadd.f32 %v1322, %v1323
  %v1325 = vsel %vm1056, %v1045, 0.0
  %v1326 = vadd.f32 %v1324, %v1325
  %v1327 = vsel %vm1056, %v1046, 0.0
  %v1328 = vadd.f32 %v1326, %v1327
  %v1329 = vsel %vm1056, %v1047, 0.0
  %v1330 = vadd.f32 %v1328, %v1329
  %v1331 = vsel %vm1056, %v1048, 0.0
  %v1332 = vadd.f32 %v1330, %v1331
  %v1333 = vsel %vm1056, %v1049, 0.0
  %v1334 = vadd.f32 %v1332, %v1333
  %v1335 = vsel %vm1056, %v1050, 0.0
  %v1336 = vadd.f32 %v1334, %v1335
  %v1337 = vsel %vm1056, %v1051, 0.0
  %v1338 = vadd.f32 %v1336, %v1337
  %v1339 = vsel %vm1056, %v1052, 0.0
  %v1340 = vadd.f32 %v1338, %v1339
  %v1341 = vsel %vm1056, %v1053, 0.0
  %v1342 = vadd.f32 %v1340, %v1341
  %v1343 = vsel %vm1056, %v1054, 0.0
  %v1344 = vadd.f32 %v1342, %v1343
  %v1345 = vsel %vm1056, %v1055, 0.0
  %v1346 = vadd.f32 %v1344, %v1345
  %v1347 = vrot.slane %v1346, 4
  %v1348 = vadd.f32 %v1346, %v1347
  %v1349 = vrot.slane %v1348, 2
  %v1350 = vadd.f32 %v1348, %v1349
  %v1351 = vrot.slane %v1350, 1
  %v1352 = vadd.f32 %v1350, %v1351
  %1353 = vadd.xlane.f32.xlu0 %v151
  %v1354 = vpop.xlane.xlu0 %1353
  %v1355 = vmax.f32 %v1354, 1e-06
  %v1356 = vrcp.pop %v1355
  %v1358 = vrot.slane %v1356, 1
  %v1359 = vrot.slane %v1356, 2
  %v1360 = vrot.slane %v1356, 3
  %v1361 = vrot.slane %v1356, 4
  %v1362 = vrot.slane %v1356, 5
  %v1363 = vrot.slane %v1356, 6
  %v1364 = vrot.slane %v1356, 7
  %v1373 = vmul.f32 %v1093, %v1356
  %v1374 = vmul.f32 %v1130, %v1358
  %v1375 = vmul.f32 %v1167, %v1359
  %v1376 = vmul.f32 %v1204, %v1360
  %v1377 = vmul.f32 %v1241, %v1361
  %v1378 = vmul.f32 %v1278, %v1362
  %v1379 = vmul.f32 %v1315, %v1363
  %v1380 = vmul.f32 %v1352, %v1364
  %v1381 = vld [vmem:[%s2] sm:$0xff]
  %v1382 = vld [vmem:[%s2 + $0x8] sm:$0xff]
  %v1383 = vld [vmem:[%s2 + $0x10] sm:$0xff]
  %v1384 = vld [vmem:[%s2 + $0x18] sm:$0xff]
  %v1385 = vld [vmem:[%s3] sm:$0x1]
  %v1387 = vperm.slane %v1385, 0
  %v1397 = vrot.slane %v1374, 7
  %vm1398 = vcmask 1041409
  %v1399 = vsel %vm1398, %v1397, %v1373
  %v1400 = vrot.slane %v1375, 6
  %vm1401 = vcmask 1042434
  %v1402 = vsel %vm1401, %v1400, %v1399
  %v1403 = vrot.slane %v1376, 5
  %vm1404 = vcmask 1043459
  %v1405 = vsel %vm1404, %v1403, %v1402
  %v1406 = vrot.slane %v1377, 4
  %vm1407 = vcmask 1044484
  %v1408 = vsel %vm1407, %v1406, %v1405
  %v1409 = vrot.slane %v1378, 3
  %vm1410 = vcmask 1045509
  %v1411 = vsel %vm1410, %v1409, %v1408
  %v1412 = vrot.slane %v1379, 2
  %vm1413 = vcmask 1046534
  %v1414 = vsel %vm1413, %v1412, %v1411
  %v1415 = vrot.slane %v1380, 1
  %vm1416 = vcmask 1047559
  %v1417 = vsel %vm1416, %v1415, %v1414
  %v1418 = vsel %vm1056, %v1417, 0
  %1420 = vmatpush.msra.mxu0 0.0
  %1421 = vmatpush.msra.mxu0 0.0
  %1422 = vmatpush.msra.mxu0 0.0
  %1423 = vmatpush.msra.mxu0 0.0
  %1424 = vmatpush.msra.mxu0 0.0
  %1425 = vmatpush.msra.mxu0 0.0
  %1426 = vmatpush.msra.mxu0 0.0
  %1427 = vmatpush.msra.mxu0 0.0
  %1428 = vmatpush.msra.mxu0 0.0
  %1429 = vmatpush.msra.mxu0 0.0
  %1430 = vmatpush.msra.mxu0 0.0
  %1431 = vmatpush.msra.mxu0 0.0
  %1432 = vmatpush.msra.mxu0 %v1384
  %1433 = vmatpush.msra.mxu0 %v1383
  %1434 = vmatpush.msra.mxu0 %v1382
  %1435 = vmatpush.msra.mxu0 %v1381
  %1436 = vmatmul.f32.gmra.mxu0 %v1418
  %v1437 = vpop.f32.mrf.mxu0
  %v1438 = vadd.f32 %v1387, %v1437
  %1439 = vdwg.mxu0
  %v1440 = vmax.f32 %v1438, 0.0
  %v1441 = vld [vmem:[%s4] sm:$0xff]
  %v1442 = vld [vmem:[%s4 + $0x8] sm:$0xff]
  %v1443 = vld [vmem:[%s4 + $0x10] sm:$0xff]
  %v1444 = vld [vmem:[%s4 + $0x18] sm:$0xff]
  %v1445 = vld [vmem:[%s5] sm:$0x1]
  %v1447 = vperm.slane %v1445, 0
  %v1450 = vsel %vm1056, %v1440, 0
  %1452 = vmatpush.msra.mxu0 0.0
  %1453 = vmatpush.msra.mxu0 0.0
  %1454 = vmatpush.msra.mxu0 0.0
  %1455 = vmatpush.msra.mxu0 0.0
  %1456 = vmatpush.msra.mxu0 0.0
  %1457 = vmatpush.msra.mxu0 0.0
  %1458 = vmatpush.msra.mxu0 0.0
  %1459 = vmatpush.msra.mxu0 0.0
  %1460 = vmatpush.msra.mxu0 0.0
  %1461 = vmatpush.msra.mxu0 0.0
  %1462 = vmatpush.msra.mxu0 0.0
  %1463 = vmatpush.msra.mxu0 0.0
  %1464 = vmatpush.msra.mxu0 %v1444
  %1465 = vmatpush.msra.mxu0 %v1443
  %1466 = vmatpush.msra.mxu0 %v1442
  %1467 = vmatpush.msra.mxu0 %v1441
  %1468 = vmatmul.f32.gmra.mxu0 %v1450
  %v1469 = vpop.f32.mrf.mxu0
  %v1470 = vadd.f32 %v1447, %v1469
  %1471 = vdwg.mxu0
  %vm1472 = vcmask 23552
  %1473 = vst.msk [vmem:[%s6] sm:$0xff] %vm1472, %v1470
  // Predicated region
  $region26: #{reg_flat_niid_forward.15} parent=0 // pred_check
    _
  $region27: #{reg_flat_niid_forward.15} parent=0 // pred_check_branch
    %1475 = sbr.rel (0) target = $region29
  $region28: #{reg_flat_niid_forward.15} parent=0 // pred_region
    _
  $region29: #{reg_flat_niid_forward.15} parent=0 // pred_fallthru
    _
  // Predicated region
  $region30: #{reg_flat_niid_forward.15} parent=0 // pred_check
    _
  $region31: #{reg_flat_niid_forward.15} parent=0 // pred_check_branch
    %1477 = sbr.rel (0) target = $region33
  $region32: #{reg_flat_niid_forward.15} parent=0 // pred_region
    _
  $region33: #{reg_flat_niid_forward.15} parent=0 // pred_fallthru
    _

</llo_original>
